<compile_context>
chip_gen: v7x
topology: tpu7x:2x2x1
jax: 0.10.0
libtpu: 0.0.40
codegen_flags: <defaults>
</compile_context>

<pallas_src>
import jax
import jax.numpy as jnp
from jax import lax
from jax.experimental import pallas as pl
from jax.experimental.pallas import tpu as pltpu


def _round_up(x, m):
    return (x + m - 1) // m * m


# ----------------------------------------------------------------------------
# Kernel 1: fused image-space losses (MSE sum, h-TV sum, w-TV sum)
#           lane-dense (bc, H*W) tiles, per-step partial sums, "parallel" grid.
# ----------------------------------------------------------------------------

def _make_image_losses_kernel(W, HW):
    def kernel(x_ref, y_ref, o_ref):
        x = x_ref[...].astype(jnp.float32)          # (bc, HW) lane-dense
        y = y_ref[...].astype(jnp.float32)

        d = x - y
        s_mse = jnp.sum(d * d)

        # h-TV: neighbour one image row down == flat shift of W.
        dh = x[:, W:] - x[:, :HW - W]
        s_htv = jnp.sum(dh * dh)

        # w-TV: neighbour one column right == flat shift of 1; mask row-crossing pairs.
        dw = x[:, 1:] - x[:, :HW - 1]
        col = lax.broadcasted_iota(jnp.int32, (1, HW - 1), 1) % W
        s_wtv = jnp.sum(jnp.where(col != W - 1, dw * dw, 0.0))

        row = lax.broadcasted_iota(jnp.int32, (8, 128), 0)
        tile = jnp.where(row == 0, s_mse,
                jnp.where(row == 1, s_htv,
                 jnp.where(row == 2, s_wtv, 0.0)))
        o_ref[...] = tile[None].astype(jnp.float32)

    return kernel


def _pick_plane_block(nc_pad, hw, budget_bytes=4 * 1024 * 1024):
    """Largest multiple-of-8 row-block whose lane-padded f32 tile fits the budget."""
    row_bytes = _round_up(hw, 128) * 4              # account for lane padding
    cap = max(8, (budget_bytes // max(1, row_bytes)) // 8 * 8)
    if nc_pad <= cap:
        return nc_pad                               # whole input in one tile
    best = 8
    for d in range(8, cap + 1, 8):
        if nc_pad % d == 0:
            best = d
    return best


def fused_image_losses(out_images, target_images, tv_loss_weight=1.0):
    n, c, h, w = out_images.shape
    nc, hw = n * c, h * w
    x = out_images.reshape(nc, hw)                  # free reshape, no transpose
    y = target_images.reshape(nc, hw)
    nc_pad = _round_up(nc, 8)
    if nc_pad != nc:                                # zero pad rows: sum-neutral
        x = jnp.pad(x, ((0, nc_pad - nc), (0, 0)))
        y = jnp.pad(y, ((0, nc_pad - nc), (0, 0)))

    bc = _pick_plane_block(nc_pad, hw)
    steps = nc_pad // bc

    kernel = _make_image_losses_kernel(w, hw)
    parts = pl.pallas_call(
        kernel,
        out_shape=jax.ShapeDtypeStruct((steps, 8, 128), jnp.float32),
        grid_spec=pltpu.PrefetchScalarGridSpec(
            num_scalar_prefetch=0,
            grid=(steps,),
            in_specs=[
                pl.BlockSpec((bc, hw), lambda i: (i, 0)),
                pl.BlockSpec((bc, hw), lambda i: (i, 0)),
            ],
            out_specs=pl.BlockSpec((1, 8, 128), lambda i: (i, 0, 0)),
        ),
        compiler_params=pltpu.CompilerParams(
            dimension_semantics=("parallel",),      # no cross-step accumulation
            vmem_limit_bytes=32 * 1024 * 1024,
        ),
    )(x, y)

    mse_sum = jnp.sum(parts[:, 0, 0])
    h_sum = jnp.sum(parts[:, 1, 0])
    w_sum = jnp.sum(parts[:, 2, 0])

    image_loss = mse_sum / (n * c * h * w)
    count_h = c * (h - 1) * w
    count_w = c * h * (w - 1)
    tv_loss = tv_loss_weight * 2.0 * (h_sum / count_h + w_sum / count_w) / n
    return image_loss, tv_loss


# ----------------------------------------------------------------------------
# Kernel 2: fused 2-layer conv "VGG" features + feature-space MSE (per batch item)
# ----------------------------------------------------------------------------

def _pick_halo(W):
    """Halo rows: multiple of 8 and of W, and >= W + 1 (zero SAME padding)."""
    h = W
    while h < W + 1 or h % 8 != 0:
        h += W
    return h


def _make_vgg_mse_kernel(H, W, C1, HALO):
    HW = H * W
    SEG = HW + HALO            # per-image stride inside the halo'ed activation buffer
    M2 = SEG + HW              # combined matmul M: img0 + middle halo + img1
    TOTAL = 2 * HW + 3 * HALO

    def kernel(ao_ref, at_ref, w1_ref, b1_ref, w2_ref, b2_ref, o_ref, a1_ref):
        # ao_ref / at_ref : (1, HW, K1p) im2col'ed RGB input (out / target image)
        # w1_ref          : (K1p, C1)   layer-1 weights, bf16 (pre-cast in wrapper)
        # w2_ref          : (9, C1, C1) layer-2 weights, bf16, one slab per 3x3 tap
        # o_ref           : (1, 8, 128) lane-dense partial sum of squared feature diffs
        # a1_ref          : bf16 VMEM scratch: [halo][img0 act][halo][img1 act][halo]
        w1 = w1_ref[...]                            # bf16, no per-step cast
        b1 = b1_ref[...]
        b2 = b2_ref[...]

        # Zero only the three halo bands, every step (scratch may be per-core/stale).
        zero_halo = jnp.zeros((HALO, C1), jnp.bfloat16)
        a1_ref[0:HALO, :] = zero_halo
        a1_ref[HALO + HW:2 * HALO + HW, :] = zero_halo
        a1_ref[TOTAL - HALO:TOTAL, :] = zero_halo

        # Layer 1: single lane-dense matmul over the (tiny) im2col'ed input + ReLU,
        # staged in bf16 so layer-2 windows are consumed by the MXU without casts.
        def layer1(a_ref, dst):
            a = a_ref[0].astype(jnp.bfloat16)       # (HW, K1p)
            h1 = jnp.dot(a, w1, preferred_element_type=jnp.float32) + b1
            a1_ref[dst:dst + HW, :] = jnp.maximum(h1, 0.0).astype(jnp.bfloat16)

        layer1(ao_ref, HALO)                        # out_images   -> segment 0
        layer1(at_ref, HALO + SEG)                  # target_images -> segment 1

        # Layer 2: 3x3 SAME conv as 9 shifted lane-dense bf16 matmuls.  Each tap's
        # window spans BOTH images (separated by a zero halo), so w2 is fed to the
        # MXU once per tap for the pair and M is 2*HW + HALO.
        col = lax.broadcasted_iota(jnp.int32, (M2, 1), 0) % W
        masks = [col >= 1, None, col <= W - 2]      # dw offsets -1 / 0 / +1

        acc = jnp.zeros((M2, C1), jnp.float32)
        for t in range(9):
            dh, dw = divmod(t, 3)
            start = HALO + (dh - 1) * W + (dw - 1)  # static offset
            win = a1_ref[start:start + M2, :]       # bf16 window (both images)
            m = masks[dw]
            if m is not None:
                win = jnp.where(m, win, 0.0)
            acc = acc + jnp.dot(win, w2_ref[t], preferred_element_type=jnp.float32)

        feat = jnp.maximum(acc + b2, 0.0)           # (M2, C1); halo rows ignored
        diff = feat[:HW, :] - feat[SEG:SEG + HW, :]
        o_ref[...] = jnp.broadcast_to(jnp.sum(diff * diff), (1, 8, 128))

    return kernel


def _im2col_3x3(x_nhwc):
    """3x3 SAME patches of the (narrow) RGB input -> (N, H*W, 9*C).  Tiny expansion."""
    n, h, w, c = x_nhwc.shape
    xp = jnp.pad(x_nhwc, ((0, 0), (1, 1), (1, 1), (0, 0)))
    cols = [xp[:, dh:dh + h, dw:dw + w, :] for dh in range(3) for dw in range(3)]
    return jnp.concatenate(cols, axis=-1).reshape(n, h * w, 9 * c)


def vgg_feature_mse(out_images, target_images, params):
    """MSE(vgg(out_images), vgg(target_images)) with a fused conv1+conv2+MSE kernel.

    # TODO(synk): the real GeneratorLoss injects a pretrained torchvision VGG16
    # feature extractor; it is replaced here by a deterministic 2-layer
    # conv3x3(SAME)+ReLU stand-in playing the same structural role (feature MSE).
    """
    n, c, h, w = out_images.shape
    c1 = params["w1"].shape[-1]
    k1 = 9 * c
    k1p = _round_up(k1, 8)
    halo = _pick_halo(w)
    hw = h * w
    total_rows = 2 * hw + 3 * halo

    def prep(x_nchw):
        x = jnp.transpose(x_nchw, (0, 2, 3, 1))     # NCHW -> NHWC
        p = _im2col_3x3(x)                          # only the narrow RGB layer
        if k1p != k1:
            p = jnp.pad(p, ((0, 0), (0, 0), (0, k1p - k1)))
        return p

    a_out = prep(out_images)
    a_tgt = prep(target_images)

    w1 = params["w1"].reshape(k1, c1)               # (3,3,C,C1) -> (9C, C1)
    if k1p != k1:
        w1 = jnp.pad(w1, ((0, k1p - k1), (0, 0)))
    w1 = w1.astype(jnp.bfloat16)                    # pre-cast once (MXU operand)
    w2 = params["w2"].reshape(9, c1, c1).astype(jnp.bfloat16)
    b1 = params["b1"].reshape(1, c1).astype(jnp.float32)
    b2 = params["b2"].reshape(1, c1).astype(jnp.float32)

    kernel = _make_vgg_mse_kernel(h, w, c1, halo)
    partials = pl.pallas_call(
        kernel,
        out_shape=jax.ShapeDtypeStruct((n, 8, 128), jnp.float32),
        grid_spec=pltpu.PrefetchScalarGridSpec(
            num_scalar_prefetch=0,
            grid=(n,),
            in_specs=[
                pl.BlockSpec((1, hw, k1p), lambda i: (i, 0, 0)),
                pl.BlockSpec((1, hw, k1p), lambda i: (i, 0, 0)),
                pl.BlockSpec((k1p, c1), lambda i: (0, 0)),
                pl.BlockSpec((1, c1), lambda i: (0, 0)),
                pl.BlockSpec((9, c1, c1), lambda i: (0, 0, 0)),
                pl.BlockSpec((1, c1), lambda i: (0, 0)),
            ],
            out_specs=pl.BlockSpec((1, 8, 128), lambda i: (i, 0, 0)),
            scratch_shapes=[
                pltpu.VMEM((total_rows, c1), jnp.bfloat16),   # halo'ed L1 activation
            ],
        ),
        compiler_params=pltpu.CompilerParams(
            dimension_semantics=("parallel",),      # batch items are independent
            vmem_limit_bytes=32 * 1024 * 1024,
        ),
    )(a_out, a_tgt, w1, b1, w2, b2)

    return jnp.sum(partials[:, 0, 0]) / (n * hw * c1)


# ----------------------------------------------------------------------------
# GeneratorLoss.forward
# ----------------------------------------------------------------------------

def generator_loss(out_labels, out_images, target_images, vgg_params,
                   tv_loss_weight=1.0):
    # adversarial term is N scalars — computed in the wrapper (review recommendation)
    adversarial_loss = jnp.mean(1.0 - out_labels)
    image_loss, tv_loss = fused_image_losses(out_images, target_images, tv_loss_weight)
    vgg_loss = vgg_feature_mse(out_images, target_images, vgg_params)
    return image_loss, vgg_loss, adversarial_loss, tv_loss


# ----------------------------------------------------------------------------
# Pure-JAX reference (for correctness checking only)
# ----------------------------------------------------------------------------

def _reference_losses(out_labels, out_images, target_images, params,
                      tv_loss_weight=1.0):
    n, c, h, w = out_images.shape
    adv = jnp.mean(1.0 - out_labels)
    img = jnp.mean((out_images - target_images) ** 2)
    h_tv = jnp.sum((out_images[:, :, 1:, :] - out_images[:, :, :-1, :]) ** 2)
    w_tv = jnp.sum((out_images[:, :, :, 1:] - out_images[:, :, :, :-1]) ** 2)
    tv = tv_loss_weight * 2.0 * (h_tv / (c * (h - 1) * w) +
                                 w_tv / (c * h * (w - 1))) / n

    def conv(x_nhwc, wgt, b):
        y = lax.conv_general_dilated(
            x_nhwc.astype(jnp.bfloat16), wgt.astype(jnp.bfloat16),
            window_strides=(1, 1), padding="SAME",
            dimension_numbers=("NHWC", "HWIO", "NHWC"),
            preferred_element_type=jnp.float32)
        return jnp.maximum(y + b, 0.0)

    def feats(x_nchw):
        x = jnp.transpose(x_nchw, (0, 2, 3, 1))
        x = conv(x, params["w1"], params["b1"])
        x = conv(x, params["w2"], params["b2"])
        return x

    vgg = jnp.mean((feats(out_images) - feats(target_images)) ** 2)
    return img, vgg, adv, tv


# ----------------------------------------------------------------------------
# Driver
# ----------------------------------------------------------------------------

if __name__ == "__main__":
    key = jax.random.PRNGKey(0)
    k1, k2, k3, kw1, kb1, kw2, kb2 = jax.random.split(key, 7)

    N, C, H, W = 2, 3, 16, 16       # small SRGAN-style RGB images (NCHW)
    C1 = 128                        # lane-dense feature width of the VGG stand-in

    out_images = jax.random.uniform(k1, (N, C, H, W), dtype=jnp.float32)
    target_images = jax.random.uniform(k2, (N, C, H, W), dtype=jnp.float32)
    out_labels = jax.random.uniform(k3, (N, 1), dtype=jnp.float32)

    vgg_params = {
        "w1": 0.1 * jax.random.normal(kw1, (3, 3, C, C1), jnp.float32),
        "b1": 0.1 * jax.random.normal(kb1, (C1,), jnp.float32),
        "w2": 0.05 * jax.random.normal(kw2, (3, 3, C1, C1), jnp.float32),
        "b2": 0.1 * jax.random.normal(kb2, (C1,), jnp.float32),
    }

    losses = jax.jit(generator_loss)(out_labels, out_images, target_images, vgg_params)
    losses = jax.block_until_ready(losses)
    image_l, vgg_l, adv_l, tv_l = losses

    ref_img, ref_vgg, ref_adv, ref_tv = _reference_losses(
        out_labels, out_images, target_images, vgg_params)

    assert bool(jnp.isfinite(image_l)) and bool(jnp.isfinite(vgg_l))
    assert bool(jnp.isfinite(adv_l)) and bool(jnp.isfinite(tv_l))
    assert jnp.allclose(image_l, ref_img, rtol=1e-3, atol=1e-5)
    assert jnp.allclose(adv_l, ref_adv, rtol=1e-3, atol=1e-5)
    assert jnp.allclose(tv_l, ref_tv, rtol=1e-3, atol=1e-5)
    assert jnp.allclose(vgg_l, ref_vgg, rtol=5e-2, atol=1e-3)
    print("KERNEL_OK")
</pallas_src>

<mosaic_0001>
module attributes {stable_mosaic.version = 11 : i64} {
  func.func @kernel(%arg0: i32, %arg1: memref<1x256x32xf32, #tpu.memory_space<vmem>>, %arg2: memref<1x256x32xf32, #tpu.memory_space<vmem>>, %arg3: memref<32x128xbf16, #tpu.memory_space<vmem>>, %arg4: memref<1x128xf32, #tpu.memory_space<vmem>>, %arg5: memref<9x128x128xbf16, #tpu.memory_space<vmem>>, %arg6: memref<1x128xf32, #tpu.memory_space<vmem>>, %arg7: memref<1x8x128xf32, #tpu.memory_space<vmem>>, %arg8: memref<608x128xbf16, #tpu.memory_space<vmem>>) attributes {dimension_semantics = [#tpu.dimension_semantics<parallel>], iteration_bounds = array<i64: 2>, scalar_prefetch = 0 : i64, scratch_operands = 1 : i64, tpu.core_type = #tpu.core_type<tc>, window_params = [{transform_indices = @transform_0, window_bounds = array<i64: 1, 256, 32>}, {transform_indices = @transform_1, window_bounds = array<i64: 1, 256, 32>}, {pipeline_mode = #tpu.pipeline_mode<synchronous>, transform_indices = @transform_2, window_bounds = array<i64: 32, 128>}, {pipeline_mode = #tpu.pipeline_mode<synchronous>, transform_indices = @transform_3, window_bounds = array<i64: 1, 128>}, {pipeline_mode = #tpu.pipeline_mode<synchronous>, transform_indices = @transform_4, window_bounds = array<i64: 9, 128, 128>}, {pipeline_mode = #tpu.pipeline_mode<synchronous>, transform_indices = @transform_5, window_bounds = array<i64: 1, 128>}, {transform_indices = @transform_6, window_bounds = array<i64: 1, 8, 128>}]} {
    %c0 = arith.constant 0 : index
    %c0_0 = arith.constant 0 : index
    %0 = vector.load %arg3[%c0, %c0_0] : memref<32x128xbf16, #tpu.memory_space<vmem>>, vector<32x128xbf16>
    %c0_1 = arith.constant 0 : index
    %c0_2 = arith.constant 0 : index
    %1 = vector.load %arg4[%c0_1, %c0_2] : memref<1x128xf32, #tpu.memory_space<vmem>>, vector<1x128xf32>
    %c0_3 = arith.constant 0 : index
    %c0_4 = arith.constant 0 : index
    %2 = vector.load %arg6[%c0_3, %c0_4] : memref<1x128xf32, #tpu.memory_space<vmem>>, vector<1x128xf32>
    %cst = arith.constant 0.000000e+00 : bf16
    %3 = vector.broadcast %cst : bf16 to vector<32x128xbf16>
    %c0_5 = arith.constant 0 : index
    %c0_6 = arith.constant 0 : index
    %4 = vector.load %arg8[%c0_5, %c0_6] : memref<608x128xbf16, #tpu.memory_space<vmem>>, vector<32x128xbf16>
    tpu.vector_store %arg8[%c0_5, %c0_6], %3 {strides = array<i32>} : memref<608x128xbf16, #tpu.memory_space<vmem>>, vector<32x128xbf16>,
    %c288 = arith.constant 288 : index
    %c0_7 = arith.constant 0 : index
    %5 = vector.load %arg8[%c288, %c0_7] : memref<608x128xbf16, #tpu.memory_space<vmem>>, vector<32x128xbf16>
    tpu.vector_store %arg8[%c288, %c0_7], %3 {strides = array<i32>} : memref<608x128xbf16, #tpu.memory_space<vmem>>, vector<32x128xbf16>,
    %c576 = arith.constant 576 : index
    %c0_8 = arith.constant 0 : index
    %6 = vector.load %arg8[%c576, %c0_8] : memref<608x128xbf16, #tpu.memory_space<vmem>>, vector<32x128xbf16>
    tpu.vector_store %arg8[%c576, %c0_8], %3 {strides = array<i32>} : memref<608x128xbf16, #tpu.memory_space<vmem>>, vector<32x128xbf16>,
    %c0_9 = arith.constant 0 : index
    %c0_10 = arith.constant 0 : index
    %c0_11 = arith.constant 0 : index
    %7 = vector.load %arg1[%c0_9, %c0_10, %c0_11] : memref<1x256x32xf32, #tpu.memory_space<vmem>>, vector<1x256x32xf32>
    %8 = vector.shape_cast %7 : vector<1x256x32xf32> to vector<256x32xf32>
    %9 = arith.truncf %8 : vector<256x32xf32> to vector<256x32xbf16>
    %cst_12 = arith.constant dense<0.000000e+00> : vector<256x128xf32>
    %10 = tpu.matmul %9, %0, %cst_12 {dimension_numbers = #tpu.dot_dimension_numbers<[1], [0], [0], [1], [0, 0, 1, 1], [], []>} : vector<256x32xbf16>, vector<32x128xbf16>, vector<256x128xf32> -> vector<256x128xf32>
    %11 = vector.broadcast %1 : vector<1x128xf32> to vector<256x128xf32>
    %12 = arith.addf %10, %11 : vector<256x128xf32>
    %cst_13 = arith.constant 0.000000e+00 : f32
    %13 = vector.broadcast %cst_13 : f32 to vector<256x128xf32>
    %14 = arith.maximumf %12, %13 : vector<256x128xf32>
    %15 = arith.truncf %14 : vector<256x128xf32> to vector<256x128xbf16>
    %c32 = arith.constant 32 : index
    %c0_14 = arith.constant 0 : index
    %16 = vector.load %arg8[%c32, %c0_14] : memref<608x128xbf16, #tpu.memory_space<vmem>>, vector<256x128xbf16>
    tpu.vector_store %arg8[%c32, %c0_14], %15 {strides = array<i32>} : memref<608x128xbf16, #tpu.memory_space<vmem>>, vector<256x128xbf16>,
    %c0_15 = arith.constant 0 : index
    %c0_16 = arith.constant 0 : index
    %c0_17 = arith.constant 0 : index
    %17 = vector.load %arg2[%c0_15, %c0_16, %c0_17] : memref<1x256x32xf32, #tpu.memory_space<vmem>>, vector<1x256x32xf32>
    %18 = vector.shape_cast %17 : vector<1x256x32xf32> to vector<256x32xf32>
    %19 = arith.truncf %18 : vector<256x32xf32> to vector<256x32xbf16>
    %cst_18 = arith.constant dense<0.000000e+00> : vector<256x128xf32>
    %20 = tpu.matmul %19, %0, %cst_18 {dimension_numbers = #tpu.dot_dimension_numbers<[1], [0], [0], [1], [0, 0, 1, 1], [], []>} : vector<256x32xbf16>, vector<32x128xbf16>, vector<256x128xf32> -> vector<256x128xf32>
    %21 = vector.broadcast %1 : vector<1x128xf32> to vector<256x128xf32>
    %22 = arith.addf %20, %21 : vector<256x128xf32>
    %cst_19 = arith.constant 0.000000e+00 : f32
    %23 = vector.broadcast %cst_19 : f32 to vector<256x128xf32>
    %24 = arith.maximumf %22, %23 : vector<256x128xf32>
    %25 = arith.truncf %24 : vector<256x128xf32> to vector<256x128xbf16>
    %c320 = arith.constant 320 : index
    %c0_20 = arith.constant 0 : index
    %26 = vector.load %arg8[%c320, %c0_20] : memref<608x128xbf16, #tpu.memory_space<vmem>>, vector<256x128xbf16>
    tpu.vector_store %arg8[%c320, %c0_20], %25 {strides = array<i32>} : memref<608x128xbf16, #tpu.memory_space<vmem>>, vector<256x128xbf16>,
    %27 = tpu.iota {dimensions = array<i32: 0>} : vector<544x1xi32>
    %c16_i32 = arith.constant 16 : i32
    %c0_i32 = arith.constant 0 : i32
    %28 = arith.cmpi eq, %c16_i32, %c0_i32 : i32
    %c1_i32 = arith.constant 1 : i32
    %29 = arith.select %28, %c1_i32, %c16_i32 : i32
    %30 = vector.broadcast %29 : i32 to vector<544x1xi32>
    %31 = arith.remsi %27, %30 : vector<544x1xi32>
    %c0_i32_21 = arith.constant 0 : i32
    %32 = vector.broadcast %c0_i32_21 : i32 to vector<544x1xi32>
    %33 = arith.cmpi ne, %31, %32 : vector<544x1xi32>
    %c0_i32_22 = arith.constant 0 : i32
    %34 = vector.broadcast %c0_i32_22 : i32 to vector<544x1xi32>
    %35 = arith.cmpi slt, %31, %34 : vector<544x1xi32>
    %c0_i32_23 = arith.constant 0 : i32
    %36 = arith.cmpi slt, %29, %c0_i32_23 : i32
    %37 = vector.broadcast %36 : i1 to vector<544x1xi1>
    %38 = vector.broadcast %37 : vector<544x1xi1> to vector<544x1xi1>
    %39 = arith.xori %35, %38 : vector<544x1xi1>
    %40 = arith.andi %39, %33 : vector<544x1xi1>
    %41 = vector.broadcast %29 : i32 to vector<544x1xi32>
    %42 = arith.addi %31, %41 : vector<544x1xi32>
    %43 = arith.select %40, %42, %31 : vector<544x1xi1>, vector<544x1xi32>
    %c1_i32_24 = arith.constant 1 : i32
    %44 = vector.broadcast %c1_i32_24 : i32 to vector<544x1xi32>
    %45 = arith.cmpi sge, %43, %44 : vector<544x1xi32>
    %c14_i32 = arith.constant 14 : i32
    %46 = vector.broadcast %c14_i32 : i32 to vector<544x1xi32>
    %47 = arith.cmpi sle, %43, %46 : vector<544x1xi32>
    %cst_25 = arith.constant 0.000000e+00 : f32
    %48 = vector.broadcast %cst_25 : f32 to vector<544x128xf32>
    %c15 = arith.constant 15 : index
    %c0_26 = arith.constant 0 : index
    %49 = vector.load %arg8[%c15, %c0_26] : memref<608x128xbf16, #tpu.memory_space<vmem>>, vector<544x128xbf16>
    %cst_27 = arith.constant 0.000000e+00 : f32
    %50 = arith.truncf %cst_27 : f32 to bf16
    %51 = vector.shape_cast %45 : vector<544x1xi1> to vector<544x1xi1>
    %52 = vector.broadcast %51 : vector<544x1xi1> to vector<544x128xi1>
    %53 = vector.broadcast %50 : bf16 to vector<544x128xbf16>
    %54 = arith.select %52, %49, %53 : vector<544x128xi1>, vector<544x128xbf16>
    %c0_28 = arith.constant 0 : index
    %c0_29 = arith.constant 0 : index
    %c0_30 = arith.constant 0 : index
    %55 = vector.load %arg5[%c0_28, %c0_29, %c0_30] : memref<9x128x128xbf16, #tpu.memory_space<vmem>>, vector<1x128x128xbf16>
    %56 = vector.shape_cast %55 : vector<1x128x128xbf16> to vector<128x128xbf16>
    %cst_31 = arith.constant dense<0.000000e+00> : vector<544x128xf32>
    %57 = tpu.matmul %54, %56, %cst_31 {dimension_numbers = #tpu.dot_dimension_numbers<[1], [0], [0], [1], [0, 0, 1, 1], [], []>} : vector<544x128xbf16>, vector<128x128xbf16>, vector<544x128xf32> -> vector<544x128xf32>
    %58 = arith.addf %48, %57 : vector<544x128xf32>
    %c16 = arith.constant 16 : index
    %c0_32 = arith.constant 0 : index
    %59 = vector.load %arg8[%c16, %c0_32] : memref<608x128xbf16, #tpu.memory_space<vmem>>, vector<544x128xbf16>
    %c1 = arith.constant 1 : index
    %c0_33 = arith.constant 0 : index
    %c0_34 = arith.constant 0 : index
    %60 = vector.load %arg5[%c1, %c0_33, %c0_34] : memref<9x128x128xbf16, #tpu.memory_space<vmem>>, vector<1x128x128xbf16>
    %61 = vector.shape_cast %60 : vector<1x128x128xbf16> to vector<128x128xbf16>
    %cst_35 = arith.constant dense<0.000000e+00> : vector<544x128xf32>
    %62 = tpu.matmul %59, %61, %cst_35 {dimension_numbers = #tpu.dot_dimension_numbers<[1], [0], [0], [1], [0, 0, 1, 1], [], []>} : vector<544x128xbf16>, vector<128x128xbf16>, vector<544x128xf32> -> vector<544x128xf32>
    %63 = arith.addf %58, %62 : vector<544x128xf32>
    %c17 = arith.constant 17 : index
    %c0_36 = arith.constant 0 : index
    %64 = vector.load %arg8[%c17, %c0_36] : memref<608x128xbf16, #tpu.memory_space<vmem>>, vector<544x128xbf16>
    %cst_37 = arith.constant 0.000000e+00 : f32
    %65 = arith.truncf %cst_37 : f32 to bf16
    %66 = vector.shape_cast %47 : vector<544x1xi1> to vector<544x1xi1>
    %67 = vector.broadcast %66 : vector<544x1xi1> to vector<544x128xi1>
    %68 = vector.broadcast %65 : bf16 to vector<544x128xbf16>
    %69 = arith.select %67, %64, %68 : vector<544x128xi1>, vector<544x128xbf16>
    %c2 = arith.constant 2 : index
    %c0_38 = arith.constant 0 : index
    %c0_39 = arith.constant 0 : index
    %70 = vector.load %arg5[%c2, %c0_38, %c0_39] : memref<9x128x128xbf16, #tpu.memory_space<vmem>>, vector<1x128x128xbf16>
    %71 = vector.shape_cast %70 : vector<1x128x128xbf16> to vector<128x128xbf16>
    %cst_40 = arith.constant dense<0.000000e+00> : vector<544x128xf32>
    %72 = tpu.matmul %69, %71, %cst_40 {dimension_numbers = #tpu.dot_dimension_numbers<[1], [0], [0], [1], [0, 0, 1, 1], [], []>} : vector<544x128xbf16>, vector<128x128xbf16>, vector<544x128xf32> -> vector<544x128xf32>
    %73 = arith.addf %63, %72 : vector<544x128xf32>
    %c31 = arith.constant 31 : index
    %c0_41 = arith.constant 0 : index
    %74 = vector.load %arg8[%c31, %c0_41] : memref<608x128xbf16, #tpu.memory_space<vmem>>, vector<544x128xbf16>
    %cst_42 = arith.constant 0.000000e+00 : f32
    %75 = arith.truncf %cst_42 : f32 to bf16
    %76 = vector.shape_cast %45 : vector<544x1xi1> to vector<544x1xi1>
    %77 = vector.broadcast %76 : vector<544x1xi1> to vector<544x128xi1>
    %78 = vector.broadcast %75 : bf16 to vector<544x128xbf16>
    %79 = arith.select %77, %74, %78 : vector<544x128xi1>, vector<544x128xbf16>
    %c3 = arith.constant 3 : index
    %c0_43 = arith.constant 0 : index
    %c0_44 = arith.constant 0 : index
    %80 = vector.load %arg5[%c3, %c0_43, %c0_44] : memref<9x128x128xbf16, #tpu.memory_space<vmem>>, vector<1x128x128xbf16>
    %81 = vector.shape_cast %80 : vector<1x128x128xbf16> to vector<128x128xbf16>
    %cst_45 = arith.constant dense<0.000000e+00> : vector<544x128xf32>
    %82 = tpu.matmul %79, %81, %cst_45 {dimension_numbers = #tpu.dot_dimension_numbers<[1], [0], [0], [1], [0, 0, 1, 1], [], []>} : vector<544x128xbf16>, vector<128x128xbf16>, vector<544x128xf32> -> vector<544x128xf32>
    %83 = arith.addf %73, %82 : vector<544x128xf32>
    %c32_46 = arith.constant 32 : index
    %c0_47 = arith.constant 0 : index
    %84 = vector.load %arg8[%c32_46, %c0_47] : memref<608x128xbf16, #tpu.memory_space<vmem>>, vector<544x128xbf16>
    %c4 = arith.constant 4 : index
    %c0_48 = arith.constant 0 : index
    %c0_49 = arith.constant 0 : index
    %85 = vector.load %arg5[%c4, %c0_48, %c0_49] : memref<9x128x128xbf16, #tpu.memory_space<vmem>>, vector<1x128x128xbf16>
    %86 = vector.shape_cast %85 : vector<1x128x128xbf16> to vector<128x128xbf16>
    %cst_50 = arith.constant dense<0.000000e+00> : vector<544x128xf32>
    %87 = tpu.matmul %84, %86, %cst_50 {dimension_numbers = #tpu.dot_dimension_numbers<[1], [0], [0], [1], [0, 0, 1, 1], [], []>} : vector<544x128xbf16>, vector<128x128xbf16>, vector<544x128xf32> -> vector<544x128xf32>
    %88 = arith.addf %83, %87 : vector<544x128xf32>
    %c33 = arith.constant 33 : index
    %c0_51 = arith.constant 0 : index
    %89 = vector.load %arg8[%c33, %c0_51] : memref<608x128xbf16, #tpu.memory_space<vmem>>, vector<544x128xbf16>
    %cst_52 = arith.constant 0.000000e+00 : f32
    %90 = arith.truncf %cst_52 : f32 to bf16
    %91 = vector.shape_cast %47 : vector<544x1xi1> to vector<544x1xi1>
    %92 = vector.broadcast %91 : vector<544x1xi1> to vector<544x128xi1>
    %93 = vector.broadcast %90 : bf16 to vector<544x128xbf16>
    %94 = arith.select %92, %89, %93 : vector<544x128xi1>, vector<544x128xbf16>
    %c5 = arith.constant 5 : index
    %c0_53 = arith.constant 0 : index
    %c0_54 = arith.constant 0 : index
    %95 = vector.load %arg5[%c5, %c0_53, %c0_54] : memref<9x128x128xbf16, #tpu.memory_space<vmem>>, vector<1x128x128xbf16>
    %96 = vector.shape_cast %95 : vector<1x128x128xbf16> to vector<128x128xbf16>
    %cst_55 = arith.constant dense<0.000000e+00> : vector<544x128xf32>
    %97 = tpu.matmul %94, %96, %cst_55 {dimension_numbers = #tpu.dot_dimension_numbers<[1], [0], [0], [1], [0, 0, 1, 1], [], []>} : vector<544x128xbf16>, vector<128x128xbf16>, vector<544x128xf32> -> vector<544x128xf32>
    %98 = arith.addf %88, %97 : vector<544x128xf32>
    %c47 = arith.constant 47 : index
    %c0_56 = arith.constant 0 : index
    %99 = vector.load %arg8[%c47, %c0_56] : memref<608x128xbf16, #tpu.memory_space<vmem>>, vector<544x128xbf16>
    %cst_57 = arith.constant 0.000000e+00 : f32
    %100 = arith.truncf %cst_57 : f32 to bf16
    %101 = vector.shape_cast %45 : vector<544x1xi1> to vector<544x1xi1>
    %102 = vector.broadcast %101 : vector<544x1xi1> to vector<544x128xi1>
    %103 = vector.broadcast %100 : bf16 to vector<544x128xbf16>
    %104 = arith.select %102, %99, %103 : vector<544x128xi1>, vector<544x128xbf16>
    %c6 = arith.constant 6 : index
    %c0_58 = arith.constant 0 : index
    %c0_59 = arith.constant 0 : index
    %105 = vector.load %arg5[%c6, %c0_58, %c0_59] : memref<9x128x128xbf16, #tpu.memory_space<vmem>>, vector<1x128x128xbf16>
    %106 = vector.shape_cast %105 : vector<1x128x128xbf16> to vector<128x128xbf16>
    %cst_60 = arith.constant dense<0.000000e+00> : vector<544x128xf32>
    %107 = tpu.matmul %104, %106, %cst_60 {dimension_numbers = #tpu.dot_dimension_numbers<[1], [0], [0], [1], [0, 0, 1, 1], [], []>} : vector<544x128xbf16>, vector<128x128xbf16>, vector<544x128xf32> -> vector<544x128xf32>
    %108 = arith.addf %98, %107 : vector<544x128xf32>
    %c48 = arith.constant 48 : index
    %c0_61 = arith.constant 0 : index
    %109 = vector.load %arg8[%c48, %c0_61] : memref<608x128xbf16, #tpu.memory_space<vmem>>, vector<544x128xbf16>
    %c7 = arith.constant 7 : index
    %c0_62 = arith.constant 0 : index
    %c0_63 = arith.constant 0 : index
    %110 = vector.load %arg5[%c7, %c0_62, %c0_63] : memref<9x128x128xbf16, #tpu.memory_space<vmem>>, vector<1x128x128xbf16>
    %111 = vector.shape_cast %110 : vector<1x128x128xbf16> to vector<128x128xbf16>
    %cst_64 = arith.constant dense<0.000000e+00> : vector<544x128xf32>
    %112 = tpu.matmul %109, %111, %cst_64 {dimension_numbers = #tpu.dot_dimension_numbers<[1], [0], [0], [1], [0, 0, 1, 1], [], []>} : vector<544x128xbf16>, vector<128x128xbf16>, vector<544x128xf32> -> vector<544x128xf32>
    %113 = arith.addf %108, %112 : vector<544x128xf32>
    %c49 = arith.constant 49 : index
    %c0_65 = arith.constant 0 : index
    %114 = vector.load %arg8[%c49, %c0_65] : memref<608x128xbf16, #tpu.memory_space<vmem>>, vector<544x128xbf16>
    %cst_66 = arith.constant 0.000000e+00 : f32
    %115 = arith.truncf %cst_66 : f32 to bf16
    %116 = vector.shape_cast %47 : vector<544x1xi1> to vector<544x1xi1>
    %117 = vector.broadcast %116 : vector<544x1xi1> to vector<544x128xi1>
    %118 = vector.broadcast %115 : bf16 to vector<544x128xbf16>
    %119 = arith.select %117, %114, %118 : vector<544x128xi1>, vector<544x128xbf16>
    %c8 = arith.constant 8 : index
    %c0_67 = arith.constant 0 : index
    %c0_68 = arith.constant 0 : index
    %120 = vector.load %arg5[%c8, %c0_67, %c0_68] : memref<9x128x128xbf16, #tpu.memory_space<vmem>>, vector<1x128x128xbf16>
    %121 = vector.shape_cast %120 : vector<1x128x128xbf16> to vector<128x128xbf16>
    %cst_69 = arith.constant dense<0.000000e+00> : vector<544x128xf32>
    %122 = tpu.matmul %119, %121, %cst_69 {dimension_numbers = #tpu.dot_dimension_numbers<[1], [0], [0], [1], [0, 0, 1, 1], [], []>} : vector<544x128xbf16>, vector<128x128xbf16>, vector<544x128xf32> -> vector<544x128xf32>
    %123 = arith.addf %113, %122 : vector<544x128xf32>
    %124 = vector.broadcast %2 : vector<1x128xf32> to vector<544x128xf32>
    %125 = arith.addf %123, %124 : vector<544x128xf32>
    %cst_70 = arith.constant 0.000000e+00 : f32
    %126 = vector.broadcast %cst_70 : f32 to vector<544x128xf32>
    %127 = arith.maximumf %125, %126 : vector<544x128xf32>
    %128 = vector.extract_strided_slice %127 {offsets = [0, 0], sizes = [256, 128], strides = [1, 1]} : vector<544x128xf32> to vector<256x128xf32>
    %129 = vector.extract_strided_slice %127 {offsets = [288, 0], sizes = [256, 128], strides = [1, 1]} : vector<544x128xf32> to vector<256x128xf32>
    %130 = arith.subf %128, %129 : vector<256x128xf32>
    %131 = arith.mulf %130, %130 : vector<256x128xf32>
    %132 = vector.shape_cast %131 : vector<256x128xf32> to vector<1x256x128xf32>
    %cst_71 = arith.constant dense<0.000000e+00> : vector<1xf32>
    %133 = vector.multi_reduction <add>, %132, %cst_71 [1, 2] : vector<1x256x128xf32> to vector<1xf32>
    %134 = vector.shape_cast %133 : vector<1xf32> to vector<1x1x1xf32>
    %135 = vector.extract %134[0, 0, 0] : f32 from vector<1x1x1xf32>
    %136 = vector.broadcast %135 : f32 to vector<1x8x128xf32>
    %c0_72 = arith.constant 0 : index
    %c0_73 = arith.constant 0 : index
    %c0_74 = arith.constant 0 : index
    %137 = vector.load %arg7[%c0_72, %c0_73, %c0_74] : memref<1x8x128xf32, #tpu.memory_space<vmem>>, vector<1x8x128xf32>
    tpu.vector_store %arg7[%c0_72, %c0_73, %c0_74], %136 {strides = array<i32>} : memref<1x8x128xf32, #tpu.memory_space<vmem>>, vector<1x8x128xf32>,
    return
  }
  func.func @transform_0(%arg0: i32) -> (i32, i32, i32) {
    %c0_i32 = arith.constant 0 : i32
    %c0_i32_0 = arith.constant 0 : i32
    %c0_i32_1 = arith.constant 0 : i32
    return %arg0, %c0_i32, %c0_i32_0 : i32, i32, i32
  }
  func.func @transform_1(%arg0: i32) -> (i32, i32, i32) {
    %c0_i32 = arith.constant 0 : i32
    %c0_i32_0 = arith.constant 0 : i32
    %c0_i32_1 = arith.constant 0 : i32
    return %arg0, %c0_i32, %c0_i32_0 : i32, i32, i32
  }
  func.func @transform_2(%arg0: i32) -> (i32, i32) {
    %c0_i32 = arith.constant 0 : i32
    %c0_i32_0 = arith.constant 0 : i32
    %c0_i32_1 = arith.constant 0 : i32
    return %c0_i32, %c0_i32_0 : i32, i32
  }
  func.func @transform_3(%arg0: i32) -> (i32, i32) {
    %c0_i32 = arith.constant 0 : i32
    %c0_i32_0 = arith.constant 0 : i32
    %c0_i32_1 = arith.constant 0 : i32
    return %c0_i32, %c0_i32_0 : i32, i32
  }
  func.func @transform_4(%arg0: i32) -> (i32, i32, i32) {
    %c0_i32 = arith.constant 0 : i32
    %c0_i32_0 = arith.constant 0 : i32
    %c0_i32_1 = arith.constant 0 : i32
    %c0_i32_2 = arith.constant 0 : i32
    return %c0_i32, %c0_i32_0, %c0_i32_1 : i32, i32, i32
  }
  func.func @transform_5(%arg0: i32) -> (i32, i32) {
    %c0_i32 = arith.constant 0 : i32
    %c0_i32_0 = arith.constant 0 : i32
    %c0_i32_1 = arith.constant 0 : i32
    return %c0_i32, %c0_i32_0 : i32, i32
  }
  func.func @transform_6(%arg0: i32) -> (i32, i32, i32) {
    %c0_i32 = arith.constant 0 : i32
    %c0_i32_0 = arith.constant 0 : i32
    %c0_i32_1 = arith.constant 0 : i32
    return %arg0, %c0_i32, %c0_i32_0 : i32, i32, i32
  }
}

module attributes {stable_mosaic.version = 11 : i64} {
  func.func @kernel(%arg0: i32, %arg1: memref<8x256xf32, #tpu.memory_space<vmem>>, %arg2: memref<8x256xf32, #tpu.memory_space<vmem>>, %arg3: memref<1x8x128xf32, #tpu.memory_space<vmem>>) attributes {dimension_semantics = [#tpu.dimension_semantics<parallel>], iteration_bounds = array<i64: 1>, scalar_prefetch = 0 : i64, scratch_operands = 0 : i64, tpu.core_type = #tpu.core_type<tc>, window_params = [{transform_indices = @transform_0, window_bounds = array<i64: 8, 256>}, {transform_indices = @transform_1, window_bounds = array<i64: 8, 256>}, {transform_indices = @transform_2, window_bounds = array<i64: 1, 8, 128>}]} {
    %c0 = arith.constant 0 : index
    %c0_0 = arith.constant 0 : index
    %0 = vector.load %arg1[%c0, %c0_0] : memref<8x256xf32, #tpu.memory_space<vmem>>, vector<8x256xf32>
    %c0_1 = arith.constant 0 : index
    %c0_2 = arith.constant 0 : index
    %1 = vector.load %arg2[%c0_1, %c0_2] : memref<8x256xf32, #tpu.memory_space<vmem>>, vector<8x256xf32>
    %2 = arith.subf %0, %1 : vector<8x256xf32>
    %3 = arith.mulf %2, %2 : vector<8x256xf32>
    %4 = vector.shape_cast %3 : vector<8x256xf32> to vector<1x8x256xf32>
    %cst = arith.constant dense<0.000000e+00> : vector<1xf32>
    %5 = vector.multi_reduction <add>, %4, %cst [1, 2] : vector<1x8x256xf32> to vector<1xf32>
    %6 = vector.shape_cast %5 : vector<1xf32> to vector<1x1x1xf32>
    %7 = vector.extract %6[0, 0, 0] : f32 from vector<1x1x1xf32>
    %8 = vector.extract_strided_slice %0 {offsets = [0, 16], sizes = [8, 240], strides = [1, 1]} : vector<8x256xf32> to vector<8x240xf32>
    %9 = vector.extract_strided_slice %0 {offsets = [0, 0], sizes = [8, 240], strides = [1, 1]} : vector<8x256xf32> to vector<8x240xf32>
    %10 = arith.subf %8, %9 : vector<8x240xf32>
    %11 = arith.mulf %10, %10 : vector<8x240xf32>
    %12 = vector.shape_cast %11 : vector<8x240xf32> to vector<1x8x240xf32>
    %cst_3 = arith.constant dense<0.000000e+00> : vector<1xf32>
    %13 = vector.multi_reduction <add>, %12, %cst_3 [1, 2] : vector<1x8x240xf32> to vector<1xf32>
    %14 = vector.shape_cast %13 : vector<1xf32> to vector<1x1x1xf32>
    %15 = vector.extract %14[0, 0, 0] : f32 from vector<1x1x1xf32>
    %16 = vector.extract_strided_slice %0 {offsets = [0, 1], sizes = [8, 255], strides = [1, 1]} : vector<8x256xf32> to vector<8x255xf32>
    %17 = vector.extract_strided_slice %0 {offsets = [0, 0], sizes = [8, 255], strides = [1, 1]} : vector<8x256xf32> to vector<8x255xf32>
    %18 = arith.subf %16, %17 : vector<8x255xf32>
    %19 = tpu.iota {dimensions = array<i32: 1>} : vector<1x255xi32>
    %c16_i32 = arith.constant 16 : i32
    %c0_i32 = arith.constant 0 : i32
    %20 = arith.cmpi eq, %c16_i32, %c0_i32 : i32
    %c1_i32 = arith.constant 1 : i32
    %21 = arith.select %20, %c1_i32, %c16_i32 : i32
    %22 = vector.broadcast %21 : i32 to vector<1x255xi32>
    %23 = arith.remsi %19, %22 : vector<1x255xi32>
    %c0_i32_4 = arith.constant 0 : i32
    %24 = vector.broadcast %c0_i32_4 : i32 to vector<1x255xi32>
    %25 = arith.cmpi ne, %23, %24 : vector<1x255xi32>
    %c0_i32_5 = arith.constant 0 : i32
    %26 = vector.broadcast %c0_i32_5 : i32 to vector<1x255xi32>
    %27 = arith.cmpi slt, %23, %26 : vector<1x255xi32>
    %c0_i32_6 = arith.constant 0 : i32
    %28 = arith.cmpi slt, %21, %c0_i32_6 : i32
    %29 = vector.broadcast %28 : i1 to vector<1x255xi1>
    %30 = vector.broadcast %29 : vector<1x255xi1> to vector<1x255xi1>
    %31 = arith.xori %27, %30 : vector<1x255xi1>
    %32 = arith.andi %31, %25 : vector<1x255xi1>
    %33 = vector.broadcast %21 : i32 to vector<1x255xi32>
    %34 = arith.addi %23, %33 : vector<1x255xi32>
    %35 = arith.select %32, %34, %23 : vector<1x255xi1>, vector<1x255xi32>
    %c15_i32 = arith.constant 15 : i32
    %36 = vector.broadcast %c15_i32 : i32 to vector<1x255xi32>
    %37 = arith.cmpi ne, %35, %36 : vector<1x255xi32>
    %38 = arith.mulf %18, %18 : vector<8x255xf32>
    %cst_7 = arith.constant 0.000000e+00 : f32
    %39 = vector.shape_cast %37 : vector<1x255xi1> to vector<1x255xi1>
    %40 = vector.broadcast %39 : vector<1x255xi1> to vector<8x255xi1>
    %41 = vector.broadcast %cst_7 : f32 to vector<8x255xf32>
    %42 = arith.select %40, %38, %41 : vector<8x255xi1>, vector<8x255xf32>
    %43 = vector.shape_cast %42 : vector<8x255xf32> to vector<1x8x255xf32>
    %cst_8 = arith.constant dense<0.000000e+00> : vector<1xf32>
    %44 = vector.multi_reduction <add>, %43, %cst_8 [1, 2] : vector<1x8x255xf32> to vector<1xf32>
    %45 = vector.shape_cast %44 : vector<1xf32> to vector<1x1x1xf32>
    %46 = vector.extract %45[0, 0, 0] : f32 from vector<1x1x1xf32>
    %47 = tpu.iota {dimensions = array<i32: 0>} : vector<8x128xi32>
    %c0_i32_9 = arith.constant 0 : i32
    %48 = vector.broadcast %c0_i32_9 : i32 to vector<8x128xi32>
    %49 = arith.cmpi eq, %47, %48 : vector<8x128xi32>
    %c1_i32_10 = arith.constant 1 : i32
    %50 = vector.broadcast %c1_i32_10 : i32 to vector<8x128xi32>
    %51 = arith.cmpi eq, %47, %50 : vector<8x128xi32>
    %c2_i32 = arith.constant 2 : i32
    %52 = vector.broadcast %c2_i32 : i32 to vector<8x128xi32>
    %53 = arith.cmpi eq, %47, %52 : vector<8x128xi32>
    %cst_11 = arith.constant 0.000000e+00 : f32
    %54 = vector.broadcast %46 : f32 to vector<8x128xf32>
    %55 = vector.broadcast %cst_11 : f32 to vector<8x128xf32>
    %56 = arith.select %53, %54, %55 : vector<8x128xi1>, vector<8x128xf32>
    %57 = vector.broadcast %15 : f32 to vector<8x128xf32>
    %58 = arith.select %51, %57, %56 : vector<8x128xi1>, vector<8x128xf32>
    %59 = vector.broadcast %7 : f32 to vector<8x128xf32>
    %60 = arith.select %49, %59, %58 : vector<8x128xi1>, vector<8x128xf32>
    %61 = vector.shape_cast %60 : vector<8x128xf32> to vector<1x8x128xf32>
    %c0_12 = arith.constant 0 : index
    %c0_13 = arith.constant 0 : index
    %c0_14 = arith.constant 0 : index
    %62 = vector.load %arg3[%c0_12, %c0_13, %c0_14] : memref<1x8x128xf32, #tpu.memory_space<vmem>>, vector<1x8x128xf32>
    tpu.vector_store %arg3[%c0_12, %c0_13, %c0_14], %61 {strides = array<i32>} : memref<1x8x128xf32, #tpu.memory_space<vmem>>, vector<1x8x128xf32>,
    return
  }
  func.func @transform_0(%arg0: i32) -> (i32, i32) {
    %c0_i32 = arith.constant 0 : i32
    %c0_i32_0 = arith.constant 0 : i32
    return %arg0, %c0_i32 : i32, i32
  }
  func.func @transform_1(%arg0: i32) -> (i32, i32) {
    %c0_i32 = arith.constant 0 : i32
    %c0_i32_0 = arith.constant 0 : i32
    return %arg0, %c0_i32 : i32, i32
  }
  func.func @transform_2(%arg0: i32) -> (i32, i32, i32) {
    %c0_i32 = arith.constant 0 : i32
    %c0_i32_0 = arith.constant 0 : i32
    %c0_i32_1 = arith.constant 0 : i32
    return %arg0, %c0_i32, %c0_i32_0 : i32, i32, i32
  }
}

</mosaic_0001>

<llo_original>
// kernel: generator_loss.2
$region0: #{generator_loss.2}
  #allocation0 [shape = 'u32[]', space=smem, size = 0x4, offset = 0x4, fixed_abs, tag = 'smem constant byte address 0x4 - core index']
  #allocation1 [shape = 'u32[144,128]{1,0:T(1,128)}', space=vmem, size = 0x12000, scoped, tag = 'internal scratch']
  %s0 = inlined_call_operand.vmem [shape: f32[8,256], index: 0, kind: input, shape index: {}]
  %s1 = inlined_call_operand.vmem [shape: f32[8,256], index: 1, kind: input, shape index: {}]
  %s2 = inlined_call_operand.vmem [shape: f32[1,8,128], index: 2, kind: output, shape index: {}]
  %s3 = sld [smem:[#allocation0]]
  $region18: #{generator_loss.2} parent=0
    _
  %s5 = ssub.s32 1, %s3
  %s6 = scalar_select 0, %s5, %s3
  // Predicated region
  $region2: #{generator_loss.2} parent=0 // pred_check
    _
  $region3: #{generator_loss.2} parent=0 // pred_check_branch
    %8 = sbr.rel (0) target = $region5
  $region4: #{generator_loss.2} parent=0 // pred_region
    _
  $region5: #{generator_loss.2} parent=0 // pred_fallthru
    _
  // Predicated region
  $region6: #{generator_loss.2} parent=0 // pred_check
    _
  $region7: #{generator_loss.2} parent=0 // pred_check_branch
    %10 = sbr.rel (0) target = $region9
  $region8: #{generator_loss.2} parent=0 // pred_region
    _
  $region9: #{generator_loss.2} parent=0 // pred_fallthru
    _
  %v11 = vld [vmem:[%s0] sm:$0xff]
  %v12 = vld [vmem:[%s0 + $0x8] sm:$0xff]
  %v13 = vld [vmem:[%s1] sm:$0xff]
  %v14 = vld [vmem:[%s1 + $0x8] sm:$0xff]
  %v15 = vsub.f32 %v11, %v13
  %v16 = vsub.f32 %v12, %v14
  %v17 = vmul.f32 %v15, %v15
  %v18 = vmul.f32 %v16, %v16
  %v19 = vadd.f32 %v17, %v18
  %20 = vadd.xlane.f32.xlu0 %v19
  %v21 = vpop.xlane.xlu0 %20
  %v22 = vrot.slane %v21, 4
  %v23 = vadd.f32 %v21, %v22
  %v24 = vrot.slane %v23, 2
  %v25 = vadd.f32 %v23, %v24
  %v26 = vrot.slane %v25, 1
  %v27 = vadd.f32 %v25, %v26
  %s28 = vtos %v27
  %31 = vrot.lane.b32.xlu0 %v11, 16
  %v32 = vpop.permute.xlu0 %31
  %33 = vrot.lane.b32.xlu0 %v12, 16
  %v34 = vpop.permute.xlu0 %33
  %vm35 = vcmask 130048
  %v36 = vsel %vm35, %v32, %v34
  %v39 = vsub.f32 %v11, %v32
  %v40 = vsub.f32 %v12, %v36
  %v41 = vmul.f32 %v39, %v39
  %v42 = vmul.f32 %v40, %v40
  %45 = vrot.lane.b32.xlu0 %v41, 112
  %v46 = vpop.permute.xlu0 %45
  %47 = vrot.lane.b32.xlu0 %v42, 112
  %v48 = vpop.permute.xlu0 %47
  %vm49 = vcmask 916480
  %v50 = vsel %vm49, %v46, %v48
  %v53 = vsel %vm49, %v48, 0.0
  %v54 = vadd.f32 %v50, %v53
  %55 = vadd.xlane.f32.xlu0 %v54
  %v56 = vpop.xlane.xlu0 %55
  %v57 = vrot.slane %v56, 4
  %v58 = vadd.f32 %v56, %v57
  %v59 = vrot.slane %v58, 2
  %v60 = vadd.f32 %v58, %v59
  %v61 = vrot.slane %v60, 1
  %v62 = vadd.f32 %v60, %v61
  %s63 = vtos %v62
  %64 = vrot.lane.b32.xlu0 %v11, 1
  %v65 = vpop.permute.xlu0 %64
  %66 = vrot.lane.b32.xlu0 %v12, 1
  %v67 = vpop.permute.xlu0 %66
  %vm68 = vcmask 7168
  %v69 = vsel %vm68, %v65, %v67
  %v72 = vsub.f32 %v11, %v65
  %v73 = vsub.f32 %v12, %v69
  %v74 = vlaneseq
  %v75 = vand.u32 %v74, 127
  %v76 = vadd.s32 %v75, 128
  %vm77 = vcmp.lt.s32.totalorder %v75, 0
  %v78 = vsub.s32 0, %v75
  %v79 = vsel %vm77, %v78, %v75
  %v80 = vshrl.u32 %v79, 4
  %v81 = vand.u32 %v79, 15
  %v82 = vsub.s32 0, %v81
  %v83 = vsel %vm77, %v82, %v81
  %vm84 = vcmp.lt.s32.totalorder %v76, 0
  %v85 = vsub.s32 0, %v76
  %v86 = vsel %vm84, %v85, %v76
  %v87 = vshrl.u32 %v86, 4
  %v88 = vand.u32 %v86, 15
  %v89 = vsub.s32 0, %v88
  %v90 = vsel %vm84, %v89, %v88
  %vm91 = vcmp.ne.s32.totalorder %v83, 0
  %vm92 = vcmp.ne.s32.totalorder %v90, 0
  %vm93 = vcmp.lt.s32.totalorder %v83, 0
  %vm94 = vcmp.lt.s32.totalorder %v90, 0
  %vm95 = vmand %vm93, %vm91
  %vm96 = vmand %vm94, %vm92
  %v97 = vadd.s32 %v83, 16
  %v98 = vadd.s32 %v90, 16
  %v99 = vsel %vm95, %v97, %v83
  %v100 = vsel %vm96, %v98, %v90
  %vm101 = vcmp.ne.s32.totalorder %v99, 15
  %vm102 = vcmp.ne.s32.totalorder %v100, 15
  %v103 = vmul.f32 %v72, %v72
  %v104 = vmul.f32 %v73, %v73
  %v105 = vsel %vm101, 1, 0
  %v106 = vsel %vm102, 1, 0
  %vm107 = vcmp.eq.s32.totalorder %v105, 1
  %vm108 = vcmp.eq.s32.totalorder %v106, 1
  %111 = vrot.lane.b32.xlu0 %v103, 127
  %v112 = vpop.permute.xlu0 %111
  %113 = vrot.lane.b32.xlu0 %v104, 127
  %v114 = vpop.permute.xlu0 %113
  %vm115 = vcmask 1039360
  %v116 = vsel %vm115, %v112, %v114
  %v119 = vsel %vm107, %v116, 0.0
  %v120 = vsel %vm108, %v114, 0.0
  %v121 = vsel %vm115, %v120, 0.0
  %v122 = vadd.f32 %v119, %v121
  %123 = vadd.xlane.f32.xlu0 %v122
  %v124 = vpop.xlane.xlu0 %123
  %v125 = vrot.slane %v124, 4
  %v126 = vadd.f32 %v124, %v125
  %v127 = vrot.slane %v126, 2
  %v128 = vadd.f32 %v126, %v127
  %v129 = vrot.slane %v128, 1
  %v130 = vadd.f32 %v128, %v129
  %s131 = vtos %v130
  %v132 = vlaneseq
  %v133 = vshrl.u32 %v132, 7
  %vm134 = vcmp.eq.s32.totalorder %v133, 0
  %vm135 = vcmp.eq.s32.totalorder %v133, 1
  %vm136 = vcmp.eq.s32.totalorder %v133, 2
  %v137 = vstv %s131
  %v138 = vsel %vm136, %v137, 0.0
  %v139 = vstv %s63
  %v140 = vsel %vm135, %v139, %v138
  %v141 = vstv %s28
  %v142 = vsel %vm134, %v141, %v140
  %143 = vst [vmem:[%s2] sm:$0xff] %v142
  // Predicated region
  $region10: #{generator_loss.2} parent=0 // pred_check
    _
  $region11: #{generator_loss.2} parent=0 // pred_check_branch
    %145 = sbr.rel (0) target = $region13
  $region12: #{generator_loss.2} parent=0 // pred_region
    _
  $region13: #{generator_loss.2} parent=0 // pred_fallthru
    _
  // Predicated region
  $region14: #{generator_loss.2} parent=0 // pred_check
    _
  $region15: #{generator_loss.2} parent=0 // pred_check_branch
    %147 = sbr.rel (0) target = $region17
  $region16: #{generator_loss.2} parent=0 // pred_region
    _
  $region17: #{generator_loss.2} parent=0 // pred_fallthru
    _

// kernel: generator_loss.3
$region0: #{generator_loss.3}
  #allocation0 [shape = 'u32[]', space=smem, size = 0x4, offset = 0x4, fixed_abs, tag = 'smem constant byte address 0x4 - core index']
  #allocation1 [shape = 'u32[144,128]{1,0:T(1,128)}', space=vmem, size = 0x12000, scoped, tag = 'internal scratch']
  #allocation2 [shape = 'bf16[608,128]{1,0:T(16,128)(2,1)}', space=vmem, size = 0x26000, scoped, tag = 'scratch operand']
  %s0 = inlined_call_operand.vmem [shape: f32[2,256,32], index: 0, kind: input, shape index: {}]
  %s1 = inlined_call_operand.vmem [shape: f32[2,256,32], index: 1, kind: input, shape index: {}]
  %s2 = inlined_call_operand.vmem [shape: bf16[32,128], index: 2, kind: input, shape index: {}]
  %s3 = inlined_call_operand.vmem [shape: f32[1,128], index: 3, kind: input, shape index: {}]
  %s4 = inlined_call_operand.vmem [shape: bf16[9,128,128], index: 4, kind: input, shape index: {}]
  %s5 = inlined_call_operand.vmem [shape: f32[1,128], index: 5, kind: input, shape index: {}]
  %s6 = inlined_call_operand.vmem [shape: f32[2,8,128], index: 6, kind: output, shape index: {}]
  %s7 = sld [smem:[#allocation0]]
  $region57: #{generator_loss.3} parent=0
    _
  %s9 = ssub.s32 1, %s7
  %s10 = scalar_select 0, %s9, %s7
  loop: start=0, step=1, limit=4
  $region2: #{generator_loss.3} parent=0 // loop_pre_header
    _
  $region3: #{generator_loss.3} parent=0 // loop_header
    %s12 = sphi 0, %s16
    %p13 = scmp.ge.s32.totalorder %s12, 4
    %s22 = sphi 0, %s24
    %s25 = sphi 0, %s22
    %s26 = sphi 0, %s25
    %s42 = sphi 0, %s26
    %s48 = sphi 0, %s50
    %s51 = sphi 0, %s48
    %s52 = sphi 0, %s51
    %s68 = sphi 0, %s52
    %s72 = sphi 0, %s72
    %s74 = sphi 0, %s72
    %s75 = sphi 0, %s74
    %s89 = sphi 0, %s75
    %s93 = sphi 0, %s93
    %s95 = sphi 0, %s93
    %s96 = sphi 0, %s95
    %s110 = sphi 0, %s96
    %s114 = sphi 0, %s114
    %s116 = sphi 0, %s114
    %s117 = sphi 0, %s116
    %s131 = sphi 0, %s117
    %s135 = sphi 0, %s135
    %s137 = sphi 0, %s135
    %s138 = sphi 0, %s137
    %s152 = sphi 0, %s138
    %s158 = sphi 0, %s160
    %s161 = sphi 0, %s158
    %s162 = sphi 0, %s161
    %s178 = sphi 0, %s162
  $region4: #{generator_loss.3} parent=0 // loop_header_branch
    %15 = sbr.rel (%p13) target = $region8
  $region5: #{generator_loss.3} parent=0 // loop_body
    %s17 = ssub.s32 %s12, 1
    %s18 = ssub.s32 %s12, 2
    %s19 = sadd.s32 %s12, 1
    %s20 = ssub.s32 %s12, %s19
    %p21 = scmp.eq.s32.totalorder %s20, 0
    %s23 = sadd.s32 %s22, 1
    %s24 = scalar_select %p21, %s22, %s23
    %p27 = pneg %p21
    %p28 = scmp.eq.s32.totalorder %s12, 1
    %p29 = por %p27, %p28
    %p30 = scmp.ne.s32.totalorder %s22, %s25
    %p31 = scmp.eq.s32.totalorder %s12, 0
    %p32 = por %p30, %p31
    %p33 = scmp.ne.s32.totalorder %s22, %s25
    %p34 = scmp.eq.s32.totalorder %s17, 1
    %p35 = por %p33, %p34
    %p36 = scmp.ne.s32.totalorder %s25, %s26
    %p37 = scmp.eq.s32.totalorder %s17, 0
    %p38 = por %p36, %p37
    %p39 = scmp.ne.s32.totalorder %s25, %s26
    %p40 = scmp.eq.s32.totalorder %s18, 1
    %p41 = por %p39, %p40
    %p43 = scmp.ne.s32.totalorder %s26, %s42
    %p44 = scmp.eq.s32.totalorder %s18, 0
    %p45 = por %p43, %p44
    %s46 = ssub.s32 %s12, %s19
    %p47 = scmp.eq.s32.totalorder %s46, 0
    %s49 = sadd.s32 %s48, 1
    %s50 = scalar_select %p47, %s48, %s49
    %p53 = pneg %p47
    %p54 = scmp.eq.s32.totalorder %s12, 1
    %p55 = por %p53, %p54
    %p56 = scmp.ne.s32.totalorder %s48, %s51
    %p57 = scmp.eq.s32.totalorder %s12, 0
    %p58 = por %p56, %p57
    %p59 = scmp.ne.s32.totalorder %s48, %s51
    %p60 = scmp.eq.s32.totalorder %s17, 1
    %p61 = por %p59, %p60
    %p62 = scmp.ne.s32.totalorder %s51, %s52
    %p63 = scmp.eq.s32.totalorder %s17, 0
    %p64 = por %p62, %p63
    %p65 = scmp.ne.s32.totalorder %s51, %s52
    %p66 = scmp.eq.s32.totalorder %s18, 1
    %p67 = por %p65, %p66
    %p69 = scmp.ne.s32.totalorder %s52, %s68
    %p70 = scmp.eq.s32.totalorder %s18, 0
    %p71 = por %p69, %p70
    %s73 = sadd.s32 %s72, 1
    %p76 = scmp.eq.s32.totalorder %s12, 1
    %p77 = scmp.ne.s32.totalorder %s72, %s74
    %p78 = scmp.eq.s32.totalorder %s12, 0
    %p79 = por %p77, %p78
    %p80 = scmp.ne.s32.totalorder %s72, %s74
    %p81 = scmp.eq.s32.totalorder %s17, 1
    %p82 = por %p80, %p81
    %p83 = scmp.ne.s32.totalorder %s74, %s75
    %p84 = scmp.eq.s32.totalorder %s17, 0
    %p85 = por %p83, %p84
    %p86 = scmp.ne.s32.totalorder %s74, %s75
    %p87 = scmp.eq.s32.totalorder %s18, 1
    %p88 = por %p86, %p87
    %p90 = scmp.ne.s32.totalorder %s75, %s89
    %p91 = scmp.eq.s32.totalorder %s18, 0
    %p92 = por %p90, %p91
    %s94 = sadd.s32 %s93, 1
    %p97 = scmp.eq.s32.totalorder %s12, 1
    %p98 = scmp.ne.s32.totalorder %s93, %s95
    %p99 = scmp.eq.s32.totalorder %s12, 0
    %p100 = por %p98, %p99
    %p101 = scmp.ne.s32.totalorder %s93, %s95
    %p102 = scmp.eq.s32.totalorder %s17, 1
    %p103 = por %p101, %p102
    %p104 = scmp.ne.s32.totalorder %s95, %s96
    %p105 = scmp.eq.s32.totalorder %s17, 0
    %p106 = por %p104, %p105
    %p107 = scmp.ne.s32.totalorder %s95, %s96
    %p108 = scmp.eq.s32.totalorder %s18, 1
    %p109 = por %p107, %p108
    %p111 = scmp.ne.s32.totalorder %s96, %s110
    %p112 = scmp.eq.s32.totalorder %s18, 0
    %p113 = por %p111, %p112
    %s115 = sadd.s32 %s114, 1
    %p118 = scmp.eq.s32.totalorder %s12, 1
    %p119 = scmp.ne.s32.totalorder %s114, %s116
    %p120 = scmp.eq.s32.totalorder %s12, 0
    %p121 = por %p119, %p120
    %p122 = scmp.ne.s32.totalorder %s114, %s116
    %p123 = scmp.eq.s32.totalorder %s17, 1
    %p124 = por %p122, %p123
    %p125 = scmp.ne.s32.totalorder %s116, %s117
    %p126 = scmp.eq.s32.totalorder %s17, 0
    %p127 = por %p125, %p126
    %p128 = scmp.ne.s32.totalorder %s116, %s117
    %p129 = scmp.eq.s32.totalorder %s18, 1
    %p130 = por %p128, %p129
    %p132 = scmp.ne.s32.totalorder %s117, %s131
    %p133 = scmp.eq.s32.totalorder %s18, 0
    %p134 = por %p132, %p133
    %s136 = sadd.s32 %s135, 1
    %p139 = scmp.eq.s32.totalorder %s12, 1
    %p140 = scmp.ne.s32.totalorder %s135, %s137
    %p141 = scmp.eq.s32.totalorder %s12, 0
    %p142 = por %p140, %p141
    %p143 = scmp.ne.s32.totalorder %s135, %s137
    %p144 = scmp.eq.s32.totalorder %s17, 1
    %p145 = por %p143, %p144
    %p146 = scmp.ne.s32.totalorder %s137, %s138
    %p147 = scmp.eq.s32.totalorder %s17, 0
    %p148 = por %p146, %p147
    %p149 = scmp.ne.s32.totalorder %s137, %s138
    %p150 = scmp.eq.s32.totalorder %s18, 1
    %p151 = por %p149, %p150
    %p153 = scmp.ne.s32.totalorder %s138, %s152
    %p154 = scmp.eq.s32.totalorder %s18, 0
    %p155 = por %p153, %p154
    %s156 = ssub.s32 %s12, %s19
    %p157 = scmp.eq.s32.totalorder %s156, 0
    %s159 = sadd.s32 %s158, 1
    %s160 = scalar_select %p157, %s158, %s159
    %p163 = pneg %p157
    %p164 = scmp.eq.s32.totalorder %s12, 1
    %p165 = por %p163, %p164
    %p166 = scmp.ne.s32.totalorder %s158, %s161
    %p167 = scmp.eq.s32.totalorder %s12, 0
    %p168 = por %p166, %p167
    %p169 = scmp.ne.s32.totalorder %s158, %s161
    %p170 = scmp.eq.s32.totalorder %s17, 1
    %p171 = por %p169, %p170
    %p172 = scmp.ne.s32.totalorder %s161, %s162
    %p173 = scmp.eq.s32.totalorder %s17, 0
    %p174 = por %p172, %p173
    %p175 = scmp.ne.s32.totalorder %s161, %s162
    %p176 = scmp.eq.s32.totalorder %s18, 1
    %p177 = por %p175, %p176
    %p179 = scmp.ne.s32.totalorder %s162, %s178
    %p180 = scmp.eq.s32.totalorder %s18, 0
    %p181 = por %p179, %p180
    %p182 = scmp.le.s32.totalorder 1, %s12
    %p183 = scmp.lt.s32.totalorder %s12, 3
    %p184 = pnand %p182, %p183
    %p185 = pneg %p184
    // Predicated region
    $region9: #{generator_loss.3} parent=5 // pred_check
      _
    $region10: #{generator_loss.3} parent=5 // pred_check_branch
      %187 = sbr.rel (%p184) target = $region12
    $region11: #{generator_loss.3} parent=5 // pred_region
      %s188 = ssub.s32 %s12, 1
      // Predicated region
      $region13: #{generator_loss.3} parent=11 // pred_check
        %p189 = pneg %p85
      $region14: #{generator_loss.3} parent=11 // pred_check_branch
        %191 = sbr.rel (%p189) target = $region16
      $region15: #{generator_loss.3} parent=11 // pred_region
        _
      $region16: #{generator_loss.3} parent=11 // pred_fallthru
        _
      // Predicated region
      $region17: #{generator_loss.3} parent=11 // pred_check
        %p192 = pneg %p106
      $region18: #{generator_loss.3} parent=11 // pred_check_branch
        %194 = sbr.rel (%p192) target = $region20
      $region19: #{generator_loss.3} parent=11 // pred_region
        _
      $region20: #{generator_loss.3} parent=11 // pred_fallthru
        _
      // Predicated region
      $region21: #{generator_loss.3} parent=11 // pred_check
        %p195 = pneg %p127
      $region22: #{generator_loss.3} parent=11 // pred_check_branch
        %197 = sbr.rel (%p195) target = $region24
      $region23: #{generator_loss.3} parent=11 // pred_region
        _
      $region24: #{generator_loss.3} parent=11 // pred_fallthru
        _
      // Predicated region
      $region25: #{generator_loss.3} parent=11 // pred_check
        %p198 = pneg %p148
      $region26: #{generator_loss.3} parent=11 // pred_check_branch
        %200 = sbr.rel (%p198) target = $region28
      $region27: #{generator_loss.3} parent=11 // pred_region
        _
      $region28: #{generator_loss.3} parent=11 // pred_fallthru
        _
    $region12: #{generator_loss.3} parent=5 // pred_fallthru
      _
    %p201 = scmp.lt.s32.totalorder %s12, 2
    // Predicated region
    $region29: #{generator_loss.3} parent=5 // pred_check
      %p202 = pneg %p201
    $region30: #{generator_loss.3} parent=5 // pred_check_branch
      %204 = sbr.rel (%p202) target = $region32
    $region31: #{generator_loss.3} parent=5 // pred_region
      // Predicated region
      $region33: #{generator_loss.3} parent=31 // pred_check
        %p205 = pneg %p32
      $region34: #{generator_loss.3} parent=31 // pred_check_branch
        %207 = sbr.rel (%p205) target = $region36
      $region35: #{generator_loss.3} parent=31 // pred_region
        %p208 = scmp.lt.s32.totalorder %s12, 1
        %s209 = scalar_select %p208, %s12, 1
        %s210 = smul.addr %s209, 32
        %s211 = smul.addr %s210, 8
        %s212 = scalar_lea.vmem %s0, %s211
      $region36: #{generator_loss.3} parent=31 // pred_fallthru
        _
      // Predicated region
      $region37: #{generator_loss.3} parent=31 // pred_check
        %p213 = pneg %p58
      $region38: #{generator_loss.3} parent=31 // pred_check_branch
        %215 = sbr.rel (%p213) target = $region40
      $region39: #{generator_loss.3} parent=31 // pred_region
        %p216 = scmp.lt.s32.totalorder %s12, 1
        %s217 = scalar_select %p216, %s12, 1
        %s218 = smul.addr %s217, 32
        %s219 = smul.addr %s218, 8
        %s220 = scalar_lea.vmem %s1, %s219
      $region40: #{generator_loss.3} parent=31 // pred_fallthru
        _
    $region32: #{generator_loss.3} parent=5 // pred_fallthru
      _
    %p221 = scmp.le.s32.totalorder 1, %s12
    %p222 = scmp.lt.s32.totalorder %s12, 3
    %p223 = pnand %p221, %p222
    %p224 = pneg %p223
    // Predicated region
    $region41: #{generator_loss.3} parent=5 // pred_check
      _
    $region42: #{generator_loss.3} parent=5 // pred_check_branch
      %226 = sbr.rel (%p223) target = $region44
    $region43: #{generator_loss.3} parent=5 // pred_region
      %s227 = ssub.s32 %s12, 1
      %p228 = scmp.lt.s32.totalorder %s17, 1
      %s229 = scalar_select %p228, %s17, 1
      %s230 = smul.addr %s229, 32
      %s231 = smul.addr %s230, 8
      %s232 = scalar_lea.vmem %s0, %s231
      %p233 = pneg %p38
      %p234 = pneg %p35
      %p235 = scmp.lt.s32.totalorder %s17, 1
      %s236 = scalar_select %p235, %s17, 1
      %s237 = smul.addr %s236, 32
      %s238 = smul.addr %s237, 8
      %s239 = scalar_lea.vmem %s1, %s238
      %p240 = pneg %p64
      %p241 = pneg %p61
      %p242 = pneg %p85
      %p243 = pneg %p82
      %p244 = pneg %p106
      %p245 = pneg %p103
      %p246 = pneg %p127
      %p247 = pneg %p124
      %p248 = pneg %p148
      %p249 = pneg %p145
      %p250 = pneg %p174
      %p251 = pneg %p171
      %p252 = scmp.lt.s32.totalorder %s17, 1
      %s253 = scalar_select %p252, %s17, 1
      %s254 = smul.addr %s253, 8
      %s255 = scalar_lea.vmem %s6, %s254
      %p256 = scmp.lt.s32.totalorder %s17, 1
      %s257 = scalar_select %p256, %s17, 1
      %s258 = smul.addr %s257, 32
      %s259 = smul.addr %s258, 8
      %s260 = scalar_lea.vmem %s0, %s259
      %p261 = scmp.lt.s32.totalorder %s17, 1
      %s262 = scalar_select %p261, %s17, 1
      %s263 = smul.addr %s262, 32
      %s264 = smul.addr %s263, 8
      %s265 = scalar_lea.vmem %s1, %s264
      %p266 = scmp.lt.s32.totalorder %s17, 1
      %s267 = scalar_select %p266, %s17, 1
      %s268 = smul.addr %s267, 8
      %s269 = scalar_lea.vmem %s6, %s268
      %v273 = vld [vmem:[%s2] sm:$0xf]
      %v274 = vld [vmem:[%s2 + $0x4] sm:$0xf]
      %v275 = vld [vmem:[%s2 + $0x8] sm:$0xf]
      %v276 = vld [vmem:[%s2 + $0xc] sm:$0xf]
      %v277 = vld [vmem:[%s3] sm:$0x1]
      %v278 = vld [vmem:[%s5] sm:$0x1]
      %279 = vst [vmem:[#allocation2] sm:$0xff] 0
      %280 = vst [vmem:[#allocation2 + $0x8] sm:$0xff] 0
      %281 = vst [vmem:[#allocation2 + $0x90] sm:$0xff] 0
      %282 = vst [vmem:[#allocation2 + $0x98] sm:$0xff] 0
      %283 = vst [vmem:[#allocation2 + $0x120] sm:$0xff] 0
      %284 = vst [vmem:[#allocation2 + $0x128] sm:$0xff] 0
      %v285 = vld [vmem:[%s260] sm:$0xff]
      %v286 = vld [vmem:[%s260 + $0x8] sm:$0xff]
      %v287 = vld [vmem:[%s260 + $0x10] sm:$0xff]
      %v288 = vld [vmem:[%s260 + $0x18] sm:$0xff]
      %v289 = vld [vmem:[%s260 + $0x20] sm:$0xff]
      %v290 = vld [vmem:[%s260 + $0x28] sm:$0xff]
      %v291 = vld [vmem:[%s260 + $0x30] sm:$0xff]
      %v292 = vld [vmem:[%s260 + $0x38] sm:$0xff]
      %v293 = vld [vmem:[%s260 + $0x40] sm:$0xff]
      %v294 = vld [vmem:[%s260 + $0x48] sm:$0xff]
      %v295 = vld [vmem:[%s260 + $0x50] sm:$0xff]
      %v296 = vld [vmem:[%s260 + $0x58] sm:$0xff]
      %v297 = vld [vmem:[%s260 + $0x60] sm:$0xff]
      %v298 = vld [vmem:[%s260 + $0x68] sm:$0xff]
      %v299 = vld [vmem:[%s260 + $0x70] sm:$0xff]
      %v300 = vld [vmem:[%s260 + $0x78] sm:$0xff]
      %v301 = vld [vmem:[%s260 + $0x80] sm:$0xff]
      %v302 = vld [vmem:[%s260 + $0x88] sm:$0xff]
      %v303 = vld [vmem:[%s260 + $0x90] sm:$0xff]
      %v304 = vld [vmem:[%s260 + $0x98] sm:$0xff]
      %v305 = vld [vmem:[%s260 + $0xa0] sm:$0xff]
      %v306 = vld [vmem:[%s260 + $0xa8] sm:$0xff]
      %v307 = vld [vmem:[%s260 + $0xb0] sm:$0xff]
      %v308 = vld [vmem:[%s260 + $0xb8] sm:$0xff]
      %v309 = vld [vmem:[%s260 + $0xc0] sm:$0xff]
      %v310 = vld [vmem:[%s260 + $0xc8] sm:$0xff]
      %v311 = vld [vmem:[%s260 + $0xd0] sm:$0xff]
      %v312 = vld [vmem:[%s260 + $0xd8] sm:$0xff]
      %v313 = vld [vmem:[%s260 + $0xe0] sm:$0xff]
      %v314 = vld [vmem:[%s260 + $0xe8] sm:$0xff]
      %v315 = vld [vmem:[%s260 + $0xf0] sm:$0xff]
      %v316 = vld [vmem:[%s260 + $0xf8] sm:$0xff]
      %v317 = vpack.c.bf16 %v286, %v285
      %v318 = vpack.c.bf16 %v288, %v287
      %v319 = vpack.c.bf16 %v290, %v289
      %v320 = vpack.c.bf16 %v292, %v291
      %v321 = vpack.c.bf16 %v294, %v293
      %v322 = vpack.c.bf16 %v296, %v295
      %v323 = vpack.c.bf16 %v298, %v297
      %v324 = vpack.c.bf16 %v300, %v299
      %v325 = vpack.c.bf16 %v302, %v301
      %v326 = vpack.c.bf16 %v304, %v303
      %v327 = vpack.c.bf16 %v306, %v305
      %v328 = vpack.c.bf16 %v308, %v307
      %v329 = vpack.c.bf16 %v310, %v309
      %v330 = vpack.c.bf16 %v312, %v311
      %v331 = vpack.c.bf16 %v314, %v313
      %v332 = vpack.c.bf16 %v316, %v315
      %v334 = vlaneseq
      %v335 = vshrl.u32 %v334, 7
      %v336 = vsub.s32 0, %v335
      %v337 = vrot.slane %v277, %v336
      %v343 = vunpack.c.l.b16 %v273
      %v344 = vunpack.c.l.b16 %v274
      %v345 = vunpack.c.l.b16 %v275
      %v346 = vunpack.c.l.b16 %v276
      %v347 = vpack.c.b16 %v344, %v343
      %v348 = vpack.c.b16 %v346, %v345
      %vm351 = vcmask 261120
      %v353 = vsel %vm351, %v317, 0
      %v356 = vsel %vm351, %v318, 0
      %v359 = vsel %vm351, %v319, 0
      %v362 = vsel %vm351, %v320, 0
      %v365 = vsel %vm351, %v321, 0
      %v368 = vsel %vm351, %v322, 0
      %v371 = vsel %vm351, %v323, 0
      %v374 = vsel %vm351, %v324, 0
      %v377 = vsel %vm351, %v325, 0
      %v380 = vsel %vm351, %v326, 0
      %v383 = vsel %vm351, %v327, 0
      %v386 = vsel %vm351, %v328, 0
      %v389 = vsel %vm351, %v329, 0
      %v392 = vsel %vm351, %v330, 0
      %v395 = vsel %vm351, %v331, 0
      %v398 = vsel %vm351, %v332, 0
      %400 = vmatprep.subr.bf16.mxu0 0
      %401 = vmatpush1.bf16.msra.mxu0 %v347
      %402 = vmatprep.subr.bf16.mxu0 0
      %403 = vmatpush1.bf16.msra.mxu0 %v348
      %404 = vmatprep.subr.bf16.mxu0 0
      %405 = vmatpush1.bf16.msra.mxu0 0
      %406 = vmatprep.subr.bf16.mxu0 0
      %407 = vmatpush1.bf16.msra.mxu0 0
      %408 = vmatprep.subr.bf16.mxu0 0
      %409 = vmatpush1.bf16.msra.mxu0 0
      %410 = vmatprep.subr.bf16.mxu0 0
      %411 = vmatpush1.bf16.msra.mxu0 0
      %412 = vmatprep.subr.bf16.mxu0 0
      %413 = vmatpush1.bf16.msra.mxu0 0
      %414 = vmatprep.subr.bf16.mxu0 0
      %415 = vmatpush1.bf16.msra.mxu0 0
      %416 = vmatprep.subr.bf16.mxu0 0
      %417 = vmatpush1.bf16.msra.mxu0 0
      %418 = vmatprep.subr.bf16.mxu0 0
      %419 = vmatpush1.bf16.msra.mxu0 0
      %420 = vmatprep.subr.bf16.mxu0 0
      %421 = vmatpush1.bf16.msra.mxu0 0
      %422 = vmatprep.subr.bf16.mxu0 0
      %423 = vmatpush1.bf16.msra.mxu0 0
      %424 = vmatprep.subr.bf16.mxu0 0
      %425 = vmatpush1.bf16.msra.mxu0 0
      %426 = vmatprep.subr.bf16.mxu0 0
      %427 = vmatpush1.bf16.msra.mxu0 0
      %428 = vmatprep.subr.bf16.mxu0 0
      %429 = vmatpush1.bf16.msra.mxu0 0
      %430 = vmatprep.subr.bf16.mxu0 0
      %431 = vmatpush1.bf16.msra.mxu0 0
      %432 = vmatprep.mubr.bf16.mxu0 0
      %433 = vmatmul.mubr.bf16.gmra.mrb[0].mxu0 %v353
      %v434 = vpop.f32.mrb[0].mxu0
      %v435 = vadd.f32 %v337, %v434
      %v436 = vpop.f32.mrb[0].mxu0
      %v437 = vpop.f32.mrb[0].mxu0
      %v438 = vadd.f32 %v337, %v437
      %v439 = vpop.f32.mrb[0].mxu0
      %440 = vmatprep.mubr.bf16.mxu0 0
      %441 = vmatmul.mubr.bf16.gmra.mrb[0].mxu0 %v356
      %v442 = vpop.f32.mrb[0].mxu0
      %v443 = vadd.f32 %v337, %v442
      %v444 = vpop.f32.mrb[0].mxu0
      %v445 = vpop.f32.mrb[0].mxu0
      %v446 = vadd.f32 %v337, %v445
      %v447 = vpop.f32.mrb[0].mxu0
      %448 = vmatprep.mubr.bf16.mxu0 0
      %449 = vmatmul.mubr.bf16.gmra.mrb[0].mxu0 %v359
      %v450 = vpop.f32.mrb[0].mxu0
      %v451 = vadd.f32 %v337, %v450
      %v452 = vpop.f32.mrb[0].mxu0
      %v453 = vpop.f32.mrb[0].mxu0
      %v454 = vadd.f32 %v337, %v453
      %v455 = vpop.f32.mrb[0].mxu0
      %456 = vmatprep.mubr.bf16.mxu0 0
      %457 = vmatmul.mubr.bf16.gmra.mrb[0].mxu0 %v362
      %v458 = vpop.f32.mrb[0].mxu0
      %v459 = vadd.f32 %v337, %v458
      %v460 = vpop.f32.mrb[0].mxu0
      %v461 = vpop.f32.mrb[0].mxu0
      %v462 = vadd.f32 %v337, %v461
      %v463 = vpop.f32.mrb[0].mxu0
      %464 = vmatprep.mubr.bf16.mxu0 0
      %465 = vmatmul.mubr.bf16.gmra.mrb[0].mxu0 %v365
      %v466 = vpop.f32.mrb[0].mxu0
      %v467 = vadd.f32 %v337, %v466
      %v468 = vpop.f32.mrb[0].mxu0
      %v469 = vpop.f32.mrb[0].mxu0
      %v470 = vadd.f32 %v337, %v469
      %v471 = vpop.f32.mrb[0].mxu0
      %472 = vmatprep.mubr.bf16.mxu0 0
      %473 = vmatmul.mubr.bf16.gmra.mrb[0].mxu0 %v368
      %v474 = vpop.f32.mrb[0].mxu0
      %v475 = vadd.f32 %v337, %v474
      %v476 = vpop.f32.mrb[0].mxu0
      %v477 = vpop.f32.mrb[0].mxu0
      %v478 = vadd.f32 %v337, %v477
      %v479 = vpop.f32.mrb[0].mxu0
      %480 = vmatprep.mubr.bf16.mxu0 0
      %481 = vmatmul.mubr.bf16.gmra.mrb[0].mxu0 %v371
      %v482 = vpop.f32.mrb[0].mxu0
      %v483 = vadd.f32 %v337, %v482
      %v484 = vpop.f32.mrb[0].mxu0
      %v485 = vpop.f32.mrb[0].mxu0
      %v486 = vadd.f32 %v337, %v485
      %v487 = vpop.f32.mrb[0].mxu0
      %488 = vmatprep.mubr.bf16.mxu0 0
      %489 = vmatmul.mubr.bf16.gmra.mrb[0].mxu0 %v374
      %v490 = vpop.f32.mrb[0].mxu0
      %v491 = vadd.f32 %v337, %v490
      %v492 = vpop.f32.mrb[0].mxu0
      %v493 = vpop.f32.mrb[0].mxu0
      %v494 = vadd.f32 %v337, %v493
      %v495 = vpop.f32.mrb[0].mxu0
      %496 = vmatprep.mubr.bf16.mxu0 0
      %497 = vmatmul.mubr.bf16.gmra.mrb[0].mxu0 %v377
      %v498 = vpop.f32.mrb[0].mxu0
      %v499 = vadd.f32 %v337, %v498
      %v500 = vpop.f32.mrb[0].mxu0
      %v501 = vpop.f32.mrb[0].mxu0
      %v502 = vadd.f32 %v337, %v501
      %v503 = vpop.f32.mrb[0].mxu0
      %504 = vmatprep.mubr.bf16.mxu0 0
      %505 = vmatmul.mubr.bf16.gmra.mrb[0].mxu0 %v380
      %v506 = vpop.f32.mrb[0].mxu0
      %v507 = vadd.f32 %v337, %v506
      %v508 = vpop.f32.mrb[0].mxu0
      %v509 = vpop.f32.mrb[0].mxu0
      %v510 = vadd.f32 %v337, %v509
      %v511 = vpop.f32.mrb[0].mxu0
      %512 = vmatprep.mubr.bf16.mxu0 0
      %513 = vmatmul.mubr.bf16.gmra.mrb[0].mxu0 %v383
      %v514 = vpop.f32.mrb[0].mxu0
      %v515 = vadd.f32 %v337, %v514
      %v516 = vpop.f32.mrb[0].mxu0
      %v517 = vpop.f32.mrb[0].mxu0
      %v518 = vadd.f32 %v337, %v517
      %v519 = vpop.f32.mrb[0].mxu0
      %520 = vmatprep.mubr.bf16.mxu0 0
      %521 = vmatmul.mubr.bf16.gmra.mrb[0].mxu0 %v386
      %v522 = vpop.f32.mrb[0].mxu0
      %v523 = vadd.f32 %v337, %v522
      %v524 = vpop.f32.mrb[0].mxu0
      %v525 = vpop.f32.mrb[0].mxu0
      %v526 = vadd.f32 %v337, %v525
      %v527 = vpop.f32.mrb[0].mxu0
      %528 = vmatprep.mubr.bf16.mxu0 0
      %529 = vmatmul.mubr.bf16.gmra.mrb[0].mxu0 %v389
      %v530 = vpop.f32.mrb[0].mxu0
      %v531 = vadd.f32 %v337, %v530
      %v532 = vpop.f32.mrb[0].mxu0
      %v533 = vpop.f32.mrb[0].mxu0
      %v534 = vadd.f32 %v337, %v533
      %v535 = vpop.f32.mrb[0].mxu0
      %536 = vmatprep.mubr.bf16.mxu0 0
      %537 = vmatmul.mubr.bf16.gmra.mrb[0].mxu0 %v392
      %v538 = vpop.f32.mrb[0].mxu0
      %v539 = vadd.f32 %v337, %v538
      %v540 = vpop.f32.mrb[0].mxu0
      %v541 = vpop.f32.mrb[0].mxu0
      %v542 = vadd.f32 %v337, %v541
      %v543 = vpop.f32.mrb[0].mxu0
      %544 = vmatprep.mubr.bf16.mxu0 0
      %545 = vmatmul.mubr.bf16.gmra.mrb[0].mxu0 %v395
      %v546 = vpop.f32.mrb[0].mxu0
      %v547 = vadd.f32 %v337, %v546
      %v548 = vpop.f32.mrb[0].mxu0
      %v549 = vpop.f32.mrb[0].mxu0
      %v550 = vadd.f32 %v337, %v549
      %v551 = vpop.f32.mrb[0].mxu0
      %552 = vmatprep.mubr.bf16.mxu0 0
      %553 = vmatmul.mubr.bf16.gmra.mrb[0].mxu0 %v398
      %v554 = vpop.f32.mrb[0].mxu0
      %v555 = vadd.f32 %v337, %v554
      %v556 = vpop.f32.mrb[0].mxu0
      %v557 = vpop.f32.mrb[0].mxu0
      %v558 = vadd.f32 %v337, %v557
      %v559 = vpop.f32.mrb[0].mxu0
      %560 = vdwg.mxu0
      %v561 = vmax.f32 %v435, 0.0
      %v562 = vmax.f32 %v438, 0.0
      %v563 = vmax.f32 %v443, 0.0
      %v564 = vmax.f32 %v446, 0.0
      %v565 = vmax.f32 %v451, 0.0
      %v566 = vmax.f32 %v454, 0.0
      %v567 = vmax.f32 %v459, 0.0
      %v568 = vmax.f32 %v462, 0.0
      %v569 = vmax.f32 %v467, 0.0
      %v570 = vmax.f32 %v470, 0.0
      %v571 = vmax.f32 %v475, 0.0
      %v572 = vmax.f32 %v478, 0.0
      %v573 = vmax.f32 %v483, 0.0
      %v574 = vmax.f32 %v486, 0.0
      %v575 = vmax.f32 %v491, 0.0
      %v576 = vmax.f32 %v494, 0.0
      %v577 = vmax.f32 %v499, 0.0
      %v578 = vmax.f32 %v502, 0.0
      %v579 = vmax.f32 %v507, 0.0
      %v580 = vmax.f32 %v510, 0.0
      %v581 = vmax.f32 %v515, 0.0
      %v582 = vmax.f32 %v518, 0.0
      %v583 = vmax.f32 %v523, 0.0
      %v584 = vmax.f32 %v526, 0.0
      %v585 = vmax.f32 %v531, 0.0
      %v586 = vmax.f32 %v534, 0.0
      %v587 = vmax.f32 %v539, 0.0
      %v588 = vmax.f32 %v542, 0.0
      %v589 = vmax.f32 %v547, 0.0
      %v590 = vmax.f32 %v550, 0.0
      %v591 = vmax.f32 %v555, 0.0
      %v592 = vmax.f32 %v558, 0.0
      %v593 = vpack.c.bf16 %v562, %v561
      %v594 = vpack.c.bf16 %v564, %v563
      %v595 = vpack.c.bf16 %v566, %v565
      %v596 = vpack.c.bf16 %v568, %v567
      %v597 = vpack.c.bf16 %v570, %v569
      %v598 = vpack.c.bf16 %v572, %v571
      %v599 = vpack.c.bf16 %v574, %v573
      %v600 = vpack.c.bf16 %v576, %v575
      %v601 = vpack.c.bf16 %v578, %v577
      %v602 = vpack.c.bf16 %v580, %v579
      %v603 = vpack.c.bf16 %v582, %v581
      %v604 = vpack.c.bf16 %v584, %v583
      %v605 = vpack.c.bf16 %v586, %v585
      %v606 = vpack.c.bf16 %v588, %v587
      %v607 = vpack.c.bf16 %v590, %v589
      %v608 = vpack.c.bf16 %v592, %v591
      %609 = vst [vmem:[#allocation2 + $0x10] sm:$0xff] %v593
      %610 = vst [vmem:[#allocation2 + $0x18] sm:$0xff] %v594
      %611 = vst [vmem:[#allocation2 + $0x20] sm:$0xff] %v595
      %612 = vst [vmem:[#allocation2 + $0x28] sm:$0xff] %v596
      %613 = vst [vmem:[#allocation2 + $0x30] sm:$0xff] %v597
      %614 = vst [vmem:[#allocation2 + $0x38] sm:$0xff] %v598
      %615 = vst [vmem:[#allocation2 + $0x40] sm:$0xff] %v599
      %616 = vst [vmem:[#allocation2 + $0x48] sm:$0xff] %v600
      %617 = vst [vmem:[#allocation2 + $0x50] sm:$0xff] %v601
      %618 = vst [vmem:[#allocation2 + $0x58] sm:$0xff] %v602
      %619 = vst [vmem:[#allocation2 + $0x60] sm:$0xff] %v603
      %620 = vst [vmem:[#allocation2 + $0x68] sm:$0xff] %v604
      %621 = vst [vmem:[#allocation2 + $0x70] sm:$0xff] %v605
      %622 = vst [vmem:[#allocation2 + $0x78] sm:$0xff] %v606
      %623 = vst [vmem:[#allocation2 + $0x80] sm:$0xff] %v607
      %624 = vst [vmem:[#allocation2 + $0x88] sm:$0xff] %v608
      %v625 = vld [vmem:[%s265] sm:$0xff]
      %v626 = vld [vmem:[%s265 + $0x8] sm:$0xff]
      %v627 = vld [vmem:[%s265 + $0x10] sm:$0xff]
      %v628 = vld [vmem:[%s265 + $0x18] sm:$0xff]
      %v629 = vld [vmem:[%s265 + $0x20] sm:$0xff]
      %v630 = vld [vmem:[%s265 + $0x28] sm:$0xff]
      %v631 = vld [vmem:[%s265 + $0x30] sm:$0xff]
      %v632 = vld [vmem:[%s265 + $0x38] sm:$0xff]
      %v633 = vld [vmem:[%s265 + $0x40] sm:$0xff]
      %v634 = vld [vmem:[%s265 + $0x48] sm:$0xff]
      %v635 = vld [vmem:[%s265 + $0x50] sm:$0xff]
      %v636 = vld [vmem:[%s265 + $0x58] sm:$0xff]
      %v637 = vld [vmem:[%s265 + $0x60] sm:$0xff]
      %v638 = vld [vmem:[%s265 + $0x68] sm:$0xff]
      %v639 = vld [vmem:[%s265 + $0x70] sm:$0xff]
      %v640 = vld [vmem:[%s265 + $0x78] sm:$0xff]
      %v641 = vld [vmem:[%s265 + $0x80] sm:$0xff]
      %v642 = vld [vmem:[%s265 + $0x88] sm:$0xff]
      %v643 = vld [vmem:[%s265 + $0x90] sm:$0xff]
      %v644 = vld [vmem:[%s265 + $0x98] sm:$0xff]
      %v645 = vld [vmem:[%s265 + $0xa0] sm:$0xff]
      %v646 = vld [vmem:[%s265 + $0xa8] sm:$0xff]
      %v647 = vld [vmem:[%s265 + $0xb0] sm:$0xff]
      %v648 = vld [vmem:[%s265 + $0xb8] sm:$0xff]
      %v649 = vld [vmem:[%s265 + $0xc0] sm:$0xff]
      %v650 = vld [vmem:[%s265 + $0xc8] sm:$0xff]
      %v651 = vld [vmem:[%s265 + $0xd0] sm:$0xff]
      %v652 = vld [vmem:[%s265 + $0xd8] sm:$0xff]
      %v653 = vld [vmem:[%s265 + $0xe0] sm:$0xff]
      %v654 = vld [vmem:[%s265 + $0xe8] sm:$0xff]
      %v655 = vld [vmem:[%s265 + $0xf0] sm:$0xff]
      %v656 = vld [vmem:[%s265 + $0xf8] sm:$0xff]
      %v657 = vpack.c.bf16 %v626, %v625
      %v658 = vpack.c.bf16 %v628, %v627
      %v659 = vpack.c.bf16 %v630, %v629
      %v660 = vpack.c.bf16 %v632, %v631
      %v661 = vpack.c.bf16 %v634, %v633
      %v662 = vpack.c.bf16 %v636, %v635
      %v663 = vpack.c.bf16 %v638, %v637
      %v664 = vpack.c.bf16 %v640, %v639
      %v665 = vpack.c.bf16 %v642, %v641
      %v666 = vpack.c.bf16 %v644, %v643
      %v667 = vpack.c.bf16 %v646, %v645
      %v668 = vpack.c.bf16 %v648, %v647
      %v669 = vpack.c.bf16 %v650, %v649
      %v670 = vpack.c.bf16 %v652, %v651
      %v671 = vpack.c.bf16 %v654, %v653
      %v672 = vpack.c.bf16 %v656, %v655
      %v674 = vsel %vm351, %v657, 0
      %v677 = vsel %vm351, %v658, 0
      %v680 = vsel %vm351, %v659, 0
      %v683 = vsel %vm351, %v660, 0
      %v686 = vsel %vm351, %v661, 0
      %v689 = vsel %vm351, %v662, 0
      %v692 = vsel %vm351, %v663, 0
      %v695 = vsel %vm351, %v664, 0
      %v698 = vsel %vm351, %v665, 0
      %v701 = vsel %vm351, %v666, 0
      %v704 = vsel %vm351, %v667, 0
      %v707 = vsel %vm351, %v668, 0
      %v710 = vsel %vm351, %v669, 0
      %v713 = vsel %vm351, %v670, 0
      %v716 = vsel %vm351, %v671, 0
      %v719 = vsel %vm351, %v672, 0
      %721 = vmatprep.subr.bf16.mxu0 0
      %722 = vmatpush1.bf16.msra.mxu0 %v347
      %723 = vmatprep.subr.bf16.mxu0 0
      %724 = vmatpush1.bf16.msra.mxu0 %v348
      %725 = vmatprep.subr.bf16.mxu0 0
      %726 = vmatpush1.bf16.msra.mxu0 0
      %727 = vmatprep.subr.bf16.mxu0 0
      %728 = vmatpush1.bf16.msra.mxu0 0
      %729 = vmatprep.subr.bf16.mxu0 0
      %730 = vmatpush1.bf16.msra.mxu0 0
      %731 = vmatprep.subr.bf16.mxu0 0
      %732 = vmatpush1.bf16.msra.mxu0 0
      %733 = vmatprep.subr.bf16.mxu0 0
      %734 = vmatpush1.bf16.msra.mxu0 0
      %735 = vmatprep.subr.bf16.mxu0 0
      %736 = vmatpush1.bf16.msra.mxu0 0
      %737 = vmatprep.subr.bf16.mxu0 0
      %738 = vmatpush1.bf16.msra.mxu0 0
      %739 = vmatprep.subr.bf16.mxu0 0
      %740 = vmatpush1.bf16.msra.mxu0 0
      %741 = vmatprep.subr.bf16.mxu0 0
      %742 = vmatpush1.bf16.msra.mxu0 0
      %743 = vmatprep.subr.bf16.mxu0 0
      %744 = vmatpush1.bf16.msra.mxu0 0
      %745 = vmatprep.subr.bf16.mxu0 0
      %746 = vmatpush1.bf16.msra.mxu0 0
      %747 = vmatprep.subr.bf16.mxu0 0
      %748 = vmatpush1.bf16.msra.mxu0 0
      %749 = vmatprep.subr.bf16.mxu0 0
      %750 = vmatpush1.bf16.msra.mxu0 0
      %751 = vmatprep.subr.bf16.mxu0 0
      %752 = vmatpush1.bf16.msra.mxu0 0
      %753 = vmatprep.mubr.bf16.mxu0 0
      %754 = vmatmul.mubr.bf16.gmra.mrb[0].mxu0 %v674
      %v755 = vpop.f32.mrb[0].mxu0
      %v756 = vadd.f32 %v337, %v755
      %v757 = vpop.f32.mrb[0].mxu0
      %v758 = vpop.f32.mrb[0].mxu0
      %v759 = vadd.f32 %v337, %v758
      %v760 = vpop.f32.mrb[0].mxu0
      %761 = vmatprep.mubr.bf16.mxu0 0
      %762 = vmatmul.mubr.bf16.gmra.mrb[0].mxu0 %v677
      %v763 = vpop.f32.mrb[0].mxu0
      %v764 = vadd.f32 %v337, %v763
      %v765 = vpop.f32.mrb[0].mxu0
      %v766 = vpop.f32.mrb[0].mxu0
      %v767 = vadd.f32 %v337, %v766
      %v768 = vpop.f32.mrb[0].mxu0
      %769 = vmatprep.mubr.bf16.mxu0 0
      %770 = vmatmul.mubr.bf16.gmra.mrb[0].mxu0 %v680
      %v771 = vpop.f32.mrb[0].mxu0
      %v772 = vadd.f32 %v337, %v771
      %v773 = vpop.f32.mrb[0].mxu0
      %v774 = vpop.f32.mrb[0].mxu0
      %v775 = vadd.f32 %v337, %v774
      %v776 = vpop.f32.mrb[0].mxu0
      %777 = vmatprep.mubr.bf16.mxu0 0
      %778 = vmatmul.mubr.bf16.gmra.mrb[0].mxu0 %v683
      %v779 = vpop.f32.mrb[0].mxu0
      %v780 = vadd.f32 %v337, %v779
      %v781 = vpop.f32.mrb[0].mxu0
      %v782 = vpop.f32.mrb[0].mxu0
      %v783 = vadd.f32 %v337, %v782
      %v784 = vpop.f32.mrb[0].mxu0
      %785 = vmatprep.mubr.bf16.mxu0 0
      %786 = vmatmul.mubr.bf16.gmra.mrb[0].mxu0 %v686
      %v787 = vpop.f32.mrb[0].mxu0
      %v788 = vadd.f32 %v337, %v787
      %v789 = vpop.f32.mrb[0].mxu0
      %v790 = vpop.f32.mrb[0].mxu0
      %v791 = vadd.f32 %v337, %v790
      %v792 = vpop.f32.mrb[0].mxu0
      %793 = vmatprep.mubr.bf16.mxu0 0
      %794 = vmatmul.mubr.bf16.gmra.mrb[0].mxu0 %v689
      %v795 = vpop.f32.mrb[0].mxu0
      %v796 = vadd.f32 %v337, %v795
      %v797 = vpop.f32.mrb[0].mxu0
      %v798 = vpop.f32.mrb[0].mxu0
      %v799 = vadd.f32 %v337, %v798
      %v800 = vpop.f32.mrb[0].mxu0
      %801 = vmatprep.mubr.bf16.mxu0 0
      %802 = vmatmul.mubr.bf16.gmra.mrb[0].mxu0 %v692
      %v803 = vpop.f32.mrb[0].mxu0
      %v804 = vadd.f32 %v337, %v803
      %v805 = vpop.f32.mrb[0].mxu0
      %v806 = vpop.f32.mrb[0].mxu0
      %v807 = vadd.f32 %v337, %v806
      %v808 = vpop.f32.mrb[0].mxu0
      %809 = vmatprep.mubr.bf16.mxu0 0
      %810 = vmatmul.mubr.bf16.gmra.mrb[0].mxu0 %v695
      %v811 = vpop.f32.mrb[0].mxu0
      %v812 = vadd.f32 %v337, %v811
      %v813 = vpop.f32.mrb[0].mxu0
      %v814 = vpop.f32.mrb[0].mxu0
      %v815 = vadd.f32 %v337, %v814
      %v816 = vpop.f32.mrb[0].mxu0
      %817 = vmatprep.mubr.bf16.mxu0 0
      %818 = vmatmul.mubr.bf16.gmra.mrb[0].mxu0 %v698
      %v819 = vpop.f32.mrb[0].mxu0
      %v820 = vadd.f32 %v337, %v819
      %v821 = vpop.f32.mrb[0].mxu0
      %v822 = vpop.f32.mrb[0].mxu0
      %v823 = vadd.f32 %v337, %v822
      %v824 = vpop.f32.mrb[0].mxu0
      %825 = vmatprep.mubr.bf16.mxu0 0
      %826 = vmatmul.mubr.bf16.gmra.mrb[0].mxu0 %v701
      %v827 = vpop.f32.mrb[0].mxu0
      %v828 = vadd.f32 %v337, %v827
      %v829 = vpop.f32.mrb[0].mxu0
      %v830 = vpop.f32.mrb[0].mxu0
      %v831 = vadd.f32 %v337, %v830
      %v832 = vpop.f32.mrb[0].mxu0
      %833 = vmatprep.mubr.bf16.mxu0 0
      %834 = vmatmul.mubr.bf16.gmra.mrb[0].mxu0 %v704
      %v835 = vpop.f32.mrb[0].mxu0
      %v836 = vadd.f32 %v337, %v835
      %v837 = vpop.f32.mrb[0].mxu0
      %v838 = vpop.f32.mrb[0].mxu0
      %v839 = vadd.f32 %v337, %v838
      %v840 = vpop.f32.mrb[0].mxu0
      %841 = vmatprep.mubr.bf16.mxu0 0
      %842 = vmatmul.mubr.bf16.gmra.mrb[0].mxu0 %v707
      %v843 = vpop.f32.mrb[0].mxu0
      %v844 = vadd.f32 %v337, %v843
      %v845 = vpop.f32.mrb[0].mxu0
      %v846 = vpop.f32.mrb[0].mxu0
      %v847 = vadd.f32 %v337, %v846
      %v848 = vpop.f32.mrb[0].mxu0
      %849 = vmatprep.mubr.bf16.mxu0 0
      %850 = vmatmul.mubr.bf16.gmra.mrb[0].mxu0 %v710
      %v851 = vpop.f32.mrb[0].mxu0
      %v852 = vadd.f32 %v337, %v851
      %v853 = vpop.f32.mrb[0].mxu0
      %v854 = vpop.f32.mrb[0].mxu0
      %v855 = vadd.f32 %v337, %v854
      %v856 = vpop.f32.mrb[0].mxu0
      %857 = vmatprep.mubr.bf16.mxu0 0
      %858 = vmatmul.mubr.bf16.gmra.mrb[0].mxu0 %v713
      %v859 = vpop.f32.mrb[0].mxu0
      %v860 = vadd.f32 %v337, %v859
      %v861 = vpop.f32.mrb[0].mxu0
      %v862 = vpop.f32.mrb[0].mxu0
      %v863 = vadd.f32 %v337, %v862
      %v864 = vpop.f32.mrb[0].mxu0
      %865 = vmatprep.mubr.bf16.mxu0 0
      %866 = vmatmul.mubr.bf16.gmra.mrb[0].mxu0 %v716
      %v867 = vpop.f32.mrb[0].mxu0
      %v868 = vadd.f32 %v337, %v867
      %v869 = vpop.f32.mrb[0].mxu0
      %v870 = vpop.f32.mrb[0].mxu0
      %v871 = vadd.f32 %v337, %v870
      %v872 = vpop.f32.mrb[0].mxu0
      %873 = vmatprep.mubr.bf16.mxu0 0
      %874 = vmatmul.mubr.bf16.gmra.mrb[0].mxu0 %v719
      %v875 = vpop.f32.mrb[0].mxu0
      %v876 = vadd.f32 %v337, %v875
      %v877 = vpop.f32.mrb[0].mxu0
      %v878 = vpop.f32.mrb[0].mxu0
      %v879 = vadd.f32 %v337, %v878
      %v880 = vpop.f32.mrb[0].mxu0
      %881 = vdwg.mxu0
      %v882 = vmax.f32 %v756, 0.0
      %v883 = vmax.f32 %v759, 0.0
      %v884 = vmax.f32 %v764, 0.0
      %v885 = vmax.f32 %v767, 0.0
      %v886 = vmax.f32 %v772, 0.0
      %v887 = vmax.f32 %v775, 0.0
      %v888 = vmax.f32 %v780, 0.0
      %v889 = vmax.f32 %v783, 0.0
      %v890 = vmax.f32 %v788, 0.0
      %v891 = vmax.f32 %v791, 0.0
      %v892 = vmax.f32 %v796, 0.0
      %v893 = vmax.f32 %v799, 0.0
      %v894 = vmax.f32 %v804, 0.0
      %v895 = vmax.f32 %v807, 0.0
      %v896 = vmax.f32 %v812, 0.0
      %v897 = vmax.f32 %v815, 0.0
      %v898 = vmax.f32 %v820, 0.0
      %v899 = vmax.f32 %v823, 0.0
      %v900 = vmax.f32 %v828, 0.0
      %v901 = vmax.f32 %v831, 0.0
      %v902 = vmax.f32 %v836, 0.0
      %v903 = vmax.f32 %v839, 0.0
      %v904 = vmax.f32 %v844, 0.0
      %v905 = vmax.f32 %v847, 0.0
      %v906 = vmax.f32 %v852, 0.0
      %v907 = vmax.f32 %v855, 0.0
      %v908 = vmax.f32 %v860, 0.0
      %v909 = vmax.f32 %v863, 0.0
      %v910 = vmax.f32 %v868, 0.0
      %v911 = vmax.f32 %v871, 0.0
      %v912 = vmax.f32 %v876, 0.0
      %v913 = vmax.f32 %v879, 0.0
      %v914 = vpack.c.bf16 %v883, %v882
      %v915 = vpack.c.bf16 %v885, %v884
      %v916 = vpack.c.bf16 %v887, %v886
      %v917 = vpack.c.bf16 %v889, %v888
      %v918 = vpack.c.bf16 %v891, %v890
      %v919 = vpack.c.bf16 %v893, %v892
      %v920 = vpack.c.bf16 %v895, %v894
      %v921 = vpack.c.bf16 %v897, %v896
      %v922 = vpack.c.bf16 %v899, %v898
      %v923 = vpack.c.bf16 %v901, %v900
      %v924 = vpack.c.bf16 %v903, %v902
      %v925 = vpack.c.bf16 %v905, %v904
      %v926 = vpack.c.bf16 %v907, %v906
      %v927 = vpack.c.bf16 %v909, %v908
      %v928 = vpack.c.bf16 %v911, %v910
      %v929 = vpack.c.bf16 %v913, %v912
      %930 = vst [vmem:[#allocation2 + $0xa0] sm:$0xff] %v914
      %931 = vst [vmem:[#allocation2 + $0xa8] sm:$0xff] %v915
      %932 = vst [vmem:[#allocation2 + $0xb0] sm:$0xff] %v916
      %933 = vst [vmem:[#allocation2 + $0xb8] sm:$0xff] %v917
      %934 = vst [vmem:[#allocation2 + $0xc0] sm:$0xff] %v918
      %935 = vst [vmem:[#allocation2 + $0xc8] sm:$0xff] %v919
      %936 = vst [vmem:[#allocation2 + $0xd0] sm:$0xff] %v920
      %937 = vst [vmem:[#allocation2 + $0xd8] sm:$0xff] %v921
      %938 = vst [vmem:[#allocation2 + $0xe0] sm:$0xff] %v922
      %939 = vst [vmem:[#allocation2 + $0xe8] sm:$0xff] %v923
      %940 = vst [vmem:[#allocation2 + $0xf0] sm:$0xff] %v924
      %941 = vst [vmem:[#allocation2 + $0xf8] sm:$0xff] %v925
      %942 = vst [vmem:[#allocation2 + $0x100] sm:$0xff] %v926
      %943 = vst [vmem:[#allocation2 + $0x108] sm:$0xff] %v927
      %944 = vst [vmem:[#allocation2 + $0x110] sm:$0xff] %v928
      %945 = vst [vmem:[#allocation2 + $0x118] sm:$0xff] %v929
      %v946 = vlaneseq
      %v947 = vshrl.u32 %v946, 7
      %v948 = vadd.s32 %v947, 8
      %v949 = vadd.s32 %v947, 16
      %v950 = vadd.s32 %v947, 24
      %v951 = vadd.s32 %v947, 32
      %v952 = vadd.s32 %v947, 40
      %v953 = vadd.s32 %v947, 48
      %v954 = vadd.s32 %v947, 56
      %v955 = vadd.s32 %v947, 64
      %v956 = vadd.s32 %v947, 72
      %v957 = vadd.s32 %v947, 80
      %v958 = vadd.s32 %v947, 88
      %v959 = vadd.s32 %v947, 96
      %v960 = vadd.s32 %v947, 104
      %v961 = vadd.s32 %v947, 112
      %v962 = vadd.s32 %v947, 120
      %v963 = vadd.s32 %v947, 128
      %v964 = vadd.s32 %v947, 136
      %v965 = vadd.s32 %v947, 144
      %v966 = vadd.s32 %v947, 152
      %v967 = vadd.s32 %v947, 160
      %v968 = vadd.s32 %v947, 168
      %v969 = vadd.s32 %v947, 176
      %v970 = vadd.s32 %v947, 184
      %v971 = vadd.s32 %v947, 192
      %v972 = vadd.s32 %v947, 200
      %v973 = vadd.s32 %v947, 208
      %v974 = vadd.s32 %v947, 216
      %v975 = vadd.s32 %v947, 224
      %v976 = vadd.s32 %v947, 232
      %v977 = vadd.s32 %v947, 240
      %v978 = vadd.s32 %v947, 248
      %v979 = vadd.s32 %v947, 256
      %v980 = vadd.s32 %v947, 264
      %v981 = vadd.s32 %v947, 272
      %v982 = vadd.s32 %v947, 280
      %v983 = vadd.s32 %v947, 288
      %v984 = vadd.s32 %v947, 296
      %v985 = vadd.s32 %v947, 304
      %v986 = vadd.s32 %v947, 312
      %v987 = vadd.s32 %v947, 320
      %v988 = vadd.s32 %v947, 328
      %v989 = vadd.s32 %v947, 336
      %v990 = vadd.s32 %v947, 344
      %v991 = vadd.s32 %v947, 352
      %v992 = vadd.s32 %v947, 360
      %v993 = vadd.s32 %v947, 368
      %v994 = vadd.s32 %v947, 376
      %v995 = vadd.s32 %v947, 384
      %v996 = vadd.s32 %v947, 392
      %v997 = vadd.s32 %v947, 400
      %v998 = vadd.s32 %v947, 408
      %v999 = vadd.s32 %v947, 416
      %v1000 = vadd.s32 %v947, 424
      %v1001 = vadd.s32 %v947, 432
      %v1002 = vadd.s32 %v947, 440
      %v1003 = vadd.s32 %v947, 448
      %v1004 = vadd.s32 %v947, 456
      %v1005 = vadd.s32 %v947, 464
      %v1006 = vadd.s32 %v947, 472
      %v1007 = vadd.s32 %v947, 480
      %v1008 = vadd.s32 %v947, 488
      %v1009 = vadd.s32 %v947, 496
      %v1010 = vadd.s32 %v947, 504
      %v1011 = vadd.s32 %v947, 512
      %v1012 = vadd.s32 %v947, 520
      %v1013 = vadd.s32 %v947, 528
      %v1014 = vadd.s32 %v947, 536
      %vm1015 = vcmp.lt.s32.totalorder %v947, 0
      %v1016 = vsub.s32 0, %v947
      %v1017 = vsel %vm1015, %v1016, %v947
      %v1018 = vshrl.u32 %v1017, 4
      %v1019 = vand.u32 %v1017, 15
      %v1020 = vsub.s32 0, %v1019
      %v1021 = vsel %vm1015, %v1020, %v1019
      %vm1022 = vcmp.lt.s32.totalorder %v948, 0
      %v1023 = vsub.s32 0, %v948
      %v1024 = vsel %vm1022, %v1023, %v948
      %v1025 = vshrl.u32 %v1024, 4
      %v1026 = vand.u32 %v1024, 15
      %v1027 = vsub.s32 0, %v1026
      %v1028 = vsel %vm1022, %v1027, %v1026
      %vm1029 = vcmp.lt.s32.totalorder %v949, 0
      %v1030 = vsub.s32 0, %v949
      %v1031 = vsel %vm1029, %v1030, %v949
      %v1032 = vshrl.u32 %v1031, 4
      %v1033 = vand.u32 %v1031, 15
      %v1034 = vsub.s32 0, %v1033
      %v1035 = vsel %vm1029, %v1034, %v1033
      %vm1036 = vcmp.lt.s32.totalorder %v950, 0
      %v1037 = vsub.s32 0, %v950
      %v1038 = vsel %vm1036, %v1037, %v950
      %v1039 = vshrl.u32 %v1038, 4
      %v1040 = vand.u32 %v1038, 15
      %v1041 = vsub.s32 0, %v1040
      %v1042 = vsel %vm1036, %v1041, %v1040
      %vm1043 = vcmp.lt.s32.totalorder %v951, 0
      %v1044 = vsub.s32 0, %v951
      %v1045 = vsel %vm1043, %v1044, %v951
      %v1046 = vshrl.u32 %v1045, 4
      %v1047 = vand.u32 %v1045, 15
      %v1048 = vsub.s32 0, %v1047
      %v1049 = vsel %vm1043, %v1048, %v1047
      %vm1050 = vcmp.lt.s32.totalorder %v952, 0
      %v1051 = vsub.s32 0, %v952
      %v1052 = vsel %vm1050, %v1051, %v952
      %v1053 = vshrl.u32 %v1052, 4
      %v1054 = vand.u32 %v1052, 15
      %v1055 = vsub.s32 0, %v1054
      %v1056 = vsel %vm1050, %v1055, %v1054
      %vm1057 = vcmp.lt.s32.totalorder %v953, 0
      %v1058 = vsub.s32 0, %v953
      %v1059 = vsel %vm1057, %v1058, %v953
      %v1060 = vshrl.u32 %v1059, 4
      %v1061 = vand.u32 %v1059, 15
      %v1062 = vsub.s32 0, %v1061
      %v1063 = vsel %vm1057, %v1062, %v1061
      %vm1064 = vcmp.lt.s32.totalorder %v954, 0
      %v1065 = vsub.s32 0, %v954
      %v1066 = vsel %vm1064, %v1065, %v954
      %v1067 = vshrl.u32 %v1066, 4
      %v1068 = vand.u32 %v1066, 15
      %v1069 = vsub.s32 0, %v1068
      %v1070 = vsel %vm1064, %v1069, %v1068
      %vm1071 = vcmp.lt.s32.totalorder %v955, 0
      %v1072 = vsub.s32 0, %v955
      %v1073 = vsel %vm1071, %v1072, %v955
      %v1074 = vshrl.u32 %v1073, 4
      %v1075 = vand.u32 %v1073, 15
      %v1076 = vsub.s32 0, %v1075
      %v1077 = vsel %vm1071, %v1076, %v1075
      %vm1078 = vcmp.lt.s32.totalorder %v956, 0
      %v1079 = vsub.s32 0, %v956
      %v1080 = vsel %vm1078, %v1079, %v956
      %v1081 = vshrl.u32 %v1080, 4
      %v1082 = vand.u32 %v1080, 15
      %v1083 = vsub.s32 0, %v1082
      %v1084 = vsel %vm1078, %v1083, %v1082
      %vm1085 = vcmp.lt.s32.totalorder %v957, 0
      %v1086 = vsub.s32 0, %v957
      %v1087 = vsel %vm1085, %v1086, %v957
      %v1088 = vshrl.u32 %v1087, 4
      %v1089 = vand.u32 %v1087, 15
      %v1090 = vsub.s32 0, %v1089
      %v1091 = vsel %vm1085, %v1090, %v1089
      %vm1092 = vcmp.lt.s32.totalorder %v958, 0
      %v1093 = vsub.s32 0, %v958
      %v1094 = vsel %vm1092, %v1093, %v958
      %v1095 = vshrl.u32 %v1094, 4
      %v1096 = vand.u32 %v1094, 15
      %v1097 = vsub.s32 0, %v1096
      %v1098 = vsel %vm1092, %v1097, %v1096
      %vm1099 = vcmp.lt.s32.totalorder %v959, 0
      %v1100 = vsub.s32 0, %v959
      %v1101 = vsel %vm1099, %v1100, %v959
      %v1102 = vshrl.u32 %v1101, 4
      %v1103 = vand.u32 %v1101, 15
      %v1104 = vsub.s32 0, %v1103
      %v1105 = vsel %vm1099, %v1104, %v1103
      %vm1106 = vcmp.lt.s32.totalorder %v960, 0
      %v1107 = vsub.s32 0, %v960
      %v1108 = vsel %vm1106, %v1107, %v960
      %v1109 = vshrl.u32 %v1108, 4
      %v1110 = vand.u32 %v1108, 15
      %v1111 = vsub.s32 0, %v1110
      %v1112 = vsel %vm1106, %v1111, %v1110
      %vm1113 = vcmp.lt.s32.totalorder %v961, 0
      %v1114 = vsub.s32 0, %v961
      %v1115 = vsel %vm1113, %v1114, %v961
      %v1116 = vshrl.u32 %v1115, 4
      %v1117 = vand.u32 %v1115, 15
      %v1118 = vsub.s32 0, %v1117
      %v1119 = vsel %vm1113, %v1118, %v1117
      %vm1120 = vcmp.lt.s32.totalorder %v962, 0
      %v1121 = vsub.s32 0, %v962
      %v1122 = vsel %vm1120, %v1121, %v962
      %v1123 = vshrl.u32 %v1122, 4
      %v1124 = vand.u32 %v1122, 15
      %v1125 = vsub.s32 0, %v1124
      %v1126 = vsel %vm1120, %v1125, %v1124
      %vm1127 = vcmp.lt.s32.totalorder %v963, 0
      %v1128 = vsub.s32 0, %v963
      %v1129 = vsel %vm1127, %v1128, %v963
      %v1130 = vshrl.u32 %v1129, 4
      %v1131 = vand.u32 %v1129, 15
      %v1132 = vsub.s32 0, %v1131
      %v1133 = vsel %vm1127, %v1132, %v1131
      %vm1134 = vcmp.lt.s32.totalorder %v964, 0
      %v1135 = vsub.s32 0, %v964
      %v1136 = vsel %vm1134, %v1135, %v964
      %v1137 = vshrl.u32 %v1136, 4
      %v1138 = vand.u32 %v1136, 15
      %v1139 = vsub.s32 0, %v1138
      %v1140 = vsel %vm1134, %v1139, %v1138
      %vm1141 = vcmp.lt.s32.totalorder %v965, 0
      %v1142 = vsub.s32 0, %v965
      %v1143 = vsel %vm1141, %v1142, %v965
      %v1144 = vshrl.u32 %v1143, 4
      %v1145 = vand.u32 %v1143, 15
      %v1146 = vsub.s32 0, %v1145
      %v1147 = vsel %vm1141, %v1146, %v1145
      %vm1148 = vcmp.lt.s32.totalorder %v966, 0
      %v1149 = vsub.s32 0, %v966
      %v1150 = vsel %vm1148, %v1149, %v966
      %v1151 = vshrl.u32 %v1150, 4
      %v1152 = vand.u32 %v1150, 15
      %v1153 = vsub.s32 0, %v1152
      %v1154 = vsel %vm1148, %v1153, %v1152
      %vm1155 = vcmp.lt.s32.totalorder %v967, 0
      %v1156 = vsub.s32 0, %v967
      %v1157 = vsel %vm1155, %v1156, %v967
      %v1158 = vshrl.u32 %v1157, 4
      %v1159 = vand.u32 %v1157, 15
      %v1160 = vsub.s32 0, %v1159
      %v1161 = vsel %vm1155, %v1160, %v1159
      %vm1162 = vcmp.lt.s32.totalorder %v968, 0
      %v1163 = vsub.s32 0, %v968
      %v1164 = vsel %vm1162, %v1163, %v968
      %v1165 = vshrl.u32 %v1164, 4
      %v1166 = vand.u32 %v1164, 15
      %v1167 = vsub.s32 0, %v1166
      %v1168 = vsel %vm1162, %v1167, %v1166
      %vm1169 = vcmp.lt.s32.totalorder %v969, 0
      %v1170 = vsub.s32 0, %v969
      %v1171 = vsel %vm1169, %v1170, %v969
      %v1172 = vshrl.u32 %v1171, 4
      %v1173 = vand.u32 %v1171, 15
      %v1174 = vsub.s32 0, %v1173
      %v1175 = vsel %vm1169, %v1174, %v1173
      %vm1176 = vcmp.lt.s32.totalorder %v970, 0
      %v1177 = vsub.s32 0, %v970
      %v1178 = vsel %vm1176, %v1177, %v970
      %v1179 = vshrl.u32 %v1178, 4
      %v1180 = vand.u32 %v1178, 15
      %v1181 = vsub.s32 0, %v1180
      %v1182 = vsel %vm1176, %v1181, %v1180
      %vm1183 = vcmp.lt.s32.totalorder %v971, 0
      %v1184 = vsub.s32 0, %v971
      %v1185 = vsel %vm1183, %v1184, %v971
      %v1186 = vshrl.u32 %v1185, 4
      %v1187 = vand.u32 %v1185, 15
      %v1188 = vsub.s32 0, %v1187
      %v1189 = vsel %vm1183, %v1188, %v1187
      %vm1190 = vcmp.lt.s32.totalorder %v972, 0
      %v1191 = vsub.s32 0, %v972
      %v1192 = vsel %vm1190, %v1191, %v972
      %v1193 = vshrl.u32 %v1192, 4
      %v1194 = vand.u32 %v1192, 15
      %v1195 = vsub.s32 0, %v1194
      %v1196 = vsel %vm1190, %v1195, %v1194
      %vm1197 = vcmp.lt.s32.totalorder %v973, 0
      %v1198 = vsub.s32 0, %v973
      %v1199 = vsel %vm1197, %v1198, %v973
      %v1200 = vshrl.u32 %v1199, 4
      %v1201 = vand.u32 %v1199, 15
      %v1202 = vsub.s32 0, %v1201
      %v1203 = vsel %vm1197, %v1202, %v1201
      %vm1204 = vcmp.lt.s32.totalorder %v974, 0
      %v1205 = vsub.s32 0, %v974
      %v1206 = vsel %vm1204, %v1205, %v974
      %v1207 = vshrl.u32 %v1206, 4
      %v1208 = vand.u32 %v1206, 15
      %v1209 = vsub.s32 0, %v1208
      %v1210 = vsel %vm1204, %v1209, %v1208
      %vm1211 = vcmp.lt.s32.totalorder %v975, 0
      %v1212 = vsub.s32 0, %v975
      %v1213 = vsel %vm1211, %v1212, %v975
      %v1214 = vshrl.u32 %v1213, 4
      %v1215 = vand.u32 %v1213, 15
      %v1216 = vsub.s32 0, %v1215
      %v1217 = vsel %vm1211, %v1216, %v1215
      %vm1218 = vcmp.lt.s32.totalorder %v976, 0
      %v1219 = vsub.s32 0, %v976
      %v1220 = vsel %vm1218, %v1219, %v976
      %v1221 = vshrl.u32 %v1220, 4
      %v1222 = vand.u32 %v1220, 15
      %v1223 = vsub.s32 0, %v1222
      %v1224 = vsel %vm1218, %v1223, %v1222
      %vm1225 = vcmp.lt.s32.totalorder %v977, 0
      %v1226 = vsub.s32 0, %v977
      %v1227 = vsel %vm1225, %v1226, %v977
      %v1228 = vshrl.u32 %v1227, 4
      %v1229 = vand.u32 %v1227, 15
      %v1230 = vsub.s32 0, %v1229
      %v1231 = vsel %vm1225, %v1230, %v1229
      %vm1232 = vcmp.lt.s32.totalorder %v978, 0
      %v1233 = vsub.s32 0, %v978
      %v1234 = vsel %vm1232, %v1233, %v978
      %v1235 = vshrl.u32 %v1234, 4
      %v1236 = vand.u32 %v1234, 15
      %v1237 = vsub.s32 0, %v1236
      %v1238 = vsel %vm1232, %v1237, %v1236
      %vm1239 = vcmp.lt.s32.totalorder %v979, 0
      %v1240 = vsub.s32 0, %v979
      %v1241 = vsel %vm1239, %v1240, %v979
      %v1242 = vshrl.u32 %v1241, 4
      %v1243 = vand.u32 %v1241, 15
      %v1244 = vsub.s32 0, %v1243
      %v1245 = vsel %vm1239, %v1244, %v1243
      %vm1246 = vcmp.lt.s32.totalorder %v980, 0
      %v1247 = vsub.s32 0, %v980
      %v1248 = vsel %vm1246, %v1247, %v980
      %v1249 = vshrl.u32 %v1248, 4
      %v1250 = vand.u32 %v1248, 15
      %v1251 = vsub.s32 0, %v1250
      %v1252 = vsel %vm1246, %v1251, %v1250
      %vm1253 = vcmp.lt.s32.totalorder %v981, 0
      %v1254 = vsub.s32 0, %v981
      %v1255 = vsel %vm1253, %v1254, %v981
      %v1256 = vshrl.u32 %v1255, 4
      %v1257 = vand.u32 %v1255, 15
      %v1258 = vsub.s32 0, %v1257
      %v1259 = vsel %vm1253, %v1258, %v1257
      %vm1260 = vcmp.lt.s32.totalorder %v982, 0
      %v1261 = vsub.s32 0, %v982
      %v1262 = vsel %vm1260, %v1261, %v982
      %v1263 = vshrl.u32 %v1262, 4
      %v1264 = vand.u32 %v1262, 15
      %v1265 = vsub.s32 0, %v1264
      %v1266 = vsel %vm1260, %v1265, %v1264
      %vm1267 = vcmp.lt.s32.totalorder %v983, 0
      %v1268 = vsub.s32 0, %v983
      %v1269 = vsel %vm1267, %v1268, %v983
      %v1270 = vshrl.u32 %v1269, 4
      %v1271 = vand.u32 %v1269, 15
      %v1272 = vsub.s32 0, %v1271
      %v1273 = vsel %vm1267, %v1272, %v1271
      %vm1274 = vcmp.lt.s32.totalorder %v984, 0
      %v1275 = vsub.s32 0, %v984
      %v1276 = vsel %vm1274, %v1275, %v984
      %v1277 = vshrl.u32 %v1276, 4
      %v1278 = vand.u32 %v1276, 15
      %v1279 = vsub.s32 0, %v1278
      %v1280 = vsel %vm1274, %v1279, %v1278
      %vm1281 = vcmp.lt.s32.totalorder %v985, 0
      %v1282 = vsub.s32 0, %v985
      %v1283 = vsel %vm1281, %v1282, %v985
      %v1284 = vshrl.u32 %v1283, 4
      %v1285 = vand.u32 %v1283, 15
      %v1286 = vsub.s32 0, %v1285
      %v1287 = vsel %vm1281, %v1286, %v1285
      %vm1288 = vcmp.lt.s32.totalorder %v986, 0
      %v1289 = vsub.s32 0, %v986
      %v1290 = vsel %vm1288, %v1289, %v986
      %v1291 = vshrl.u32 %v1290, 4
      %v1292 = vand.u32 %v1290, 15
      %v1293 = vsub.s32 0, %v1292
      %v1294 = vsel %vm1288, %v1293, %v1292
      %vm1295 = vcmp.lt.s32.totalorder %v987, 0
      %v1296 = vsub.s32 0, %v987
      %v1297 = vsel %vm1295, %v1296, %v987
      %v1298 = vshrl.u32 %v1297, 4
      %v1299 = vand.u32 %v1297, 15
      %v1300 = vsub.s32 0, %v1299
      %v1301 = vsel %vm1295, %v1300, %v1299
      %vm1302 = vcmp.lt.s32.totalorder %v988, 0
      %v1303 = vsub.s32 0, %v988
      %v1304 = vsel %vm1302, %v1303, %v988
      %v1305 = vshrl.u32 %v1304, 4
      %v1306 = vand.u32 %v1304, 15
      %v1307 = vsub.s32 0, %v1306
      %v1308 = vsel %vm1302, %v1307, %v1306
      %vm1309 = vcmp.lt.s32.totalorder %v989, 0
      %v1310 = vsub.s32 0, %v989
      %v1311 = vsel %vm1309, %v1310, %v989
      %v1312 = vshrl.u32 %v1311, 4
      %v1313 = vand.u32 %v1311, 15
      %v1314 = vsub.s32 0, %v1313
      %v1315 = vsel %vm1309, %v1314, %v1313
      %vm1316 = vcmp.lt.s32.totalorder %v990, 0
      %v1317 = vsub.s32 0, %v990
      %v1318 = vsel %vm1316, %v1317, %v990
      %v1319 = vshrl.u32 %v1318, 4
      %v1320 = vand.u32 %v1318, 15
      %v1321 = vsub.s32 0, %v1320
      %v1322 = vsel %vm1316, %v1321, %v1320
      %vm1323 = vcmp.lt.s32.totalorder %v991, 0
      %v1324 = vsub.s32 0, %v991
      %v1325 = vsel %vm1323, %v1324, %v991
      %v1326 = vshrl.u32 %v1325, 4
      %v1327 = vand.u32 %v1325, 15
      %v1328 = vsub.s32 0, %v1327
      %v1329 = vsel %vm1323, %v1328, %v1327
      %vm1330 = vcmp.lt.s32.totalorder %v992, 0
      %v1331 = vsub.s32 0, %v992
      %v1332 = vsel %vm1330, %v1331, %v992
      %v1333 = vshrl.u32 %v1332, 4
      %v1334 = vand.u32 %v1332, 15
      %v1335 = vsub.s32 0, %v1334
      %v1336 = vsel %vm1330, %v1335, %v1334
      %vm1337 = vcmp.lt.s32.totalorder %v993, 0
      %v1338 = vsub.s32 0, %v993
      %v1339 = vsel %vm1337, %v1338, %v993
      %v1340 = vshrl.u32 %v1339, 4
      %v1341 = vand.u32 %v1339, 15
      %v1342 = vsub.s32 0, %v1341
      %v1343 = vsel %vm1337, %v1342, %v1341
      %vm1344 = vcmp.lt.s32.totalorder %v994, 0
      %v1345 = vsub.s32 0, %v994
      %v1346 = vsel %vm1344, %v1345, %v994
      %v1347 = vshrl.u32 %v1346, 4
      %v1348 = vand.u32 %v1346, 15
      %v1349 = vsub.s32 0, %v1348
      %v1350 = vsel %vm1344, %v1349, %v1348
      %vm1351 = vcmp.lt.s32.totalorder %v995, 0
      %v1352 = vsub.s32 0, %v995
      %v1353 = vsel %vm1351, %v1352, %v995
      %v1354 = vshrl.u32 %v1353, 4
      %v1355 = vand.u32 %v1353, 15
      %v1356 = vsub.s32 0, %v1355
      %v1357 = vsel %vm1351, %v1356, %v1355
      %vm1358 = vcmp.lt.s32.totalorder %v996, 0
      %v1359 = vsub.s32 0, %v996
      %v1360 = vsel %vm1358, %v1359, %v996
      %v1361 = vshrl.u32 %v1360, 4
      %v1362 = vand.u32 %v1360, 15
      %v1363 = vsub.s32 0, %v1362
      %v1364 = vsel %vm1358, %v1363, %v1362
      %vm1365 = vcmp.lt.s32.totalorder %v997, 0
      %v1366 = vsub.s32 0, %v997
      %v1367 = vsel %vm1365, %v1366, %v997
      %v1368 = vshrl.u32 %v1367, 4
      %v1369 = vand.u32 %v1367, 15
      %v1370 = vsub.s32 0, %v1369
      %v1371 = vsel %vm1365, %v1370, %v1369
      %vm1372 = vcmp.lt.s32.totalorder %v998, 0
      %v1373 = vsub.s32 0, %v998
      %v1374 = vsel %vm1372, %v1373, %v998
      %v1375 = vshrl.u32 %v1374, 4
      %v1376 = vand.u32 %v1374, 15
      %v1377 = vsub.s32 0, %v1376
      %v1378 = vsel %vm1372, %v1377, %v1376
      %vm1379 = vcmp.lt.s32.totalorder %v999, 0
      %v1380 = vsub.s32 0, %v999
      %v1381 = vsel %vm1379, %v1380, %v999
      %v1382 = vshrl.u32 %v1381, 4
      %v1383 = vand.u32 %v1381, 15
      %v1384 = vsub.s32 0, %v1383
      %v1385 = vsel %vm1379, %v1384, %v1383
      %vm1386 = vcmp.lt.s32.totalorder %v1000, 0
      %v1387 = vsub.s32 0, %v1000
      %v1388 = vsel %vm1386, %v1387, %v1000
      %v1389 = vshrl.u32 %v1388, 4
      %v1390 = vand.u32 %v1388, 15
      %v1391 = vsub.s32 0, %v1390
      %v1392 = vsel %vm1386, %v1391, %v1390
      %vm1393 = vcmp.lt.s32.totalorder %v1001, 0
      %v1394 = vsub.s32 0, %v1001
      %v1395 = vsel %vm1393, %v1394, %v1001
      %v1396 = vshrl.u32 %v1395, 4
      %v1397 = vand.u32 %v1395, 15
      %v1398 = vsub.s32 0, %v1397
      %v1399 = vsel %vm1393, %v1398, %v1397
      %vm1400 = vcmp.lt.s32.totalorder %v1002, 0
      %v1401 = vsub.s32 0, %v1002
      %v1402 = vsel %vm1400, %v1401, %v1002
      %v1403 = vshrl.u32 %v1402, 4
      %v1404 = vand.u32 %v1402, 15
      %v1405 = vsub.s32 0, %v1404
      %v1406 = vsel %vm1400, %v1405, %v1404
      %vm1407 = vcmp.lt.s32.totalorder %v1003, 0
      %v1408 = vsub.s32 0, %v1003
      %v1409 = vsel %vm1407, %v1408, %v1003
      %v1410 = vshrl.u32 %v1409, 4
      %v1411 = vand.u32 %v1409, 15
      %v1412 = vsub.s32 0, %v1411
      %v1413 = vsel %vm1407, %v1412, %v1411
      %vm1414 = vcmp.lt.s32.totalorder %v1004, 0
      %v1415 = vsub.s32 0, %v1004
      %v1416 = vsel %vm1414, %v1415, %v1004
      %v1417 = vshrl.u32 %v1416, 4
      %v1418 = vand.u32 %v1416, 15
      %v1419 = vsub.s32 0, %v1418
      %v1420 = vsel %vm1414, %v1419, %v1418
      %vm1421 = vcmp.lt.s32.totalorder %v1005, 0
      %v1422 = vsub.s32 0, %v1005
      %v1423 = vsel %vm1421, %v1422, %v1005
      %v1424 = vshrl.u32 %v1423, 4
      %v1425 = vand.u32 %v1423, 15
      %v1426 = vsub.s32 0, %v1425
      %v1427 = vsel %vm1421, %v1426, %v1425
      %vm1428 = vcmp.lt.s32.totalorder %v1006, 0
      %v1429 = vsub.s32 0, %v1006
      %v1430 = vsel %vm1428, %v1429, %v1006
      %v1431 = vshrl.u32 %v1430, 4
      %v1432 = vand.u32 %v1430, 15
      %v1433 = vsub.s32 0, %v1432
      %v1434 = vsel %vm1428, %v1433, %v1432
      %vm1435 = vcmp.lt.s32.totalorder %v1007, 0
      %v1436 = vsub.s32 0, %v1007
      %v1437 = vsel %vm1435, %v1436, %v1007
      %v1438 = vshrl.u32 %v1437, 4
      %v1439 = vand.u32 %v1437, 15
      %v1440 = vsub.s32 0, %v1439
      %v1441 = vsel %vm1435, %v1440, %v1439
      %vm1442 = vcmp.lt.s32.totalorder %v1008, 0
      %v1443 = vsub.s32 0, %v1008
      %v1444 = vsel %vm1442, %v1443, %v1008
      %v1445 = vshrl.u32 %v1444, 4
      %v1446 = vand.u32 %v1444, 15
      %v1447 = vsub.s32 0, %v1446
      %v1448 = vsel %vm1442, %v1447, %v1446
      %vm1449 = vcmp.lt.s32.totalorder %v1009, 0
      %v1450 = vsub.s32 0, %v1009
      %v1451 = vsel %vm1449, %v1450, %v1009
      %v1452 = vshrl.u32 %v1451, 4
      %v1453 = vand.u32 %v1451, 15
      %v1454 = vsub.s32 0, %v1453
      %v1455 = vsel %vm1449, %v1454, %v1453
      %vm1456 = vcmp.lt.s32.totalorder %v1010, 0
      %v1457 = vsub.s32 0, %v1010
      %v1458 = vsel %vm1456, %v1457, %v1010
      %v1459 = vshrl.u32 %v1458, 4
      %v1460 = vand.u32 %v1458, 15
      %v1461 = vsub.s32 0, %v1460
      %v1462 = vsel %vm1456, %v1461, %v1460
      %vm1463 = vcmp.lt.s32.totalorder %v1011, 0
      %v1464 = vsub.s32 0, %v1011
      %v1465 = vsel %vm1463, %v1464, %v1011
      %v1466 = vshrl.u32 %v1465, 4
      %v1467 = vand.u32 %v1465, 15
      %v1468 = vsub.s32 0, %v1467
      %v1469 = vsel %vm1463, %v1468, %v1467
      %vm1470 = vcmp.lt.s32.totalorder %v1012, 0
      %v1471 = vsub.s32 0, %v1012
      %v1472 = vsel %vm1470, %v1471, %v1012
      %v1473 = vshrl.u32 %v1472, 4
      %v1474 = vand.u32 %v1472, 15
      %v1475 = vsub.s32 0, %v1474
      %v1476 = vsel %vm1470, %v1475, %v1474
      %vm1477 = vcmp.lt.s32.totalorder %v1013, 0
      %v1478 = vsub.s32 0, %v1013
      %v1479 = vsel %vm1477, %v1478, %v1013
      %v1480 = vshrl.u32 %v1479, 4
      %v1481 = vand.u32 %v1479, 15
      %v1482 = vsub.s32 0, %v1481
      %v1483 = vsel %vm1477, %v1482, %v1481
      %vm1484 = vcmp.lt.s32.totalorder %v1014, 0
      %v1485 = vsub.s32 0, %v1014
      %v1486 = vsel %vm1484, %v1485, %v1014
      %v1487 = vshrl.u32 %v1486, 4
      %v1488 = vand.u32 %v1486, 15
      %v1489 = vsub.s32 0, %v1488
      %v1490 = vsel %vm1484, %v1489, %v1488
      %vm1491 = vcmp.ne.s32.totalorder %v1021, 0
      %vm1492 = vcmp.ne.s32.totalorder %v1028, 0
      %vm1493 = vcmp.ne.s32.totalorder %v1035, 0
      %vm1494 = vcmp.ne.s32.totalorder %v1042, 0
      %vm1495 = vcmp.ne.s32.totalorder %v1049, 0
      %vm1496 = vcmp.ne.s32.totalorder %v1056, 0
      %vm1497 = vcmp.ne.s32.totalorder %v1063, 0
      %vm1498 = vcmp.ne.s32.totalorder %v1070, 0
      %vm1499 = vcmp.ne.s32.totalorder %v1077, 0
      %vm1500 = vcmp.ne.s32.totalorder %v1084, 0
      %vm1501 = vcmp.ne.s32.totalorder %v1091, 0
      %vm1502 = vcmp.ne.s32.totalorder %v1098, 0
      %vm1503 = vcmp.ne.s32.totalorder %v1105, 0
      %vm1504 = vcmp.ne.s32.totalorder %v1112, 0
      %vm1505 = vcmp.ne.s32.totalorder %v1119, 0
      %vm1506 = vcmp.ne.s32.totalorder %v1126, 0
      %vm1507 = vcmp.ne.s32.totalorder %v1133, 0
      %vm1508 = vcmp.ne.s32.totalorder %v1140, 0
      %vm1509 = vcmp.ne.s32.totalorder %v1147, 0
      %vm1510 = vcmp.ne.s32.totalorder %v1154, 0
      %vm1511 = vcmp.ne.s32.totalorder %v1161, 0
      %vm1512 = vcmp.ne.s32.totalorder %v1168, 0
      %vm1513 = vcmp.ne.s32.totalorder %v1175, 0
      %vm1514 = vcmp.ne.s32.totalorder %v1182, 0
      %vm1515 = vcmp.ne.s32.totalorder %v1189, 0
      %vm1516 = vcmp.ne.s32.totalorder %v1196, 0
      %vm1517 = vcmp.ne.s32.totalorder %v1203, 0
      %vm1518 = vcmp.ne.s32.totalorder %v1210, 0
      %vm1519 = vcmp.ne.s32.totalorder %v1217, 0
      %vm1520 = vcmp.ne.s32.totalorder %v1224, 0
      %vm1521 = vcmp.ne.s32.totalorder %v1231, 0
      %vm1522 = vcmp.ne.s32.totalorder %v1238, 0
      %vm1523 = vcmp.ne.s32.totalorder %v1245, 0
      %vm1524 = vcmp.ne.s32.totalorder %v1252, 0
      %vm1525 = vcmp.ne.s32.totalorder %v1259, 0
      %vm1526 = vcmp.ne.s32.totalorder %v1266, 0
      %vm1527 = vcmp.ne.s32.totalorder %v1273, 0
      %vm1528 = vcmp.ne.s32.totalorder %v1280, 0
      %vm1529 = vcmp.ne.s32.totalorder %v1287, 0
      %vm1530 = vcmp.ne.s32.totalorder %v1294, 0
      %vm1531 = vcmp.ne.s32.totalorder %v1301, 0
      %vm1532 = vcmp.ne.s32.totalorder %v1308, 0
      %vm1533 = vcmp.ne.s32.totalorder %v1315, 0
      %vm1534 = vcmp.ne.s32.totalorder %v1322, 0
      %vm1535 = vcmp.ne.s32.totalorder %v1329, 0
      %vm1536 = vcmp.ne.s32.totalorder %v1336, 0
      %vm1537 = vcmp.ne.s32.totalorder %v1343, 0
      %vm1538 = vcmp.ne.s32.totalorder %v1350, 0
      %vm1539 = vcmp.ne.s32.totalorder %v1357, 0
      %vm1540 = vcmp.ne.s32.totalorder %v1364, 0
      %vm1541 = vcmp.ne.s32.totalorder %v1371, 0
      %vm1542 = vcmp.ne.s32.totalorder %v1378, 0
      %vm1543 = vcmp.ne.s32.totalorder %v1385, 0
      %vm1544 = vcmp.ne.s32.totalorder %v1392, 0
      %vm1545 = vcmp.ne.s32.totalorder %v1399, 0
      %vm1546 = vcmp.ne.s32.totalorder %v1406, 0
      %vm1547 = vcmp.ne.s32.totalorder %v1413, 0
      %vm1548 = vcmp.ne.s32.totalorder %v1420, 0
      %vm1549 = vcmp.ne.s32.totalorder %v1427, 0
      %vm1550 = vcmp.ne.s32.totalorder %v1434, 0
      %vm1551 = vcmp.ne.s32.totalorder %v1441, 0
      %vm1552 = vcmp.ne.s32.totalorder %v1448, 0
      %vm1553 = vcmp.ne.s32.totalorder %v1455, 0
      %vm1554 = vcmp.ne.s32.totalorder %v1462, 0
      %vm1555 = vcmp.ne.s32.totalorder %v1469, 0
      %vm1556 = vcmp.ne.s32.totalorder %v1476, 0
      %vm1557 = vcmp.ne.s32.totalorder %v1483, 0
      %vm1558 = vcmp.ne.s32.totalorder %v1490, 0
      %vm1559 = vcmp.lt.s32.totalorder %v1021, 0
      %vm1560 = vcmp.lt.s32.totalorder %v1028, 0
      %vm1561 = vcmp.lt.s32.totalorder %v1035, 0
      %vm1562 = vcmp.lt.s32.totalorder %v1042, 0
      %vm1563 = vcmp.lt.s32.totalorder %v1049, 0
      %vm1564 = vcmp.lt.s32.totalorder %v1056, 0
      %vm1565 = vcmp.lt.s32.totalorder %v1063, 0
      %vm1566 = vcmp.lt.s32.totalorder %v1070, 0
      %vm1567 = vcmp.lt.s32.totalorder %v1077, 0
      %vm1568 = vcmp.lt.s32.totalorder %v1084, 0
      %vm1569 = vcmp.lt.s32.totalorder %v1091, 0
      %vm1570 = vcmp.lt.s32.totalorder %v1098, 0
      %vm1571 = vcmp.lt.s32.totalorder %v1105, 0
      %vm1572 = vcmp.lt.s32.totalorder %v1112, 0
      %vm1573 = vcmp.lt.s32.totalorder %v1119, 0
      %vm1574 = vcmp.lt.s32.totalorder %v1126, 0
      %vm1575 = vcmp.lt.s32.totalorder %v1133, 0
      %vm1576 = vcmp.lt.s32.totalorder %v1140, 0
      %vm1577 = vcmp.lt.s32.totalorder %v1147, 0
      %vm1578 = vcmp.lt.s32.totalorder %v1154, 0
      %vm1579 = vcmp.lt.s32.totalorder %v1161, 0
      %vm1580 = vcmp.lt.s32.totalorder %v1168, 0
      %vm1581 = vcmp.lt.s32.totalorder %v1175, 0
      %vm1582 = vcmp.lt.s32.totalorder %v1182, 0
      %vm1583 = vcmp.lt.s32.totalorder %v1189, 0
      %vm1584 = vcmp.lt.s32.totalorder %v1196, 0
      %vm1585 = vcmp.lt.s32.totalorder %v1203, 0
      %vm1586 = vcmp.lt.s32.totalorder %v1210, 0
      %vm1587 = vcmp.lt.s32.totalorder %v1217, 0
      %vm1588 = vcmp.lt.s32.totalorder %v1224, 0
      %vm1589 = vcmp.lt.s32.totalorder %v1231, 0
      %vm1590 = vcmp.lt.s32.totalorder %v1238, 0
      %vm1591 = vcmp.lt.s32.totalorder %v1245, 0
      %vm1592 = vcmp.lt.s32.totalorder %v1252, 0
      %vm1593 = vcmp.lt.s32.totalorder %v1259, 0
      %vm1594 = vcmp.lt.s32.totalorder %v1266, 0
      %vm1595 = vcmp.lt.s32.totalorder %v1273, 0
      %vm1596 = vcmp.lt.s32.totalorder %v1280, 0
      %vm1597 = vcmp.lt.s32.totalorder %v1287, 0
      %vm1598 = vcmp.lt.s32.totalorder %v1294, 0
      %vm1599 = vcmp.lt.s32.totalorder %v1301, 0
      %vm1600 = vcmp.lt.s32.totalorder %v1308, 0
      %vm1601 = vcmp.lt.s32.totalorder %v1315, 0
      %vm1602 = vcmp.lt.s32.totalorder %v1322, 0
      %vm1603 = vcmp.lt.s32.totalorder %v1329, 0
      %vm1604 = vcmp.lt.s32.totalorder %v1336, 0
      %vm1605 = vcmp.lt.s32.totalorder %v1343, 0
      %vm1606 = vcmp.lt.s32.totalorder %v1350, 0
      %vm1607 = vcmp.lt.s32.totalorder %v1357, 0
      %vm1608 = vcmp.lt.s32.totalorder %v1364, 0
      %vm1609 = vcmp.lt.s32.totalorder %v1371, 0
      %vm1610 = vcmp.lt.s32.totalorder %v1378, 0
      %vm1611 = vcmp.lt.s32.totalorder %v1385, 0
      %vm1612 = vcmp.lt.s32.totalorder %v1392, 0
      %vm1613 = vcmp.lt.s32.totalorder %v1399, 0
      %vm1614 = vcmp.lt.s32.totalorder %v1406, 0
      %vm1615 = vcmp.lt.s32.totalorder %v1413, 0
      %vm1616 = vcmp.lt.s32.totalorder %v1420, 0
      %vm1617 = vcmp.lt.s32.totalorder %v1427, 0
      %vm1618 = vcmp.lt.s32.totalorder %v1434, 0
      %vm1619 = vcmp.lt.s32.totalorder %v1441, 0
      %vm1620 = vcmp.lt.s32.totalorder %v1448, 0
      %vm1621 = vcmp.lt.s32.totalorder %v1455, 0
      %vm1622 = vcmp.lt.s32.totalorder %v1462, 0
      %vm1623 = vcmp.lt.s32.totalorder %v1469, 0
      %vm1624 = vcmp.lt.s32.totalorder %v1476, 0
      %vm1625 = vcmp.lt.s32.totalorder %v1483, 0
      %vm1626 = vcmp.lt.s32.totalorder %v1490, 0
      %vm1627 = vmand %vm1559, %vm1491
      %vm1628 = vmand %vm1560, %vm1492
      %vm1629 = vmand %vm1561, %vm1493
      %vm1630 = vmand %vm1562, %vm1494
      %vm1631 = vmand %vm1563, %vm1495
      %vm1632 = vmand %vm1564, %vm1496
      %vm1633 = vmand %vm1565, %vm1497
      %vm1634 = vmand %vm1566, %vm1498
      %vm1635 = vmand %vm1567, %vm1499
      %vm1636 = vmand %vm1568, %vm1500
      %vm1637 = vmand %vm1569, %vm1501
      %vm1638 = vmand %vm1570, %vm1502
      %vm1639 = vmand %vm1571, %vm1503
      %vm1640 = vmand %vm1572, %vm1504
      %vm1641 = vmand %vm1573, %vm1505
      %vm1642 = vmand %vm1574, %vm1506
      %vm1643 = vmand %vm1575, %vm1507
      %vm1644 = vmand %vm1576, %vm1508
      %vm1645 = vmand %vm1577, %vm1509
      %vm1646 = vmand %vm1578, %vm1510
      %vm1647 = vmand %vm1579, %vm1511
      %vm1648 = vmand %vm1580, %vm1512
      %vm1649 = vmand %vm1581, %vm1513
      %vm1650 = vmand %vm1582, %vm1514
      %vm1651 = vmand %vm1583, %vm1515
      %vm1652 = vmand %vm1584, %vm1516
      %vm1653 = vmand %vm1585, %vm1517
      %vm1654 = vmand %vm1586, %vm1518
      %vm1655 = vmand %vm1587, %vm1519
      %vm1656 = vmand %vm1588, %vm1520
      %vm1657 = vmand %vm1589, %vm1521
      %vm1658 = vmand %vm1590, %vm1522
      %vm1659 = vmand %vm1591, %vm1523
      %vm1660 = vmand %vm1592, %vm1524
      %vm1661 = vmand %vm1593, %vm1525
      %vm1662 = vmand %vm1594, %vm1526
      %vm1663 = vmand %vm1595, %vm1527
      %vm1664 = vmand %vm1596, %vm1528
      %vm1665 = vmand %vm1597, %vm1529
      %vm1666 = vmand %vm1598, %vm1530
      %vm1667 = vmand %vm1599, %vm1531
      %vm1668 = vmand %vm1600, %vm1532
      %vm1669 = vmand %vm1601, %vm1533
      %vm1670 = vmand %vm1602, %vm1534
      %vm1671 = vmand %vm1603, %vm1535
      %vm1672 = vmand %vm1604, %vm1536
      %vm1673 = vmand %vm1605, %vm1537
      %vm1674 = vmand %vm1606, %vm1538
      %vm1675 = vmand %vm1607, %vm1539
      %vm1676 = vmand %vm1608, %vm1540
      %vm1677 = vmand %vm1609, %vm1541
      %vm1678 = vmand %vm1610, %vm1542
      %vm1679 = vmand %vm1611, %vm1543
      %vm1680 = vmand %vm1612, %vm1544
      %vm1681 = vmand %vm1613, %vm1545
      %vm1682 = vmand %vm1614, %vm1546
      %vm1683 = vmand %vm1615, %vm1547
      %vm1684 = vmand %vm1616, %vm1548
      %vm1685 = vmand %vm1617, %vm1549
      %vm1686 = vmand %vm1618, %vm1550
      %vm1687 = vmand %vm1619, %vm1551
      %vm1688 = vmand %vm1620, %vm1552
      %vm1689 = vmand %vm1621, %vm1553
      %vm1690 = vmand %vm1622, %vm1554
      %vm1691 = vmand %vm1623, %vm1555
      %vm1692 = vmand %vm1624, %vm1556
      %vm1693 = vmand %vm1625, %vm1557
      %vm1694 = vmand %vm1626, %vm1558
      %v1695 = vadd.s32 %v1021, 16
      %v1696 = vadd.s32 %v1028, 16
      %v1697 = vadd.s32 %v1035, 16
      %v1698 = vadd.s32 %v1042, 16
      %v1699 = vadd.s32 %v1049, 16
      %v1700 = vadd.s32 %v1056, 16
      %v1701 = vadd.s32 %v1063, 16
      %v1702 = vadd.s32 %v1070, 16
      %v1703 = vadd.s32 %v1077, 16
      %v1704 = vadd.s32 %v1084, 16
      %v1705 = vadd.s32 %v1091, 16
      %v1706 = vadd.s32 %v1098, 16
      %v1707 = vadd.s32 %v1105, 16
      %v1708 = vadd.s32 %v1112, 16
      %v1709 = vadd.s32 %v1119, 16
      %v1710 = vadd.s32 %v1126, 16
      %v1711 = vadd.s32 %v1133, 16
      %v1712 = vadd.s32 %v1140, 16
      %v1713 = vadd.s32 %v1147, 16
      %v1714 = vadd.s32 %v1154, 16
      %v1715 = vadd.s32 %v1161, 16
      %v1716 = vadd.s32 %v1168, 16
      %v1717 = vadd.s32 %v1175, 16
      %v1718 = vadd.s32 %v1182, 16
      %v1719 = vadd.s32 %v1189, 16
      %v1720 = vadd.s32 %v1196, 16
      %v1721 = vadd.s32 %v1203, 16
      %v1722 = vadd.s32 %v1210, 16
      %v1723 = vadd.s32 %v1217, 16
      %v1724 = vadd.s32 %v1224, 16
      %v1725 = vadd.s32 %v1231, 16
      %v1726 = vadd.s32 %v1238, 16
      %v1727 = vadd.s32 %v1245, 16
      %v1728 = vadd.s32 %v1252, 16
      %v1729 = vadd.s32 %v1259, 16
      %v1730 = vadd.s32 %v1266, 16
      %v1731 = vadd.s32 %v1273, 16
      %v1732 = vadd.s32 %v1280, 16
      %v1733 = vadd.s32 %v1287, 16
      %v1734 = vadd.s32 %v1294, 16
      %v1735 = vadd.s32 %v1301, 16
      %v1736 = vadd.s32 %v1308, 16
      %v1737 = vadd.s32 %v1315, 16
      %v1738 = vadd.s32 %v1322, 16
      %v1739 = vadd.s32 %v1329, 16
      %v1740 = vadd.s32 %v1336, 16
      %v1741 = vadd.s32 %v1343, 16
      %v1742 = vadd.s32 %v1350, 16
      %v1743 = vadd.s32 %v1357, 16
      %v1744 = vadd.s32 %v1364, 16
      %v1745 = vadd.s32 %v1371, 16
      %v1746 = vadd.s32 %v1378, 16
      %v1747 = vadd.s32 %v1385, 16
      %v1748 = vadd.s32 %v1392, 16
      %v1749 = vadd.s32 %v1399, 16
      %v1750 = vadd.s32 %v1406, 16
      %v1751 = vadd.s32 %v1413, 16
      %v1752 = vadd.s32 %v1420, 16
      %v1753 = vadd.s32 %v1427, 16
      %v1754 = vadd.s32 %v1434, 16
      %v1755 = vadd.s32 %v1441, 16
      %v1756 = vadd.s32 %v1448, 16
      %v1757 = vadd.s32 %v1455, 16
      %v1758 = vadd.s32 %v1462, 16
      %v1759 = vadd.s32 %v1469, 16
      %v1760 = vadd.s32 %v1476, 16
      %v1761 = vadd.s32 %v1483, 16
      %v1762 = vadd.s32 %v1490, 16
      %v1763 = vsel %vm1627, %v1695, %v1021
      %v1764 = vsel %vm1628, %v1696, %v1028
      %v1765 = vsel %vm1629, %v1697, %v1035
      %v1766 = vsel %vm1630, %v1698, %v1042
      %v1767 = vsel %vm1631, %v1699, %v1049
      %v1768 = vsel %vm1632, %v1700, %v1056
      %v1769 = vsel %vm1633, %v1701, %v1063
      %v1770 = vsel %vm1634, %v1702, %v1070
      %v1771 = vsel %vm1635, %v1703, %v1077
      %v1772 = vsel %vm1636, %v1704, %v1084
      %v1773 = vsel %vm1637, %v1705, %v1091
      %v1774 = vsel %vm1638, %v1706, %v1098
      %v1775 = vsel %vm1639, %v1707, %v1105
      %v1776 = vsel %vm1640, %v1708, %v1112
      %v1777 = vsel %vm1641, %v1709, %v1119
      %v1778 = vsel %vm1642, %v1710, %v1126
      %v1779 = vsel %vm1643, %v1711, %v1133
      %v1780 = vsel %vm1644, %v1712, %v1140
      %v1781 = vsel %vm1645, %v1713, %v1147
      %v1782 = vsel %vm1646, %v1714, %v1154
      %v1783 = vsel %vm1647, %v1715, %v1161
      %v1784 = vsel %vm1648, %v1716, %v1168
      %v1785 = vsel %vm1649, %v1717, %v1175
      %v1786 = vsel %vm1650, %v1718, %v1182
      %v1787 = vsel %vm1651, %v1719, %v1189
      %v1788 = vsel %vm1652, %v1720, %v1196
      %v1789 = vsel %vm1653, %v1721, %v1203
      %v1790 = vsel %vm1654, %v1722, %v1210
      %v1791 = vsel %vm1655, %v1723, %v1217
      %v1792 = vsel %vm1656, %v1724, %v1224
      %v1793 = vsel %vm1657, %v1725, %v1231
      %v1794 = vsel %vm1658, %v1726, %v1238
      %v1795 = vsel %vm1659, %v1727, %v1245
      %v1796 = vsel %vm1660, %v1728, %v1252
      %v1797 = vsel %vm1661, %v1729, %v1259
      %v1798 = vsel %vm1662, %v1730, %v1266
      %v1799 = vsel %vm1663, %v1731, %v1273
      %v1800 = vsel %vm1664, %v1732, %v1280
      %v1801 = vsel %vm1665, %v1733, %v1287
      %v1802 = vsel %vm1666, %v1734, %v1294
      %v1803 = vsel %vm1667, %v1735, %v1301
      %v1804 = vsel %vm1668, %v1736, %v1308
      %v1805 = vsel %vm1669, %v1737, %v1315
      %v1806 = vsel %vm1670, %v1738, %v1322
      %v1807 = vsel %vm1671, %v1739, %v1329
      %v1808 = vsel %vm1672, %v1740, %v1336
      %v1809 = vsel %vm1673, %v1741, %v1343
      %v1810 = vsel %vm1674, %v1742, %v1350
      %v1811 = vsel %vm1675, %v1743, %v1357
      %v1812 = vsel %vm1676, %v1744, %v1364
      %v1813 = vsel %vm1677, %v1745, %v1371
      %v1814 = vsel %vm1678, %v1746, %v1378
      %v1815 = vsel %vm1679, %v1747, %v1385
      %v1816 = vsel %vm1680, %v1748, %v1392
      %v1817 = vsel %vm1681, %v1749, %v1399
      %v1818 = vsel %vm1682, %v1750, %v1406
      %v1819 = vsel %vm1683, %v1751, %v1413
      %v1820 = vsel %vm1684, %v1752, %v1420
      %v1821 = vsel %vm1685, %v1753, %v1427
      %v1822 = vsel %vm1686, %v1754, %v1434
      %v1823 = vsel %vm1687, %v1755, %v1441
      %v1824 = vsel %vm1688, %v1756, %v1448
      %v1825 = vsel %vm1689, %v1757, %v1455
      %v1826 = vsel %vm1690, %v1758, %v1462
      %v1827 = vsel %vm1691, %v1759, %v1469
      %v1828 = vsel %vm1692, %v1760, %v1476
      %v1829 = vsel %vm1693, %v1761, %v1483
      %v1830 = vsel %vm1694, %v1762, %v1490
      %vm1831 = vcmp.ge.s32.totalorder %v1763, 1
      %vm1832 = vcmp.ge.s32.totalorder %v1764, 1
      %vm1833 = vcmp.ge.s32.totalorder %v1765, 1
      %vm1834 = vcmp.ge.s32.totalorder %v1766, 1
      %vm1835 = vcmp.ge.s32.totalorder %v1767, 1
      %vm1836 = vcmp.ge.s32.totalorder %v1768, 1
      %vm1837 = vcmp.ge.s32.totalorder %v1769, 1
      %vm1838 = vcmp.ge.s32.totalorder %v1770, 1
      %vm1839 = vcmp.ge.s32.totalorder %v1771, 1
      %vm1840 = vcmp.ge.s32.totalorder %v1772, 1
      %vm1841 = vcmp.ge.s32.totalorder %v1773, 1
      %vm1842 = vcmp.ge.s32.totalorder %v1774, 1
      %vm1843 = vcmp.ge.s32.totalorder %v1775, 1
      %vm1844 = vcmp.ge.s32.totalorder %v1776, 1
      %vm1845 = vcmp.ge.s32.totalorder %v1777, 1
      %vm1846 = vcmp.ge.s32.totalorder %v1778, 1
      %vm1847 = vcmp.ge.s32.totalorder %v1779, 1
      %vm1848 = vcmp.ge.s32.totalorder %v1780, 1
      %vm1849 = vcmp.ge.s32.totalorder %v1781, 1
      %vm1850 = vcmp.ge.s32.totalorder %v1782, 1
      %vm1851 = vcmp.ge.s32.totalorder %v1783, 1
      %vm1852 = vcmp.ge.s32.totalorder %v1784, 1
      %vm1853 = vcmp.ge.s32.totalorder %v1785, 1
      %vm1854 = vcmp.ge.s32.totalorder %v1786, 1
      %vm1855 = vcmp.ge.s32.totalorder %v1787, 1
      %vm1856 = vcmp.ge.s32.totalorder %v1788, 1
      %vm1857 = vcmp.ge.s32.totalorder %v1789, 1
      %vm1858 = vcmp.ge.s32.totalorder %v1790, 1
      %vm1859 = vcmp.ge.s32.totalorder %v1791, 1
      %vm1860 = vcmp.ge.s32.totalorder %v1792, 1
      %vm1861 = vcmp.ge.s32.totalorder %v1793, 1
      %vm1862 = vcmp.ge.s32.totalorder %v1794, 1
      %vm1863 = vcmp.ge.s32.totalorder %v1795, 1
      %vm1864 = vcmp.ge.s32.totalorder %v1796, 1
      %vm1865 = vcmp.ge.s32.totalorder %v1797, 1
      %vm1866 = vcmp.ge.s32.totalorder %v1798, 1
      %vm1867 = vcmp.ge.s32.totalorder %v1799, 1
      %vm1868 = vcmp.ge.s32.totalorder %v1800, 1
      %vm1869 = vcmp.ge.s32.totalorder %v1801, 1
      %vm1870 = vcmp.ge.s32.totalorder %v1802, 1
      %vm1871 = vcmp.ge.s32.totalorder %v1803, 1
      %vm1872 = vcmp.ge.s32.totalorder %v1804, 1
      %vm1873 = vcmp.ge.s32.totalorder %v1805, 1
      %vm1874 = vcmp.ge.s32.totalorder %v1806, 1
      %vm1875 = vcmp.ge.s32.totalorder %v1807, 1
      %vm1876 = vcmp.ge.s32.totalorder %v1808, 1
      %vm1877 = vcmp.ge.s32.totalorder %v1809, 1
      %vm1878 = vcmp.ge.s32.totalorder %v1810, 1
      %vm1879 = vcmp.ge.s32.totalorder %v1811, 1
      %vm1880 = vcmp.ge.s32.totalorder %v1812, 1
      %vm1881 = vcmp.ge.s32.totalorder %v1813, 1
      %vm1882 = vcmp.ge.s32.totalorder %v1814, 1
      %vm1883 = vcmp.ge.s32.totalorder %v1815, 1
      %vm1884 = vcmp.ge.s32.totalorder %v1816, 1
      %vm1885 = vcmp.ge.s32.totalorder %v1817, 1
      %vm1886 = vcmp.ge.s32.totalorder %v1818, 1
      %vm1887 = vcmp.ge.s32.totalorder %v1819, 1
      %vm1888 = vcmp.ge.s32.totalorder %v1820, 1
      %vm1889 = vcmp.ge.s32.totalorder %v1821, 1
      %vm1890 = vcmp.ge.s32.totalorder %v1822, 1
      %vm1891 = vcmp.ge.s32.totalorder %v1823, 1
      %vm1892 = vcmp.ge.s32.totalorder %v1824, 1
      %vm1893 = vcmp.ge.s32.totalorder %v1825, 1
      %vm1894 = vcmp.ge.s32.totalorder %v1826, 1
      %vm1895 = vcmp.ge.s32.totalorder %v1827, 1
      %vm1896 = vcmp.ge.s32.totalorder %v1828, 1
      %vm1897 = vcmp.ge.s32.totalorder %v1829, 1
      %vm1898 = vcmp.ge.s32.totalorder %v1830, 1
      %vm1899 = vcmp.le.s32.totalorder %v1763, 14
      %vm1900 = vcmp.le.s32.totalorder %v1764, 14
      %vm1901 = vcmp.le.s32.totalorder %v1765, 14
      %vm1902 = vcmp.le.s32.totalorder %v1766, 14
      %vm1903 = vcmp.le.s32.totalorder %v1767, 14
      %vm1904 = vcmp.le.s32.totalorder %v1768, 14
      %vm1905 = vcmp.le.s32.totalorder %v1769, 14
      %vm1906 = vcmp.le.s32.totalorder %v1770, 14
      %vm1907 = vcmp.le.s32.totalorder %v1771, 14
      %vm1908 = vcmp.le.s32.totalorder %v1772, 14
      %vm1909 = vcmp.le.s32.totalorder %v1773, 14
      %vm1910 = vcmp.le.s32.totalorder %v1774, 14
      %vm1911 = vcmp.le.s32.totalorder %v1775, 14
      %vm1912 = vcmp.le.s32.totalorder %v1776, 14
      %vm1913 = vcmp.le.s32.totalorder %v1777, 14
      %vm1914 = vcmp.le.s32.totalorder %v1778, 14
      %vm1915 = vcmp.le.s32.totalorder %v1779, 14
      %vm1916 = vcmp.le.s32.totalorder %v1780, 14
      %vm1917 = vcmp.le.s32.totalorder %v1781, 14
      %vm1918 = vcmp.le.s32.totalorder %v1782, 14
      %vm1919 = vcmp.le.s32.totalorder %v1783, 14
      %vm1920 = vcmp.le.s32.totalorder %v1784, 14
      %vm1921 = vcmp.le.s32.totalorder %v1785, 14
      %vm1922 = vcmp.le.s32.totalorder %v1786, 14
      %vm1923 = vcmp.le.s32.totalorder %v1787, 14
      %vm1924 = vcmp.le.s32.totalorder %v1788, 14
      %vm1925 = vcmp.le.s32.totalorder %v1789, 14
      %vm1926 = vcmp.le.s32.totalorder %v1790, 14
      %vm1927 = vcmp.le.s32.totalorder %v1791, 14
      %vm1928 = vcmp.le.s32.totalorder %v1792, 14
      %vm1929 = vcmp.le.s32.totalorder %v1793, 14
      %vm1930 = vcmp.le.s32.totalorder %v1794, 14
      %vm1931 = vcmp.le.s32.totalorder %v1795, 14
      %vm1932 = vcmp.le.s32.totalorder %v1796, 14
      %vm1933 = vcmp.le.s32.totalorder %v1797, 14
      %vm1934 = vcmp.le.s32.totalorder %v1798, 14
      %vm1935 = vcmp.le.s32.totalorder %v1799, 14
      %vm1936 = vcmp.le.s32.totalorder %v1800, 14
      %vm1937 = vcmp.le.s32.totalorder %v1801, 14
      %vm1938 = vcmp.le.s32.totalorder %v1802, 14
      %vm1939 = vcmp.le.s32.totalorder %v1803, 14
      %vm1940 = vcmp.le.s32.totalorder %v1804, 14
      %vm1941 = vcmp.le.s32.totalorder %v1805, 14
      %vm1942 = vcmp.le.s32.totalorder %v1806, 14
      %vm1943 = vcmp.le.s32.totalorder %v1807, 14
      %vm1944 = vcmp.le.s32.totalorder %v1808, 14
      %vm1945 = vcmp.le.s32.totalorder %v1809, 14
      %vm1946 = vcmp.le.s32.totalorder %v1810, 14
      %vm1947 = vcmp.le.s32.totalorder %v1811, 14
      %vm1948 = vcmp.le.s32.totalorder %v1812, 14
      %vm1949 = vcmp.le.s32.totalorder %v1813, 14
      %vm1950 = vcmp.le.s32.totalorder %v1814, 14
      %vm1951 = vcmp.le.s32.totalorder %v1815, 14
      %vm1952 = vcmp.le.s32.totalorder %v1816, 14
      %vm1953 = vcmp.le.s32.totalorder %v1817, 14
      %vm1954 = vcmp.le.s32.totalorder %v1818, 14
      %vm1955 = vcmp.le.s32.totalorder %v1819, 14
      %vm1956 = vcmp.le.s32.totalorder %v1820, 14
      %vm1957 = vcmp.le.s32.totalorder %v1821, 14
      %vm1958 = vcmp.le.s32.totalorder %v1822, 14
      %vm1959 = vcmp.le.s32.totalorder %v1823, 14
      %vm1960 = vcmp.le.s32.totalorder %v1824, 14
      %vm1961 = vcmp.le.s32.totalorder %v1825, 14
      %vm1962 = vcmp.le.s32.totalorder %v1826, 14
      %vm1963 = vcmp.le.s32.totalorder %v1827, 14
      %vm1964 = vcmp.le.s32.totalorder %v1828, 14
      %vm1965 = vcmp.le.s32.totalorder %v1829, 14
      %vm1966 = vcmp.le.s32.totalorder %v1830, 14
      %v1967 = vld [vmem:[#allocation2] sm:$0x80]
      %v1968 = vld [vmem:[#allocation2 + $0x8] sm:$0xff]
      %v1969 = vld [vmem:[#allocation2 + $0x10] sm:$0xff]
      %v1970 = vld [vmem:[#allocation2 + $0x18] sm:$0xff]
      %v1971 = vld [vmem:[#allocation2 + $0x20] sm:$0xff]
      %v1972 = vld [vmem:[#allocation2 + $0x28] sm:$0xff]
      %v1973 = vld [vmem:[#allocation2 + $0x30] sm:$0xff]
      %v1974 = vld [vmem:[#allocation2 + $0x38] sm:$0xff]
      %v1975 = vld [vmem:[#allocation2 + $0x40] sm:$0xff]
      %v1976 = vld [vmem:[#allocation2 + $0x48] sm:$0xff]
      %v1977 = vld [vmem:[#allocation2 + $0x50] sm:$0xff]
      %v1978 = vld [vmem:[#allocation2 + $0x58] sm:$0xff]
      %v1979 = vld [vmem:[#allocation2 + $0x60] sm:$0xff]
      %v1980 = vld [vmem:[#allocation2 + $0x68] sm:$0xff]
      %v1981 = vld [vmem:[#allocation2 + $0x70] sm:$0xff]
      %v1982 = vld [vmem:[#allocation2 + $0x78] sm:$0xff]
      %v1983 = vld [vmem:[#allocation2 + $0x80] sm:$0xff]
      %v1984 = vld [vmem:[#allocation2 + $0x88] sm:$0xff]
      %v1985 = vld [vmem:[#allocation2 + $0x90] sm:$0xff]
      %v1986 = vld [vmem:[#allocation2 + $0x98] sm:$0xff]
      %v1987 = vld [vmem:[#allocation2 + $0xa0] sm:$0xff]
      %v1988 = vld [vmem:[#allocation2 + $0xa8] sm:$0xff]
      %v1989 = vld [vmem:[#allocation2 + $0xb0] sm:$0xff]
      %v1990 = vld [vmem:[#allocation2 + $0xb8] sm:$0xff]
      %v1991 = vld [vmem:[#allocation2 + $0xc0] sm:$0xff]
      %v1992 = vld [vmem:[#allocation2 + $0xc8] sm:$0xff]
      %v1993 = vld [vmem:[#allocation2 + $0xd0] sm:$0xff]
      %v1994 = vld [vmem:[#allocation2 + $0xd8] sm:$0xff]
      %v1995 = vld [vmem:[#allocation2 + $0xe0] sm:$0xff]
      %v1996 = vld [vmem:[#allocation2 + $0xe8] sm:$0xff]
      %v1997 = vld [vmem:[#allocation2 + $0xf0] sm:$0xff]
      %v1998 = vld [vmem:[#allocation2 + $0xf8] sm:$0xff]
      %v1999 = vld [vmem:[#allocation2 + $0x100] sm:$0xff]
      %v2000 = vld [vmem:[#allocation2 + $0x108] sm:$0xff]
      %v2001 = vld [vmem:[#allocation2 + $0x110] sm:$0xff]
      %v2002 = vsel %vm1831, 1, 0
      %v2003 = vsel %vm1832, 1, 0
      %v2004 = vsel %vm1833, 1, 0
      %v2005 = vsel %vm1834, 1, 0
      %v2006 = vsel %vm1835, 1, 0
      %v2007 = vsel %vm1836, 1, 0
      %v2008 = vsel %vm1837, 1, 0
      %v2009 = vsel %vm1838, 1, 0
      %v2010 = vsel %vm1839, 1, 0
      %v2011 = vsel %vm1840, 1, 0
      %v2012 = vsel %vm1841, 1, 0
      %v2013 = vsel %vm1842, 1, 0
      %v2014 = vsel %vm1843, 1, 0
      %v2015 = vsel %vm1844, 1, 0
      %v2016 = vsel %vm1845, 1, 0
      %v2017 = vsel %vm1846, 1, 0
      %v2018 = vsel %vm1847, 1, 0
      %v2019 = vsel %vm1848, 1, 0
      %v2020 = vsel %vm1849, 1, 0
      %v2021 = vsel %vm1850, 1, 0
      %v2022 = vsel %vm1851, 1, 0
      %v2023 = vsel %vm1852, 1, 0
      %v2024 = vsel %vm1853, 1, 0
      %v2025 = vsel %vm1854, 1, 0
      %v2026 = vsel %vm1855, 1, 0
      %v2027 = vsel %vm1856, 1, 0
      %v2028 = vsel %vm1857, 1, 0
      %v2029 = vsel %vm1858, 1, 0
      %v2030 = vsel %vm1859, 1, 0
      %v2031 = vsel %vm1860, 1, 0
      %v2032 = vsel %vm1861, 1, 0
      %v2033 = vsel %vm1862, 1, 0
      %v2034 = vsel %vm1863, 1, 0
      %v2035 = vsel %vm1864, 1, 0
      %v2036 = vsel %vm1865, 1, 0
      %v2037 = vsel %vm1866, 1, 0
      %v2038 = vsel %vm1867, 1, 0
      %v2039 = vsel %vm1868, 1, 0
      %v2040 = vsel %vm1869, 1, 0
      %v2041 = vsel %vm1870, 1, 0
      %v2042 = vsel %vm1871, 1, 0
      %v2043 = vsel %vm1872, 1, 0
      %v2044 = vsel %vm1873, 1, 0
      %v2045 = vsel %vm1874, 1, 0
      %v2046 = vsel %vm1875, 1, 0
      %v2047 = vsel %vm1876, 1, 0
      %v2048 = vsel %vm1877, 1, 0
      %v2049 = vsel %vm1878, 1, 0
      %v2050 = vsel %vm1879, 1, 0
      %v2051 = vsel %vm1880, 1, 0
      %v2052 = vsel %vm1881, 1, 0
      %v2053 = vsel %vm1882, 1, 0
      %v2054 = vsel %vm1883, 1, 0
      %v2055 = vsel %vm1884, 1, 0
      %v2056 = vsel %vm1885, 1, 0
      %v2057 = vsel %vm1886, 1, 0
      %v2058 = vsel %vm1887, 1, 0
      %v2059 = vsel %vm1888, 1, 0
      %v2060 = vsel %vm1889, 1, 0
      %v2061 = vsel %vm1890, 1, 0
      %v2062 = vsel %vm1891, 1, 0
      %v2063 = vsel %vm1892, 1, 0
      %v2064 = vsel %vm1893, 1, 0
      %v2065 = vsel %vm1894, 1, 0
      %v2066 = vsel %vm1895, 1, 0
      %v2067 = vsel %vm1896, 1, 0
      %v2068 = vsel %vm1897, 1, 0
      %v2069 = vsel %vm1898, 1, 0
      %vm2070 = vcmp.eq.s32.totalorder %v2002, 1
      %vm2071 = vcmp.eq.s32.totalorder %v2003, 1
      %vm2072 = vcmp.eq.s32.totalorder %v2004, 1
      %vm2073 = vcmp.eq.s32.totalorder %v2005, 1
      %vm2074 = vcmp.eq.s32.totalorder %v2006, 1
      %vm2075 = vcmp.eq.s32.totalorder %v2007, 1
      %vm2076 = vcmp.eq.s32.totalorder %v2008, 1
      %vm2077 = vcmp.eq.s32.totalorder %v2009, 1
      %vm2078 = vcmp.eq.s32.totalorder %v2010, 1
      %vm2079 = vcmp.eq.s32.totalorder %v2011, 1
      %vm2080 = vcmp.eq.s32.totalorder %v2012, 1
      %vm2081 = vcmp.eq.s32.totalorder %v2013, 1
      %vm2082 = vcmp.eq.s32.totalorder %v2014, 1
      %vm2083 = vcmp.eq.s32.totalorder %v2015, 1
      %vm2084 = vcmp.eq.s32.totalorder %v2016, 1
      %vm2085 = vcmp.eq.s32.totalorder %v2017, 1
      %vm2086 = vcmp.eq.s32.totalorder %v2018, 1
      %vm2087 = vcmp.eq.s32.totalorder %v2019, 1
      %vm2088 = vcmp.eq.s32.totalorder %v2020, 1
      %vm2089 = vcmp.eq.s32.totalorder %v2021, 1
      %vm2090 = vcmp.eq.s32.totalorder %v2022, 1
      %vm2091 = vcmp.eq.s32.totalorder %v2023, 1
      %vm2092 = vcmp.eq.s32.totalorder %v2024, 1
      %vm2093 = vcmp.eq.s32.totalorder %v2025, 1
      %vm2094 = vcmp.eq.s32.totalorder %v2026, 1
      %vm2095 = vcmp.eq.s32.totalorder %v2027, 1
      %vm2096 = vcmp.eq.s32.totalorder %v2028, 1
      %vm2097 = vcmp.eq.s32.totalorder %v2029, 1
      %vm2098 = vcmp.eq.s32.totalorder %v2030, 1
      %vm2099 = vcmp.eq.s32.totalorder %v2031, 1
      %vm2100 = vcmp.eq.s32.totalorder %v2032, 1
      %vm2101 = vcmp.eq.s32.totalorder %v2033, 1
      %vm2102 = vcmp.eq.s32.totalorder %v2034, 1
      %vm2103 = vcmp.eq.s32.totalorder %v2035, 1
      %vm2104 = vcmp.eq.s32.totalorder %v2036, 1
      %vm2105 = vcmp.eq.s32.totalorder %v2037, 1
      %vm2106 = vcmp.eq.s32.totalorder %v2038, 1
      %vm2107 = vcmp.eq.s32.totalorder %v2039, 1
      %vm2108 = vcmp.eq.s32.totalorder %v2040, 1
      %vm2109 = vcmp.eq.s32.totalorder %v2041, 1
      %vm2110 = vcmp.eq.s32.totalorder %v2042, 1
      %vm2111 = vcmp.eq.s32.totalorder %v2043, 1
      %vm2112 = vcmp.eq.s32.totalorder %v2044, 1
      %vm2113 = vcmp.eq.s32.totalorder %v2045, 1
      %vm2114 = vcmp.eq.s32.totalorder %v2046, 1
      %vm2115 = vcmp.eq.s32.totalorder %v2047, 1
      %vm2116 = vcmp.eq.s32.totalorder %v2048, 1
      %vm2117 = vcmp.eq.s32.totalorder %v2049, 1
      %vm2118 = vcmp.eq.s32.totalorder %v2050, 1
      %vm2119 = vcmp.eq.s32.totalorder %v2051, 1
      %vm2120 = vcmp.eq.s32.totalorder %v2052, 1
      %vm2121 = vcmp.eq.s32.totalorder %v2053, 1
      %vm2122 = vcmp.eq.s32.totalorder %v2054, 1
      %vm2123 = vcmp.eq.s32.totalorder %v2055, 1
      %vm2124 = vcmp.eq.s32.totalorder %v2056, 1
      %vm2125 = vcmp.eq.s32.totalorder %v2057, 1
      %vm2126 = vcmp.eq.s32.totalorder %v2058, 1
      %vm2127 = vcmp.eq.s32.totalorder %v2059, 1
      %vm2128 = vcmp.eq.s32.totalorder %v2060, 1
      %vm2129 = vcmp.eq.s32.totalorder %v2061, 1
      %vm2130 = vcmp.eq.s32.totalorder %v2062, 1
      %vm2131 = vcmp.eq.s32.totalorder %v2063, 1
      %vm2132 = vcmp.eq.s32.totalorder %v2064, 1
      %vm2133 = vcmp.eq.s32.totalorder %v2065, 1
      %vm2134 = vcmp.eq.s32.totalorder %v2066, 1
      %vm2135 = vcmp.eq.s32.totalorder %v2067, 1
      %vm2136 = vcmp.eq.s32.totalorder %v2068, 1
      %vm2137 = vcmp.eq.s32.totalorder %v2069, 1
      %vm2138 = vmpackc.low %vm2070, %vm2070
      %vm2139 = vmpackc.low %vm2071, %vm2071
      %vm2140 = vmpackc.low %vm2072, %vm2072
      %vm2141 = vmpackc.low %vm2073, %vm2073
      %vm2142 = vmpackc.low %vm2074, %vm2074
      %vm2143 = vmpackc.low %vm2075, %vm2075
      %vm2144 = vmpackc.low %vm2076, %vm2076
      %vm2145 = vmpackc.low %vm2077, %vm2077
      %vm2146 = vmpackc.low %vm2078, %vm2078
      %vm2147 = vmpackc.low %vm2079, %vm2079
      %vm2148 = vmpackc.low %vm2080, %vm2080
      %vm2149 = vmpackc.low %vm2081, %vm2081
      %vm2150 = vmpackc.low %vm2082, %vm2082
      %vm2151 = vmpackc.low %vm2083, %vm2083
      %vm2152 = vmpackc.low %vm2084, %vm2084
      %vm2153 = vmpackc.low %vm2085, %vm2085
      %vm2154 = vmpackc.low %vm2086, %vm2086
      %vm2155 = vmpackc.low %vm2087, %vm2087
      %vm2156 = vmpackc.low %vm2088, %vm2088
      %vm2157 = vmpackc.low %vm2089, %vm2089
      %vm2158 = vmpackc.low %vm2090, %vm2090
      %vm2159 = vmpackc.low %vm2091, %vm2091
      %vm2160 = vmpackc.low %vm2092, %vm2092
      %vm2161 = vmpackc.low %vm2093, %vm2093
      %vm2162 = vmpackc.low %vm2094, %vm2094
      %vm2163 = vmpackc.low %vm2095, %vm2095
      %vm2164 = vmpackc.low %vm2096, %vm2096
      %vm2165 = vmpackc.low %vm2097, %vm2097
      %vm2166 = vmpackc.low %vm2098, %vm2098
      %vm2167 = vmpackc.low %vm2099, %vm2099
      %vm2168 = vmpackc.low %vm2100, %vm2100
      %vm2169 = vmpackc.low %vm2101, %vm2101
      %vm2170 = vmpackc.low %vm2102, %vm2102
      %vm2171 = vmpackc.low %vm2103, %vm2103
      %vm2172 = vmpackc.low %vm2104, %vm2104
      %vm2173 = vmpackc.low %vm2105, %vm2105
      %vm2174 = vmpackc.low %vm2106, %vm2106
      %vm2175 = vmpackc.low %vm2107, %vm2107
      %vm2176 = vmpackc.low %vm2108, %vm2108
      %vm2177 = vmpackc.low %vm2109, %vm2109
      %vm2178 = vmpackc.low %vm2110, %vm2110
      %vm2179 = vmpackc.low %vm2111, %vm2111
      %vm2180 = vmpackc.low %vm2112, %vm2112
      %vm2181 = vmpackc.low %vm2113, %vm2113
      %vm2182 = vmpackc.low %vm2114, %vm2114
      %vm2183 = vmpackc.low %vm2115, %vm2115
      %vm2184 = vmpackc.low %vm2116, %vm2116
      %vm2185 = vmpackc.low %vm2117, %vm2117
      %vm2186 = vmpackc.low %vm2118, %vm2118
      %vm2187 = vmpackc.low %vm2119, %vm2119
      %vm2188 = vmpackc.low %vm2120, %vm2120
      %vm2189 = vmpackc.low %vm2121, %vm2121
      %vm2190 = vmpackc.low %vm2122, %vm2122
      %vm2191 = vmpackc.low %vm2123, %vm2123
      %vm2192 = vmpackc.low %vm2124, %vm2124
      %vm2193 = vmpackc.low %vm2125, %vm2125
      %vm2194 = vmpackc.low %vm2126, %vm2126
      %vm2195 = vmpackc.low %vm2127, %vm2127
      %vm2196 = vmpackc.low %vm2128, %vm2128
      %vm2197 = vmpackc.low %vm2129, %vm2129
      %vm2198 = vmpackc.low %vm2130, %vm2130
      %vm2199 = vmpackc.low %vm2131, %vm2131
      %vm2200 = vmpackc.low %vm2132, %vm2132
      %vm2201 = vmpackc.low %vm2133, %vm2133
      %vm2202 = vmpackc.low %vm2134, %vm2134
      %vm2203 = vmpackc.low %vm2135, %vm2135
      %vm2204 = vmpackc.low %vm2136, %vm2136
      %vm2205 = vmpackc.low %vm2137, %vm2137
      %v2206 = vsel %vm2138, 65537, 0
      %v2207 = vsel %vm2139, 65537, 0
      %v2208 = vsel %vm2140, 65537, 0
      %v2209 = vsel %vm2141, 65537, 0
      %v2210 = vsel %vm2142, 65537, 0
      %v2211 = vsel %vm2143, 65537, 0
      %v2212 = vsel %vm2144, 65537, 0
      %v2213 = vsel %vm2145, 65537, 0
      %v2214 = vsel %vm2146, 65537, 0
      %v2215 = vsel %vm2147, 65537, 0
      %v2216 = vsel %vm2148, 65537, 0
      %v2217 = vsel %vm2149, 65537, 0
      %v2218 = vsel %vm2150, 65537, 0
      %v2219 = vsel %vm2151, 65537, 0
      %v2220 = vsel %vm2152, 65537, 0
      %v2221 = vsel %vm2153, 65537, 0
      %v2222 = vsel %vm2154, 65537, 0
      %v2223 = vsel %vm2155, 65537, 0
      %v2224 = vsel %vm2156, 65537, 0
      %v2225 = vsel %vm2157, 65537, 0
      %v2226 = vsel %vm2158, 65537, 0
      %v2227 = vsel %vm2159, 65537, 0
      %v2228 = vsel %vm2160, 65537, 0
      %v2229 = vsel %vm2161, 65537, 0
      %v2230 = vsel %vm2162, 65537, 0
      %v2231 = vsel %vm2163, 65537, 0
      %v2232 = vsel %vm2164, 65537, 0
      %v2233 = vsel %vm2165, 65537, 0
      %v2234 = vsel %vm2166, 65537, 0
      %v2235 = vsel %vm2167, 65537, 0
      %v2236 = vsel %vm2168, 65537, 0
      %v2237 = vsel %vm2169, 65537, 0
      %v2238 = vsel %vm2170, 65537, 0
      %v2239 = vsel %vm2171, 65537, 0
      %v2240 = vsel %vm2172, 65537, 0
      %v2241 = vsel %vm2173, 65537, 0
      %v2242 = vsel %vm2174, 65537, 0
      %v2243 = vsel %vm2175, 65537, 0
      %v2244 = vsel %vm2176, 65537, 0
      %v2245 = vsel %vm2177, 65537, 0
      %v2246 = vsel %vm2178, 65537, 0
      %v2247 = vsel %vm2179, 65537, 0
      %v2248 = vsel %vm2180, 65537, 0
      %v2249 = vsel %vm2181, 65537, 0
      %v2250 = vsel %vm2182, 65537, 0
      %v2251 = vsel %vm2183, 65537, 0
      %v2252 = vsel %vm2184, 65537, 0
      %v2253 = vsel %vm2185, 65537, 0
      %v2254 = vsel %vm2186, 65537, 0
      %v2255 = vsel %vm2187, 65537, 0
      %v2256 = vsel %vm2188, 65537, 0
      %v2257 = vsel %vm2189, 65537, 0
      %v2258 = vsel %vm2190, 65537, 0
      %v2259 = vsel %vm2191, 65537, 0
      %v2260 = vsel %vm2192, 65537, 0
      %v2261 = vsel %vm2193, 65537, 0
      %v2262 = vsel %vm2194, 65537, 0
      %v2263 = vsel %vm2195, 65537, 0
      %v2264 = vsel %vm2196, 65537, 0
      %v2265 = vsel %vm2197, 65537, 0
      %v2266 = vsel %vm2198, 65537, 0
      %v2267 = vsel %vm2199, 65537, 0
      %v2268 = vsel %vm2200, 65537, 0
      %v2269 = vsel %vm2201, 65537, 0
      %v2270 = vsel %vm2202, 65537, 0
      %v2271 = vsel %vm2203, 65537, 0
      %v2272 = vsel %vm2204, 65537, 0
      %v2273 = vsel %vm2205, 65537, 0
      %v2274 = vunpack.c.l.b16 %v2206
      %v2275 = vunpack.c.l.b16 %v2207
      %v2276 = vunpack.c.l.b16 %v2208
      %v2277 = vunpack.c.l.b16 %v2209
      %v2278 = vunpack.c.l.b16 %v2210
      %v2279 = vunpack.c.l.b16 %v2211
      %v2280 = vunpack.c.l.b16 %v2212
      %v2281 = vunpack.c.l.b16 %v2213
      %v2282 = vunpack.c.l.b16 %v2214
      %v2283 = vunpack.c.l.b16 %v2215
      %v2284 = vunpack.c.l.b16 %v2216
      %v2285 = vunpack.c.l.b16 %v2217
      %v2286 = vunpack.c.l.b16 %v2218
      %v2287 = vunpack.c.l.b16 %v2219
      %v2288 = vunpack.c.l.b16 %v2220
      %v2289 = vunpack.c.l.b16 %v2221
      %v2290 = vunpack.c.l.b16 %v2222
      %v2291 = vunpack.c.l.b16 %v2223
      %v2292 = vunpack.c.l.b16 %v2224
      %v2293 = vunpack.c.l.b16 %v2225
      %v2294 = vunpack.c.l.b16 %v2226
      %v2295 = vunpack.c.l.b16 %v2227
      %v2296 = vunpack.c.l.b16 %v2228
      %v2297 = vunpack.c.l.b16 %v2229
      %v2298 = vunpack.c.l.b16 %v2230
      %v2299 = vunpack.c.l.b16 %v2231
      %v2300 = vunpack.c.l.b16 %v2232
      %v2301 = vunpack.c.l.b16 %v2233
      %v2302 = vunpack.c.l.b16 %v2234
      %v2303 = vunpack.c.l.b16 %v2235
      %v2304 = vunpack.c.l.b16 %v2236
      %v2305 = vunpack.c.l.b16 %v2237
      %v2306 = vunpack.c.l.b16 %v2238
      %v2307 = vunpack.c.l.b16 %v2239
      %v2308 = vunpack.c.l.b16 %v2240
      %v2309 = vunpack.c.l.b16 %v2241
      %v2310 = vunpack.c.l.b16 %v2242
      %v2311 = vunpack.c.l.b16 %v2243
      %v2312 = vunpack.c.l.b16 %v2244
      %v2313 = vunpack.c.l.b16 %v2245
      %v2314 = vunpack.c.l.b16 %v2246
      %v2315 = vunpack.c.l.b16 %v2247
      %v2316 = vunpack.c.l.b16 %v2248
      %v2317 = vunpack.c.l.b16 %v2249
      %v2318 = vunpack.c.l.b16 %v2250
      %v2319 = vunpack.c.l.b16 %v2251
      %v2320 = vunpack.c.l.b16 %v2252
      %v2321 = vunpack.c.l.b16 %v2253
      %v2322 = vunpack.c.l.b16 %v2254
      %v2323 = vunpack.c.l.b16 %v2255
      %v2324 = vunpack.c.l.b16 %v2256
      %v2325 = vunpack.c.l.b16 %v2257
      %v2326 = vunpack.c.l.b16 %v2258
      %v2327 = vunpack.c.l.b16 %v2259
      %v2328 = vunpack.c.l.b16 %v2260
      %v2329 = vunpack.c.l.b16 %v2261
      %v2330 = vunpack.c.l.b16 %v2262
      %v2331 = vunpack.c.l.b16 %v2263
      %v2332 = vunpack.c.l.b16 %v2264
      %v2333 = vunpack.c.l.b16 %v2265
      %v2334 = vunpack.c.l.b16 %v2266
      %v2335 = vunpack.c.l.b16 %v2267
      %v2336 = vunpack.c.l.b16 %v2268
      %v2337 = vunpack.c.l.b16 %v2269
      %v2338 = vunpack.c.l.b16 %v2270
      %v2339 = vunpack.c.l.b16 %v2271
      %v2340 = vunpack.c.l.b16 %v2272
      %v2341 = vunpack.c.l.b16 %v2273
      %v2342 = vpack.c.b16 %v2275, %v2274
      %v2343 = vpack.c.b16 %v2277, %v2276
      %v2344 = vpack.c.b16 %v2279, %v2278
      %v2345 = vpack.c.b16 %v2281, %v2280
      %v2346 = vpack.c.b16 %v2283, %v2282
      %v2347 = vpack.c.b16 %v2285, %v2284
      %v2348 = vpack.c.b16 %v2287, %v2286
      %v2349 = vpack.c.b16 %v2289, %v2288
      %v2350 = vpack.c.b16 %v2291, %v2290
      %v2351 = vpack.c.b16 %v2293, %v2292
      %v2352 = vpack.c.b16 %v2295, %v2294
      %v2353 = vpack.c.b16 %v2297, %v2296
      %v2354 = vpack.c.b16 %v2299, %v2298
      %v2355 = vpack.c.b16 %v2301, %v2300
      %v2356 = vpack.c.b16 %v2303, %v2302
      %v2357 = vpack.c.b16 %v2305, %v2304
      %v2358 = vpack.c.b16 %v2307, %v2306
      %v2359 = vpack.c.b16 %v2309, %v2308
      %v2360 = vpack.c.b16 %v2311, %v2310
      %v2361 = vpack.c.b16 %v2313, %v2312
      %v2362 = vpack.c.b16 %v2315, %v2314
      %v2363 = vpack.c.b16 %v2317, %v2316
      %v2364 = vpack.c.b16 %v2319, %v2318
      %v2365 = vpack.c.b16 %v2321, %v2320
      %v2366 = vpack.c.b16 %v2323, %v2322
      %v2367 = vpack.c.b16 %v2325, %v2324
      %v2368 = vpack.c.b16 %v2327, %v2326
      %v2369 = vpack.c.b16 %v2329, %v2328
      %v2370 = vpack.c.b16 %v2331, %v2330
      %v2371 = vpack.c.b16 %v2333, %v2332
      %v2372 = vpack.c.b16 %v2335, %v2334
      %v2373 = vpack.c.b16 %v2337, %v2336
      %v2374 = vpack.c.b16 %v2339, %v2338
      %v2375 = vpack.c.b16 %v2341, %v2340
      %vm2376 = vsmask.f32 7424
      %v2378 = vshll.u32 %v2342, 16
      %v2380 = vrot.slane %v2378, 1
      %v2381 = vshrl.u32 %v2342, 16
      %v2383 = vor.u32 %v2381, %v2380
      %v2385 = vshll.u32 %v2343, 16
      %v2387 = vrot.slane %v2385, 1
      %v2388 = vsel %vm2376, %v2383, %v2387
      %v2389 = vshrl.u32 %v2343, 16
      %v2391 = vor.u32 %v2389, %v2387
      %v2393 = vshll.u32 %v2344, 16
      %v2395 = vrot.slane %v2393, 1
      %v2396 = vsel %vm2376, %v2391, %v2395
      %v2397 = vshrl.u32 %v2344, 16
      %v2399 = vor.u32 %v2397, %v2395
      %v2401 = vshll.u32 %v2345, 16
      %v2403 = vrot.slane %v2401, 1
      %v2404 = vsel %vm2376, %v2399, %v2403
      %v2405 = vshrl.u32 %v2345, 16
      %v2407 = vor.u32 %v2405, %v2403
      %v2409 = vshll.u32 %v2346, 16
      %v2411 = vrot.slane %v2409, 1
      %v2412 = vsel %vm2376, %v2407, %v2411
      %v2413 = vshrl.u32 %v2346, 16
      %v2415 = vor.u32 %v2413, %v2411
      %v2417 = vshll.u32 %v2347, 16
      %v2419 = vrot.slane %v2417, 1
      %v2420 = vsel %vm2376, %v2415, %v2419
      %v2421 = vshrl.u32 %v2347, 16
      %v2423 = vor.u32 %v2421, %v2419
      %v2425 = vshll.u32 %v2348, 16
      %v2427 = vrot.slane %v2425, 1
      %v2428 = vsel %vm2376, %v2423, %v2427
      %v2429 = vshrl.u32 %v2348, 16
      %v2431 = vor.u32 %v2429, %v2427
      %v2433 = vshll.u32 %v2349, 16
      %v2435 = vrot.slane %v2433, 1
      %v2436 = vsel %vm2376, %v2431, %v2435
      %v2437 = vshrl.u32 %v2349, 16
      %v2439 = vor.u32 %v2437, %v2435
      %v2441 = vshll.u32 %v2350, 16
      %v2443 = vrot.slane %v2441, 1
      %v2444 = vsel %vm2376, %v2439, %v2443
      %v2445 = vshrl.u32 %v2350, 16
      %v2447 = vor.u32 %v2445, %v2443
      %v2449 = vshll.u32 %v2351, 16
      %v2451 = vrot.slane %v2449, 1
      %v2452 = vsel %vm2376, %v2447, %v2451
      %v2453 = vshrl.u32 %v2351, 16
      %v2455 = vor.u32 %v2453, %v2451
      %v2457 = vshll.u32 %v2352, 16
      %v2459 = vrot.slane %v2457, 1
      %v2460 = vsel %vm2376, %v2455, %v2459
      %v2461 = vshrl.u32 %v2352, 16
      %v2463 = vor.u32 %v2461, %v2459
      %v2465 = vshll.u32 %v2353, 16
      %v2467 = vrot.slane %v2465, 1
      %v2468 = vsel %vm2376, %v2463, %v2467
      %v2469 = vshrl.u32 %v2353, 16
      %v2471 = vor.u32 %v2469, %v2467
      %v2473 = vshll.u32 %v2354, 16
      %v2475 = vrot.slane %v2473, 1
      %v2476 = vsel %vm2376, %v2471, %v2475
      %v2477 = vshrl.u32 %v2354, 16
      %v2479 = vor.u32 %v2477, %v2475
      %v2481 = vshll.u32 %v2355, 16
      %v2483 = vrot.slane %v2481, 1
      %v2484 = vsel %vm2376, %v2479, %v2483
      %v2485 = vshrl.u32 %v2355, 16
      %v2487 = vor.u32 %v2485, %v2483
      %v2489 = vshll.u32 %v2356, 16
      %v2491 = vrot.slane %v2489, 1
      %v2492 = vsel %vm2376, %v2487, %v2491
      %v2493 = vshrl.u32 %v2356, 16
      %v2495 = vor.u32 %v2493, %v2491
      %v2497 = vshll.u32 %v2357, 16
      %v2499 = vrot.slane %v2497, 1
      %v2500 = vsel %vm2376, %v2495, %v2499
      %v2501 = vshrl.u32 %v2357, 16
      %v2503 = vor.u32 %v2501, %v2499
      %v2505 = vshll.u32 %v2358, 16
      %v2507 = vrot.slane %v2505, 1
      %v2508 = vsel %vm2376, %v2503, %v2507
      %v2509 = vshrl.u32 %v2358, 16
      %v2511 = vor.u32 %v2509, %v2507
      %v2513 = vshll.u32 %v2359, 16
      %v2515 = vrot.slane %v2513, 1
      %v2516 = vsel %vm2376, %v2511, %v2515
      %v2517 = vshrl.u32 %v2359, 16
      %v2519 = vor.u32 %v2517, %v2515
      %v2521 = vshll.u32 %v2360, 16
      %v2523 = vrot.slane %v2521, 1
      %v2524 = vsel %vm2376, %v2519, %v2523
      %v2525 = vshrl.u32 %v2360, 16
      %v2527 = vor.u32 %v2525, %v2523
      %v2529 = vshll.u32 %v2361, 16
      %v2531 = vrot.slane %v2529, 1
      %v2532 = vsel %vm2376, %v2527, %v2531
      %v2533 = vshrl.u32 %v2361, 16
      %v2535 = vor.u32 %v2533, %v2531
      %v2537 = vshll.u32 %v2362, 16
      %v2539 = vrot.slane %v2537, 1
      %v2540 = vsel %vm2376, %v2535, %v2539
      %v2541 = vshrl.u32 %v2362, 16
      %v2543 = vor.u32 %v2541, %v2539
      %v2545 = vshll.u32 %v2363, 16
      %v2547 = vrot.slane %v2545, 1
      %v2548 = vsel %vm2376, %v2543, %v2547
      %v2549 = vshrl.u32 %v2363, 16
      %v2551 = vor.u32 %v2549, %v2547
      %v2553 = vshll.u32 %v2364, 16
      %v2555 = vrot.slane %v2553, 1
      %v2556 = vsel %vm2376, %v2551, %v2555
      %v2557 = vshrl.u32 %v2364, 16
      %v2559 = vor.u32 %v2557, %v2555
      %v2561 = vshll.u32 %v2365, 16
      %v2563 = vrot.slane %v2561, 1
      %v2564 = vsel %vm2376, %v2559, %v2563
      %v2565 = vshrl.u32 %v2365, 16
      %v2567 = vor.u32 %v2565, %v2563
      %v2569 = vshll.u32 %v2366, 16
      %v2571 = vrot.slane %v2569, 1
      %v2572 = vsel %vm2376, %v2567, %v2571
      %v2573 = vshrl.u32 %v2366, 16
      %v2575 = vor.u32 %v2573, %v2571
      %v2577 = vshll.u32 %v2367, 16
      %v2579 = vrot.slane %v2577, 1
      %v2580 = vsel %vm2376, %v2575, %v2579
      %v2581 = vshrl.u32 %v2367, 16
      %v2583 = vor.u32 %v2581, %v2579
      %v2585 = vshll.u32 %v2368, 16
      %v2587 = vrot.slane %v2585, 1
      %v2588 = vsel %vm2376, %v2583, %v2587
      %v2589 = vshrl.u32 %v2368, 16
      %v2591 = vor.u32 %v2589, %v2587
      %v2593 = vshll.u32 %v2369, 16
      %v2595 = vrot.slane %v2593, 1
      %v2596 = vsel %vm2376, %v2591, %v2595
      %v2597 = vshrl.u32 %v2369, 16
      %v2599 = vor.u32 %v2597, %v2595
      %v2601 = vshll.u32 %v2370, 16
      %v2603 = vrot.slane %v2601, 1
      %v2604 = vsel %vm2376, %v2599, %v2603
      %v2605 = vshrl.u32 %v2370, 16
      %v2607 = vor.u32 %v2605, %v2603
      %v2609 = vshll.u32 %v2371, 16
      %v2611 = vrot.slane %v2609, 1
      %v2612 = vsel %vm2376, %v2607, %v2611
      %v2613 = vshrl.u32 %v2371, 16
      %v2615 = vor.u32 %v2613, %v2611
      %v2617 = vshll.u32 %v2372, 16
      %v2619 = vrot.slane %v2617, 1
      %v2620 = vsel %vm2376, %v2615, %v2619
      %v2621 = vshrl.u32 %v2372, 16
      %v2623 = vor.u32 %v2621, %v2619
      %v2625 = vshll.u32 %v2373, 16
      %v2627 = vrot.slane %v2625, 1
      %v2628 = vsel %vm2376, %v2623, %v2627
      %v2629 = vshrl.u32 %v2373, 16
      %v2631 = vor.u32 %v2629, %v2627
      %v2633 = vshll.u32 %v2374, 16
      %v2635 = vrot.slane %v2633, 1
      %v2636 = vsel %vm2376, %v2631, %v2635
      %v2637 = vshrl.u32 %v2374, 16
      %v2639 = vor.u32 %v2637, %v2635
      %v2641 = vshll.u32 %v2375, 16
      %v2643 = vrot.slane %v2641, 1
      %v2644 = vsel %vm2376, %v2639, %v2643
      %v2645 = vshrl.u32 %v2375, 16
      %v2647 = vor.u32 %v2645, %v2643
      %vm2648 = vcmp.ne.s16.totalorder %v2380, 0
      %vm2649 = vcmp.ne.s16.totalorder %v2388, 0
      %vm2650 = vcmp.ne.s16.totalorder %v2396, 0
      %vm2651 = vcmp.ne.s16.totalorder %v2404, 0
      %vm2652 = vcmp.ne.s16.totalorder %v2412, 0
      %vm2653 = vcmp.ne.s16.totalorder %v2420, 0
      %vm2654 = vcmp.ne.s16.totalorder %v2428, 0
      %vm2655 = vcmp.ne.s16.totalorder %v2436, 0
      %vm2656 = vcmp.ne.s16.totalorder %v2444, 0
      %vm2657 = vcmp.ne.s16.totalorder %v2452, 0
      %vm2658 = vcmp.ne.s16.totalorder %v2460, 0
      %vm2659 = vcmp.ne.s16.totalorder %v2468, 0
      %vm2660 = vcmp.ne.s16.totalorder %v2476, 0
      %vm2661 = vcmp.ne.s16.totalorder %v2484, 0
      %vm2662 = vcmp.ne.s16.totalorder %v2492, 0
      %vm2663 = vcmp.ne.s16.totalorder %v2500, 0
      %vm2664 = vcmp.ne.s16.totalorder %v2508, 0
      %vm2665 = vcmp.ne.s16.totalorder %v2516, 0
      %vm2666 = vcmp.ne.s16.totalorder %v2524, 0
      %vm2667 = vcmp.ne.s16.totalorder %v2532, 0
      %vm2668 = vcmp.ne.s16.totalorder %v2540, 0
      %vm2669 = vcmp.ne.s16.totalorder %v2548, 0
      %vm2670 = vcmp.ne.s16.totalorder %v2556, 0
      %vm2671 = vcmp.ne.s16.totalorder %v2564, 0
      %vm2672 = vcmp.ne.s16.totalorder %v2572, 0
      %vm2673 = vcmp.ne.s16.totalorder %v2580, 0
      %vm2674 = vcmp.ne.s16.totalorder %v2588, 0
      %vm2675 = vcmp.ne.s16.totalorder %v2596, 0
      %vm2676 = vcmp.ne.s16.totalorder %v2604, 0
      %vm2677 = vcmp.ne.s16.totalorder %v2612, 0
      %vm2678 = vcmp.ne.s16.totalorder %v2620, 0
      %vm2679 = vcmp.ne.s16.totalorder %v2628, 0
      %vm2680 = vcmp.ne.s16.totalorder %v2636, 0
      %vm2681 = vcmp.ne.s16.totalorder %v2644, 0
      %vm2682 = vcmp.ne.s16.totalorder %v2647, 0
      %v2683 = vsel %vm2648, %v1967, 0
      %v2684 = vsel %vm2649, %v1968, 0
      %v2685 = vsel %vm2650, %v1969, 0
      %v2686 = vsel %vm2651, %v1970, 0
      %v2687 = vsel %vm2652, %v1971, 0
      %v2688 = vsel %vm2653, %v1972, 0
      %v2689 = vsel %vm2654, %v1973, 0
      %v2690 = vsel %vm2655, %v1974, 0
      %v2691 = vsel %vm2656, %v1975, 0
      %v2692 = vsel %vm2657, %v1976, 0
      %v2693 = vsel %vm2658, %v1977, 0
      %v2694 = vsel %vm2659, %v1978, 0
      %v2695 = vsel %vm2660, %v1979, 0
      %v2696 = vsel %vm2661, %v1980, 0
      %v2697 = vsel %vm2662, %v1981, 0
      %v2698 = vsel %vm2663, %v1982, 0
      %v2699 = vsel %vm2664, %v1983, 0
      %v2700 = vsel %vm2665, %v1984, 0
      %v2701 = vsel %vm2666, %v1985, 0
      %v2702 = vsel %vm2667, %v1986, 0
      %v2703 = vsel %vm2668, %v1987, 0
      %v2704 = vsel %vm2669, %v1988, 0
      %v2705 = vsel %vm2670, %v1989, 0
      %v2706 = vsel %vm2671, %v1990, 0
      %v2707 = vsel %vm2672, %v1991, 0
      %v2708 = vsel %vm2673, %v1992, 0
      %v2709 = vsel %vm2674, %v1993, 0
      %v2710 = vsel %vm2675, %v1994, 0
      %v2711 = vsel %vm2676, %v1995, 0
      %v2712 = vsel %vm2677, %v1996, 0
      %v2713 = vsel %vm2678, %v1997, 0
      %v2714 = vsel %vm2679, %v1998, 0
      %v2715 = vsel %vm2680, %v1999, 0
      %v2716 = vsel %vm2681, %v2000, 0
      %v2717 = vsel %vm2682, %v2001, 0
      %v2718 = vld [vmem:[%s4] sm:$0xf]
      %v2719 = vld [vmem:[%s4 + $0x4] sm:$0xf]
      %v2720 = vld [vmem:[%s4 + $0x8] sm:$0xf]
      %v2721 = vld [vmem:[%s4 + $0xc] sm:$0xf]
      %v2722 = vld [vmem:[%s4 + $0x10] sm:$0xf]
      %v2723 = vld [vmem:[%s4 + $0x14] sm:$0xf]
      %v2724 = vld [vmem:[%s4 + $0x18] sm:$0xf]
      %v2725 = vld [vmem:[%s4 + $0x1c] sm:$0xf]
      %v2726 = vld [vmem:[%s4 + $0x20] sm:$0xf]
      %v2727 = vld [vmem:[%s4 + $0x24] sm:$0xf]
      %v2728 = vld [vmem:[%s4 + $0x28] sm:$0xf]
      %v2729 = vld [vmem:[%s4 + $0x2c] sm:$0xf]
      %v2730 = vld [vmem:[%s4 + $0x30] sm:$0xf]
      %v2731 = vld [vmem:[%s4 + $0x34] sm:$0xf]
      %v2732 = vld [vmem:[%s4 + $0x38] sm:$0xf]
      %v2733 = vld [vmem:[%s4 + $0x3c] sm:$0xf]
      %s2734 = scalar_lea.vmem %s4, 64
      %v2735 = vld [vmem:[%s2734] sm:$0xf]
      %v2736 = vld [vmem:[%s2734 + $0x4] sm:$0xf]
      %v2737 = vld [vmem:[%s2734 + $0x8] sm:$0xf]
      %v2738 = vld [vmem:[%s2734 + $0xc] sm:$0xf]
      %v2739 = vld [vmem:[%s2734 + $0x10] sm:$0xf]
      %v2740 = vld [vmem:[%s2734 + $0x14] sm:$0xf]
      %v2741 = vld [vmem:[%s2734 + $0x18] sm:$0xf]
      %v2742 = vld [vmem:[%s2734 + $0x1c] sm:$0xf]
      %v2743 = vld [vmem:[%s2734 + $0x20] sm:$0xf]
      %v2744 = vld [vmem:[%s2734 + $0x24] sm:$0xf]
      %v2745 = vld [vmem:[%s2734 + $0x28] sm:$0xf]
      %v2746 = vld [vmem:[%s2734 + $0x2c] sm:$0xf]
      %v2747 = vld [vmem:[%s2734 + $0x30] sm:$0xf]
      %v2748 = vld [vmem:[%s2734 + $0x34] sm:$0xf]
      %v2749 = vld [vmem:[%s2734 + $0x38] sm:$0xf]
      %v2750 = vld [vmem:[%s2734 + $0x3c] sm:$0xf]
      %v2767 = vunpack.c.l.b16 %v2735
      %v2768 = vunpack.c.l.b16 %v2736
      %v2769 = vunpack.c.l.b16 %v2737
      %v2770 = vunpack.c.l.b16 %v2738
      %v2771 = vunpack.c.l.b16 %v2739
      %v2772 = vunpack.c.l.b16 %v2740
      %v2773 = vunpack.c.l.b16 %v2741
      %v2774 = vunpack.c.l.b16 %v2742
      %v2775 = vunpack.c.l.b16 %v2743
      %v2776 = vunpack.c.l.b16 %v2744
      %v2777 = vunpack.c.l.b16 %v2745
      %v2778 = vunpack.c.l.b16 %v2746
      %v2779 = vunpack.c.l.b16 %v2747
      %v2780 = vunpack.c.l.b16 %v2748
      %v2781 = vunpack.c.l.b16 %v2749
      %v2782 = vunpack.c.l.b16 %v2750
      %v2783 = vpack.c.b16 %v2768, %v2767
      %v2784 = vpack.c.b16 %v2770, %v2769
      %v2785 = vpack.c.b16 %v2772, %v2771
      %v2786 = vpack.c.b16 %v2774, %v2773
      %v2787 = vpack.c.b16 %v2776, %v2775
      %v2788 = vpack.c.b16 %v2778, %v2777
      %v2789 = vpack.c.b16 %v2780, %v2779
      %v2790 = vpack.c.b16 %v2782, %v2781
      %2799 = vmatprep.subr.bf16.mxu0 0
      %2800 = vmatpush1.bf16.msra.mxu0 %v2783
      %2801 = vmatprep.subr.bf16.mxu0 0
      %2802 = vmatpush1.bf16.msra.mxu0 %v2784
      %2803 = vmatprep.subr.bf16.mxu0 0
      %2804 = vmatpush1.bf16.msra.mxu0 %v2785
      %2805 = vmatprep.subr.bf16.mxu0 0
      %2806 = vmatpush1.bf16.msra.mxu0 %v2786
      %2807 = vmatprep.subr.bf16.mxu0 0
      %2808 = vmatpush1.bf16.msra.mxu0 %v2787
      %2809 = vmatprep.subr.bf16.mxu0 0
      %2810 = vmatpush1.bf16.msra.mxu0 %v2788
      %2811 = vmatprep.subr.bf16.mxu0 0
      %2812 = vmatpush1.bf16.msra.mxu0 %v2789
      %2813 = vmatprep.subr.bf16.mxu0 0
      %2814 = vmatpush1.bf16.msra.mxu0 %v2790
      %2815 = vmatprep.subr.bf16.mxu0 0
      %2816 = vmatpush1.bf16.msra.mxu0 0
      %2817 = vmatprep.subr.bf16.mxu0 0
      %2818 = vmatpush1.bf16.msra.mxu0 0
      %2819 = vmatprep.subr.bf16.mxu0 0
      %2820 = vmatpush1.bf16.msra.mxu0 0
      %2821 = vmatprep.subr.bf16.mxu0 0
      %2822 = vmatpush1.bf16.msra.mxu0 0
      %2823 = vmatprep.subr.bf16.mxu0 0
      %2824 = vmatpush1.bf16.msra.mxu0 0
      %2825 = vmatprep.subr.bf16.mxu0 0
      %2826 = vmatpush1.bf16.msra.mxu0 0
      %2827 = vmatprep.subr.bf16.mxu0 0
      %2828 = vmatpush1.bf16.msra.mxu0 0
      %2829 = vmatprep.subr.bf16.mxu0 0
      %2830 = vmatpush1.bf16.msra.mxu0 0
      %2831 = vmatprep.mubr.bf16.mxu0 0
      %2832 = vmatmul.mubr.bf16.gmra.mrb[0].mxu0 %v1968
      %v2833 = vpop.f32.mrb[0].mxu0
      %v2834 = vadd.f32 0.0, %v2833
      %v2835 = vpop.f32.mrb[0].mxu0
      %v2836 = vpop.f32.mrb[0].mxu0
      %v2837 = vadd.f32 0.0, %v2836
      %v2838 = vpop.f32.mrb[0].mxu0
      %2839 = vmatprep.mubr.bf16.mxu0 0
      %2840 = vmatmul.mubr.bf16.gmra.mrb[0].mxu0 %v1969
      %v2841 = vpop.f32.mrb[0].mxu0
      %v2842 = vadd.f32 0.0, %v2841
      %v2843 = vpop.f32.mrb[0].mxu0
      %v2844 = vpop.f32.mrb[0].mxu0
      %v2845 = vadd.f32 0.0, %v2844
      %v2846 = vpop.f32.mrb[0].mxu0
      %2847 = vmatprep.mubr.bf16.mxu0 0
      %2848 = vmatmul.mubr.bf16.gmra.mrb[0].mxu0 %v1970
      %v2849 = vpop.f32.mrb[0].mxu0
      %v2850 = vadd.f32 0.0, %v2849
      %v2851 = vpop.f32.mrb[0].mxu0
      %v2852 = vpop.f32.mrb[0].mxu0
      %v2853 = vadd.f32 0.0, %v2852
      %v2854 = vpop.f32.mrb[0].mxu0
      %2855 = vmatprep.mubr.bf16.mxu0 0
      %2856 = vmatmul.mubr.bf16.gmra.mrb[0].mxu0 %v1971
      %v2857 = vpop.f32.mrb[0].mxu0
      %v2858 = vadd.f32 0.0, %v2857
      %v2859 = vpop.f32.mrb[0].mxu0
      %v2860 = vpop.f32.mrb[0].mxu0
      %v2861 = vadd.f32 0.0, %v2860
      %v2862 = vpop.f32.mrb[0].mxu0
      %2863 = vmatprep.mubr.bf16.mxu0 0
      %2864 = vmatmul.mubr.bf16.gmra.mrb[0].mxu0 %v1972
      %v2865 = vpop.f32.mrb[0].mxu0
      %v2866 = vadd.f32 0.0, %v2865
      %v2867 = vpop.f32.mrb[0].mxu0
      %v2868 = vpop.f32.mrb[0].mxu0
      %v2869 = vadd.f32 0.0, %v2868
      %v2870 = vpop.f32.mrb[0].mxu0
      %2871 = vmatprep.mubr.bf16.mxu0 0
      %2872 = vmatmul.mubr.bf16.gmra.mrb[0].mxu0 %v1973
      %v2873 = vpop.f32.mrb[0].mxu0
      %v2874 = vadd.f32 0.0, %v2873
      %v2875 = vpop.f32.mrb[0].mxu0
      %v2876 = vpop.f32.mrb[0].mxu0
      %v2877 = vadd.f32 0.0, %v2876
      %v2878 = vpop.f32.mrb[0].mxu0
      %2879 = vmatprep.mubr.bf16.mxu0 0
      %2880 = vmatmul.mubr.bf16.gmra.mrb[0].mxu0 %v1974
      %v2881 = vpop.f32.mrb[0].mxu0
      %v2882 = vadd.f32 0.0, %v2881
      %v2883 = vpop.f32.mrb[0].mxu0
      %v2884 = vpop.f32.mrb[0].mxu0
      %v2885 = vadd.f32 0.0, %v2884
      %v2886 = vpop.f32.mrb[0].mxu0
      %2887 = vmatprep.mubr.bf16.mxu0 0
      %2888 = vmatmul.mubr.bf16.gmra.mrb[0].mxu0 %v1975
      %v2889 = vpop.f32.mrb[0].mxu0
      %v2890 = vadd.f32 0.0, %v2889
      %v2891 = vpop.f32.mrb[0].mxu0
      %v2892 = vpop.f32.mrb[0].mxu0
      %v2893 = vadd.f32 0.0, %v2892
      %v2894 = vpop.f32.mrb[0].mxu0
      %2895 = vmatprep.mubr.bf16.mxu0 0
      %2896 = vmatmul.mubr.bf16.gmra.mrb[0].mxu0 %v1976
      %v2897 = vpop.f32.mrb[0].mxu0
      %v2898 = vadd.f32 0.0, %v2897
      %v2899 = vpop.f32.mrb[0].mxu0
      %v2900 = vpop.f32.mrb[0].mxu0
      %v2901 = vadd.f32 0.0, %v2900
      %v2902 = vpop.f32.mrb[0].mxu0
      %2903 = vmatprep.mubr.bf16.mxu0 0
      %2904 = vmatmul.mubr.bf16.gmra.mrb[0].mxu0 %v1977
      %v2905 = vpop.f32.mrb[0].mxu0
      %v2906 = vadd.f32 0.0, %v2905
      %v2907 = vpop.f32.mrb[0].mxu0
      %v2908 = vpop.f32.mrb[0].mxu0
      %v2909 = vadd.f32 0.0, %v2908
      %v2910 = vpop.f32.mrb[0].mxu0
      %2911 = vmatprep.mubr.bf16.mxu0 0
      %2912 = vmatmul.mubr.bf16.gmra.mrb[0].mxu0 %v1978
      %v2913 = vpop.f32.mrb[0].mxu0
      %v2914 = vadd.f32 0.0, %v2913
      %v2915 = vpop.f32.mrb[0].mxu0
      %v2916 = vpop.f32.mrb[0].mxu0
      %v2917 = vadd.f32 0.0, %v2916
      %v2918 = vpop.f32.mrb[0].mxu0
      %2919 = vmatprep.mubr.bf16.mxu0 0
      %2920 = vmatmul.mubr.bf16.gmra.mrb[0].mxu0 %v1979
      %v2921 = vpop.f32.mrb[0].mxu0
      %v2922 = vadd.f32 0.0, %v2921
      %v2923 = vpop.f32.mrb[0].mxu0
      %v2924 = vpop.f32.mrb[0].mxu0
      %v2925 = vadd.f32 0.0, %v2924
      %v2926 = vpop.f32.mrb[0].mxu0
      %2927 = vmatprep.mubr.bf16.mxu0 0
      %2928 = vmatmul.mubr.bf16.gmra.mrb[0].mxu0 %v1980
      %v2929 = vpop.f32.mrb[0].mxu0
      %v2930 = vadd.f32 0.0, %v2929
      %v2931 = vpop.f32.mrb[0].mxu0
      %v2932 = vpop.f32.mrb[0].mxu0
      %v2933 = vadd.f32 0.0, %v2932
      %v2934 = vpop.f32.mrb[0].mxu0
      %2935 = vmatprep.mubr.bf16.mxu0 0
      %2936 = vmatmul.mubr.bf16.gmra.mrb[0].mxu0 %v1981
      %v2937 = vpop.f32.mrb[0].mxu0
      %v2938 = vadd.f32 0.0, %v2937
      %v2939 = vpop.f32.mrb[0].mxu0
      %v2940 = vpop.f32.mrb[0].mxu0
      %v2941 = vadd.f32 0.0, %v2940
      %v2942 = vpop.f32.mrb[0].mxu0
      %2943 = vmatprep.mubr.bf16.mxu0 0
      %2944 = vmatmul.mubr.bf16.gmra.mrb[0].mxu0 %v1982
      %v2945 = vpop.f32.mrb[0].mxu0
      %v2946 = vadd.f32 0.0, %v2945
      %v2947 = vpop.f32.mrb[0].mxu0
      %v2948 = vpop.f32.mrb[0].mxu0
      %v2949 = vadd.f32 0.0, %v2948
      %v2950 = vpop.f32.mrb[0].mxu0
      %2951 = vmatprep.mubr.bf16.mxu0 0
      %2952 = vmatmul.mubr.bf16.gmra.mrb[0].mxu0 %v1983
      %v2953 = vpop.f32.mrb[0].mxu0
      %v2954 = vadd.f32 0.0, %v2953
      %v2955 = vpop.f32.mrb[0].mxu0
      %v2956 = vpop.f32.mrb[0].mxu0
      %v2957 = vadd.f32 0.0, %v2956
      %v2958 = vpop.f32.mrb[0].mxu0
      %2959 = vmatprep.mubr.bf16.mxu0 0
      %2960 = vmatmul.mubr.bf16.gmra.mrb[0].mxu0 %v1984
      %v2961 = vpop.f32.mrb[0].mxu0
      %v2962 = vpop.f32.mrb[0].mxu0
      %v2963 = vpop.f32.mrb[0].mxu0
      %v2964 = vpop.f32.mrb[0].mxu0
      %2965 = vmatprep.mubr.bf16.mxu0 0
      %2966 = vmatmul.mubr.bf16.gmra.mrb[0].mxu0 %v1985
      %v2967 = vpop.f32.mrb[0].mxu0
      %v2968 = vpop.f32.mrb[0].mxu0
      %v2969 = vpop.f32.mrb[0].mxu0
      %v2970 = vpop.f32.mrb[0].mxu0
      %2971 = vmatprep.mubr.bf16.mxu0 0
      %2972 = vmatmul.mubr.bf16.gmra.mrb[0].mxu0 %v1986
      %v2973 = vpop.f32.mrb[0].mxu0
      %v2974 = vadd.f32 0.0, %v2973
      %v2975 = vpop.f32.mrb[0].mxu0
      %v2976 = vpop.f32.mrb[0].mxu0
      %v2977 = vadd.f32 0.0, %v2976
      %v2978 = vpop.f32.mrb[0].mxu0
      %2979 = vmatprep.mubr.bf16.mxu0 0
      %2980 = vmatmul.mubr.bf16.gmra.mrb[0].mxu0 %v1987
      %v2981 = vpop.f32.mrb[0].mxu0
      %v2982 = vadd.f32 0.0, %v2981
      %v2983 = vpop.f32.mrb[0].mxu0
      %v2984 = vpop.f32.mrb[0].mxu0
      %v2985 = vadd.f32 0.0, %v2984
      %v2986 = vpop.f32.mrb[0].mxu0
      %2987 = vmatprep.mubr.bf16.mxu0 0
      %2988 = vmatmul.mubr.bf16.gmra.mrb[0].mxu0 %v1988
      %v2989 = vpop.f32.mrb[0].mxu0
      %v2990 = vadd.f32 0.0, %v2989
      %v2991 = vpop.f32.mrb[0].mxu0
      %v2992 = vpop.f32.mrb[0].mxu0
      %v2993 = vadd.f32 0.0, %v2992
      %v2994 = vpop.f32.mrb[0].mxu0
      %2995 = vmatprep.mubr.bf16.mxu0 0
      %2996 = vmatmul.mubr.bf16.gmra.mrb[0].mxu0 %v1989
      %v2997 = vpop.f32.mrb[0].mxu0
      %v2998 = vadd.f32 0.0, %v2997
      %v2999 = vpop.f32.mrb[0].mxu0
      %v3000 = vpop.f32.mrb[0].mxu0
      %v3001 = vadd.f32 0.0, %v3000
      %v3002 = vpop.f32.mrb[0].mxu0
      %3003 = vmatprep.mubr.bf16.mxu0 0
      %3004 = vmatmul.mubr.bf16.gmra.mrb[0].mxu0 %v1990
      %v3005 = vpop.f32.mrb[0].mxu0
      %v3006 = vadd.f32 0.0, %v3005
      %v3007 = vpop.f32.mrb[0].mxu0
      %v3008 = vpop.f32.mrb[0].mxu0
      %v3009 = vadd.f32 0.0, %v3008
      %v3010 = vpop.f32.mrb[0].mxu0
      %3011 = vmatprep.mubr.bf16.mxu0 0
      %3012 = vmatmul.mubr.bf16.gmra.mrb[0].mxu0 %v1991
      %v3013 = vpop.f32.mrb[0].mxu0
      %v3014 = vadd.f32 0.0, %v3013
      %v3015 = vpop.f32.mrb[0].mxu0
      %v3016 = vpop.f32.mrb[0].mxu0
      %v3017 = vadd.f32 0.0, %v3016
      %v3018 = vpop.f32.mrb[0].mxu0
      %3019 = vmatprep.mubr.bf16.mxu0 0
      %3020 = vmatmul.mubr.bf16.gmra.mrb[0].mxu0 %v1992
      %v3021 = vpop.f32.mrb[0].mxu0
      %v3022 = vadd.f32 0.0, %v3021
      %v3023 = vpop.f32.mrb[0].mxu0
      %v3024 = vpop.f32.mrb[0].mxu0
      %v3025 = vadd.f32 0.0, %v3024
      %v3026 = vpop.f32.mrb[0].mxu0
      %3027 = vmatprep.mubr.bf16.mxu0 0
      %3028 = vmatmul.mubr.bf16.gmra.mrb[0].mxu0 %v1993
      %v3029 = vpop.f32.mrb[0].mxu0
      %v3030 = vadd.f32 0.0, %v3029
      %v3031 = vpop.f32.mrb[0].mxu0
      %v3032 = vpop.f32.mrb[0].mxu0
      %v3033 = vadd.f32 0.0, %v3032
      %v3034 = vpop.f32.mrb[0].mxu0
      %3035 = vmatprep.mubr.bf16.mxu0 0
      %3036 = vmatmul.mubr.bf16.gmra.mrb[0].mxu0 %v1994
      %v3037 = vpop.f32.mrb[0].mxu0
      %v3038 = vadd.f32 0.0, %v3037
      %v3039 = vpop.f32.mrb[0].mxu0
      %v3040 = vpop.f32.mrb[0].mxu0
      %v3041 = vadd.f32 0.0, %v3040
      %v3042 = vpop.f32.mrb[0].mxu0
      %3043 = vmatprep.mubr.bf16.mxu0 0
      %3044 = vmatmul.mubr.bf16.gmra.mrb[0].mxu0 %v1995
      %v3045 = vpop.f32.mrb[0].mxu0
      %v3046 = vadd.f32 0.0, %v3045
      %v3047 = vpop.f32.mrb[0].mxu0
      %v3048 = vpop.f32.mrb[0].mxu0
      %v3049 = vadd.f32 0.0, %v3048
      %v3050 = vpop.f32.mrb[0].mxu0
      %3051 = vmatprep.mubr.bf16.mxu0 0
      %3052 = vmatmul.mubr.bf16.gmra.mrb[0].mxu0 %v1996
      %v3053 = vpop.f32.mrb[0].mxu0
      %v3054 = vadd.f32 0.0, %v3053
      %v3055 = vpop.f32.mrb[0].mxu0
      %v3056 = vpop.f32.mrb[0].mxu0
      %v3057 = vadd.f32 0.0, %v3056
      %v3058 = vpop.f32.mrb[0].mxu0
      %3059 = vmatprep.mubr.bf16.mxu0 0
      %3060 = vmatmul.mubr.bf16.gmra.mrb[0].mxu0 %v1997
      %v3061 = vpop.f32.mrb[0].mxu0
      %v3062 = vadd.f32 0.0, %v3061
      %v3063 = vpop.f32.mrb[0].mxu0
      %v3064 = vpop.f32.mrb[0].mxu0
      %v3065 = vadd.f32 0.0, %v3064
      %v3066 = vpop.f32.mrb[0].mxu0
      %3067 = vmatprep.mubr.bf16.mxu0 0
      %3068 = vmatmul.mubr.bf16.gmra.mrb[0].mxu0 %v1998
      %v3069 = vpop.f32.mrb[0].mxu0
      %v3070 = vadd.f32 0.0, %v3069
      %v3071 = vpop.f32.mrb[0].mxu0
      %v3072 = vpop.f32.mrb[0].mxu0
      %v3073 = vadd.f32 0.0, %v3072
      %v3074 = vpop.f32.mrb[0].mxu0
      %3075 = vmatprep.mubr.bf16.mxu0 0
      %3076 = vmatmul.mubr.bf16.gmra.mrb[0].mxu0 %v1999
      %v3077 = vpop.f32.mrb[0].mxu0
      %v3078 = vadd.f32 0.0, %v3077
      %v3079 = vpop.f32.mrb[0].mxu0
      %v3080 = vpop.f32.mrb[0].mxu0
      %v3081 = vadd.f32 0.0, %v3080
      %v3082 = vpop.f32.mrb[0].mxu0
      %3083 = vmatprep.mubr.bf16.mxu0 0
      %3084 = vmatmul.mubr.bf16.gmra.mrb[0].mxu0 %v2000
      %v3085 = vpop.f32.mrb[0].mxu0
      %v3086 = vadd.f32 0.0, %v3085
      %v3087 = vpop.f32.mrb[0].mxu0
      %v3088 = vpop.f32.mrb[0].mxu0
      %v3089 = vadd.f32 0.0, %v3088
      %v3090 = vpop.f32.mrb[0].mxu0
      %3091 = vmatprep.mubr.bf16.mxu0 0
      %3092 = vmatmul.mubr.bf16.gmra.mrb[0].mxu0 %v2001
      %v3093 = vpop.f32.mrb[0].mxu0
      %v3094 = vadd.f32 0.0, %v3093
      %v3095 = vpop.f32.mrb[0].mxu0
      %v3096 = vpop.f32.mrb[0].mxu0
      %v3097 = vadd.f32 0.0, %v3096
      %v3098 = vpop.f32.mrb[0].mxu0
      %3099 = vdwg.mxu0
      %vm3100 = vsmask.f32 256
      %v3102 = vshrl.u32 %v2683, 16
      %v3104 = vrot.slane %v3102, 7
      %v3106 = vshrl.u32 %v2684, 16
      %v3108 = vrot.slane %v3106, 7
      %v3109 = vshll.u32 %v2684, 16
      %v3111 = vor.u32 %v3108, %v3109
      %v3112 = vsel %vm3100, %v3104, %v3111
      %v3114 = vshrl.u32 %v2685, 16
      %v3116 = vrot.slane %v3114, 7
      %v3117 = vshll.u32 %v2685, 16
      %v3119 = vor.u32 %v3116, %v3117
      %v3120 = vsel %vm3100, %v3108, %v3119
      %v3122 = vshrl.u32 %v2686, 16
      %v3124 = vrot.slane %v3122, 7
      %v3125 = vshll.u32 %v2686, 16
      %v3127 = vor.u32 %v3124, %v3125
      %v3128 = vsel %vm3100, %v3116, %v3127
      %v3130 = vshrl.u32 %v2687, 16
      %v3132 = vrot.slane %v3130, 7
      %v3133 = vshll.u32 %v2687, 16
      %v3135 = vor.u32 %v3132, %v3133
      %v3136 = vsel %vm3100, %v3124, %v3135
      %v3138 = vshrl.u32 %v2688, 16
      %v3140 = vrot.slane %v3138, 7
      %v3141 = vshll.u32 %v2688, 16
      %v3143 = vor.u32 %v3140, %v3141
      %v3144 = vsel %vm3100, %v3132, %v3143
      %v3146 = vshrl.u32 %v2689, 16
      %v3148 = vrot.slane %v3146, 7
      %v3149 = vshll.u32 %v2689, 16
      %v3151 = vor.u32 %v3148, %v3149
      %v3152 = vsel %vm3100, %v3140, %v3151
      %v3154 = vshrl.u32 %v2690, 16
      %v3156 = vrot.slane %v3154, 7
      %v3157 = vshll.u32 %v2690, 16
      %v3159 = vor.u32 %v3156, %v3157
      %v3160 = vsel %vm3100, %v3148, %v3159
      %v3162 = vshrl.u32 %v2691, 16
      %v3164 = vrot.slane %v3162, 7
      %v3165 = vshll.u32 %v2691, 16
      %v3167 = vor.u32 %v3164, %v3165
      %v3168 = vsel %vm3100, %v3156, %v3167
      %v3170 = vshrl.u32 %v2692, 16
      %v3172 = vrot.slane %v3170, 7
      %v3173 = vshll.u32 %v2692, 16
      %v3175 = vor.u32 %v3172, %v3173
      %v3176 = vsel %vm3100, %v3164, %v3175
      %v3178 = vshrl.u32 %v2693, 16
      %v3180 = vrot.slane %v3178, 7
      %v3181 = vshll.u32 %v2693, 16
      %v3183 = vor.u32 %v3180, %v3181
      %v3184 = vsel %vm3100, %v3172, %v3183
      %v3186 = vshrl.u32 %v2694, 16
      %v3188 = vrot.slane %v3186, 7
      %v3189 = vshll.u32 %v2694, 16
      %v3191 = vor.u32 %v3188, %v3189
      %v3192 = vsel %vm3100, %v3180, %v3191
      %v3194 = vshrl.u32 %v2695, 16
      %v3196 = vrot.slane %v3194, 7
      %v3197 = vshll.u32 %v2695, 16
      %v3199 = vor.u32 %v3196, %v3197
      %v3200 = vsel %vm3100, %v3188, %v3199
      %v3202 = vshrl.u32 %v2696, 16
      %v3204 = vrot.slane %v3202, 7
      %v3205 = vshll.u32 %v2696, 16
      %v3207 = vor.u32 %v3204, %v3205
      %v3208 = vsel %vm3100, %v3196, %v3207
      %v3210 = vshrl.u32 %v2697, 16
      %v3212 = vrot.slane %v3210, 7
      %v3213 = vshll.u32 %v2697, 16
      %v3215 = vor.u32 %v3212, %v3213
      %v3216 = vsel %vm3100, %v3204, %v3215
      %v3218 = vshrl.u32 %v2698, 16
      %v3220 = vrot.slane %v3218, 7
      %v3221 = vshll.u32 %v2698, 16
      %v3223 = vor.u32 %v3220, %v3221
      %v3224 = vsel %vm3100, %v3212, %v3223
      %v3226 = vshrl.u32 %v2699, 16
      %v3228 = vrot.slane %v3226, 7
      %v3229 = vshll.u32 %v2699, 16
      %v3231 = vor.u32 %v3228, %v3229
      %v3232 = vsel %vm3100, %v3220, %v3231
      %v3234 = vshrl.u32 %v2700, 16
      %v3236 = vrot.slane %v3234, 7
      %v3237 = vshll.u32 %v2700, 16
      %v3239 = vor.u32 %v3236, %v3237
      %v3240 = vsel %vm3100, %v3228, %v3239
      %v3242 = vshrl.u32 %v2701, 16
      %v3244 = vrot.slane %v3242, 7
      %v3245 = vshll.u32 %v2701, 16
      %v3247 = vor.u32 %v3244, %v3245
      %v3248 = vsel %vm3100, %v3236, %v3247
      %v3250 = vshrl.u32 %v2702, 16
      %v3252 = vrot.slane %v3250, 7
      %v3253 = vshll.u32 %v2702, 16
      %v3255 = vor.u32 %v3252, %v3253
      %v3256 = vsel %vm3100, %v3244, %v3255
      %v3258 = vshrl.u32 %v2703, 16
      %v3260 = vrot.slane %v3258, 7
      %v3261 = vshll.u32 %v2703, 16
      %v3263 = vor.u32 %v3260, %v3261
      %v3264 = vsel %vm3100, %v3252, %v3263
      %v3266 = vshrl.u32 %v2704, 16
      %v3268 = vrot.slane %v3266, 7
      %v3269 = vshll.u32 %v2704, 16
      %v3271 = vor.u32 %v3268, %v3269
      %v3272 = vsel %vm3100, %v3260, %v3271
      %v3274 = vshrl.u32 %v2705, 16
      %v3276 = vrot.slane %v3274, 7
      %v3277 = vshll.u32 %v2705, 16
      %v3279 = vor.u32 %v3276, %v3277
      %v3280 = vsel %vm3100, %v3268, %v3279
      %v3282 = vshrl.u32 %v2706, 16
      %v3284 = vrot.slane %v3282, 7
      %v3285 = vshll.u32 %v2706, 16
      %v3287 = vor.u32 %v3284, %v3285
      %v3288 = vsel %vm3100, %v3276, %v3287
      %v3290 = vshrl.u32 %v2707, 16
      %v3292 = vrot.slane %v3290, 7
      %v3293 = vshll.u32 %v2707, 16
      %v3295 = vor.u32 %v3292, %v3293
      %v3296 = vsel %vm3100, %v3284, %v3295
      %v3298 = vshrl.u32 %v2708, 16
      %v3300 = vrot.slane %v3298, 7
      %v3301 = vshll.u32 %v2708, 16
      %v3303 = vor.u32 %v3300, %v3301
      %v3304 = vsel %vm3100, %v3292, %v3303
      %v3306 = vshrl.u32 %v2709, 16
      %v3308 = vrot.slane %v3306, 7
      %v3309 = vshll.u32 %v2709, 16
      %v3311 = vor.u32 %v3308, %v3309
      %v3312 = vsel %vm3100, %v3300, %v3311
      %v3314 = vshrl.u32 %v2710, 16
      %v3316 = vrot.slane %v3314, 7
      %v3317 = vshll.u32 %v2710, 16
      %v3319 = vor.u32 %v3316, %v3317
      %v3320 = vsel %vm3100, %v3308, %v3319
      %v3322 = vshrl.u32 %v2711, 16
      %v3324 = vrot.slane %v3322, 7
      %v3325 = vshll.u32 %v2711, 16
      %v3327 = vor.u32 %v3324, %v3325
      %v3328 = vsel %vm3100, %v3316, %v3327
      %v3330 = vshrl.u32 %v2712, 16
      %v3332 = vrot.slane %v3330, 7
      %v3333 = vshll.u32 %v2712, 16
      %v3335 = vor.u32 %v3332, %v3333
      %v3336 = vsel %vm3100, %v3324, %v3335
      %v3338 = vshrl.u32 %v2713, 16
      %v3340 = vrot.slane %v3338, 7
      %v3341 = vshll.u32 %v2713, 16
      %v3343 = vor.u32 %v3340, %v3341
      %v3344 = vsel %vm3100, %v3332, %v3343
      %v3346 = vshrl.u32 %v2714, 16
      %v3348 = vrot.slane %v3346, 7
      %v3349 = vshll.u32 %v2714, 16
      %v3351 = vor.u32 %v3348, %v3349
      %v3352 = vsel %vm3100, %v3340, %v3351
      %v3354 = vshrl.u32 %v2715, 16
      %v3356 = vrot.slane %v3354, 7
      %v3357 = vshll.u32 %v2715, 16
      %v3359 = vor.u32 %v3356, %v3357
      %v3360 = vsel %vm3100, %v3348, %v3359
      %v3362 = vshrl.u32 %v2716, 16
      %v3364 = vrot.slane %v3362, 7
      %v3365 = vshll.u32 %v2716, 16
      %v3367 = vor.u32 %v3364, %v3365
      %v3368 = vsel %vm3100, %v3356, %v3367
      %v3370 = vshrl.u32 %v2717, 16
      %v3372 = vrot.slane %v3370, 7
      %v3373 = vshll.u32 %v2717, 16
      %v3375 = vor.u32 %v3372, %v3373
      %v3376 = vsel %vm3100, %v3364, %v3375
      %v3427 = vunpack.c.l.b16 %v2718
      %v3428 = vunpack.c.l.b16 %v2719
      %v3429 = vunpack.c.l.b16 %v2720
      %v3430 = vunpack.c.l.b16 %v2721
      %v3431 = vunpack.c.l.b16 %v2722
      %v3432 = vunpack.c.l.b16 %v2723
      %v3433 = vunpack.c.l.b16 %v2724
      %v3434 = vunpack.c.l.b16 %v2725
      %v3435 = vunpack.c.l.b16 %v2726
      %v3436 = vunpack.c.l.b16 %v2727
      %v3437 = vunpack.c.l.b16 %v2728
      %v3438 = vunpack.c.l.b16 %v2729
      %v3439 = vunpack.c.l.b16 %v2730
      %v3440 = vunpack.c.l.b16 %v2731
      %v3441 = vunpack.c.l.b16 %v2732
      %v3442 = vunpack.c.l.b16 %v2733
      %v3443 = vpack.c.b16 %v3428, %v3427
      %v3444 = vpack.c.b16 %v3430, %v3429
      %v3445 = vpack.c.b16 %v3432, %v3431
      %v3446 = vpack.c.b16 %v3434, %v3433
      %v3447 = vpack.c.b16 %v3436, %v3435
      %v3448 = vpack.c.b16 %v3438, %v3437
      %v3449 = vpack.c.b16 %v3440, %v3439
      %v3450 = vpack.c.b16 %v3442, %v3441
      %3459 = vmatprep.subr.bf16.mxu0 0
      %3460 = vmatpush1.bf16.msra.mxu0 %v3443
      %3461 = vmatprep.subr.bf16.mxu0 0
      %3462 = vmatpush1.bf16.msra.mxu0 %v3444
      %3463 = vmatprep.subr.bf16.mxu0 0
      %3464 = vmatpush1.bf16.msra.mxu0 %v3445
      %3465 = vmatprep.subr.bf16.mxu0 0
      %3466 = vmatpush1.bf16.msra.mxu0 %v3446
      %3467 = vmatprep.subr.bf16.mxu0 0
      %3468 = vmatpush1.bf16.msra.mxu0 %v3447
      %3469 = vmatprep.subr.bf16.mxu0 0
      %3470 = vmatpush1.bf16.msra.mxu0 %v3448
      %3471 = vmatprep.subr.bf16.mxu0 0
      %3472 = vmatpush1.bf16.msra.mxu0 %v3449
      %3473 = vmatprep.subr.bf16.mxu0 0
      %3474 = vmatpush1.bf16.msra.mxu0 %v3450
      %3475 = vmatprep.subr.bf16.mxu0 0
      %3476 = vmatpush1.bf16.msra.mxu0 0
      %3477 = vmatprep.subr.bf16.mxu0 0
      %3478 = vmatpush1.bf16.msra.mxu0 0
      %3479 = vmatprep.subr.bf16.mxu0 0
      %3480 = vmatpush1.bf16.msra.mxu0 0
      %3481 = vmatprep.subr.bf16.mxu0 0
      %3482 = vmatpush1.bf16.msra.mxu0 0
      %3483 = vmatprep.subr.bf16.mxu0 0
      %3484 = vmatpush1.bf16.msra.mxu0 0
      %3485 = vmatprep.subr.bf16.mxu0 0
      %3486 = vmatpush1.bf16.msra.mxu0 0
      %3487 = vmatprep.subr.bf16.mxu0 0
      %3488 = vmatpush1.bf16.msra.mxu0 0
      %3489 = vmatprep.subr.bf16.mxu0 0
      %3490 = vmatpush1.bf16.msra.mxu0 0
      %3491 = vmatprep.mubr.bf16.mxu0 0
      %3492 = vmatmul.mubr.bf16.gmra.mrb[0].mxu0 %v3112
      %v3493 = vpop.f32.mrb[0].mxu0
      %v3494 = vadd.f32 %v2834, %v3493
      %v3495 = vpop.f32.mrb[0].mxu0
      %v3496 = vpop.f32.mrb[0].mxu0
      %v3497 = vadd.f32 %v2837, %v3496
      %v3498 = vpop.f32.mrb[0].mxu0
      %3499 = vmatprep.mubr.bf16.mxu0 0
      %3500 = vmatmul.mubr.bf16.gmra.mrb[0].mxu0 %v3120
      %v3501 = vpop.f32.mrb[0].mxu0
      %v3502 = vadd.f32 %v2842, %v3501
      %v3503 = vpop.f32.mrb[0].mxu0
      %v3504 = vpop.f32.mrb[0].mxu0
      %v3505 = vadd.f32 %v2845, %v3504
      %v3506 = vpop.f32.mrb[0].mxu0
      %3507 = vmatprep.mubr.bf16.mxu0 0
      %3508 = vmatmul.mubr.bf16.gmra.mrb[0].mxu0 %v3128
      %v3509 = vpop.f32.mrb[0].mxu0
      %v3510 = vadd.f32 %v2850, %v3509
      %v3511 = vpop.f32.mrb[0].mxu0
      %v3512 = vpop.f32.mrb[0].mxu0
      %v3513 = vadd.f32 %v2853, %v3512
      %v3514 = vpop.f32.mrb[0].mxu0
      %3515 = vmatprep.mubr.bf16.mxu0 0
      %3516 = vmatmul.mubr.bf16.gmra.mrb[0].mxu0 %v3136
      %v3517 = vpop.f32.mrb[0].mxu0
      %v3518 = vadd.f32 %v2858, %v3517
      %v3519 = vpop.f32.mrb[0].mxu0
      %v3520 = vpop.f32.mrb[0].mxu0
      %v3521 = vadd.f32 %v2861, %v3520
      %v3522 = vpop.f32.mrb[0].mxu0
      %3523 = vmatprep.mubr.bf16.mxu0 0
      %3524 = vmatmul.mubr.bf16.gmra.mrb[0].mxu0 %v3144
      %v3525 = vpop.f32.mrb[0].mxu0
      %v3526 = vadd.f32 %v2866, %v3525
      %v3527 = vpop.f32.mrb[0].mxu0
      %v3528 = vpop.f32.mrb[0].mxu0
      %v3529 = vadd.f32 %v2869, %v3528
      %v3530 = vpop.f32.mrb[0].mxu0
      %3531 = vmatprep.mubr.bf16.mxu0 0
      %3532 = vmatmul.mubr.bf16.gmra.mrb[0].mxu0 %v3152
      %v3533 = vpop.f32.mrb[0].mxu0
      %v3534 = vadd.f32 %v2874, %v3533
      %v3535 = vpop.f32.mrb[0].mxu0
      %v3536 = vpop.f32.mrb[0].mxu0
      %v3537 = vadd.f32 %v2877, %v3536
      %v3538 = vpop.f32.mrb[0].mxu0
      %3539 = vmatprep.mubr.bf16.mxu0 0
      %3540 = vmatmul.mubr.bf16.gmra.mrb[0].mxu0 %v3160
      %v3541 = vpop.f32.mrb[0].mxu0
      %v3542 = vadd.f32 %v2882, %v3541
      %v3543 = vpop.f32.mrb[0].mxu0
      %v3544 = vpop.f32.mrb[0].mxu0
      %v3545 = vadd.f32 %v2885, %v3544
      %v3546 = vpop.f32.mrb[0].mxu0
      %3547 = vmatprep.mubr.bf16.mxu0 0
      %3548 = vmatmul.mubr.bf16.gmra.mrb[0].mxu0 %v3168
      %v3549 = vpop.f32.mrb[0].mxu0
      %v3550 = vadd.f32 %v2890, %v3549
      %v3551 = vpop.f32.mrb[0].mxu0
      %v3552 = vpop.f32.mrb[0].mxu0
      %v3553 = vadd.f32 %v2893, %v3552
      %v3554 = vpop.f32.mrb[0].mxu0
      %3555 = vmatprep.mubr.bf16.mxu0 0
      %3556 = vmatmul.mubr.bf16.gmra.mrb[0].mxu0 %v3176
      %v3557 = vpop.f32.mrb[0].mxu0
      %v3558 = vadd.f32 %v2898, %v3557
      %v3559 = vpop.f32.mrb[0].mxu0
      %v3560 = vpop.f32.mrb[0].mxu0
      %v3561 = vadd.f32 %v2901, %v3560
      %v3562 = vpop.f32.mrb[0].mxu0
      %3563 = vmatprep.mubr.bf16.mxu0 0
      %3564 = vmatmul.mubr.bf16.gmra.mrb[0].mxu0 %v3184
      %v3565 = vpop.f32.mrb[0].mxu0
      %v3566 = vadd.f32 %v2906, %v3565
      %v3567 = vpop.f32.mrb[0].mxu0
      %v3568 = vpop.f32.mrb[0].mxu0
      %v3569 = vadd.f32 %v2909, %v3568
      %v3570 = vpop.f32.mrb[0].mxu0
      %3571 = vmatprep.mubr.bf16.mxu0 0
      %3572 = vmatmul.mubr.bf16.gmra.mrb[0].mxu0 %v3192
      %v3573 = vpop.f32.mrb[0].mxu0
      %v3574 = vadd.f32 %v2914, %v3573
      %v3575 = vpop.f32.mrb[0].mxu0
      %v3576 = vpop.f32.mrb[0].mxu0
      %v3577 = vadd.f32 %v2917, %v3576
      %v3578 = vpop.f32.mrb[0].mxu0
      %3579 = vmatprep.mubr.bf16.mxu0 0
      %3580 = vmatmul.mubr.bf16.gmra.mrb[0].mxu0 %v3200
      %v3581 = vpop.f32.mrb[0].mxu0
      %v3582 = vadd.f32 %v2922, %v3581
      %v3583 = vpop.f32.mrb[0].mxu0
      %v3584 = vpop.f32.mrb[0].mxu0
      %v3585 = vadd.f32 %v2925, %v3584
      %v3586 = vpop.f32.mrb[0].mxu0
      %3587 = vmatprep.mubr.bf16.mxu0 0
      %3588 = vmatmul.mubr.bf16.gmra.mrb[0].mxu0 %v3208
      %v3589 = vpop.f32.mrb[0].mxu0
      %v3590 = vadd.f32 %v2930, %v3589
      %v3591 = vpop.f32.mrb[0].mxu0
      %v3592 = vpop.f32.mrb[0].mxu0
      %v3593 = vadd.f32 %v2933, %v3592
      %v3594 = vpop.f32.mrb[0].mxu0
      %3595 = vmatprep.mubr.bf16.mxu0 0
      %3596 = vmatmul.mubr.bf16.gmra.mrb[0].mxu0 %v3216
      %v3597 = vpop.f32.mrb[0].mxu0
      %v3598 = vadd.f32 %v2938, %v3597
      %v3599 = vpop.f32.mrb[0].mxu0
      %v3600 = vpop.f32.mrb[0].mxu0
      %v3601 = vadd.f32 %v2941, %v3600
      %v3602 = vpop.f32.mrb[0].mxu0
      %3603 = vmatprep.mubr.bf16.mxu0 0
      %3604 = vmatmul.mubr.bf16.gmra.mrb[0].mxu0 %v3224
      %v3605 = vpop.f32.mrb[0].mxu0
      %v3606 = vadd.f32 %v2946, %v3605
      %v3607 = vpop.f32.mrb[0].mxu0
      %v3608 = vpop.f32.mrb[0].mxu0
      %v3609 = vadd.f32 %v2949, %v3608
      %v3610 = vpop.f32.mrb[0].mxu0
      %3611 = vmatprep.mubr.bf16.mxu0 0
      %3612 = vmatmul.mubr.bf16.gmra.mrb[0].mxu0 %v3232
      %v3613 = vpop.f32.mrb[0].mxu0
      %v3614 = vadd.f32 %v2954, %v3613
      %v3615 = vpop.f32.mrb[0].mxu0
      %v3616 = vpop.f32.mrb[0].mxu0
      %v3617 = vadd.f32 %v2957, %v3616
      %v3618 = vpop.f32.mrb[0].mxu0
      %3619 = vmatprep.mubr.bf16.mxu0 0
      %3620 = vmatmul.mubr.bf16.gmra.mrb[0].mxu0 %v3240
      %v3621 = vpop.f32.mrb[0].mxu0
      %v3622 = vpop.f32.mrb[0].mxu0
      %v3623 = vpop.f32.mrb[0].mxu0
      %v3624 = vpop.f32.mrb[0].mxu0
      %3625 = vmatprep.mubr.bf16.mxu0 0
      %3626 = vmatmul.mubr.bf16.gmra.mrb[0].mxu0 %v3248
      %v3627 = vpop.f32.mrb[0].mxu0
      %v3628 = vpop.f32.mrb[0].mxu0
      %v3629 = vpop.f32.mrb[0].mxu0
      %v3630 = vpop.f32.mrb[0].mxu0
      %3631 = vmatprep.mubr.bf16.mxu0 0
      %3632 = vmatmul.mubr.bf16.gmra.mrb[0].mxu0 %v3256
      %v3633 = vpop.f32.mrb[0].mxu0
      %v3634 = vadd.f32 %v2974, %v3633
      %v3635 = vpop.f32.mrb[0].mxu0
      %v3636 = vpop.f32.mrb[0].mxu0
      %v3637 = vadd.f32 %v2977, %v3636
      %v3638 = vpop.f32.mrb[0].mxu0
      %3639 = vmatprep.mubr.bf16.mxu0 0
      %3640 = vmatmul.mubr.bf16.gmra.mrb[0].mxu0 %v3264
      %v3641 = vpop.f32.mrb[0].mxu0
      %v3642 = vadd.f32 %v2982, %v3641
      %v3643 = vpop.f32.mrb[0].mxu0
      %v3644 = vpop.f32.mrb[0].mxu0
      %v3645 = vadd.f32 %v2985, %v3644
      %v3646 = vpop.f32.mrb[0].mxu0
      %3647 = vmatprep.mubr.bf16.mxu0 0
      %3648 = vmatmul.mubr.bf16.gmra.mrb[0].mxu0 %v3272
      %v3649 = vpop.f32.mrb[0].mxu0
      %v3650 = vadd.f32 %v2990, %v3649
      %v3651 = vpop.f32.mrb[0].mxu0
      %v3652 = vpop.f32.mrb[0].mxu0
      %v3653 = vadd.f32 %v2993, %v3652
      %v3654 = vpop.f32.mrb[0].mxu0
      %3655 = vmatprep.mubr.bf16.mxu0 0
      %3656 = vmatmul.mubr.bf16.gmra.mrb[0].mxu0 %v3280
      %v3657 = vpop.f32.mrb[0].mxu0
      %v3658 = vadd.f32 %v2998, %v3657
      %v3659 = vpop.f32.mrb[0].mxu0
      %v3660 = vpop.f32.mrb[0].mxu0
      %v3661 = vadd.f32 %v3001, %v3660
      %v3662 = vpop.f32.mrb[0].mxu0
      %3663 = vmatprep.mubr.bf16.mxu0 0
      %3664 = vmatmul.mubr.bf16.gmra.mrb[0].mxu0 %v3288
      %v3665 = vpop.f32.mrb[0].mxu0
      %v3666 = vadd.f32 %v3006, %v3665
      %v3667 = vpop.f32.mrb[0].mxu0
      %v3668 = vpop.f32.mrb[0].mxu0
      %v3669 = vadd.f32 %v3009, %v3668
      %v3670 = vpop.f32.mrb[0].mxu0
      %3671 = vmatprep.mubr.bf16.mxu0 0
      %3672 = vmatmul.mubr.bf16.gmra.mrb[0].mxu0 %v3296
      %v3673 = vpop.f32.mrb[0].mxu0
      %v3674 = vadd.f32 %v3014, %v3673
      %v3675 = vpop.f32.mrb[0].mxu0
      %v3676 = vpop.f32.mrb[0].mxu0
      %v3677 = vadd.f32 %v3017, %v3676
      %v3678 = vpop.f32.mrb[0].mxu0
      %3679 = vmatprep.mubr.bf16.mxu0 0
      %3680 = vmatmul.mubr.bf16.gmra.mrb[0].mxu0 %v3304
      %v3681 = vpop.f32.mrb[0].mxu0
      %v3682 = vadd.f32 %v3022, %v3681
      %v3683 = vpop.f32.mrb[0].mxu0
      %v3684 = vpop.f32.mrb[0].mxu0
      %v3685 = vadd.f32 %v3025, %v3684
      %v3686 = vpop.f32.mrb[0].mxu0
      %3687 = vmatprep.mubr.bf16.mxu0 0
      %3688 = vmatmul.mubr.bf16.gmra.mrb[0].mxu0 %v3312
      %v3689 = vpop.f32.mrb[0].mxu0
      %v3690 = vadd.f32 %v3030, %v3689
      %v3691 = vpop.f32.mrb[0].mxu0
      %v3692 = vpop.f32.mrb[0].mxu0
      %v3693 = vadd.f32 %v3033, %v3692
      %v3694 = vpop.f32.mrb[0].mxu0
      %3695 = vmatprep.mubr.bf16.mxu0 0
      %3696 = vmatmul.mubr.bf16.gmra.mrb[0].mxu0 %v3320
      %v3697 = vpop.f32.mrb[0].mxu0
      %v3698 = vadd.f32 %v3038, %v3697
      %v3699 = vpop.f32.mrb[0].mxu0
      %v3700 = vpop.f32.mrb[0].mxu0
      %v3701 = vadd.f32 %v3041, %v3700
      %v3702 = vpop.f32.mrb[0].mxu0
      %3703 = vmatprep.mubr.bf16.mxu0 0
      %3704 = vmatmul.mubr.bf16.gmra.mrb[0].mxu0 %v3328
      %v3705 = vpop.f32.mrb[0].mxu0
      %v3706 = vadd.f32 %v3046, %v3705
      %v3707 = vpop.f32.mrb[0].mxu0
      %v3708 = vpop.f32.mrb[0].mxu0
      %v3709 = vadd.f32 %v3049, %v3708
      %v3710 = vpop.f32.mrb[0].mxu0
      %3711 = vmatprep.mubr.bf16.mxu0 0
      %3712 = vmatmul.mubr.bf16.gmra.mrb[0].mxu0 %v3336
      %v3713 = vpop.f32.mrb[0].mxu0
      %v3714 = vadd.f32 %v3054, %v3713
      %v3715 = vpop.f32.mrb[0].mxu0
      %v3716 = vpop.f32.mrb[0].mxu0
      %v3717 = vadd.f32 %v3057, %v3716
      %v3718 = vpop.f32.mrb[0].mxu0
      %3719 = vmatprep.mubr.bf16.mxu0 0
      %3720 = vmatmul.mubr.bf16.gmra.mrb[0].mxu0 %v3344
      %v3721 = vpop.f32.mrb[0].mxu0
      %v3722 = vadd.f32 %v3062, %v3721
      %v3723 = vpop.f32.mrb[0].mxu0
      %v3724 = vpop.f32.mrb[0].mxu0
      %v3725 = vadd.f32 %v3065, %v3724
      %v3726 = vpop.f32.mrb[0].mxu0
      %3727 = vmatprep.mubr.bf16.mxu0 0
      %3728 = vmatmul.mubr.bf16.gmra.mrb[0].mxu0 %v3352
      %v3729 = vpop.f32.mrb[0].mxu0
      %v3730 = vadd.f32 %v3070, %v3729
      %v3731 = vpop.f32.mrb[0].mxu0
      %v3732 = vpop.f32.mrb[0].mxu0
      %v3733 = vadd.f32 %v3073, %v3732
      %v3734 = vpop.f32.mrb[0].mxu0
      %3735 = vmatprep.mubr.bf16.mxu0 0
      %3736 = vmatmul.mubr.bf16.gmra.mrb[0].mxu0 %v3360
      %v3737 = vpop.f32.mrb[0].mxu0
      %v3738 = vadd.f32 %v3078, %v3737
      %v3739 = vpop.f32.mrb[0].mxu0
      %v3740 = vpop.f32.mrb[0].mxu0
      %v3741 = vadd.f32 %v3081, %v3740
      %v3742 = vpop.f32.mrb[0].mxu0
      %3743 = vmatprep.mubr.bf16.mxu0 0
      %3744 = vmatmul.mubr.bf16.gmra.mrb[0].mxu0 %v3368
      %v3745 = vpop.f32.mrb[0].mxu0
      %v3746 = vadd.f32 %v3086, %v3745
      %v3747 = vpop.f32.mrb[0].mxu0
      %v3748 = vpop.f32.mrb[0].mxu0
      %v3749 = vadd.f32 %v3089, %v3748
      %v3750 = vpop.f32.mrb[0].mxu0
      %3751 = vmatprep.mubr.bf16.mxu0 0
      %3752 = vmatmul.mubr.bf16.gmra.mrb[0].mxu0 %v3376
      %v3753 = vpop.f32.mrb[0].mxu0
      %v3754 = vadd.f32 %v3094, %v3753
      %v3755 = vpop.f32.mrb[0].mxu0
      %v3756 = vpop.f32.mrb[0].mxu0
      %v3757 = vadd.f32 %v3097, %v3756
      %v3758 = vpop.f32.mrb[0].mxu0
      %3759 = vdwg.mxu0
      %v3760 = vld [vmem:[#allocation2 + $0x8] sm:$0xff]
      %v3761 = vld [vmem:[#allocation2 + $0x10] sm:$0xff]
      %v3762 = vld [vmem:[#allocation2 + $0x18] sm:$0xff]
      %v3763 = vld [vmem:[#allocation2 + $0x20] sm:$0xff]
      %v3764 = vld [vmem:[#allocation2 + $0x28] sm:$0xff]
      %v3765 = vld [vmem:[#allocation2 + $0x30] sm:$0xff]
      %v3766 = vld [vmem:[#allocation2 + $0x38] sm:$0xff]
      %v3767 = vld [vmem:[#allocation2 + $0x40] sm:$0xff]
      %v3768 = vld [vmem:[#allocation2 + $0x48] sm:$0xff]
      %v3769 = vld [vmem:[#allocation2 + $0x50] sm:$0xff]
      %v3770 = vld [vmem:[#allocation2 + $0x58] sm:$0xff]
      %v3771 = vld [vmem:[#allocation2 + $0x60] sm:$0xff]
      %v3772 = vld [vmem:[#allocation2 + $0x68] sm:$0xff]
      %v3773 = vld [vmem:[#allocation2 + $0x70] sm:$0xff]
      %v3774 = vld [vmem:[#allocation2 + $0x78] sm:$0xff]
      %v3775 = vld [vmem:[#allocation2 + $0x80] sm:$0xff]
      %v3776 = vld [vmem:[#allocation2 + $0x88] sm:$0xff]
      %v3777 = vld [vmem:[#allocation2 + $0x90] sm:$0xff]
      %v3778 = vld [vmem:[#allocation2 + $0x98] sm:$0xff]
      %v3779 = vld [vmem:[#allocation2 + $0xa0] sm:$0xff]
      %v3780 = vld [vmem:[#allocation2 + $0xa8] sm:$0xff]
      %v3781 = vld [vmem:[#allocation2 + $0xb0] sm:$0xff]
      %v3782 = vld [vmem:[#allocation2 + $0xb8] sm:$0xff]
      %v3783 = vld [vmem:[#allocation2 + $0xc0] sm:$0xff]
      %v3784 = vld [vmem:[#allocation2 + $0xc8] sm:$0xff]
      %v3785 = vld [vmem:[#allocation2 + $0xd0] sm:$0xff]
      %v3786 = vld [vmem:[#allocation2 + $0xd8] sm:$0xff]
      %v3787 = vld [vmem:[#allocation2 + $0xe0] sm:$0xff]
      %v3788 = vld [vmem:[#allocation2 + $0xe8] sm:$0xff]
      %v3789 = vld [vmem:[#allocation2 + $0xf0] sm:$0xff]
      %v3790 = vld [vmem:[#allocation2 + $0xf8] sm:$0xff]
      %v3791 = vld [vmem:[#allocation2 + $0x100] sm:$0xff]
      %v3792 = vld [vmem:[#allocation2 + $0x108] sm:$0xff]
      %v3793 = vld [vmem:[#allocation2 + $0x110] sm:$0xff]
      %v3794 = vld [vmem:[#allocation2 + $0x118] sm:$0x1]
      %v3795 = vsel %vm1899, 1, 0
      %v3796 = vsel %vm1900, 1, 0
      %v3797 = vsel %vm1901, 1, 0
      %v3798 = vsel %vm1902, 1, 0
      %v3799 = vsel %vm1903, 1, 0
      %v3800 = vsel %vm1904, 1, 0
      %v3801 = vsel %vm1905, 1, 0
      %v3802 = vsel %vm1906, 1, 0
      %v3803 = vsel %vm1907, 1, 0
      %v3804 = vsel %vm1908, 1, 0
      %v3805 = vsel %vm1909, 1, 0
      %v3806 = vsel %vm1910, 1, 0
      %v3807 = vsel %vm1911, 1, 0
      %v3808 = vsel %vm1912, 1, 0
      %v3809 = vsel %vm1913, 1, 0
      %v3810 = vsel %vm1914, 1, 0
      %v3811 = vsel %vm1915, 1, 0
      %v3812 = vsel %vm1916, 1, 0
      %v3813 = vsel %vm1917, 1, 0
      %v3814 = vsel %vm1918, 1, 0
      %v3815 = vsel %vm1919, 1, 0
      %v3816 = vsel %vm1920, 1, 0
      %v3817 = vsel %vm1921, 1, 0
      %v3818 = vsel %vm1922, 1, 0
      %v3819 = vsel %vm1923, 1, 0
      %v3820 = vsel %vm1924, 1, 0
      %v3821 = vsel %vm1925, 1, 0
      %v3822 = vsel %vm1926, 1, 0
      %v3823 = vsel %vm1927, 1, 0
      %v3824 = vsel %vm1928, 1, 0
      %v3825 = vsel %vm1929, 1, 0
      %v3826 = vsel %vm1930, 1, 0
      %v3827 = vsel %vm1931, 1, 0
      %v3828 = vsel %vm1932, 1, 0
      %v3829 = vsel %vm1933, 1, 0
      %v3830 = vsel %vm1934, 1, 0
      %v3831 = vsel %vm1935, 1, 0
      %v3832 = vsel %vm1936, 1, 0
      %v3833 = vsel %vm1937, 1, 0
      %v3834 = vsel %vm1938, 1, 0
      %v3835 = vsel %vm1939, 1, 0
      %v3836 = vsel %vm1940, 1, 0
      %v3837 = vsel %vm1941, 1, 0
      %v3838 = vsel %vm1942, 1, 0
      %v3839 = vsel %vm1943, 1, 0
      %v3840 = vsel %vm1944, 1, 0
      %v3841 = vsel %vm1945, 1, 0
      %v3842 = vsel %vm1946, 1, 0
      %v3843 = vsel %vm1947, 1, 0
      %v3844 = vsel %vm1948, 1, 0
      %v3845 = vsel %vm1949, 1, 0
      %v3846 = vsel %vm1950, 1, 0
      %v3847 = vsel %vm1951, 1, 0
      %v3848 = vsel %vm1952, 1, 0
      %v3849 = vsel %vm1953, 1, 0
      %v3850 = vsel %vm1954, 1, 0
      %v3851 = vsel %vm1955, 1, 0
      %v3852 = vsel %vm1956, 1, 0
      %v3853 = vsel %vm1957, 1, 0
      %v3854 = vsel %vm1958, 1, 0
      %v3855 = vsel %vm1959, 1, 0
      %v3856 = vsel %vm1960, 1, 0
      %v3857 = vsel %vm1961, 1, 0
      %v3858 = vsel %vm1962, 1, 0
      %v3859 = vsel %vm1963, 1, 0
      %v3860 = vsel %vm1964, 1, 0
      %v3861 = vsel %vm1965, 1, 0
      %v3862 = vsel %vm1966, 1, 0
      %vm3863 = vcmp.eq.s32.totalorder %v3795, 1
      %vm3864 = vcmp.eq.s32.totalorder %v3796, 1
      %vm3865 = vcmp.eq.s32.totalorder %v3797, 1
      %vm3866 = vcmp.eq.s32.totalorder %v3798, 1
      %vm3867 = vcmp.eq.s32.totalorder %v3799, 1
      %vm3868 = vcmp.eq.s32.totalorder %v3800, 1
      %vm3869 = vcmp.eq.s32.totalorder %v3801, 1
      %vm3870 = vcmp.eq.s32.totalorder %v3802, 1
      %vm3871 = vcmp.eq.s32.totalorder %v3803, 1
      %vm3872 = vcmp.eq.s32.totalorder %v3804, 1
      %vm3873 = vcmp.eq.s32.totalorder %v3805, 1
      %vm3874 = vcmp.eq.s32.totalorder %v3806, 1
      %vm3875 = vcmp.eq.s32.totalorder %v3807, 1
      %vm3876 = vcmp.eq.s32.totalorder %v3808, 1
      %vm3877 = vcmp.eq.s32.totalorder %v3809, 1
      %vm3878 = vcmp.eq.s32.totalorder %v3810, 1
      %vm3879 = vcmp.eq.s32.totalorder %v3811, 1
      %vm3880 = vcmp.eq.s32.totalorder %v3812, 1
      %vm3881 = vcmp.eq.s32.totalorder %v3813, 1
      %vm3882 = vcmp.eq.s32.totalorder %v3814, 1
      %vm3883 = vcmp.eq.s32.totalorder %v3815, 1
      %vm3884 = vcmp.eq.s32.totalorder %v3816, 1
      %vm3885 = vcmp.eq.s32.totalorder %v3817, 1
      %vm3886 = vcmp.eq.s32.totalorder %v3818, 1
      %vm3887 = vcmp.eq.s32.totalorder %v3819, 1
      %vm3888 = vcmp.eq.s32.totalorder %v3820, 1
      %vm3889 = vcmp.eq.s32.totalorder %v3821, 1
      %vm3890 = vcmp.eq.s32.totalorder %v3822, 1
      %vm3891 = vcmp.eq.s32.totalorder %v3823, 1
      %vm3892 = vcmp.eq.s32.totalorder %v3824, 1
      %vm3893 = vcmp.eq.s32.totalorder %v3825, 1
      %vm3894 = vcmp.eq.s32.totalorder %v3826, 1
      %vm3895 = vcmp.eq.s32.totalorder %v3827, 1
      %vm3896 = vcmp.eq.s32.totalorder %v3828, 1
      %vm3897 = vcmp.eq.s32.totalorder %v3829, 1
      %vm3898 = vcmp.eq.s32.totalorder %v3830, 1
      %vm3899 = vcmp.eq.s32.totalorder %v3831, 1
      %vm3900 = vcmp.eq.s32.totalorder %v3832, 1
      %vm3901 = vcmp.eq.s32.totalorder %v3833, 1
      %vm3902 = vcmp.eq.s32.totalorder %v3834, 1
      %vm3903 = vcmp.eq.s32.totalorder %v3835, 1
      %vm3904 = vcmp.eq.s32.totalorder %v3836, 1
      %vm3905 = vcmp.eq.s32.totalorder %v3837, 1
      %vm3906 = vcmp.eq.s32.totalorder %v3838, 1
      %vm3907 = vcmp.eq.s32.totalorder %v3839, 1
      %vm3908 = vcmp.eq.s32.totalorder %v3840, 1
      %vm3909 = vcmp.eq.s32.totalorder %v3841, 1
      %vm3910 = vcmp.eq.s32.totalorder %v3842, 1
      %vm3911 = vcmp.eq.s32.totalorder %v3843, 1
      %vm3912 = vcmp.eq.s32.totalorder %v3844, 1
      %vm3913 = vcmp.eq.s32.totalorder %v3845, 1
      %vm3914 = vcmp.eq.s32.totalorder %v3846, 1
      %vm3915 = vcmp.eq.s32.totalorder %v3847, 1
      %vm3916 = vcmp.eq.s32.totalorder %v3848, 1
      %vm3917 = vcmp.eq.s32.totalorder %v3849, 1
      %vm3918 = vcmp.eq.s32.totalorder %v3850, 1
      %vm3919 = vcmp.eq.s32.totalorder %v3851, 1
      %vm3920 = vcmp.eq.s32.totalorder %v3852, 1
      %vm3921 = vcmp.eq.s32.totalorder %v3853, 1
      %vm3922 = vcmp.eq.s32.totalorder %v3854, 1
      %vm3923 = vcmp.eq.s32.totalorder %v3855, 1
      %vm3924 = vcmp.eq.s32.totalorder %v3856, 1
      %vm3925 = vcmp.eq.s32.totalorder %v3857, 1
      %vm3926 = vcmp.eq.s32.totalorder %v3858, 1
      %vm3927 = vcmp.eq.s32.totalorder %v3859, 1
      %vm3928 = vcmp.eq.s32.totalorder %v3860, 1
      %vm3929 = vcmp.eq.s32.totalorder %v3861, 1
      %vm3930 = vcmp.eq.s32.totalorder %v3862, 1
      %vm3931 = vmpackc.low %vm3863, %vm3863
      %vm3932 = vmpackc.low %vm3864, %vm3864
      %vm3933 = vmpackc.low %vm3865, %vm3865
      %vm3934 = vmpackc.low %vm3866, %vm3866
      %vm3935 = vmpackc.low %vm3867, %vm3867
      %vm3936 = vmpackc.low %vm3868, %vm3868
      %vm3937 = vmpackc.low %vm3869, %vm3869
      %vm3938 = vmpackc.low %vm3870, %vm3870
      %vm3939 = vmpackc.low %vm3871, %vm3871
      %vm3940 = vmpackc.low %vm3872, %vm3872
      %vm3941 = vmpackc.low %vm3873, %vm3873
      %vm3942 = vmpackc.low %vm3874, %vm3874
      %vm3943 = vmpackc.low %vm3875, %vm3875
      %vm3944 = vmpackc.low %vm3876, %vm3876
      %vm3945 = vmpackc.low %vm3877, %vm3877
      %vm3946 = vmpackc.low %vm3878, %vm3878
      %vm3947 = vmpackc.low %vm3879, %vm3879
      %vm3948 = vmpackc.low %vm3880, %vm3880
      %vm3949 = vmpackc.low %vm3881, %vm3881
      %vm3950 = vmpackc.low %vm3882, %vm3882
      %vm3951 = vmpackc.low %vm3883, %vm3883
      %vm3952 = vmpackc.low %vm3884, %vm3884
      %vm3953 = vmpackc.low %vm3885, %vm3885
      %vm3954 = vmpackc.low %vm3886, %vm3886
      %vm3955 = vmpackc.low %vm3887, %vm3887
      %vm3956 = vmpackc.low %vm3888, %vm3888
      %vm3957 = vmpackc.low %vm3889, %vm3889
      %vm3958 = vmpackc.low %vm3890, %vm3890
      %vm3959 = vmpackc.low %vm3891, %vm3891
      %vm3960 = vmpackc.low %vm3892, %vm3892
      %vm3961 = vmpackc.low %vm3893, %vm3893
      %vm3962 = vmpackc.low %vm3894, %vm3894
      %vm3963 = vmpackc.low %vm3895, %vm3895
      %vm3964 = vmpackc.low %vm3896, %vm3896
      %vm3965 = vmpackc.low %vm3897, %vm3897
      %vm3966 = vmpackc.low %vm3898, %vm3898
      %vm3967 = vmpackc.low %vm3899, %vm3899
      %vm3968 = vmpackc.low %vm3900, %vm3900
      %vm3969 = vmpackc.low %vm3901, %vm3901
      %vm3970 = vmpackc.low %vm3902, %vm3902
      %vm3971 = vmpackc.low %vm3903, %vm3903
      %vm3972 = vmpackc.low %vm3904, %vm3904
      %vm3973 = vmpackc.low %vm3905, %vm3905
      %vm3974 = vmpackc.low %vm3906, %vm3906
      %vm3975 = vmpackc.low %vm3907, %vm3907
      %vm3976 = vmpackc.low %vm3908, %vm3908
      %vm3977 = vmpackc.low %vm3909, %vm3909
      %vm3978 = vmpackc.low %vm3910, %vm3910
      %vm3979 = vmpackc.low %vm3911, %vm3911
      %vm3980 = vmpackc.low %vm3912, %vm3912
      %vm3981 = vmpackc.low %vm3913, %vm3913
      %vm3982 = vmpackc.low %vm3914, %vm3914
      %vm3983 = vmpackc.low %vm3915, %vm3915
      %vm3984 = vmpackc.low %vm3916, %vm3916
      %vm3985 = vmpackc.low %vm3917, %vm3917
      %vm3986 = vmpackc.low %vm3918, %vm3918
      %vm3987 = vmpackc.low %vm3919, %vm3919
      %vm3988 = vmpackc.low %vm3920, %vm3920
      %vm3989 = vmpackc.low %vm3921, %vm3921
      %vm3990 = vmpackc.low %vm3922, %vm3922
      %vm3991 = vmpackc.low %vm3923, %vm3923
      %vm3992 = vmpackc.low %vm3924, %vm3924
      %vm3993 = vmpackc.low %vm3925, %vm3925
      %vm3994 = vmpackc.low %vm3926, %vm3926
      %vm3995 = vmpackc.low %vm3927, %vm3927
      %vm3996 = vmpackc.low %vm3928, %vm3928
      %vm3997 = vmpackc.low %vm3929, %vm3929
      %vm3998 = vmpackc.low %vm3930, %vm3930
      %v3999 = vsel %vm3931, 65537, 0
      %v4000 = vsel %vm3932, 65537, 0
      %v4001 = vsel %vm3933, 65537, 0
      %v4002 = vsel %vm3934, 65537, 0
      %v4003 = vsel %vm3935, 65537, 0
      %v4004 = vsel %vm3936, 65537, 0
      %v4005 = vsel %vm3937, 65537, 0
      %v4006 = vsel %vm3938, 65537, 0
      %v4007 = vsel %vm3939, 65537, 0
      %v4008 = vsel %vm3940, 65537, 0
      %v4009 = vsel %vm3941, 65537, 0
      %v4010 = vsel %vm3942, 65537, 0
      %v4011 = vsel %vm3943, 65537, 0
      %v4012 = vsel %vm3944, 65537, 0
      %v4013 = vsel %vm3945, 65537, 0
      %v4014 = vsel %vm3946, 65537, 0
      %v4015 = vsel %vm3947, 65537, 0
      %v4016 = vsel %vm3948, 65537, 0
      %v4017 = vsel %vm3949, 65537, 0
      %v4018 = vsel %vm3950, 65537, 0
      %v4019 = vsel %vm3951, 65537, 0
      %v4020 = vsel %vm3952, 65537, 0
      %v4021 = vsel %vm3953, 65537, 0
      %v4022 = vsel %vm3954, 65537, 0
      %v4023 = vsel %vm3955, 65537, 0
      %v4024 = vsel %vm3956, 65537, 0
      %v4025 = vsel %vm3957, 65537, 0
      %v4026 = vsel %vm3958, 65537, 0
      %v4027 = vsel %vm3959, 65537, 0
      %v4028 = vsel %vm3960, 65537, 0
      %v4029 = vsel %vm3961, 65537, 0
      %v4030 = vsel %vm3962, 65537, 0
      %v4031 = vsel %vm3963, 65537, 0
      %v4032 = vsel %vm3964, 65537, 0
      %v4033 = vsel %vm3965, 65537, 0
      %v4034 = vsel %vm3966, 65537, 0
      %v4035 = vsel %vm3967, 65537, 0
      %v4036 = vsel %vm3968, 65537, 0
      %v4037 = vsel %vm3969, 65537, 0
      %v4038 = vsel %vm3970, 65537, 0
      %v4039 = vsel %vm3971, 65537, 0
      %v4040 = vsel %vm3972, 65537, 0
      %v4041 = vsel %vm3973, 65537, 0
      %v4042 = vsel %vm3974, 65537, 0
      %v4043 = vsel %vm3975, 65537, 0
      %v4044 = vsel %vm3976, 65537, 0
      %v4045 = vsel %vm3977, 65537, 0
      %v4046 = vsel %vm3978, 65537, 0
      %v4047 = vsel %vm3979, 65537, 0
      %v4048 = vsel %vm3980, 65537, 0
      %v4049 = vsel %vm3981, 65537, 0
      %v4050 = vsel %vm3982, 65537, 0
      %v4051 = vsel %vm3983, 65537, 0
      %v4052 = vsel %vm3984, 65537, 0
      %v4053 = vsel %vm3985, 65537, 0
      %v4054 = vsel %vm3986, 65537, 0
      %v4055 = vsel %vm3987, 65537, 0
      %v4056 = vsel %vm3988, 65537, 0
      %v4057 = vsel %vm3989, 65537, 0
      %v4058 = vsel %vm3990, 65537, 0
      %v4059 = vsel %vm3991, 65537, 0
      %v4060 = vsel %vm3992, 65537, 0
      %v4061 = vsel %vm3993, 65537, 0
      %v4062 = vsel %vm3994, 65537, 0
      %v4063 = vsel %vm3995, 65537, 0
      %v4064 = vsel %vm3996, 65537, 0
      %v4065 = vsel %vm3997, 65537, 0
      %v4066 = vsel %vm3998, 65537, 0
      %v4067 = vunpack.c.l.b16 %v3999
      %v4068 = vunpack.c.l.b16 %v4000
      %v4069 = vunpack.c.l.b16 %v4001
      %v4070 = vunpack.c.l.b16 %v4002
      %v4071 = vunpack.c.l.b16 %v4003
      %v4072 = vunpack.c.l.b16 %v4004
      %v4073 = vunpack.c.l.b16 %v4005
      %v4074 = vunpack.c.l.b16 %v4006
      %v4075 = vunpack.c.l.b16 %v4007
      %v4076 = vunpack.c.l.b16 %v4008
      %v4077 = vunpack.c.l.b16 %v4009
      %v4078 = vunpack.c.l.b16 %v4010
      %v4079 = vunpack.c.l.b16 %v4011
      %v4080 = vunpack.c.l.b16 %v4012
      %v4081 = vunpack.c.l.b16 %v4013
      %v4082 = vunpack.c.l.b16 %v4014
      %v4083 = vunpack.c.l.b16 %v4015
      %v4084 = vunpack.c.l.b16 %v4016
      %v4085 = vunpack.c.l.b16 %v4017
      %v4086 = vunpack.c.l.b16 %v4018
      %v4087 = vunpack.c.l.b16 %v4019
      %v4088 = vunpack.c.l.b16 %v4020
      %v4089 = vunpack.c.l.b16 %v4021
      %v4090 = vunpack.c.l.b16 %v4022
      %v4091 = vunpack.c.l.b16 %v4023
      %v4092 = vunpack.c.l.b16 %v4024
      %v4093 = vunpack.c.l.b16 %v4025
      %v4094 = vunpack.c.l.b16 %v4026
      %v4095 = vunpack.c.l.b16 %v4027
      %v4096 = vunpack.c.l.b16 %v4028
      %v4097 = vunpack.c.l.b16 %v4029
      %v4098 = vunpack.c.l.b16 %v4030
      %v4099 = vunpack.c.l.b16 %v4031
      %v4100 = vunpack.c.l.b16 %v4032
      %v4101 = vunpack.c.l.b16 %v4033
      %v4102 = vunpack.c.l.b16 %v4034
      %v4103 = vunpack.c.l.b16 %v4035
      %v4104 = vunpack.c.l.b16 %v4036
      %v4105 = vunpack.c.l.b16 %v4037
      %v4106 = vunpack.c.l.b16 %v4038
      %v4107 = vunpack.c.l.b16 %v4039
      %v4108 = vunpack.c.l.b16 %v4040
      %v4109 = vunpack.c.l.b16 %v4041
      %v4110 = vunpack.c.l.b16 %v4042
      %v4111 = vunpack.c.l.b16 %v4043
      %v4112 = vunpack.c.l.b16 %v4044
      %v4113 = vunpack.c.l.b16 %v4045
      %v4114 = vunpack.c.l.b16 %v4046
      %v4115 = vunpack.c.l.b16 %v4047
      %v4116 = vunpack.c.l.b16 %v4048
      %v4117 = vunpack.c.l.b16 %v4049
      %v4118 = vunpack.c.l.b16 %v4050
      %v4119 = vunpack.c.l.b16 %v4051
      %v4120 = vunpack.c.l.b16 %v4052
      %v4121 = vunpack.c.l.b16 %v4053
      %v4122 = vunpack.c.l.b16 %v4054
      %v4123 = vunpack.c.l.b16 %v4055
      %v4124 = vunpack.c.l.b16 %v4056
      %v4125 = vunpack.c.l.b16 %v4057
      %v4126 = vunpack.c.l.b16 %v4058
      %v4127 = vunpack.c.l.b16 %v4059
      %v4128 = vunpack.c.l.b16 %v4060
      %v4129 = vunpack.c.l.b16 %v4061
      %v4130 = vunpack.c.l.b16 %v4062
      %v4131 = vunpack.c.l.b16 %v4063
      %v4132 = vunpack.c.l.b16 %v4064
      %v4133 = vunpack.c.l.b16 %v4065
      %v4134 = vunpack.c.l.b16 %v4066
      %v4135 = vpack.c.b16 %v4068, %v4067
      %v4136 = vpack.c.b16 %v4070, %v4069
      %v4137 = vpack.c.b16 %v4072, %v4071
      %v4138 = vpack.c.b16 %v4074, %v4073
      %v4139 = vpack.c.b16 %v4076, %v4075
      %v4140 = vpack.c.b16 %v4078, %v4077
      %v4141 = vpack.c.b16 %v4080, %v4079
      %v4142 = vpack.c.b16 %v4082, %v4081
      %v4143 = vpack.c.b16 %v4084, %v4083
      %v4144 = vpack.c.b16 %v4086, %v4085
      %v4145 = vpack.c.b16 %v4088, %v4087
      %v4146 = vpack.c.b16 %v4090, %v4089
      %v4147 = vpack.c.b16 %v4092, %v4091
      %v4148 = vpack.c.b16 %v4094, %v4093
      %v4149 = vpack.c.b16 %v4096, %v4095
      %v4150 = vpack.c.b16 %v4098, %v4097
      %v4151 = vpack.c.b16 %v4100, %v4099
      %v4152 = vpack.c.b16 %v4102, %v4101
      %v4153 = vpack.c.b16 %v4104, %v4103
      %v4154 = vpack.c.b16 %v4106, %v4105
      %v4155 = vpack.c.b16 %v4108, %v4107
      %v4156 = vpack.c.b16 %v4110, %v4109
      %v4157 = vpack.c.b16 %v4112, %v4111
      %v4158 = vpack.c.b16 %v4114, %v4113
      %v4159 = vpack.c.b16 %v4116, %v4115
      %v4160 = vpack.c.b16 %v4118, %v4117
      %v4161 = vpack.c.b16 %v4120, %v4119
      %v4162 = vpack.c.b16 %v4122, %v4121
      %v4163 = vpack.c.b16 %v4124, %v4123
      %v4164 = vpack.c.b16 %v4126, %v4125
      %v4165 = vpack.c.b16 %v4128, %v4127
      %v4166 = vpack.c.b16 %v4130, %v4129
      %v4167 = vpack.c.b16 %v4132, %v4131
      %v4168 = vpack.c.b16 %v4134, %v4133
      %v4170 = vshrl.u32 %v4135, 16
      %v4172 = vrot.slane %v4170, 7
      %v4173 = vshll.u32 %v4135, 16
      %v4175 = vor.u32 %v4172, %v4173
      %v4177 = vshrl.u32 %v4136, 16
      %v4179 = vrot.slane %v4177, 7
      %v4180 = vshll.u32 %v4136, 16
      %v4182 = vor.u32 %v4179, %v4180
      %v4183 = vsel %vm3100, %v4172, %v4182
      %v4185 = vshrl.u32 %v4137, 16
      %v4187 = vrot.slane %v4185, 7
      %v4188 = vshll.u32 %v4137, 16
      %v4190 = vor.u32 %v4187, %v4188
      %v4191 = vsel %vm3100, %v4179, %v4190
      %v4193 = vshrl.u32 %v4138, 16
      %v4195 = vrot.slane %v4193, 7
      %v4196 = vshll.u32 %v4138, 16
      %v4198 = vor.u32 %v4195, %v4196
      %v4199 = vsel %vm3100, %v4187, %v4198
      %v4201 = vshrl.u32 %v4139, 16
      %v4203 = vrot.slane %v4201, 7
      %v4204 = vshll.u32 %v4139, 16
      %v4206 = vor.u32 %v4203, %v4204
      %v4207 = vsel %vm3100, %v4195, %v4206
      %v4209 = vshrl.u32 %v4140, 16
      %v4211 = vrot.slane %v4209, 7
      %v4212 = vshll.u32 %v4140, 16
      %v4214 = vor.u32 %v4211, %v4212
      %v4215 = vsel %vm3100, %v4203, %v4214
      %v4217 = vshrl.u32 %v4141, 16
      %v4219 = vrot.slane %v4217, 7
      %v4220 = vshll.u32 %v4141, 16
      %v4222 = vor.u32 %v4219, %v4220
      %v4223 = vsel %vm3100, %v4211, %v4222
      %v4225 = vshrl.u32 %v4142, 16
      %v4227 = vrot.slane %v4225, 7
      %v4228 = vshll.u32 %v4142, 16
      %v4230 = vor.u32 %v4227, %v4228
      %v4231 = vsel %vm3100, %v4219, %v4230
      %v4233 = vshrl.u32 %v4143, 16
      %v4235 = vrot.slane %v4233, 7
      %v4236 = vshll.u32 %v4143, 16
      %v4238 = vor.u32 %v4235, %v4236
      %v4239 = vsel %vm3100, %v4227, %v4238
      %v4241 = vshrl.u32 %v4144, 16
      %v4243 = vrot.slane %v4241, 7
      %v4244 = vshll.u32 %v4144, 16
      %v4246 = vor.u32 %v4243, %v4244
      %v4247 = vsel %vm3100, %v4235, %v4246
      %v4249 = vshrl.u32 %v4145, 16
      %v4251 = vrot.slane %v4249, 7
      %v4252 = vshll.u32 %v4145, 16
      %v4254 = vor.u32 %v4251, %v4252
      %v4255 = vsel %vm3100, %v4243, %v4254
      %v4257 = vshrl.u32 %v4146, 16
      %v4259 = vrot.slane %v4257, 7
      %v4260 = vshll.u32 %v4146, 16
      %v4262 = vor.u32 %v4259, %v4260
      %v4263 = vsel %vm3100, %v4251, %v4262
      %v4265 = vshrl.u32 %v4147, 16
      %v4267 = vrot.slane %v4265, 7
      %v4268 = vshll.u32 %v4147, 16
      %v4270 = vor.u32 %v4267, %v4268
      %v4271 = vsel %vm3100, %v4259, %v4270
      %v4273 = vshrl.u32 %v4148, 16
      %v4275 = vrot.slane %v4273, 7
      %v4276 = vshll.u32 %v4148, 16
      %v4278 = vor.u32 %v4275, %v4276
      %v4279 = vsel %vm3100, %v4267, %v4278
      %v4281 = vshrl.u32 %v4149, 16
      %v4283 = vrot.slane %v4281, 7
      %v4284 = vshll.u32 %v4149, 16
      %v4286 = vor.u32 %v4283, %v4284
      %v4287 = vsel %vm3100, %v4275, %v4286
      %v4289 = vshrl.u32 %v4150, 16
      %v4291 = vrot.slane %v4289, 7
      %v4292 = vshll.u32 %v4150, 16
      %v4294 = vor.u32 %v4291, %v4292
      %v4295 = vsel %vm3100, %v4283, %v4294
      %v4297 = vshrl.u32 %v4151, 16
      %v4299 = vrot.slane %v4297, 7
      %v4300 = vshll.u32 %v4151, 16
      %v4302 = vor.u32 %v4299, %v4300
      %v4303 = vsel %vm3100, %v4291, %v4302
      %v4305 = vshrl.u32 %v4152, 16
      %v4307 = vrot.slane %v4305, 7
      %v4308 = vshll.u32 %v4152, 16
      %v4310 = vor.u32 %v4307, %v4308
      %v4311 = vsel %vm3100, %v4299, %v4310
      %v4313 = vshrl.u32 %v4153, 16
      %v4315 = vrot.slane %v4313, 7
      %v4316 = vshll.u32 %v4153, 16
      %v4318 = vor.u32 %v4315, %v4316
      %v4319 = vsel %vm3100, %v4307, %v4318
      %v4321 = vshrl.u32 %v4154, 16
      %v4323 = vrot.slane %v4321, 7
      %v4324 = vshll.u32 %v4154, 16
      %v4326 = vor.u32 %v4323, %v4324
      %v4327 = vsel %vm3100, %v4315, %v4326
      %v4329 = vshrl.u32 %v4155, 16
      %v4331 = vrot.slane %v4329, 7
      %v4332 = vshll.u32 %v4155, 16
      %v4334 = vor.u32 %v4331, %v4332
      %v4335 = vsel %vm3100, %v4323, %v4334
      %v4337 = vshrl.u32 %v4156, 16
      %v4339 = vrot.slane %v4337, 7
      %v4340 = vshll.u32 %v4156, 16
      %v4342 = vor.u32 %v4339, %v4340
      %v4343 = vsel %vm3100, %v4331, %v4342
      %v4345 = vshrl.u32 %v4157, 16
      %v4347 = vrot.slane %v4345, 7
      %v4348 = vshll.u32 %v4157, 16
      %v4350 = vor.u32 %v4347, %v4348
      %v4351 = vsel %vm3100, %v4339, %v4350
      %v4353 = vshrl.u32 %v4158, 16
      %v4355 = vrot.slane %v4353, 7
      %v4356 = vshll.u32 %v4158, 16
      %v4358 = vor.u32 %v4355, %v4356
      %v4359 = vsel %vm3100, %v4347, %v4358
      %v4361 = vshrl.u32 %v4159, 16
      %v4363 = vrot.slane %v4361, 7
      %v4364 = vshll.u32 %v4159, 16
      %v4366 = vor.u32 %v4363, %v4364
      %v4367 = vsel %vm3100, %v4355, %v4366
      %v4369 = vshrl.u32 %v4160, 16
      %v4371 = vrot.slane %v4369, 7
      %v4372 = vshll.u32 %v4160, 16
      %v4374 = vor.u32 %v4371, %v4372
      %v4375 = vsel %vm3100, %v4363, %v4374
      %v4377 = vshrl.u32 %v4161, 16
      %v4379 = vrot.slane %v4377, 7
      %v4380 = vshll.u32 %v4161, 16
      %v4382 = vor.u32 %v4379, %v4380
      %v4383 = vsel %vm3100, %v4371, %v4382
      %v4385 = vshrl.u32 %v4162, 16
      %v4387 = vrot.slane %v4385, 7
      %v4388 = vshll.u32 %v4162, 16
      %v4390 = vor.u32 %v4387, %v4388
      %v4391 = vsel %vm3100, %v4379, %v4390
      %v4393 = vshrl.u32 %v4163, 16
      %v4395 = vrot.slane %v4393, 7
      %v4396 = vshll.u32 %v4163, 16
      %v4398 = vor.u32 %v4395, %v4396
      %v4399 = vsel %vm3100, %v4387, %v4398
      %v4401 = vshrl.u32 %v4164, 16
      %v4403 = vrot.slane %v4401, 7
      %v4404 = vshll.u32 %v4164, 16
      %v4406 = vor.u32 %v4403, %v4404
      %v4407 = vsel %vm3100, %v4395, %v4406
      %v4409 = vshrl.u32 %v4165, 16
      %v4411 = vrot.slane %v4409, 7
      %v4412 = vshll.u32 %v4165, 16
      %v4414 = vor.u32 %v4411, %v4412
      %v4415 = vsel %vm3100, %v4403, %v4414
      %v4417 = vshrl.u32 %v4166, 16
      %v4419 = vrot.slane %v4417, 7
      %v4420 = vshll.u32 %v4166, 16
      %v4422 = vor.u32 %v4419, %v4420
      %v4423 = vsel %vm3100, %v4411, %v4422
      %v4425 = vshrl.u32 %v4167, 16
      %v4427 = vrot.slane %v4425, 7
      %v4428 = vshll.u32 %v4167, 16
      %v4430 = vor.u32 %v4427, %v4428
      %v4431 = vsel %vm3100, %v4419, %v4430
      %v4433 = vshrl.u32 %v4168, 16
      %v4435 = vrot.slane %v4433, 7
      %v4436 = vshll.u32 %v4168, 16
      %v4438 = vor.u32 %v4435, %v4436
      %v4439 = vsel %vm3100, %v4427, %v4438
      %vm4440 = vcmp.ne.s16.totalorder %v4175, 0
      %vm4441 = vcmp.ne.s16.totalorder %v4183, 0
      %vm4442 = vcmp.ne.s16.totalorder %v4191, 0
      %vm4443 = vcmp.ne.s16.totalorder %v4199, 0
      %vm4444 = vcmp.ne.s16.totalorder %v4207, 0
      %vm4445 = vcmp.ne.s16.totalorder %v4215, 0
      %vm4446 = vcmp.ne.s16.totalorder %v4223, 0
      %vm4447 = vcmp.ne.s16.totalorder %v4231, 0
      %vm4448 = vcmp.ne.s16.totalorder %v4239, 0
      %vm4449 = vcmp.ne.s16.totalorder %v4247, 0
      %vm4450 = vcmp.ne.s16.totalorder %v4255, 0
      %vm4451 = vcmp.ne.s16.totalorder %v4263, 0
      %vm4452 = vcmp.ne.s16.totalorder %v4271, 0
      %vm4453 = vcmp.ne.s16.totalorder %v4279, 0
      %vm4454 = vcmp.ne.s16.totalorder %v4287, 0
      %vm4455 = vcmp.ne.s16.totalorder %v4295, 0
      %vm4456 = vcmp.ne.s16.totalorder %v4303, 0
      %vm4457 = vcmp.ne.s16.totalorder %v4311, 0
      %vm4458 = vcmp.ne.s16.totalorder %v4319, 0
      %vm4459 = vcmp.ne.s16.totalorder %v4327, 0
      %vm4460 = vcmp.ne.s16.totalorder %v4335, 0
      %vm4461 = vcmp.ne.s16.totalorder %v4343, 0
      %vm4462 = vcmp.ne.s16.totalorder %v4351, 0
      %vm4463 = vcmp.ne.s16.totalorder %v4359, 0
      %vm4464 = vcmp.ne.s16.totalorder %v4367, 0
      %vm4465 = vcmp.ne.s16.totalorder %v4375, 0
      %vm4466 = vcmp.ne.s16.totalorder %v4383, 0
      %vm4467 = vcmp.ne.s16.totalorder %v4391, 0
      %vm4468 = vcmp.ne.s16.totalorder %v4399, 0
      %vm4469 = vcmp.ne.s16.totalorder %v4407, 0
      %vm4470 = vcmp.ne.s16.totalorder %v4415, 0
      %vm4471 = vcmp.ne.s16.totalorder %v4423, 0
      %vm4472 = vcmp.ne.s16.totalorder %v4431, 0
      %vm4473 = vcmp.ne.s16.totalorder %v4439, 0
      %vm4474 = vcmp.ne.s16.totalorder %v4435, 0
      %v4475 = vsel %vm4440, %v3760, 0
      %v4476 = vsel %vm4441, %v3761, 0
      %v4477 = vsel %vm4442, %v3762, 0
      %v4478 = vsel %vm4443, %v3763, 0
      %v4479 = vsel %vm4444, %v3764, 0
      %v4480 = vsel %vm4445, %v3765, 0
      %v4481 = vsel %vm4446, %v3766, 0
      %v4482 = vsel %vm4447, %v3767, 0
      %v4483 = vsel %vm4448, %v3768, 0
      %v4484 = vsel %vm4449, %v3769, 0
      %v4485 = vsel %vm4450, %v3770, 0
      %v4486 = vsel %vm4451, %v3771, 0
      %v4487 = vsel %vm4452, %v3772, 0
      %v4488 = vsel %vm4453, %v3773, 0
      %v4489 = vsel %vm4454, %v3774, 0
      %v4490 = vsel %vm4455, %v3775, 0
      %v4491 = vsel %vm4456, %v3776, 0
      %v4492 = vsel %vm4457, %v3777, 0
      %v4493 = vsel %vm4458, %v3778, 0
      %v4494 = vsel %vm4459, %v3779, 0
      %v4495 = vsel %vm4460, %v3780, 0
      %v4496 = vsel %vm4461, %v3781, 0
      %v4497 = vsel %vm4462, %v3782, 0
      %v4498 = vsel %vm4463, %v3783, 0
      %v4499 = vsel %vm4464, %v3784, 0
      %v4500 = vsel %vm4465, %v3785, 0
      %v4501 = vsel %vm4466, %v3786, 0
      %v4502 = vsel %vm4467, %v3787, 0
      %v4503 = vsel %vm4468, %v3788, 0
      %v4504 = vsel %vm4469, %v3789, 0
      %v4505 = vsel %vm4470, %v3790, 0
      %v4506 = vsel %vm4471, %v3791, 0
      %v4507 = vsel %vm4472, %v3792, 0
      %v4508 = vsel %vm4473, %v3793, 0
      %v4509 = vsel %vm4474, %v3794, 0
      %s4510 = scalar_lea.vmem %s4, 128
      %v4511 = vld [vmem:[%s4510] sm:$0xf]
      %v4512 = vld [vmem:[%s4510 + $0x4] sm:$0xf]
      %v4513 = vld [vmem:[%s4510 + $0x8] sm:$0xf]
      %v4514 = vld [vmem:[%s4510 + $0xc] sm:$0xf]
      %v4515 = vld [vmem:[%s4510 + $0x10] sm:$0xf]
      %v4516 = vld [vmem:[%s4510 + $0x14] sm:$0xf]
      %v4517 = vld [vmem:[%s4510 + $0x18] sm:$0xf]
      %v4518 = vld [vmem:[%s4510 + $0x1c] sm:$0xf]
      %v4519 = vld [vmem:[%s4510 + $0x20] sm:$0xf]
      %v4520 = vld [vmem:[%s4510 + $0x24] sm:$0xf]
      %v4521 = vld [vmem:[%s4510 + $0x28] sm:$0xf]
      %v4522 = vld [vmem:[%s4510 + $0x2c] sm:$0xf]
      %v4523 = vld [vmem:[%s4510 + $0x30] sm:$0xf]
      %v4524 = vld [vmem:[%s4510 + $0x34] sm:$0xf]
      %v4525 = vld [vmem:[%s4510 + $0x38] sm:$0xf]
      %v4526 = vld [vmem:[%s4510 + $0x3c] sm:$0xf]
      %v4528 = vshrl.u32 %v4475, 16
      %v4530 = vshll.u32 %v4475, 16
      %v4532 = vrot.slane %v4530, 1
      %v4533 = vor.u32 %v4528, %v4532
      %v4535 = vshll.u32 %v4476, 16
      %v4537 = vrot.slane %v4535, 1
      %v4538 = vsel %vm2376, %v4533, %v4537
      %v4539 = vshrl.u32 %v4476, 16
      %v4541 = vor.u32 %v4539, %v4537
      %v4543 = vshll.u32 %v4477, 16
      %v4545 = vrot.slane %v4543, 1
      %v4546 = vsel %vm2376, %v4541, %v4545
      %v4547 = vshrl.u32 %v4477, 16
      %v4549 = vor.u32 %v4547, %v4545
      %v4551 = vshll.u32 %v4478, 16
      %v4553 = vrot.slane %v4551, 1
      %v4554 = vsel %vm2376, %v4549, %v4553
      %v4555 = vshrl.u32 %v4478, 16
      %v4557 = vor.u32 %v4555, %v4553
      %v4559 = vshll.u32 %v4479, 16
      %v4561 = vrot.slane %v4559, 1
      %v4562 = vsel %vm2376, %v4557, %v4561
      %v4563 = vshrl.u32 %v4479, 16
      %v4565 = vor.u32 %v4563, %v4561
      %v4567 = vshll.u32 %v4480, 16
      %v4569 = vrot.slane %v4567, 1
      %v4570 = vsel %vm2376, %v4565, %v4569
      %v4571 = vshrl.u32 %v4480, 16
      %v4573 = vor.u32 %v4571, %v4569
      %v4575 = vshll.u32 %v4481, 16
      %v4577 = vrot.slane %v4575, 1
      %v4578 = vsel %vm2376, %v4573, %v4577
      %v4579 = vshrl.u32 %v4481, 16
      %v4581 = vor.u32 %v4579, %v4577
      %v4583 = vshll.u32 %v4482, 16
      %v4585 = vrot.slane %v4583, 1
      %v4586 = vsel %vm2376, %v4581, %v4585
      %v4587 = vshrl.u32 %v4482, 16
      %v4589 = vor.u32 %v4587, %v4585
      %v4591 = vshll.u32 %v4483, 16
      %v4593 = vrot.slane %v4591, 1
      %v4594 = vsel %vm2376, %v4589, %v4593
      %v4595 = vshrl.u32 %v4483, 16
      %v4597 = vor.u32 %v4595, %v4593
      %v4599 = vshll.u32 %v4484, 16
      %v4601 = vrot.slane %v4599, 1
      %v4602 = vsel %vm2376, %v4597, %v4601
      %v4603 = vshrl.u32 %v4484, 16
      %v4605 = vor.u32 %v4603, %v4601
      %v4607 = vshll.u32 %v4485, 16
      %v4609 = vrot.slane %v4607, 1
      %v4610 = vsel %vm2376, %v4605, %v4609
      %v4611 = vshrl.u32 %v4485, 16
      %v4613 = vor.u32 %v4611, %v4609
      %v4615 = vshll.u32 %v4486, 16
      %v4617 = vrot.slane %v4615, 1
      %v4618 = vsel %vm2376, %v4613, %v4617
      %v4619 = vshrl.u32 %v4486, 16
      %v4621 = vor.u32 %v4619, %v4617
      %v4623 = vshll.u32 %v4487, 16
      %v4625 = vrot.slane %v4623, 1
      %v4626 = vsel %vm2376, %v4621, %v4625
      %v4627 = vshrl.u32 %v4487, 16
      %v4629 = vor.u32 %v4627, %v4625
      %v4631 = vshll.u32 %v4488, 16
      %v4633 = vrot.slane %v4631, 1
      %v4634 = vsel %vm2376, %v4629, %v4633
      %v4635 = vshrl.u32 %v4488, 16
      %v4637 = vor.u32 %v4635, %v4633
      %v4639 = vshll.u32 %v4489, 16
      %v4641 = vrot.slane %v4639, 1
      %v4642 = vsel %vm2376, %v4637, %v4641
      %v4643 = vshrl.u32 %v4489, 16
      %v4645 = vor.u32 %v4643, %v4641
      %v4647 = vshll.u32 %v4490, 16
      %v4649 = vrot.slane %v4647, 1
      %v4650 = vsel %vm2376, %v4645, %v4649
      %v4651 = vshrl.u32 %v4490, 16
      %v4653 = vor.u32 %v4651, %v4649
      %v4655 = vshll.u32 %v4491, 16
      %v4657 = vrot.slane %v4655, 1
      %v4658 = vsel %vm2376, %v4653, %v4657
      %v4659 = vshrl.u32 %v4491, 16
      %v4661 = vor.u32 %v4659, %v4657
      %v4663 = vshll.u32 %v4492, 16
      %v4665 = vrot.slane %v4663, 1
      %v4666 = vsel %vm2376, %v4661, %v4665
      %v4667 = vshrl.u32 %v4492, 16
      %v4669 = vor.u32 %v4667, %v4665
      %v4671 = vshll.u32 %v4493, 16
      %v4673 = vrot.slane %v4671, 1
      %v4674 = vsel %vm2376, %v4669, %v4673
      %v4675 = vshrl.u32 %v4493, 16
      %v4677 = vor.u32 %v4675, %v4673
      %v4679 = vshll.u32 %v4494, 16
      %v4681 = vrot.slane %v4679, 1
      %v4682 = vsel %vm2376, %v4677, %v4681
      %v4683 = vshrl.u32 %v4494, 16
      %v4685 = vor.u32 %v4683, %v4681
      %v4687 = vshll.u32 %v4495, 16
      %v4689 = vrot.slane %v4687, 1
      %v4690 = vsel %vm2376, %v4685, %v4689
      %v4691 = vshrl.u32 %v4495, 16
      %v4693 = vor.u32 %v4691, %v4689
      %v4695 = vshll.u32 %v4496, 16
      %v4697 = vrot.slane %v4695, 1
      %v4698 = vsel %vm2376, %v4693, %v4697
      %v4699 = vshrl.u32 %v4496, 16
      %v4701 = vor.u32 %v4699, %v4697
      %v4703 = vshll.u32 %v4497, 16
      %v4705 = vrot.slane %v4703, 1
      %v4706 = vsel %vm2376, %v4701, %v4705
      %v4707 = vshrl.u32 %v4497, 16
      %v4709 = vor.u32 %v4707, %v4705
      %v4711 = vshll.u32 %v4498, 16
      %v4713 = vrot.slane %v4711, 1
      %v4714 = vsel %vm2376, %v4709, %v4713
      %v4715 = vshrl.u32 %v4498, 16
      %v4717 = vor.u32 %v4715, %v4713
      %v4719 = vshll.u32 %v4499, 16
      %v4721 = vrot.slane %v4719, 1
      %v4722 = vsel %vm2376, %v4717, %v4721
      %v4723 = vshrl.u32 %v4499, 16
      %v4725 = vor.u32 %v4723, %v4721
      %v4727 = vshll.u32 %v4500, 16
      %v4729 = vrot.slane %v4727, 1
      %v4730 = vsel %vm2376, %v4725, %v4729
      %v4731 = vshrl.u32 %v4500, 16
      %v4733 = vor.u32 %v4731, %v4729
      %v4735 = vshll.u32 %v4501, 16
      %v4737 = vrot.slane %v4735, 1
      %v4738 = vsel %vm2376, %v4733, %v4737
      %v4739 = vshrl.u32 %v4501, 16
      %v4741 = vor.u32 %v4739, %v4737
      %v4743 = vshll.u32 %v4502, 16
      %v4745 = vrot.slane %v4743, 1
      %v4746 = vsel %vm2376, %v4741, %v4745
      %v4747 = vshrl.u32 %v4502, 16
      %v4749 = vor.u32 %v4747, %v4745
      %v4751 = vshll.u32 %v4503, 16
      %v4753 = vrot.slane %v4751, 1
      %v4754 = vsel %vm2376, %v4749, %v4753
      %v4755 = vshrl.u32 %v4503, 16
      %v4757 = vor.u32 %v4755, %v4753
      %v4759 = vshll.u32 %v4504, 16
      %v4761 = vrot.slane %v4759, 1
      %v4762 = vsel %vm2376, %v4757, %v4761
      %v4763 = vshrl.u32 %v4504, 16
      %v4765 = vor.u32 %v4763, %v4761
      %v4767 = vshll.u32 %v4505, 16
      %v4769 = vrot.slane %v4767, 1
      %v4770 = vsel %vm2376, %v4765, %v4769
      %v4771 = vshrl.u32 %v4505, 16
      %v4773 = vor.u32 %v4771, %v4769
      %v4775 = vshll.u32 %v4506, 16
      %v4777 = vrot.slane %v4775, 1
      %v4778 = vsel %vm2376, %v4773, %v4777
      %v4779 = vshrl.u32 %v4506, 16
      %v4781 = vor.u32 %v4779, %v4777
      %v4783 = vshll.u32 %v4507, 16
      %v4785 = vrot.slane %v4783, 1
      %v4786 = vsel %vm2376, %v4781, %v4785
      %v4787 = vshrl.u32 %v4507, 16
      %v4789 = vor.u32 %v4787, %v4785
      %v4791 = vshll.u32 %v4508, 16
      %v4793 = vrot.slane %v4791, 1
      %v4794 = vsel %vm2376, %v4789, %v4793
      %v4795 = vshrl.u32 %v4508, 16
      %v4797 = vor.u32 %v4795, %v4793
      %v4799 = vshll.u32 %v4509, 16
      %v4801 = vrot.slane %v4799, 1
      %v4802 = vsel %vm2376, %v4797, %v4801
      %v4853 = vunpack.c.l.b16 %v4511
      %v4854 = vunpack.c.l.b16 %v4512
      %v4855 = vunpack.c.l.b16 %v4513
      %v4856 = vunpack.c.l.b16 %v4514
      %v4857 = vunpack.c.l.b16 %v4515
      %v4858 = vunpack.c.l.b16 %v4516
      %v4859 = vunpack.c.l.b16 %v4517
      %v4860 = vunpack.c.l.b16 %v4518
      %v4861 = vunpack.c.l.b16 %v4519
      %v4862 = vunpack.c.l.b16 %v4520
      %v4863 = vunpack.c.l.b16 %v4521
      %v4864 = vunpack.c.l.b16 %v4522
      %v4865 = vunpack.c.l.b16 %v4523
      %v4866 = vunpack.c.l.b16 %v4524
      %v4867 = vunpack.c.l.b16 %v4525
      %v4868 = vunpack.c.l.b16 %v4526
      %v4869 = vpack.c.b16 %v4854, %v4853
      %v4870 = vpack.c.b16 %v4856, %v4855
      %v4871 = vpack.c.b16 %v4858, %v4857
      %v4872 = vpack.c.b16 %v4860, %v4859
      %v4873 = vpack.c.b16 %v4862, %v4861
      %v4874 = vpack.c.b16 %v4864, %v4863
      %v4875 = vpack.c.b16 %v4866, %v4865
      %v4876 = vpack.c.b16 %v4868, %v4867
      %4885 = vmatprep.subr.bf16.mxu0 0
      %4886 = vmatpush1.bf16.msra.mxu0 %v4869
      %4887 = vmatprep.subr.bf16.mxu0 0
      %4888 = vmatpush1.bf16.msra.mxu0 %v4870
      %4889 = vmatprep.subr.bf16.mxu0 0
      %4890 = vmatpush1.bf16.msra.mxu0 %v4871
      %4891 = vmatprep.subr.bf16.mxu0 0
      %4892 = vmatpush1.bf16.msra.mxu0 %v4872
      %4893 = vmatprep.subr.bf16.mxu0 0
      %4894 = vmatpush1.bf16.msra.mxu0 %v4873
      %4895 = vmatprep.subr.bf16.mxu0 0
      %4896 = vmatpush1.bf16.msra.mxu0 %v4874
      %4897 = vmatprep.subr.bf16.mxu0 0
      %4898 = vmatpush1.bf16.msra.mxu0 %v4875
      %4899 = vmatprep.subr.bf16.mxu0 0
      %4900 = vmatpush1.bf16.msra.mxu0 %v4876
      %4901 = vmatprep.subr.bf16.mxu0 0
      %4902 = vmatpush1.bf16.msra.mxu0 0
      %4903 = vmatprep.subr.bf16.mxu0 0
      %4904 = vmatpush1.bf16.msra.mxu0 0
      %4905 = vmatprep.subr.bf16.mxu0 0
      %4906 = vmatpush1.bf16.msra.mxu0 0
      %4907 = vmatprep.subr.bf16.mxu0 0
      %4908 = vmatpush1.bf16.msra.mxu0 0
      %4909 = vmatprep.subr.bf16.mxu0 0
      %4910 = vmatpush1.bf16.msra.mxu0 0
      %4911 = vmatprep.subr.bf16.mxu0 0
      %4912 = vmatpush1.bf16.msra.mxu0 0
      %4913 = vmatprep.subr.bf16.mxu0 0
      %4914 = vmatpush1.bf16.msra.mxu0 0
      %4915 = vmatprep.subr.bf16.mxu0 0
      %4916 = vmatpush1.bf16.msra.mxu0 0
      %4917 = vmatprep.mubr.bf16.mxu0 0
      %4918 = vmatmul.mubr.bf16.gmra.mrb[0].mxu0 %v4538
      %v4919 = vpop.f32.mrb[0].mxu0
      %v4920 = vadd.f32 0.0, %v4919
      %v4921 = vpop.f32.mrb[0].mxu0
      %v4922 = vpop.f32.mrb[0].mxu0
      %v4923 = vadd.f32 0.0, %v4922
      %v4924 = vpop.f32.mrb[0].mxu0
      %4925 = vmatprep.mubr.bf16.mxu0 0
      %4926 = vmatmul.mubr.bf16.gmra.mrb[0].mxu0 %v4546
      %v4927 = vpop.f32.mrb[0].mxu0
      %v4928 = vadd.f32 0.0, %v4927
      %v4929 = vpop.f32.mrb[0].mxu0
      %v4930 = vpop.f32.mrb[0].mxu0
      %v4931 = vadd.f32 0.0, %v4930
      %v4932 = vpop.f32.mrb[0].mxu0
      %4933 = vmatprep.mubr.bf16.mxu0 0
      %4934 = vmatmul.mubr.bf16.gmra.mrb[0].mxu0 %v4554
      %v4935 = vpop.f32.mrb[0].mxu0
      %v4936 = vadd.f32 0.0, %v4935
      %v4937 = vpop.f32.mrb[0].mxu0
      %v4938 = vpop.f32.mrb[0].mxu0
      %v4939 = vadd.f32 0.0, %v4938
      %v4940 = vpop.f32.mrb[0].mxu0
      %4941 = vmatprep.mubr.bf16.mxu0 0
      %4942 = vmatmul.mubr.bf16.gmra.mrb[0].mxu0 %v4562
      %v4943 = vpop.f32.mrb[0].mxu0
      %v4944 = vadd.f32 0.0, %v4943
      %v4945 = vpop.f32.mrb[0].mxu0
      %v4946 = vpop.f32.mrb[0].mxu0
      %v4947 = vadd.f32 0.0, %v4946
      %v4948 = vpop.f32.mrb[0].mxu0
      %4949 = vmatprep.mubr.bf16.mxu0 0
      %4950 = vmatmul.mubr.bf16.gmra.mrb[0].mxu0 %v4570
      %v4951 = vpop.f32.mrb[0].mxu0
      %v4952 = vadd.f32 0.0, %v4951
      %v4953 = vpop.f32.mrb[0].mxu0
      %v4954 = vpop.f32.mrb[0].mxu0
      %v4955 = vadd.f32 0.0, %v4954
      %v4956 = vpop.f32.mrb[0].mxu0
      %4957 = vmatprep.mubr.bf16.mxu0 0
      %4958 = vmatmul.mubr.bf16.gmra.mrb[0].mxu0 %v4578
      %v4959 = vpop.f32.mrb[0].mxu0
      %v4960 = vadd.f32 0.0, %v4959
      %v4961 = vpop.f32.mrb[0].mxu0
      %v4962 = vpop.f32.mrb[0].mxu0
      %v4963 = vadd.f32 0.0, %v4962
      %v4964 = vpop.f32.mrb[0].mxu0
      %4965 = vmatprep.mubr.bf16.mxu0 0
      %4966 = vmatmul.mubr.bf16.gmra.mrb[0].mxu0 %v4586
      %v4967 = vpop.f32.mrb[0].mxu0
      %v4968 = vadd.f32 0.0, %v4967
      %v4969 = vpop.f32.mrb[0].mxu0
      %v4970 = vpop.f32.mrb[0].mxu0
      %v4971 = vadd.f32 0.0, %v4970
      %v4972 = vpop.f32.mrb[0].mxu0
      %4973 = vmatprep.mubr.bf16.mxu0 0
      %4974 = vmatmul.mubr.bf16.gmra.mrb[0].mxu0 %v4594
      %v4975 = vpop.f32.mrb[0].mxu0
      %v4976 = vadd.f32 0.0, %v4975
      %v4977 = vpop.f32.mrb[0].mxu0
      %v4978 = vpop.f32.mrb[0].mxu0
      %v4979 = vadd.f32 0.0, %v4978
      %v4980 = vpop.f32.mrb[0].mxu0
      %4981 = vmatprep.mubr.bf16.mxu0 0
      %4982 = vmatmul.mubr.bf16.gmra.mrb[0].mxu0 %v4602
      %v4983 = vpop.f32.mrb[0].mxu0
      %v4984 = vadd.f32 0.0, %v4983
      %v4985 = vpop.f32.mrb[0].mxu0
      %v4986 = vpop.f32.mrb[0].mxu0
      %v4987 = vadd.f32 0.0, %v4986
      %v4988 = vpop.f32.mrb[0].mxu0
      %4989 = vmatprep.mubr.bf16.mxu0 0
      %4990 = vmatmul.mubr.bf16.gmra.mrb[0].mxu0 %v4610
      %v4991 = vpop.f32.mrb[0].mxu0
      %v4992 = vadd.f32 0.0, %v4991
      %v4993 = vpop.f32.mrb[0].mxu0
      %v4994 = vpop.f32.mrb[0].mxu0
      %v4995 = vadd.f32 0.0, %v4994
      %v4996 = vpop.f32.mrb[0].mxu0
      %4997 = vmatprep.mubr.bf16.mxu0 0
      %4998 = vmatmul.mubr.bf16.gmra.mrb[0].mxu0 %v4618
      %v4999 = vpop.f32.mrb[0].mxu0
      %v5000 = vadd.f32 0.0, %v4999
      %v5001 = vpop.f32.mrb[0].mxu0
      %v5002 = vpop.f32.mrb[0].mxu0
      %v5003 = vadd.f32 0.0, %v5002
      %v5004 = vpop.f32.mrb[0].mxu0
      %5005 = vmatprep.mubr.bf16.mxu0 0
      %5006 = vmatmul.mubr.bf16.gmra.mrb[0].mxu0 %v4626
      %v5007 = vpop.f32.mrb[0].mxu0
      %v5008 = vadd.f32 0.0, %v5007
      %v5009 = vpop.f32.mrb[0].mxu0
      %v5010 = vpop.f32.mrb[0].mxu0
      %v5011 = vadd.f32 0.0, %v5010
      %v5012 = vpop.f32.mrb[0].mxu0
      %5013 = vmatprep.mubr.bf16.mxu0 0
      %5014 = vmatmul.mubr.bf16.gmra.mrb[0].mxu0 %v4634
      %v5015 = vpop.f32.mrb[0].mxu0
      %v5016 = vadd.f32 0.0, %v5015
      %v5017 = vpop.f32.mrb[0].mxu0
      %v5018 = vpop.f32.mrb[0].mxu0
      %v5019 = vadd.f32 0.0, %v5018
      %v5020 = vpop.f32.mrb[0].mxu0
      %5021 = vmatprep.mubr.bf16.mxu0 0
      %5022 = vmatmul.mubr.bf16.gmra.mrb[0].mxu0 %v4642
      %v5023 = vpop.f32.mrb[0].mxu0
      %v5024 = vadd.f32 0.0, %v5023
      %v5025 = vpop.f32.mrb[0].mxu0
      %v5026 = vpop.f32.mrb[0].mxu0
      %v5027 = vadd.f32 0.0, %v5026
      %v5028 = vpop.f32.mrb[0].mxu0
      %5029 = vmatprep.mubr.bf16.mxu0 0
      %5030 = vmatmul.mubr.bf16.gmra.mrb[0].mxu0 %v4650
      %v5031 = vpop.f32.mrb[0].mxu0
      %v5032 = vadd.f32 0.0, %v5031
      %v5033 = vpop.f32.mrb[0].mxu0
      %v5034 = vpop.f32.mrb[0].mxu0
      %v5035 = vadd.f32 0.0, %v5034
      %v5036 = vpop.f32.mrb[0].mxu0
      %5037 = vmatprep.mubr.bf16.mxu0 0
      %5038 = vmatmul.mubr.bf16.gmra.mrb[0].mxu0 %v4658
      %v5039 = vpop.f32.mrb[0].mxu0
      %v5040 = vadd.f32 0.0, %v5039
      %v5041 = vpop.f32.mrb[0].mxu0
      %v5042 = vpop.f32.mrb[0].mxu0
      %v5043 = vadd.f32 0.0, %v5042
      %v5044 = vpop.f32.mrb[0].mxu0
      %5045 = vmatprep.mubr.bf16.mxu0 0
      %5046 = vmatmul.mubr.bf16.gmra.mrb[0].mxu0 %v4666
      %v5047 = vpop.f32.mrb[0].mxu0
      %v5048 = vpop.f32.mrb[0].mxu0
      %v5049 = vpop.f32.mrb[0].mxu0
      %v5050 = vpop.f32.mrb[0].mxu0
      %5051 = vmatprep.mubr.bf16.mxu0 0
      %5052 = vmatmul.mubr.bf16.gmra.mrb[0].mxu0 %v4674
      %v5053 = vpop.f32.mrb[0].mxu0
      %v5054 = vpop.f32.mrb[0].mxu0
      %v5055 = vpop.f32.mrb[0].mxu0
      %v5056 = vpop.f32.mrb[0].mxu0
      %5057 = vmatprep.mubr.bf16.mxu0 0
      %5058 = vmatmul.mubr.bf16.gmra.mrb[0].mxu0 %v4682
      %v5059 = vpop.f32.mrb[0].mxu0
      %v5060 = vadd.f32 0.0, %v5059
      %v5061 = vpop.f32.mrb[0].mxu0
      %v5062 = vpop.f32.mrb[0].mxu0
      %v5063 = vadd.f32 0.0, %v5062
      %v5064 = vpop.f32.mrb[0].mxu0
      %5065 = vmatprep.mubr.bf16.mxu0 0
      %5066 = vmatmul.mubr.bf16.gmra.mrb[0].mxu0 %v4690
      %v5067 = vpop.f32.mrb[0].mxu0
      %v5068 = vadd.f32 0.0, %v5067
      %v5069 = vpop.f32.mrb[0].mxu0
      %v5070 = vpop.f32.mrb[0].mxu0
      %v5071 = vadd.f32 0.0, %v5070
      %v5072 = vpop.f32.mrb[0].mxu0
      %5073 = vmatprep.mubr.bf16.mxu0 0
      %5074 = vmatmul.mubr.bf16.gmra.mrb[0].mxu0 %v4698
      %v5075 = vpop.f32.mrb[0].mxu0
      %v5076 = vadd.f32 0.0, %v5075
      %v5077 = vpop.f32.mrb[0].mxu0
      %v5078 = vpop.f32.mrb[0].mxu0
      %v5079 = vadd.f32 0.0, %v5078
      %v5080 = vpop.f32.mrb[0].mxu0
      %5081 = vmatprep.mubr.bf16.mxu0 0
      %5082 = vmatmul.mubr.bf16.gmra.mrb[0].mxu0 %v4706
      %v5083 = vpop.f32.mrb[0].mxu0
      %v5084 = vadd.f32 0.0, %v5083
      %v5085 = vpop.f32.mrb[0].mxu0
      %v5086 = vpop.f32.mrb[0].mxu0
      %v5087 = vadd.f32 0.0, %v5086
      %v5088 = vpop.f32.mrb[0].mxu0
      %5089 = vmatprep.mubr.bf16.mxu0 0
      %5090 = vmatmul.mubr.bf16.gmra.mrb[0].mxu0 %v4714
      %v5091 = vpop.f32.mrb[0].mxu0
      %v5092 = vadd.f32 0.0, %v5091
      %v5093 = vpop.f32.mrb[0].mxu0
      %v5094 = vpop.f32.mrb[0].mxu0
      %v5095 = vadd.f32 0.0, %v5094
      %v5096 = vpop.f32.mrb[0].mxu0
      %5097 = vmatprep.mubr.bf16.mxu0 0
      %5098 = vmatmul.mubr.bf16.gmra.mrb[0].mxu0 %v4722
      %v5099 = vpop.f32.mrb[0].mxu0
      %v5100 = vadd.f32 0.0, %v5099
      %v5101 = vpop.f32.mrb[0].mxu0
      %v5102 = vpop.f32.mrb[0].mxu0
      %v5103 = vadd.f32 0.0, %v5102
      %v5104 = vpop.f32.mrb[0].mxu0
      %5105 = vmatprep.mubr.bf16.mxu0 0
      %5106 = vmatmul.mubr.bf16.gmra.mrb[0].mxu0 %v4730
      %v5107 = vpop.f32.mrb[0].mxu0
      %v5108 = vadd.f32 0.0, %v5107
      %v5109 = vpop.f32.mrb[0].mxu0
      %v5110 = vpop.f32.mrb[0].mxu0
      %v5111 = vadd.f32 0.0, %v5110
      %v5112 = vpop.f32.mrb[0].mxu0
      %5113 = vmatprep.mubr.bf16.mxu0 0
      %5114 = vmatmul.mubr.bf16.gmra.mrb[0].mxu0 %v4738
      %v5115 = vpop.f32.mrb[0].mxu0
      %v5116 = vadd.f32 0.0, %v5115
      %v5117 = vpop.f32.mrb[0].mxu0
      %v5118 = vpop.f32.mrb[0].mxu0
      %v5119 = vadd.f32 0.0, %v5118
      %v5120 = vpop.f32.mrb[0].mxu0
      %5121 = vmatprep.mubr.bf16.mxu0 0
      %5122 = vmatmul.mubr.bf16.gmra.mrb[0].mxu0 %v4746
      %v5123 = vpop.f32.mrb[0].mxu0
      %v5124 = vadd.f32 0.0, %v5123
      %v5125 = vpop.f32.mrb[0].mxu0
      %v5126 = vpop.f32.mrb[0].mxu0
      %v5127 = vadd.f32 0.0, %v5126
      %v5128 = vpop.f32.mrb[0].mxu0
      %5129 = vmatprep.mubr.bf16.mxu0 0
      %5130 = vmatmul.mubr.bf16.gmra.mrb[0].mxu0 %v4754
      %v5131 = vpop.f32.mrb[0].mxu0
      %v5132 = vadd.f32 0.0, %v5131
      %v5133 = vpop.f32.mrb[0].mxu0
      %v5134 = vpop.f32.mrb[0].mxu0
      %v5135 = vadd.f32 0.0, %v5134
      %v5136 = vpop.f32.mrb[0].mxu0
      %5137 = vmatprep.mubr.bf16.mxu0 0
      %5138 = vmatmul.mubr.bf16.gmra.mrb[0].mxu0 %v4762
      %v5139 = vpop.f32.mrb[0].mxu0
      %v5140 = vadd.f32 0.0, %v5139
      %v5141 = vpop.f32.mrb[0].mxu0
      %v5142 = vpop.f32.mrb[0].mxu0
      %v5143 = vadd.f32 0.0, %v5142
      %v5144 = vpop.f32.mrb[0].mxu0
      %5145 = vmatprep.mubr.bf16.mxu0 0
      %5146 = vmatmul.mubr.bf16.gmra.mrb[0].mxu0 %v4770
      %v5147 = vpop.f32.mrb[0].mxu0
      %v5148 = vadd.f32 0.0, %v5147
      %v5149 = vpop.f32.mrb[0].mxu0
      %v5150 = vpop.f32.mrb[0].mxu0
      %v5151 = vadd.f32 0.0, %v5150
      %v5152 = vpop.f32.mrb[0].mxu0
      %5153 = vmatprep.mubr.bf16.mxu0 0
      %5154 = vmatmul.mubr.bf16.gmra.mrb[0].mxu0 %v4778
      %v5155 = vpop.f32.mrb[0].mxu0
      %v5156 = vadd.f32 0.0, %v5155
      %v5157 = vpop.f32.mrb[0].mxu0
      %v5158 = vpop.f32.mrb[0].mxu0
      %v5159 = vadd.f32 0.0, %v5158
      %v5160 = vpop.f32.mrb[0].mxu0
      %5161 = vmatprep.mubr.bf16.mxu0 0
      %5162 = vmatmul.mubr.bf16.gmra.mrb[0].mxu0 %v4786
      %v5163 = vpop.f32.mrb[0].mxu0
      %v5164 = vadd.f32 0.0, %v5163
      %v5165 = vpop.f32.mrb[0].mxu0
      %v5166 = vpop.f32.mrb[0].mxu0
      %v5167 = vadd.f32 0.0, %v5166
      %v5168 = vpop.f32.mrb[0].mxu0
      %5169 = vmatprep.mubr.bf16.mxu0 0
      %5170 = vmatmul.mubr.bf16.gmra.mrb[0].mxu0 %v4794
      %v5171 = vpop.f32.mrb[0].mxu0
      %v5172 = vadd.f32 0.0, %v5171
      %v5173 = vpop.f32.mrb[0].mxu0
      %v5174 = vpop.f32.mrb[0].mxu0
      %v5175 = vadd.f32 0.0, %v5174
      %v5176 = vpop.f32.mrb[0].mxu0
      %5177 = vmatprep.mubr.bf16.mxu0 0
      %5178 = vmatmul.mubr.bf16.gmra.mrb[0].mxu0 %v4802
      %v5179 = vpop.f32.mrb[0].mxu0
      %v5180 = vadd.f32 0.0, %v5179
      %v5181 = vpop.f32.mrb[0].mxu0
      %v5182 = vpop.f32.mrb[0].mxu0
      %v5183 = vadd.f32 0.0, %v5182
      %v5184 = vpop.f32.mrb[0].mxu0
      %5185 = vdwg.mxu0
      %v5186 = vadd.f32 %v3494, %v4920
      %v5187 = vadd.f32 %v3497, %v4923
      %v5188 = vadd.f32 %v3502, %v4928
      %v5189 = vadd.f32 %v3505, %v4931
      %v5190 = vadd.f32 %v3510, %v4936
      %v5191 = vadd.f32 %v3513, %v4939
      %v5192 = vadd.f32 %v3518, %v4944
      %v5193 = vadd.f32 %v3521, %v4947
      %v5194 = vadd.f32 %v3526, %v4952
      %v5195 = vadd.f32 %v3529, %v4955
      %v5196 = vadd.f32 %v3534, %v4960
      %v5197 = vadd.f32 %v3537, %v4963
      %v5198 = vadd.f32 %v3542, %v4968
      %v5199 = vadd.f32 %v3545, %v4971
      %v5200 = vadd.f32 %v3550, %v4976
      %v5201 = vadd.f32 %v3553, %v4979
      %v5202 = vadd.f32 %v3558, %v4984
      %v5203 = vadd.f32 %v3561, %v4987
      %v5204 = vadd.f32 %v3566, %v4992
      %v5205 = vadd.f32 %v3569, %v4995
      %v5206 = vadd.f32 %v3574, %v5000
      %v5207 = vadd.f32 %v3577, %v5003
      %v5208 = vadd.f32 %v3582, %v5008
      %v5209 = vadd.f32 %v3585, %v5011
      %v5210 = vadd.f32 %v3590, %v5016
      %v5211 = vadd.f32 %v3593, %v5019
      %v5212 = vadd.f32 %v3598, %v5024
      %v5213 = vadd.f32 %v3601, %v5027
      %v5214 = vadd.f32 %v3606, %v5032
      %v5215 = vadd.f32 %v3609, %v5035
      %v5216 = vadd.f32 %v3614, %v5040
      %v5217 = vadd.f32 %v3617, %v5043
      %v5218 = vadd.f32 %v3634, %v5060
      %v5219 = vadd.f32 %v3637, %v5063
      %v5220 = vadd.f32 %v3642, %v5068
      %v5221 = vadd.f32 %v3645, %v5071
      %v5222 = vadd.f32 %v3650, %v5076
      %v5223 = vadd.f32 %v3653, %v5079
      %v5224 = vadd.f32 %v3658, %v5084
      %v5225 = vadd.f32 %v3661, %v5087
      %v5226 = vadd.f32 %v3666, %v5092
      %v5227 = vadd.f32 %v3669, %v5095
      %v5228 = vadd.f32 %v3674, %v5100
      %v5229 = vadd.f32 %v3677, %v5103
      %v5230 = vadd.f32 %v3682, %v5108
      %v5231 = vadd.f32 %v3685, %v5111
      %v5232 = vadd.f32 %v3690, %v5116
      %v5233 = vadd.f32 %v3693, %v5119
      %v5234 = vadd.f32 %v3698, %v5124
      %v5235 = vadd.f32 %v3701, %v5127
      %v5236 = vadd.f32 %v3706, %v5132
      %v5237 = vadd.f32 %v3709, %v5135
      %v5238 = vadd.f32 %v3714, %v5140
      %v5239 = vadd.f32 %v3717, %v5143
      %v5240 = vadd.f32 %v3722, %v5148
      %v5241 = vadd.f32 %v3725, %v5151
      %v5242 = vadd.f32 %v3730, %v5156
      %v5243 = vadd.f32 %v3733, %v5159
      %v5244 = vadd.f32 %v3738, %v5164
      %v5245 = vadd.f32 %v3741, %v5167
      %v5246 = vadd.f32 %v3746, %v5172
      %v5247 = vadd.f32 %v3749, %v5175
      %v5248 = vadd.f32 %v3754, %v5180
      %v5249 = vadd.f32 %v3757, %v5183
      %v5250 = vld [vmem:[#allocation2 + $0x8] sm:$0x80]
      %v5251 = vld [vmem:[#allocation2 + $0x118] sm:$0xff]
      %v5252 = vsel %vm2648, %v5250, 0
      %v5253 = vsel %vm2649, %v3761, 0
      %v5254 = vsel %vm2650, %v3762, 0
      %v5255 = vsel %vm2651, %v3763, 0
      %v5256 = vsel %vm2652, %v3764, 0
      %v5257 = vsel %vm2653, %v3765, 0
      %v5258 = vsel %vm2654, %v3766, 0
      %v5259 = vsel %vm2655, %v3767, 0
      %v5260 = vsel %vm2656, %v3768, 0
      %v5261 = vsel %vm2657, %v3769, 0
      %v5262 = vsel %vm2658, %v3770, 0
      %v5263 = vsel %vm2659, %v3771, 0
      %v5264 = vsel %vm2660, %v3772, 0
      %v5265 = vsel %vm2661, %v3773, 0
      %v5266 = vsel %vm2662, %v3774, 0
      %v5267 = vsel %vm2663, %v3775, 0
      %v5268 = vsel %vm2664, %v3776, 0
      %v5269 = vsel %vm2665, %v3777, 0
      %v5270 = vsel %vm2666, %v3778, 0
      %v5271 = vsel %vm2667, %v3779, 0
      %v5272 = vsel %vm2668, %v3780, 0
      %v5273 = vsel %vm2669, %v3781, 0
      %v5274 = vsel %vm2670, %v3782, 0
      %v5275 = vsel %vm2671, %v3783, 0
      %v5276 = vsel %vm2672, %v3784, 0
      %v5277 = vsel %vm2673, %v3785, 0
      %v5278 = vsel %vm2674, %v3786, 0
      %v5279 = vsel %vm2675, %v3787, 0
      %v5280 = vsel %vm2676, %v3788, 0
      %v5281 = vsel %vm2677, %v3789, 0
      %v5282 = vsel %vm2678, %v3790, 0
      %v5283 = vsel %vm2679, %v3791, 0
      %v5284 = vsel %vm2680, %v3792, 0
      %v5285 = vsel %vm2681, %v3793, 0
      %v5286 = vsel %vm2682, %v5251, 0
      %s5287 = scalar_lea.vmem %s4, 192
      %v5288 = vld [vmem:[%s5287] sm:$0xf]
      %v5289 = vld [vmem:[%s5287 + $0x4] sm:$0xf]
      %v5290 = vld [vmem:[%s5287 + $0x8] sm:$0xf]
      %v5291 = vld [vmem:[%s5287 + $0xc] sm:$0xf]
      %v5292 = vld [vmem:[%s5287 + $0x10] sm:$0xf]
      %v5293 = vld [vmem:[%s5287 + $0x14] sm:$0xf]
      %v5294 = vld [vmem:[%s5287 + $0x18] sm:$0xf]
      %v5295 = vld [vmem:[%s5287 + $0x1c] sm:$0xf]
      %v5296 = vld [vmem:[%s5287 + $0x20] sm:$0xf]
      %v5297 = vld [vmem:[%s5287 + $0x24] sm:$0xf]
      %v5298 = vld [vmem:[%s5287 + $0x28] sm:$0xf]
      %v5299 = vld [vmem:[%s5287 + $0x2c] sm:$0xf]
      %v5300 = vld [vmem:[%s5287 + $0x30] sm:$0xf]
      %v5301 = vld [vmem:[%s5287 + $0x34] sm:$0xf]
      %v5302 = vld [vmem:[%s5287 + $0x38] sm:$0xf]
      %v5303 = vld [vmem:[%s5287 + $0x3c] sm:$0xf]
      %v5305 = vshrl.u32 %v5252, 16
      %v5307 = vrot.slane %v5305, 7
      %v5309 = vshrl.u32 %v5253, 16
      %v5311 = vrot.slane %v5309, 7
      %v5312 = vshll.u32 %v5253, 16
      %v5314 = vor.u32 %v5311, %v5312
      %v5315 = vsel %vm3100, %v5307, %v5314
      %v5317 = vshrl.u32 %v5254, 16
      %v5319 = vrot.slane %v5317, 7
      %v5320 = vshll.u32 %v5254, 16
      %v5322 = vor.u32 %v5319, %v5320
      %v5323 = vsel %vm3100, %v5311, %v5322
      %v5325 = vshrl.u32 %v5255, 16
      %v5327 = vrot.slane %v5325, 7
      %v5328 = vshll.u32 %v5255, 16
      %v5330 = vor.u32 %v5327, %v5328
      %v5331 = vsel %vm3100, %v5319, %v5330
      %v5333 = vshrl.u32 %v5256, 16
      %v5335 = vrot.slane %v5333, 7
      %v5336 = vshll.u32 %v5256, 16
      %v5338 = vor.u32 %v5335, %v5336
      %v5339 = vsel %vm3100, %v5327, %v5338
      %v5341 = vshrl.u32 %v5257, 16
      %v5343 = vrot.slane %v5341, 7
      %v5344 = vshll.u32 %v5257, 16
      %v5346 = vor.u32 %v5343, %v5344
      %v5347 = vsel %vm3100, %v5335, %v5346
      %v5349 = vshrl.u32 %v5258, 16
      %v5351 = vrot.slane %v5349, 7
      %v5352 = vshll.u32 %v5258, 16
      %v5354 = vor.u32 %v5351, %v5352
      %v5355 = vsel %vm3100, %v5343, %v5354
      %v5357 = vshrl.u32 %v5259, 16
      %v5359 = vrot.slane %v5357, 7
      %v5360 = vshll.u32 %v5259, 16
      %v5362 = vor.u32 %v5359, %v5360
      %v5363 = vsel %vm3100, %v5351, %v5362
      %v5365 = vshrl.u32 %v5260, 16
      %v5367 = vrot.slane %v5365, 7
      %v5368 = vshll.u32 %v5260, 16
      %v5370 = vor.u32 %v5367, %v5368
      %v5371 = vsel %vm3100, %v5359, %v5370
      %v5373 = vshrl.u32 %v5261, 16
      %v5375 = vrot.slane %v5373, 7
      %v5376 = vshll.u32 %v5261, 16
      %v5378 = vor.u32 %v5375, %v5376
      %v5379 = vsel %vm3100, %v5367, %v5378
      %v5381 = vshrl.u32 %v5262, 16
      %v5383 = vrot.slane %v5381, 7
      %v5384 = vshll.u32 %v5262, 16
      %v5386 = vor.u32 %v5383, %v5384
      %v5387 = vsel %vm3100, %v5375, %v5386
      %v5389 = vshrl.u32 %v5263, 16
      %v5391 = vrot.slane %v5389, 7
      %v5392 = vshll.u32 %v5263, 16
      %v5394 = vor.u32 %v5391, %v5392
      %v5395 = vsel %vm3100, %v5383, %v5394
      %v5397 = vshrl.u32 %v5264, 16
      %v5399 = vrot.slane %v5397, 7
      %v5400 = vshll.u32 %v5264, 16
      %v5402 = vor.u32 %v5399, %v5400
      %v5403 = vsel %vm3100, %v5391, %v5402
      %v5405 = vshrl.u32 %v5265, 16
      %v5407 = vrot.slane %v5405, 7
      %v5408 = vshll.u32 %v5265, 16
      %v5410 = vor.u32 %v5407, %v5408
      %v5411 = vsel %vm3100, %v5399, %v5410
      %v5413 = vshrl.u32 %v5266, 16
      %v5415 = vrot.slane %v5413, 7
      %v5416 = vshll.u32 %v5266, 16
      %v5418 = vor.u32 %v5415, %v5416
      %v5419 = vsel %vm3100, %v5407, %v5418
      %v5421 = vshrl.u32 %v5267, 16
      %v5423 = vrot.slane %v5421, 7
      %v5424 = vshll.u32 %v5267, 16
      %v5426 = vor.u32 %v5423, %v5424
      %v5427 = vsel %vm3100, %v5415, %v5426
      %v5429 = vshrl.u32 %v5268, 16
      %v5431 = vrot.slane %v5429, 7
      %v5432 = vshll.u32 %v5268, 16
      %v5434 = vor.u32 %v5431, %v5432
      %v5435 = vsel %vm3100, %v5423, %v5434
      %v5437 = vshrl.u32 %v5269, 16
      %v5439 = vrot.slane %v5437, 7
      %v5440 = vshll.u32 %v5269, 16
      %v5442 = vor.u32 %v5439, %v5440
      %v5443 = vsel %vm3100, %v5431, %v5442
      %v5445 = vshrl.u32 %v5270, 16
      %v5447 = vrot.slane %v5445, 7
      %v5448 = vshll.u32 %v5270, 16
      %v5450 = vor.u32 %v5447, %v5448
      %v5451 = vsel %vm3100, %v5439, %v5450
      %v5453 = vshrl.u32 %v5271, 16
      %v5455 = vrot.slane %v5453, 7
      %v5456 = vshll.u32 %v5271, 16
      %v5458 = vor.u32 %v5455, %v5456
      %v5459 = vsel %vm3100, %v5447, %v5458
      %v5461 = vshrl.u32 %v5272, 16
      %v5463 = vrot.slane %v5461, 7
      %v5464 = vshll.u32 %v5272, 16
      %v5466 = vor.u32 %v5463, %v5464
      %v5467 = vsel %vm3100, %v5455, %v5466
      %v5469 = vshrl.u32 %v5273, 16
      %v5471 = vrot.slane %v5469, 7
      %v5472 = vshll.u32 %v5273, 16
      %v5474 = vor.u32 %v5471, %v5472
      %v5475 = vsel %vm3100, %v5463, %v5474
      %v5477 = vshrl.u32 %v5274, 16
      %v5479 = vrot.slane %v5477, 7
      %v5480 = vshll.u32 %v5274, 16
      %v5482 = vor.u32 %v5479, %v5480
      %v5483 = vsel %vm3100, %v5471, %v5482
      %v5485 = vshrl.u32 %v5275, 16
      %v5487 = vrot.slane %v5485, 7
      %v5488 = vshll.u32 %v5275, 16
      %v5490 = vor.u32 %v5487, %v5488
      %v5491 = vsel %vm3100, %v5479, %v5490
      %v5493 = vshrl.u32 %v5276, 16
      %v5495 = vrot.slane %v5493, 7
      %v5496 = vshll.u32 %v5276, 16
      %v5498 = vor.u32 %v5495, %v5496
      %v5499 = vsel %vm3100, %v5487, %v5498
      %v5501 = vshrl.u32 %v5277, 16
      %v5503 = vrot.slane %v5501, 7
      %v5504 = vshll.u32 %v5277, 16
      %v5506 = vor.u32 %v5503, %v5504
      %v5507 = vsel %vm3100, %v5495, %v5506
      %v5509 = vshrl.u32 %v5278, 16
      %v5511 = vrot.slane %v5509, 7
      %v5512 = vshll.u32 %v5278, 16
      %v5514 = vor.u32 %v5511, %v5512
      %v5515 = vsel %vm3100, %v5503, %v5514
      %v5517 = vshrl.u32 %v5279, 16
      %v5519 = vrot.slane %v5517, 7
      %v5520 = vshll.u32 %v5279, 16
      %v5522 = vor.u32 %v5519, %v5520
      %v5523 = vsel %vm3100, %v5511, %v5522
      %v5525 = vshrl.u32 %v5280, 16
      %v5527 = vrot.slane %v5525, 7
      %v5528 = vshll.u32 %v5280, 16
      %v5530 = vor.u32 %v5527, %v5528
      %v5531 = vsel %vm3100, %v5519, %v5530
      %v5533 = vshrl.u32 %v5281, 16
      %v5535 = vrot.slane %v5533, 7
      %v5536 = vshll.u32 %v5281, 16
      %v5538 = vor.u32 %v5535, %v5536
      %v5539 = vsel %vm3100, %v5527, %v5538
      %v5541 = vshrl.u32 %v5282, 16
      %v5543 = vrot.slane %v5541, 7
      %v5544 = vshll.u32 %v5282, 16
      %v5546 = vor.u32 %v5543, %v5544
      %v5547 = vsel %vm3100, %v5535, %v5546
      %v5549 = vshrl.u32 %v5283, 16
      %v5551 = vrot.slane %v5549, 7
      %v5552 = vshll.u32 %v5283, 16
      %v5554 = vor.u32 %v5551, %v5552
      %v5555 = vsel %vm3100, %v5543, %v5554
      %v5557 = vshrl.u32 %v5284, 16
      %v5559 = vrot.slane %v5557, 7
      %v5560 = vshll.u32 %v5284, 16
      %v5562 = vor.u32 %v5559, %v5560
      %v5563 = vsel %vm3100, %v5551, %v5562
      %v5565 = vshrl.u32 %v5285, 16
      %v5567 = vrot.slane %v5565, 7
      %v5568 = vshll.u32 %v5285, 16
      %v5570 = vor.u32 %v5567, %v5568
      %v5571 = vsel %vm3100, %v5559, %v5570
      %v5573 = vshrl.u32 %v5286, 16
      %v5575 = vrot.slane %v5573, 7
      %v5576 = vshll.u32 %v5286, 16
      %v5578 = vor.u32 %v5575, %v5576
      %v5579 = vsel %vm3100, %v5567, %v5578
      %v5630 = vunpack.c.l.b16 %v5288
      %v5631 = vunpack.c.l.b16 %v5289
      %v5632 = vunpack.c.l.b16 %v5290
      %v5633 = vunpack.c.l.b16 %v5291
      %v5634 = vunpack.c.l.b16 %v5292
      %v5635 = vunpack.c.l.b16 %v5293
      %v5636 = vunpack.c.l.b16 %v5294
      %v5637 = vunpack.c.l.b16 %v5295
      %v5638 = vunpack.c.l.b16 %v5296
      %v5639 = vunpack.c.l.b16 %v5297
      %v5640 = vunpack.c.l.b16 %v5298
      %v5641 = vunpack.c.l.b16 %v5299
      %v5642 = vunpack.c.l.b16 %v5300
      %v5643 = vunpack.c.l.b16 %v5301
      %v5644 = vunpack.c.l.b16 %v5302
      %v5645 = vunpack.c.l.b16 %v5303
      %v5646 = vpack.c.b16 %v5631, %v5630
      %v5647 = vpack.c.b16 %v5633, %v5632
      %v5648 = vpack.c.b16 %v5635, %v5634
      %v5649 = vpack.c.b16 %v5637, %v5636
      %v5650 = vpack.c.b16 %v5639, %v5638
      %v5651 = vpack.c.b16 %v5641, %v5640
      %v5652 = vpack.c.b16 %v5643, %v5642
      %v5653 = vpack.c.b16 %v5645, %v5644
      %5662 = vmatprep.subr.bf16.mxu0 0
      %5663 = vmatpush1.bf16.msra.mxu0 %v5646
      %5664 = vmatprep.subr.bf16.mxu0 0
      %5665 = vmatpush1.bf16.msra.mxu0 %v5647
      %5666 = vmatprep.subr.bf16.mxu0 0
      %5667 = vmatpush1.bf16.msra.mxu0 %v5648
      %5668 = vmatprep.subr.bf16.mxu0 0
      %5669 = vmatpush1.bf16.msra.mxu0 %v5649
      %5670 = vmatprep.subr.bf16.mxu0 0
      %5671 = vmatpush1.bf16.msra.mxu0 %v5650
      %5672 = vmatprep.subr.bf16.mxu0 0
      %5673 = vmatpush1.bf16.msra.mxu0 %v5651
      %5674 = vmatprep.subr.bf16.mxu0 0
      %5675 = vmatpush1.bf16.msra.mxu0 %v5652
      %5676 = vmatprep.subr.bf16.mxu0 0
      %5677 = vmatpush1.bf16.msra.mxu0 %v5653
      %5678 = vmatprep.subr.bf16.mxu0 0
      %5679 = vmatpush1.bf16.msra.mxu0 0
      %5680 = vmatprep.subr.bf16.mxu0 0
      %5681 = vmatpush1.bf16.msra.mxu0 0
      %5682 = vmatprep.subr.bf16.mxu0 0
      %5683 = vmatpush1.bf16.msra.mxu0 0
      %5684 = vmatprep.subr.bf16.mxu0 0
      %5685 = vmatpush1.bf16.msra.mxu0 0
      %5686 = vmatprep.subr.bf16.mxu0 0
      %5687 = vmatpush1.bf16.msra.mxu0 0
      %5688 = vmatprep.subr.bf16.mxu0 0
      %5689 = vmatpush1.bf16.msra.mxu0 0
      %5690 = vmatprep.subr.bf16.mxu0 0
      %5691 = vmatpush1.bf16.msra.mxu0 0
      %5692 = vmatprep.subr.bf16.mxu0 0
      %5693 = vmatpush1.bf16.msra.mxu0 0
      %5694 = vmatprep.mubr.bf16.mxu0 0
      %5695 = vmatmul.mubr.bf16.gmra.mrb[0].mxu0 %v5315
      %v5696 = vpop.f32.mrb[0].mxu0
      %v5697 = vadd.f32 0.0, %v5696
      %v5698 = vpop.f32.mrb[0].mxu0
      %v5699 = vpop.f32.mrb[0].mxu0
      %v5700 = vadd.f32 0.0, %v5699
      %v5701 = vpop.f32.mrb[0].mxu0
      %5702 = vmatprep.mubr.bf16.mxu0 0
      %5703 = vmatmul.mubr.bf16.gmra.mrb[0].mxu0 %v5323
      %v5704 = vpop.f32.mrb[0].mxu0
      %v5705 = vadd.f32 0.0, %v5704
      %v5706 = vpop.f32.mrb[0].mxu0
      %v5707 = vpop.f32.mrb[0].mxu0
      %v5708 = vadd.f32 0.0, %v5707
      %v5709 = vpop.f32.mrb[0].mxu0
      %5710 = vmatprep.mubr.bf16.mxu0 0
      %5711 = vmatmul.mubr.bf16.gmra.mrb[0].mxu0 %v5331
      %v5712 = vpop.f32.mrb[0].mxu0
      %v5713 = vadd.f32 0.0, %v5712
      %v5714 = vpop.f32.mrb[0].mxu0
      %v5715 = vpop.f32.mrb[0].mxu0
      %v5716 = vadd.f32 0.0, %v5715
      %v5717 = vpop.f32.mrb[0].mxu0
      %5718 = vmatprep.mubr.bf16.mxu0 0
      %5719 = vmatmul.mubr.bf16.gmra.mrb[0].mxu0 %v5339
      %v5720 = vpop.f32.mrb[0].mxu0
      %v5721 = vadd.f32 0.0, %v5720
      %v5722 = vpop.f32.mrb[0].mxu0
      %v5723 = vpop.f32.mrb[0].mxu0
      %v5724 = vadd.f32 0.0, %v5723
      %v5725 = vpop.f32.mrb[0].mxu0
      %5726 = vmatprep.mubr.bf16.mxu0 0
      %5727 = vmatmul.mubr.bf16.gmra.mrb[0].mxu0 %v5347
      %v5728 = vpop.f32.mrb[0].mxu0
      %v5729 = vadd.f32 0.0, %v5728
      %v5730 = vpop.f32.mrb[0].mxu0
      %v5731 = vpop.f32.mrb[0].mxu0
      %v5732 = vadd.f32 0.0, %v5731
      %v5733 = vpop.f32.mrb[0].mxu0
      %5734 = vmatprep.mubr.bf16.mxu0 0
      %5735 = vmatmul.mubr.bf16.gmra.mrb[0].mxu0 %v5355
      %v5736 = vpop.f32.mrb[0].mxu0
      %v5737 = vadd.f32 0.0, %v5736
      %v5738 = vpop.f32.mrb[0].mxu0
      %v5739 = vpop.f32.mrb[0].mxu0
      %v5740 = vadd.f32 0.0, %v5739
      %v5741 = vpop.f32.mrb[0].mxu0
      %5742 = vmatprep.mubr.bf16.mxu0 0
      %5743 = vmatmul.mubr.bf16.gmra.mrb[0].mxu0 %v5363
      %v5744 = vpop.f32.mrb[0].mxu0
      %v5745 = vadd.f32 0.0, %v5744
      %v5746 = vpop.f32.mrb[0].mxu0
      %v5747 = vpop.f32.mrb[0].mxu0
      %v5748 = vadd.f32 0.0, %v5747
      %v5749 = vpop.f32.mrb[0].mxu0
      %5750 = vmatprep.mubr.bf16.mxu0 0
      %5751 = vmatmul.mubr.bf16.gmra.mrb[0].mxu0 %v5371
      %v5752 = vpop.f32.mrb[0].mxu0
      %v5753 = vadd.f32 0.0, %v5752
      %v5754 = vpop.f32.mrb[0].mxu0
      %v5755 = vpop.f32.mrb[0].mxu0
      %v5756 = vadd.f32 0.0, %v5755
      %v5757 = vpop.f32.mrb[0].mxu0
      %5758 = vmatprep.mubr.bf16.mxu0 0
      %5759 = vmatmul.mubr.bf16.gmra.mrb[0].mxu0 %v5379
      %v5760 = vpop.f32.mrb[0].mxu0
      %v5761 = vadd.f32 0.0, %v5760
      %v5762 = vpop.f32.mrb[0].mxu0
      %v5763 = vpop.f32.mrb[0].mxu0
      %v5764 = vadd.f32 0.0, %v5763
      %v5765 = vpop.f32.mrb[0].mxu0
      %5766 = vmatprep.mubr.bf16.mxu0 0
      %5767 = vmatmul.mubr.bf16.gmra.mrb[0].mxu0 %v5387
      %v5768 = vpop.f32.mrb[0].mxu0
      %v5769 = vadd.f32 0.0, %v5768
      %v5770 = vpop.f32.mrb[0].mxu0
      %v5771 = vpop.f32.mrb[0].mxu0
      %v5772 = vadd.f32 0.0, %v5771
      %v5773 = vpop.f32.mrb[0].mxu0
      %5774 = vmatprep.mubr.bf16.mxu0 0
      %5775 = vmatmul.mubr.bf16.gmra.mrb[0].mxu0 %v5395
      %v5776 = vpop.f32.mrb[0].mxu0
      %v5777 = vadd.f32 0.0, %v5776
      %v5778 = vpop.f32.mrb[0].mxu0
      %v5779 = vpop.f32.mrb[0].mxu0
      %v5780 = vadd.f32 0.0, %v5779
      %v5781 = vpop.f32.mrb[0].mxu0
      %5782 = vmatprep.mubr.bf16.mxu0 0
      %5783 = vmatmul.mubr.bf16.gmra.mrb[0].mxu0 %v5403
      %v5784 = vpop.f32.mrb[0].mxu0
      %v5785 = vadd.f32 0.0, %v5784
      %v5786 = vpop.f32.mrb[0].mxu0
      %v5787 = vpop.f32.mrb[0].mxu0
      %v5788 = vadd.f32 0.0, %v5787
      %v5789 = vpop.f32.mrb[0].mxu0
      %5790 = vmatprep.mubr.bf16.mxu0 0
      %5791 = vmatmul.mubr.bf16.gmra.mrb[0].mxu0 %v5411
      %v5792 = vpop.f32.mrb[0].mxu0
      %v5793 = vadd.f32 0.0, %v5792
      %v5794 = vpop.f32.mrb[0].mxu0
      %v5795 = vpop.f32.mrb[0].mxu0
      %v5796 = vadd.f32 0.0, %v5795
      %v5797 = vpop.f32.mrb[0].mxu0
      %5798 = vmatprep.mubr.bf16.mxu0 0
      %5799 = vmatmul.mubr.bf16.gmra.mrb[0].mxu0 %v5419
      %v5800 = vpop.f32.mrb[0].mxu0
      %v5801 = vadd.f32 0.0, %v5800
      %v5802 = vpop.f32.mrb[0].mxu0
      %v5803 = vpop.f32.mrb[0].mxu0
      %v5804 = vadd.f32 0.0, %v5803
      %v5805 = vpop.f32.mrb[0].mxu0
      %5806 = vmatprep.mubr.bf16.mxu0 0
      %5807 = vmatmul.mubr.bf16.gmra.mrb[0].mxu0 %v5427
      %v5808 = vpop.f32.mrb[0].mxu0
      %v5809 = vadd.f32 0.0, %v5808
      %v5810 = vpop.f32.mrb[0].mxu0
      %v5811 = vpop.f32.mrb[0].mxu0
      %v5812 = vadd.f32 0.0, %v5811
      %v5813 = vpop.f32.mrb[0].mxu0
      %5814 = vmatprep.mubr.bf16.mxu0 0
      %5815 = vmatmul.mubr.bf16.gmra.mrb[0].mxu0 %v5435
      %v5816 = vpop.f32.mrb[0].mxu0
      %v5817 = vadd.f32 0.0, %v5816
      %v5818 = vpop.f32.mrb[0].mxu0
      %v5819 = vpop.f32.mrb[0].mxu0
      %v5820 = vadd.f32 0.0, %v5819
      %v5821 = vpop.f32.mrb[0].mxu0
      %5822 = vmatprep.mubr.bf16.mxu0 0
      %5823 = vmatmul.mubr.bf16.gmra.mrb[0].mxu0 %v5443
      %v5824 = vpop.f32.mrb[0].mxu0
      %v5825 = vpop.f32.mrb[0].mxu0
      %v5826 = vpop.f32.mrb[0].mxu0
      %v5827 = vpop.f32.mrb[0].mxu0
      %5828 = vmatprep.mubr.bf16.mxu0 0
      %5829 = vmatmul.mubr.bf16.gmra.mrb[0].mxu0 %v5451
      %v5830 = vpop.f32.mrb[0].mxu0
      %v5831 = vpop.f32.mrb[0].mxu0
      %v5832 = vpop.f32.mrb[0].mxu0
      %v5833 = vpop.f32.mrb[0].mxu0
      %5834 = vmatprep.mubr.bf16.mxu0 0
      %5835 = vmatmul.mubr.bf16.gmra.mrb[0].mxu0 %v5459
      %v5836 = vpop.f32.mrb[0].mxu0
      %v5837 = vadd.f32 0.0, %v5836
      %v5838 = vpop.f32.mrb[0].mxu0
      %v5839 = vpop.f32.mrb[0].mxu0
      %v5840 = vadd.f32 0.0, %v5839
      %v5841 = vpop.f32.mrb[0].mxu0
      %5842 = vmatprep.mubr.bf16.mxu0 0
      %5843 = vmatmul.mubr.bf16.gmra.mrb[0].mxu0 %v5467
      %v5844 = vpop.f32.mrb[0].mxu0
      %v5845 = vadd.f32 0.0, %v5844
      %v5846 = vpop.f32.mrb[0].mxu0
      %v5847 = vpop.f32.mrb[0].mxu0
      %v5848 = vadd.f32 0.0, %v5847
      %v5849 = vpop.f32.mrb[0].mxu0
      %5850 = vmatprep.mubr.bf16.mxu0 0
      %5851 = vmatmul.mubr.bf16.gmra.mrb[0].mxu0 %v5475
      %v5852 = vpop.f32.mrb[0].mxu0
      %v5853 = vadd.f32 0.0, %v5852
      %v5854 = vpop.f32.mrb[0].mxu0
      %v5855 = vpop.f32.mrb[0].mxu0
      %v5856 = vadd.f32 0.0, %v5855
      %v5857 = vpop.f32.mrb[0].mxu0
      %5858 = vmatprep.mubr.bf16.mxu0 0
      %5859 = vmatmul.mubr.bf16.gmra.mrb[0].mxu0 %v5483
      %v5860 = vpop.f32.mrb[0].mxu0
      %v5861 = vadd.f32 0.0, %v5860
      %v5862 = vpop.f32.mrb[0].mxu0
      %v5863 = vpop.f32.mrb[0].mxu0
      %v5864 = vadd.f32 0.0, %v5863
      %v5865 = vpop.f32.mrb[0].mxu0
      %5866 = vmatprep.mubr.bf16.mxu0 0
      %5867 = vmatmul.mubr.bf16.gmra.mrb[0].mxu0 %v5491
      %v5868 = vpop.f32.mrb[0].mxu0
      %v5869 = vadd.f32 0.0, %v5868
      %v5870 = vpop.f32.mrb[0].mxu0
      %v5871 = vpop.f32.mrb[0].mxu0
      %v5872 = vadd.f32 0.0, %v5871
      %v5873 = vpop.f32.mrb[0].mxu0
      %5874 = vmatprep.mubr.bf16.mxu0 0
      %5875 = vmatmul.mubr.bf16.gmra.mrb[0].mxu0 %v5499
      %v5876 = vpop.f32.mrb[0].mxu0
      %v5877 = vadd.f32 0.0, %v5876
      %v5878 = vpop.f32.mrb[0].mxu0
      %v5879 = vpop.f32.mrb[0].mxu0
      %v5880 = vadd.f32 0.0, %v5879
      %v5881 = vpop.f32.mrb[0].mxu0
      %5882 = vmatprep.mubr.bf16.mxu0 0
      %5883 = vmatmul.mubr.bf16.gmra.mrb[0].mxu0 %v5507
      %v5884 = vpop.f32.mrb[0].mxu0
      %v5885 = vadd.f32 0.0, %v5884
      %v5886 = vpop.f32.mrb[0].mxu0
      %v5887 = vpop.f32.mrb[0].mxu0
      %v5888 = vadd.f32 0.0, %v5887
      %v5889 = vpop.f32.mrb[0].mxu0
      %5890 = vmatprep.mubr.bf16.mxu0 0
      %5891 = vmatmul.mubr.bf16.gmra.mrb[0].mxu0 %v5515
      %v5892 = vpop.f32.mrb[0].mxu0
      %v5893 = vadd.f32 0.0, %v5892
      %v5894 = vpop.f32.mrb[0].mxu0
      %v5895 = vpop.f32.mrb[0].mxu0
      %v5896 = vadd.f32 0.0, %v5895
      %v5897 = vpop.f32.mrb[0].mxu0
      %5898 = vmatprep.mubr.bf16.mxu0 0
      %5899 = vmatmul.mubr.bf16.gmra.mrb[0].mxu0 %v5523
      %v5900 = vpop.f32.mrb[0].mxu0
      %v5901 = vadd.f32 0.0, %v5900
      %v5902 = vpop.f32.mrb[0].mxu0
      %v5903 = vpop.f32.mrb[0].mxu0
      %v5904 = vadd.f32 0.0, %v5903
      %v5905 = vpop.f32.mrb[0].mxu0
      %5906 = vmatprep.mubr.bf16.mxu0 0
      %5907 = vmatmul.mubr.bf16.gmra.mrb[0].mxu0 %v5531
      %v5908 = vpop.f32.mrb[0].mxu0
      %v5909 = vadd.f32 0.0, %v5908
      %v5910 = vpop.f32.mrb[0].mxu0
      %v5911 = vpop.f32.mrb[0].mxu0
      %v5912 = vadd.f32 0.0, %v5911
      %v5913 = vpop.f32.mrb[0].mxu0
      %5914 = vmatprep.mubr.bf16.mxu0 0
      %5915 = vmatmul.mubr.bf16.gmra.mrb[0].mxu0 %v5539
      %v5916 = vpop.f32.mrb[0].mxu0
      %v5917 = vadd.f32 0.0, %v5916
      %v5918 = vpop.f32.mrb[0].mxu0
      %v5919 = vpop.f32.mrb[0].mxu0
      %v5920 = vadd.f32 0.0, %v5919
      %v5921 = vpop.f32.mrb[0].mxu0
      %5922 = vmatprep.mubr.bf16.mxu0 0
      %5923 = vmatmul.mubr.bf16.gmra.mrb[0].mxu0 %v5547
      %v5924 = vpop.f32.mrb[0].mxu0
      %v5925 = vadd.f32 0.0, %v5924
      %v5926 = vpop.f32.mrb[0].mxu0
      %v5927 = vpop.f32.mrb[0].mxu0
      %v5928 = vadd.f32 0.0, %v5927
      %v5929 = vpop.f32.mrb[0].mxu0
      %5930 = vmatprep.mubr.bf16.mxu0 0
      %5931 = vmatmul.mubr.bf16.gmra.mrb[0].mxu0 %v5555
      %v5932 = vpop.f32.mrb[0].mxu0
      %v5933 = vadd.f32 0.0, %v5932
      %v5934 = vpop.f32.mrb[0].mxu0
      %v5935 = vpop.f32.mrb[0].mxu0
      %v5936 = vadd.f32 0.0, %v5935
      %v5937 = vpop.f32.mrb[0].mxu0
      %5938 = vmatprep.mubr.bf16.mxu0 0
      %5939 = vmatmul.mubr.bf16.gmra.mrb[0].mxu0 %v5563
      %v5940 = vpop.f32.mrb[0].mxu0
      %v5941 = vadd.f32 0.0, %v5940
      %v5942 = vpop.f32.mrb[0].mxu0
      %v5943 = vpop.f32.mrb[0].mxu0
      %v5944 = vadd.f32 0.0, %v5943
      %v5945 = vpop.f32.mrb[0].mxu0
      %5946 = vmatprep.mubr.bf16.mxu0 0
      %5947 = vmatmul.mubr.bf16.gmra.mrb[0].mxu0 %v5571
      %v5948 = vpop.f32.mrb[0].mxu0
      %v5949 = vadd.f32 0.0, %v5948
      %v5950 = vpop.f32.mrb[0].mxu0
      %v5951 = vpop.f32.mrb[0].mxu0
      %v5952 = vadd.f32 0.0, %v5951
      %v5953 = vpop.f32.mrb[0].mxu0
      %5954 = vmatprep.mubr.bf16.mxu0 0
      %5955 = vmatmul.mubr.bf16.gmra.mrb[0].mxu0 %v5579
      %v5956 = vpop.f32.mrb[0].mxu0
      %v5957 = vadd.f32 0.0, %v5956
      %v5958 = vpop.f32.mrb[0].mxu0
      %v5959 = vpop.f32.mrb[0].mxu0
      %v5960 = vadd.f32 0.0, %v5959
      %v5961 = vpop.f32.mrb[0].mxu0
      %5962 = vdwg.mxu0
      %v5963 = vadd.f32 %v5186, %v5697
      %v5964 = vadd.f32 %v5187, %v5700
      %v5965 = vadd.f32 %v5188, %v5705
      %v5966 = vadd.f32 %v5189, %v5708
      %v5967 = vadd.f32 %v5190, %v5713
      %v5968 = vadd.f32 %v5191, %v5716
      %v5969 = vadd.f32 %v5192, %v5721
      %v5970 = vadd.f32 %v5193, %v5724
      %v5971 = vadd.f32 %v5194, %v5729
      %v5972 = vadd.f32 %v5195, %v5732
      %v5973 = vadd.f32 %v5196, %v5737
      %v5974 = vadd.f32 %v5197, %v5740
      %v5975 = vadd.f32 %v5198, %v5745
      %v5976 = vadd.f32 %v5199, %v5748
      %v5977 = vadd.f32 %v5200, %v5753
      %v5978 = vadd.f32 %v5201, %v5756
      %v5979 = vadd.f32 %v5202, %v5761
      %v5980 = vadd.f32 %v5203, %v5764
      %v5981 = vadd.f32 %v5204, %v5769
      %v5982 = vadd.f32 %v5205, %v5772
      %v5983 = vadd.f32 %v5206, %v5777
      %v5984 = vadd.f32 %v5207, %v5780
      %v5985 = vadd.f32 %v5208, %v5785
      %v5986 = vadd.f32 %v5209, %v5788
      %v5987 = vadd.f32 %v5210, %v5793
      %v5988 = vadd.f32 %v5211, %v5796
      %v5989 = vadd.f32 %v5212, %v5801
      %v5990 = vadd.f32 %v5213, %v5804
      %v5991 = vadd.f32 %v5214, %v5809
      %v5992 = vadd.f32 %v5215, %v5812
      %v5993 = vadd.f32 %v5216, %v5817
      %v5994 = vadd.f32 %v5217, %v5820
      %v5995 = vadd.f32 %v5218, %v5837
      %v5996 = vadd.f32 %v5219, %v5840
      %v5997 = vadd.f32 %v5220, %v5845
      %v5998 = vadd.f32 %v5221, %v5848
      %v5999 = vadd.f32 %v5222, %v5853
      %v6000 = vadd.f32 %v5223, %v5856
      %v6001 = vadd.f32 %v5224, %v5861
      %v6002 = vadd.f32 %v5225, %v5864
      %v6003 = vadd.f32 %v5226, %v5869
      %v6004 = vadd.f32 %v5227, %v5872
      %v6005 = vadd.f32 %v5228, %v5877
      %v6006 = vadd.f32 %v5229, %v5880
      %v6007 = vadd.f32 %v5230, %v5885
      %v6008 = vadd.f32 %v5231, %v5888
      %v6009 = vadd.f32 %v5232, %v5893
      %v6010 = vadd.f32 %v5233, %v5896
      %v6011 = vadd.f32 %v5234, %v5901
      %v6012 = vadd.f32 %v5235, %v5904
      %v6013 = vadd.f32 %v5236, %v5909
      %v6014 = vadd.f32 %v5237, %v5912
      %v6015 = vadd.f32 %v5238, %v5917
      %v6016 = vadd.f32 %v5239, %v5920
      %v6017 = vadd.f32 %v5240, %v5925
      %v6018 = vadd.f32 %v5241, %v5928
      %v6019 = vadd.f32 %v5242, %v5933
      %v6020 = vadd.f32 %v5243, %v5936
      %v6021 = vadd.f32 %v5244, %v5941
      %v6022 = vadd.f32 %v5245, %v5944
      %v6023 = vadd.f32 %v5246, %v5949
      %v6024 = vadd.f32 %v5247, %v5952
      %v6025 = vadd.f32 %v5248, %v5957
      %v6026 = vadd.f32 %v5249, %v5960
      %s6027 = scalar_lea.vmem %s4, 256
      %v6028 = vld [vmem:[%s6027] sm:$0xf]
      %v6029 = vld [vmem:[%s6027 + $0x4] sm:$0xf]
      %v6030 = vld [vmem:[%s6027 + $0x8] sm:$0xf]
      %v6031 = vld [vmem:[%s6027 + $0xc] sm:$0xf]
      %v6032 = vld [vmem:[%s6027 + $0x10] sm:$0xf]
      %v6033 = vld [vmem:[%s6027 + $0x14] sm:$0xf]
      %v6034 = vld [vmem:[%s6027 + $0x18] sm:$0xf]
      %v6035 = vld [vmem:[%s6027 + $0x1c] sm:$0xf]
      %v6036 = vld [vmem:[%s6027 + $0x20] sm:$0xf]
      %v6037 = vld [vmem:[%s6027 + $0x24] sm:$0xf]
      %v6038 = vld [vmem:[%s6027 + $0x28] sm:$0xf]
      %v6039 = vld [vmem:[%s6027 + $0x2c] sm:$0xf]
      %v6040 = vld [vmem:[%s6027 + $0x30] sm:$0xf]
      %v6041 = vld [vmem:[%s6027 + $0x34] sm:$0xf]
      %v6042 = vld [vmem:[%s6027 + $0x38] sm:$0xf]
      %v6043 = vld [vmem:[%s6027 + $0x3c] sm:$0xf]
      %v6060 = vunpack.c.l.b16 %v6028
      %v6061 = vunpack.c.l.b16 %v6029
      %v6062 = vunpack.c.l.b16 %v6030
      %v6063 = vunpack.c.l.b16 %v6031
      %v6064 = vunpack.c.l.b16 %v6032
      %v6065 = vunpack.c.l.b16 %v6033
      %v6066 = vunpack.c.l.b16 %v6034
      %v6067 = vunpack.c.l.b16 %v6035
      %v6068 = vunpack.c.l.b16 %v6036
      %v6069 = vunpack.c.l.b16 %v6037
      %v6070 = vunpack.c.l.b16 %v6038
      %v6071 = vunpack.c.l.b16 %v6039
      %v6072 = vunpack.c.l.b16 %v6040
      %v6073 = vunpack.c.l.b16 %v6041
      %v6074 = vunpack.c.l.b16 %v6042
      %v6075 = vunpack.c.l.b16 %v6043
      %v6076 = vpack.c.b16 %v6061, %v6060
      %v6077 = vpack.c.b16 %v6063, %v6062
      %v6078 = vpack.c.b16 %v6065, %v6064
      %v6079 = vpack.c.b16 %v6067, %v6066
      %v6080 = vpack.c.b16 %v6069, %v6068
      %v6081 = vpack.c.b16 %v6071, %v6070
      %v6082 = vpack.c.b16 %v6073, %v6072
      %v6083 = vpack.c.b16 %v6075, %v6074
      %6092 = vmatprep.subr.bf16.mxu0 0
      %6093 = vmatpush1.bf16.msra.mxu0 %v6076
      %6094 = vmatprep.subr.bf16.mxu0 0
      %6095 = vmatpush1.bf16.msra.mxu0 %v6077
      %6096 = vmatprep.subr.bf16.mxu0 0
      %6097 = vmatpush1.bf16.msra.mxu0 %v6078
      %6098 = vmatprep.subr.bf16.mxu0 0
      %6099 = vmatpush1.bf16.msra.mxu0 %v6079
      %6100 = vmatprep.subr.bf16.mxu0 0
      %6101 = vmatpush1.bf16.msra.mxu0 %v6080
      %6102 = vmatprep.subr.bf16.mxu0 0
      %6103 = vmatpush1.bf16.msra.mxu0 %v6081
      %6104 = vmatprep.subr.bf16.mxu0 0
      %6105 = vmatpush1.bf16.msra.mxu0 %v6082
      %6106 = vmatprep.subr.bf16.mxu0 0
      %6107 = vmatpush1.bf16.msra.mxu0 %v6083
      %6108 = vmatprep.subr.bf16.mxu0 0
      %6109 = vmatpush1.bf16.msra.mxu0 0
      %6110 = vmatprep.subr.bf16.mxu0 0
      %6111 = vmatpush1.bf16.msra.mxu0 0
      %6112 = vmatprep.subr.bf16.mxu0 0
      %6113 = vmatpush1.bf16.msra.mxu0 0
      %6114 = vmatprep.subr.bf16.mxu0 0
      %6115 = vmatpush1.bf16.msra.mxu0 0
      %6116 = vmatprep.subr.bf16.mxu0 0
      %6117 = vmatpush1.bf16.msra.mxu0 0
      %6118 = vmatprep.subr.bf16.mxu0 0
      %6119 = vmatpush1.bf16.msra.mxu0 0
      %6120 = vmatprep.subr.bf16.mxu0 0
      %6121 = vmatpush1.bf16.msra.mxu0 0
      %6122 = vmatprep.subr.bf16.mxu0 0
      %6123 = vmatpush1.bf16.msra.mxu0 0
      %6124 = vmatprep.mubr.bf16.mxu0 0
      %6125 = vmatmul.mubr.bf16.gmra.mrb[0].mxu0 %v3761
      %v6126 = vpop.f32.mrb[0].mxu0
      %v6127 = vadd.f32 0.0, %v6126
      %v6128 = vpop.f32.mrb[0].mxu0
      %v6129 = vpop.f32.mrb[0].mxu0
      %v6130 = vadd.f32 0.0, %v6129
      %v6131 = vpop.f32.mrb[0].mxu0
      %6132 = vmatprep.mubr.bf16.mxu0 0
      %6133 = vmatmul.mubr.bf16.gmra.mrb[0].mxu0 %v3762
      %v6134 = vpop.f32.mrb[0].mxu0
      %v6135 = vadd.f32 0.0, %v6134
      %v6136 = vpop.f32.mrb[0].mxu0
      %v6137 = vpop.f32.mrb[0].mxu0
      %v6138 = vadd.f32 0.0, %v6137
      %v6139 = vpop.f32.mrb[0].mxu0
      %6140 = vmatprep.mubr.bf16.mxu0 0
      %6141 = vmatmul.mubr.bf16.gmra.mrb[0].mxu0 %v3763
      %v6142 = vpop.f32.mrb[0].mxu0
      %v6143 = vadd.f32 0.0, %v6142
      %v6144 = vpop.f32.mrb[0].mxu0
      %v6145 = vpop.f32.mrb[0].mxu0
      %v6146 = vadd.f32 0.0, %v6145
      %v6147 = vpop.f32.mrb[0].mxu0
      %6148 = vmatprep.mubr.bf16.mxu0 0
      %6149 = vmatmul.mubr.bf16.gmra.mrb[0].mxu0 %v3764
      %v6150 = vpop.f32.mrb[0].mxu0
      %v6151 = vadd.f32 0.0, %v6150
      %v6152 = vpop.f32.mrb[0].mxu0
      %v6153 = vpop.f32.mrb[0].mxu0
      %v6154 = vadd.f32 0.0, %v6153
      %v6155 = vpop.f32.mrb[0].mxu0
      %6156 = vmatprep.mubr.bf16.mxu0 0
      %6157 = vmatmul.mubr.bf16.gmra.mrb[0].mxu0 %v3765
      %v6158 = vpop.f32.mrb[0].mxu0
      %v6159 = vadd.f32 0.0, %v6158
      %v6160 = vpop.f32.mrb[0].mxu0
      %v6161 = vpop.f32.mrb[0].mxu0
      %v6162 = vadd.f32 0.0, %v6161
      %v6163 = vpop.f32.mrb[0].mxu0
      %6164 = vmatprep.mubr.bf16.mxu0 0
      %6165 = vmatmul.mubr.bf16.gmra.mrb[0].mxu0 %v3766
      %v6166 = vpop.f32.mrb[0].mxu0
      %v6167 = vadd.f32 0.0, %v6166
      %v6168 = vpop.f32.mrb[0].mxu0
      %v6169 = vpop.f32.mrb[0].mxu0
      %v6170 = vadd.f32 0.0, %v6169
      %v6171 = vpop.f32.mrb[0].mxu0
      %6172 = vmatprep.mubr.bf16.mxu0 0
      %6173 = vmatmul.mubr.bf16.gmra.mrb[0].mxu0 %v3767
      %v6174 = vpop.f32.mrb[0].mxu0
      %v6175 = vadd.f32 0.0, %v6174
      %v6176 = vpop.f32.mrb[0].mxu0
      %v6177 = vpop.f32.mrb[0].mxu0
      %v6178 = vadd.f32 0.0, %v6177
      %v6179 = vpop.f32.mrb[0].mxu0
      %6180 = vmatprep.mubr.bf16.mxu0 0
      %6181 = vmatmul.mubr.bf16.gmra.mrb[0].mxu0 %v3768
      %v6182 = vpop.f32.mrb[0].mxu0
      %v6183 = vadd.f32 0.0, %v6182
      %v6184 = vpop.f32.mrb[0].mxu0
      %v6185 = vpop.f32.mrb[0].mxu0
      %v6186 = vadd.f32 0.0, %v6185
      %v6187 = vpop.f32.mrb[0].mxu0
      %6188 = vmatprep.mubr.bf16.mxu0 0
      %6189 = vmatmul.mubr.bf16.gmra.mrb[0].mxu0 %v3769
      %v6190 = vpop.f32.mrb[0].mxu0
      %v6191 = vadd.f32 0.0, %v6190
      %v6192 = vpop.f32.mrb[0].mxu0
      %v6193 = vpop.f32.mrb[0].mxu0
      %v6194 = vadd.f32 0.0, %v6193
      %v6195 = vpop.f32.mrb[0].mxu0
      %6196 = vmatprep.mubr.bf16.mxu0 0
      %6197 = vmatmul.mubr.bf16.gmra.mrb[0].mxu0 %v3770
      %v6198 = vpop.f32.mrb[0].mxu0
      %v6199 = vadd.f32 0.0, %v6198
      %v6200 = vpop.f32.mrb[0].mxu0
      %v6201 = vpop.f32.mrb[0].mxu0
      %v6202 = vadd.f32 0.0, %v6201
      %v6203 = vpop.f32.mrb[0].mxu0
      %6204 = vmatprep.mubr.bf16.mxu0 0
      %6205 = vmatmul.mubr.bf16.gmra.mrb[0].mxu0 %v3771
      %v6206 = vpop.f32.mrb[0].mxu0
      %v6207 = vadd.f32 0.0, %v6206
      %v6208 = vpop.f32.mrb[0].mxu0
      %v6209 = vpop.f32.mrb[0].mxu0
      %v6210 = vadd.f32 0.0, %v6209
      %v6211 = vpop.f32.mrb[0].mxu0
      %6212 = vmatprep.mubr.bf16.mxu0 0
      %6213 = vmatmul.mubr.bf16.gmra.mrb[0].mxu0 %v3772
      %v6214 = vpop.f32.mrb[0].mxu0
      %v6215 = vadd.f32 0.0, %v6214
      %v6216 = vpop.f32.mrb[0].mxu0
      %v6217 = vpop.f32.mrb[0].mxu0
      %v6218 = vadd.f32 0.0, %v6217
      %v6219 = vpop.f32.mrb[0].mxu0
      %6220 = vmatprep.mubr.bf16.mxu0 0
      %6221 = vmatmul.mubr.bf16.gmra.mrb[0].mxu0 %v3773
      %v6222 = vpop.f32.mrb[0].mxu0
      %v6223 = vadd.f32 0.0, %v6222
      %v6224 = vpop.f32.mrb[0].mxu0
      %v6225 = vpop.f32.mrb[0].mxu0
      %v6226 = vadd.f32 0.0, %v6225
      %v6227 = vpop.f32.mrb[0].mxu0
      %6228 = vmatprep.mubr.bf16.mxu0 0
      %6229 = vmatmul.mubr.bf16.gmra.mrb[0].mxu0 %v3774
      %v6230 = vpop.f32.mrb[0].mxu0
      %v6231 = vadd.f32 0.0, %v6230
      %v6232 = vpop.f32.mrb[0].mxu0
      %v6233 = vpop.f32.mrb[0].mxu0
      %v6234 = vadd.f32 0.0, %v6233
      %v6235 = vpop.f32.mrb[0].mxu0
      %6236 = vmatprep.mubr.bf16.mxu0 0
      %6237 = vmatmul.mubr.bf16.gmra.mrb[0].mxu0 %v3775
      %v6238 = vpop.f32.mrb[0].mxu0
      %v6239 = vadd.f32 0.0, %v6238
      %v6240 = vpop.f32.mrb[0].mxu0
      %v6241 = vpop.f32.mrb[0].mxu0
      %v6242 = vadd.f32 0.0, %v6241
      %v6243 = vpop.f32.mrb[0].mxu0
      %6244 = vmatprep.mubr.bf16.mxu0 0
      %6245 = vmatmul.mubr.bf16.gmra.mrb[0].mxu0 %v3776
      %v6246 = vpop.f32.mrb[0].mxu0
      %v6247 = vadd.f32 0.0, %v6246
      %v6248 = vpop.f32.mrb[0].mxu0
      %v6249 = vpop.f32.mrb[0].mxu0
      %v6250 = vadd.f32 0.0, %v6249
      %v6251 = vpop.f32.mrb[0].mxu0
      %6252 = vmatprep.mubr.bf16.mxu0 0
      %6253 = vmatmul.mubr.bf16.gmra.mrb[0].mxu0 %v3777
      %v6254 = vpop.f32.mrb[0].mxu0
      %v6255 = vpop.f32.mrb[0].mxu0
      %v6256 = vpop.f32.mrb[0].mxu0
      %v6257 = vpop.f32.mrb[0].mxu0
      %6258 = vmatprep.mubr.bf16.mxu0 0
      %6259 = vmatmul.mubr.bf16.gmra.mrb[0].mxu0 %v3778
      %v6260 = vpop.f32.mrb[0].mxu0
      %v6261 = vpop.f32.mrb[0].mxu0
      %v6262 = vpop.f32.mrb[0].mxu0
      %v6263 = vpop.f32.mrb[0].mxu0
      %6264 = vmatprep.mubr.bf16.mxu0 0
      %6265 = vmatmul.mubr.bf16.gmra.mrb[0].mxu0 %v3779
      %v6266 = vpop.f32.mrb[0].mxu0
      %v6267 = vadd.f32 0.0, %v6266
      %v6268 = vpop.f32.mrb[0].mxu0
      %v6269 = vpop.f32.mrb[0].mxu0
      %v6270 = vadd.f32 0.0, %v6269
      %v6271 = vpop.f32.mrb[0].mxu0
      %6272 = vmatprep.mubr.bf16.mxu0 0
      %6273 = vmatmul.mubr.bf16.gmra.mrb[0].mxu0 %v3780
      %v6274 = vpop.f32.mrb[0].mxu0
      %v6275 = vadd.f32 0.0, %v6274
      %v6276 = vpop.f32.mrb[0].mxu0
      %v6277 = vpop.f32.mrb[0].mxu0
      %v6278 = vadd.f32 0.0, %v6277
      %v6279 = vpop.f32.mrb[0].mxu0
      %6280 = vmatprep.mubr.bf16.mxu0 0
      %6281 = vmatmul.mubr.bf16.gmra.mrb[0].mxu0 %v3781
      %v6282 = vpop.f32.mrb[0].mxu0
      %v6283 = vadd.f32 0.0, %v6282
      %v6284 = vpop.f32.mrb[0].mxu0
      %v6285 = vpop.f32.mrb[0].mxu0
      %v6286 = vadd.f32 0.0, %v6285
      %v6287 = vpop.f32.mrb[0].mxu0
      %6288 = vmatprep.mubr.bf16.mxu0 0
      %6289 = vmatmul.mubr.bf16.gmra.mrb[0].mxu0 %v3782
      %v6290 = vpop.f32.mrb[0].mxu0
      %v6291 = vadd.f32 0.0, %v6290
      %v6292 = vpop.f32.mrb[0].mxu0
      %v6293 = vpop.f32.mrb[0].mxu0
      %v6294 = vadd.f32 0.0, %v6293
      %v6295 = vpop.f32.mrb[0].mxu0
      %6296 = vmatprep.mubr.bf16.mxu0 0
      %6297 = vmatmul.mubr.bf16.gmra.mrb[0].mxu0 %v3783
      %v6298 = vpop.f32.mrb[0].mxu0
      %v6299 = vadd.f32 0.0, %v6298
      %v6300 = vpop.f32.mrb[0].mxu0
      %v6301 = vpop.f32.mrb[0].mxu0
      %v6302 = vadd.f32 0.0, %v6301
      %v6303 = vpop.f32.mrb[0].mxu0
      %6304 = vmatprep.mubr.bf16.mxu0 0
      %6305 = vmatmul.mubr.bf16.gmra.mrb[0].mxu0 %v3784
      %v6306 = vpop.f32.mrb[0].mxu0
      %v6307 = vadd.f32 0.0, %v6306
      %v6308 = vpop.f32.mrb[0].mxu0
      %v6309 = vpop.f32.mrb[0].mxu0
      %v6310 = vadd.f32 0.0, %v6309
      %v6311 = vpop.f32.mrb[0].mxu0
      %6312 = vmatprep.mubr.bf16.mxu0 0
      %6313 = vmatmul.mubr.bf16.gmra.mrb[0].mxu0 %v3785
      %v6314 = vpop.f32.mrb[0].mxu0
      %v6315 = vadd.f32 0.0, %v6314
      %v6316 = vpop.f32.mrb[0].mxu0
      %v6317 = vpop.f32.mrb[0].mxu0
      %v6318 = vadd.f32 0.0, %v6317
      %v6319 = vpop.f32.mrb[0].mxu0
      %6320 = vmatprep.mubr.bf16.mxu0 0
      %6321 = vmatmul.mubr.bf16.gmra.mrb[0].mxu0 %v3786
      %v6322 = vpop.f32.mrb[0].mxu0
      %v6323 = vadd.f32 0.0, %v6322
      %v6324 = vpop.f32.mrb[0].mxu0
      %v6325 = vpop.f32.mrb[0].mxu0
      %v6326 = vadd.f32 0.0, %v6325
      %v6327 = vpop.f32.mrb[0].mxu0
      %6328 = vmatprep.mubr.bf16.mxu0 0
      %6329 = vmatmul.mubr.bf16.gmra.mrb[0].mxu0 %v3787
      %v6330 = vpop.f32.mrb[0].mxu0
      %v6331 = vadd.f32 0.0, %v6330
      %v6332 = vpop.f32.mrb[0].mxu0
      %v6333 = vpop.f32.mrb[0].mxu0
      %v6334 = vadd.f32 0.0, %v6333
      %v6335 = vpop.f32.mrb[0].mxu0
      %6336 = vmatprep.mubr.bf16.mxu0 0
      %6337 = vmatmul.mubr.bf16.gmra.mrb[0].mxu0 %v3788
      %v6338 = vpop.f32.mrb[0].mxu0
      %v6339 = vadd.f32 0.0, %v6338
      %v6340 = vpop.f32.mrb[0].mxu0
      %v6341 = vpop.f32.mrb[0].mxu0
      %v6342 = vadd.f32 0.0, %v6341
      %v6343 = vpop.f32.mrb[0].mxu0
      %6344 = vmatprep.mubr.bf16.mxu0 0
      %6345 = vmatmul.mubr.bf16.gmra.mrb[0].mxu0 %v3789
      %v6346 = vpop.f32.mrb[0].mxu0
      %v6347 = vadd.f32 0.0, %v6346
      %v6348 = vpop.f32.mrb[0].mxu0
      %v6349 = vpop.f32.mrb[0].mxu0
      %v6350 = vadd.f32 0.0, %v6349
      %v6351 = vpop.f32.mrb[0].mxu0
      %6352 = vmatprep.mubr.bf16.mxu0 0
      %6353 = vmatmul.mubr.bf16.gmra.mrb[0].mxu0 %v3790
      %v6354 = vpop.f32.mrb[0].mxu0
      %v6355 = vadd.f32 0.0, %v6354
      %v6356 = vpop.f32.mrb[0].mxu0
      %v6357 = vpop.f32.mrb[0].mxu0
      %v6358 = vadd.f32 0.0, %v6357
      %v6359 = vpop.f32.mrb[0].mxu0
      %6360 = vmatprep.mubr.bf16.mxu0 0
      %6361 = vmatmul.mubr.bf16.gmra.mrb[0].mxu0 %v3791
      %v6362 = vpop.f32.mrb[0].mxu0
      %v6363 = vadd.f32 0.0, %v6362
      %v6364 = vpop.f32.mrb[0].mxu0
      %v6365 = vpop.f32.mrb[0].mxu0
      %v6366 = vadd.f32 0.0, %v6365
      %v6367 = vpop.f32.mrb[0].mxu0
      %6368 = vmatprep.mubr.bf16.mxu0 0
      %6369 = vmatmul.mubr.bf16.gmra.mrb[0].mxu0 %v3792
      %v6370 = vpop.f32.mrb[0].mxu0
      %v6371 = vadd.f32 0.0, %v6370
      %v6372 = vpop.f32.mrb[0].mxu0
      %v6373 = vpop.f32.mrb[0].mxu0
      %v6374 = vadd.f32 0.0, %v6373
      %v6375 = vpop.f32.mrb[0].mxu0
      %6376 = vmatprep.mubr.bf16.mxu0 0
      %6377 = vmatmul.mubr.bf16.gmra.mrb[0].mxu0 %v3793
      %v6378 = vpop.f32.mrb[0].mxu0
      %v6379 = vadd.f32 0.0, %v6378
      %v6380 = vpop.f32.mrb[0].mxu0
      %v6381 = vpop.f32.mrb[0].mxu0
      %v6382 = vadd.f32 0.0, %v6381
      %v6383 = vpop.f32.mrb[0].mxu0
      %6384 = vmatprep.mubr.bf16.mxu0 0
      %6385 = vmatmul.mubr.bf16.gmra.mrb[0].mxu0 %v5251
      %v6386 = vpop.f32.mrb[0].mxu0
      %v6387 = vadd.f32 0.0, %v6386
      %v6388 = vpop.f32.mrb[0].mxu0
      %v6389 = vpop.f32.mrb[0].mxu0
      %v6390 = vadd.f32 0.0, %v6389
      %v6391 = vpop.f32.mrb[0].mxu0
      %6392 = vdwg.mxu0
      %v6393 = vadd.f32 %v5963, %v6127
      %v6394 = vadd.f32 %v5964, %v6130
      %v6395 = vadd.f32 %v5965, %v6135
      %v6396 = vadd.f32 %v5966, %v6138
      %v6397 = vadd.f32 %v5967, %v6143
      %v6398 = vadd.f32 %v5968, %v6146
      %v6399 = vadd.f32 %v5969, %v6151
      %v6400 = vadd.f32 %v5970, %v6154
      %v6401 = vadd.f32 %v5971, %v6159
      %v6402 = vadd.f32 %v5972, %v6162
      %v6403 = vadd.f32 %v5973, %v6167
      %v6404 = vadd.f32 %v5974, %v6170
      %v6405 = vadd.f32 %v5975, %v6175
      %v6406 = vadd.f32 %v5976, %v6178
      %v6407 = vadd.f32 %v5977, %v6183
      %v6408 = vadd.f32 %v5978, %v6186
      %v6409 = vadd.f32 %v5979, %v6191
      %v6410 = vadd.f32 %v5980, %v6194
      %v6411 = vadd.f32 %v5981, %v6199
      %v6412 = vadd.f32 %v5982, %v6202
      %v6413 = vadd.f32 %v5983, %v6207
      %v6414 = vadd.f32 %v5984, %v6210
      %v6415 = vadd.f32 %v5985, %v6215
      %v6416 = vadd.f32 %v5986, %v6218
      %v6417 = vadd.f32 %v5987, %v6223
      %v6418 = vadd.f32 %v5988, %v6226
      %v6419 = vadd.f32 %v5989, %v6231
      %v6420 = vadd.f32 %v5990, %v6234
      %v6421 = vadd.f32 %v5991, %v6239
      %v6422 = vadd.f32 %v5992, %v6242
      %v6423 = vadd.f32 %v5993, %v6247
      %v6424 = vadd.f32 %v5994, %v6250
      %v6425 = vadd.f32 %v5995, %v6267
      %v6426 = vadd.f32 %v5996, %v6270
      %v6427 = vadd.f32 %v5997, %v6275
      %v6428 = vadd.f32 %v5998, %v6278
      %v6429 = vadd.f32 %v5999, %v6283
      %v6430 = vadd.f32 %v6000, %v6286
      %v6431 = vadd.f32 %v6001, %v6291
      %v6432 = vadd.f32 %v6002, %v6294
      %v6433 = vadd.f32 %v6003, %v6299
      %v6434 = vadd.f32 %v6004, %v6302
      %v6435 = vadd.f32 %v6005, %v6307
      %v6436 = vadd.f32 %v6006, %v6310
      %v6437 = vadd.f32 %v6007, %v6315
      %v6438 = vadd.f32 %v6008, %v6318
      %v6439 = vadd.f32 %v6009, %v6323
      %v6440 = vadd.f32 %v6010, %v6326
      %v6441 = vadd.f32 %v6011, %v6331
      %v6442 = vadd.f32 %v6012, %v6334
      %v6443 = vadd.f32 %v6013, %v6339
      %v6444 = vadd.f32 %v6014, %v6342
      %v6445 = vadd.f32 %v6015, %v6347
      %v6446 = vadd.f32 %v6016, %v6350
      %v6447 = vadd.f32 %v6017, %v6355
      %v6448 = vadd.f32 %v6018, %v6358
      %v6449 = vadd.f32 %v6019, %v6363
      %v6450 = vadd.f32 %v6020, %v6366
      %v6451 = vadd.f32 %v6021, %v6371
      %v6452 = vadd.f32 %v6022, %v6374
      %v6453 = vadd.f32 %v6023, %v6379
      %v6454 = vadd.f32 %v6024, %v6382
      %v6455 = vadd.f32 %v6025, %v6387
      %v6456 = vadd.f32 %v6026, %v6390
      %v6457 = vld [vmem:[#allocation2 + $0x10] sm:$0xff]
      %v6458 = vld [vmem:[#allocation2 + $0x18] sm:$0xff]
      %v6459 = vld [vmem:[#allocation2 + $0x20] sm:$0xff]
      %v6460 = vld [vmem:[#allocation2 + $0x28] sm:$0xff]
      %v6461 = vld [vmem:[#allocation2 + $0x30] sm:$0xff]
      %v6462 = vld [vmem:[#allocation2 + $0x38] sm:$0xff]
      %v6463 = vld [vmem:[#allocation2 + $0x40] sm:$0xff]
      %v6464 = vld [vmem:[#allocation2 + $0x48] sm:$0xff]
      %v6465 = vld [vmem:[#allocation2 + $0x50] sm:$0xff]
      %v6466 = vld [vmem:[#allocation2 + $0x58] sm:$0xff]
      %v6467 = vld [vmem:[#allocation2 + $0x60] sm:$0xff]
      %v6468 = vld [vmem:[#allocation2 + $0x68] sm:$0xff]
      %v6469 = vld [vmem:[#allocation2 + $0x70] sm:$0xff]
      %v6470 = vld [vmem:[#allocation2 + $0x78] sm:$0xff]
      %v6471 = vld [vmem:[#allocation2 + $0x80] sm:$0xff]
      %v6472 = vld [vmem:[#allocation2 + $0x88] sm:$0xff]
      %v6473 = vld [vmem:[#allocation2 + $0x90] sm:$0xff]
      %v6474 = vld [vmem:[#allocation2 + $0x98] sm:$0xff]
      %v6475 = vld [vmem:[#allocation2 + $0xa0] sm:$0xff]
      %v6476 = vld [vmem:[#allocation2 + $0xa8] sm:$0xff]
      %v6477 = vld [vmem:[#allocation2 + $0xb0] sm:$0xff]
      %v6478 = vld [vmem:[#allocation2 + $0xb8] sm:$0xff]
      %v6479 = vld [vmem:[#allocation2 + $0xc0] sm:$0xff]
      %v6480 = vld [vmem:[#allocation2 + $0xc8] sm:$0xff]
      %v6481 = vld [vmem:[#allocation2 + $0xd0] sm:$0xff]
      %v6482 = vld [vmem:[#allocation2 + $0xd8] sm:$0xff]
      %v6483 = vld [vmem:[#allocation2 + $0xe0] sm:$0xff]
      %v6484 = vld [vmem:[#allocation2 + $0xe8] sm:$0xff]
      %v6485 = vld [vmem:[#allocation2 + $0xf0] sm:$0xff]
      %v6486 = vld [vmem:[#allocation2 + $0xf8] sm:$0xff]
      %v6487 = vld [vmem:[#allocation2 + $0x100] sm:$0xff]
      %v6488 = vld [vmem:[#allocation2 + $0x108] sm:$0xff]
      %v6489 = vld [vmem:[#allocation2 + $0x110] sm:$0xff]
      %v6490 = vld [vmem:[#allocation2 + $0x118] sm:$0xff]
      %v6491 = vld [vmem:[#allocation2 + $0x120] sm:$0x1]
      %v6492 = vsel %vm4440, %v6457, 0
      %v6493 = vsel %vm4441, %v6458, 0
      %v6494 = vsel %vm4442, %v6459, 0
      %v6495 = vsel %vm4443, %v6460, 0
      %v6496 = vsel %vm4444, %v6461, 0
      %v6497 = vsel %vm4445, %v6462, 0
      %v6498 = vsel %vm4446, %v6463, 0
      %v6499 = vsel %vm4447, %v6464, 0
      %v6500 = vsel %vm4448, %v6465, 0
      %v6501 = vsel %vm4449, %v6466, 0
      %v6502 = vsel %vm4450, %v6467, 0
      %v6503 = vsel %vm4451, %v6468, 0
      %v6504 = vsel %vm4452, %v6469, 0
      %v6505 = vsel %vm4453, %v6470, 0
      %v6506 = vsel %vm4454, %v6471, 0
      %v6507 = vsel %vm4455, %v6472, 0
      %v6508 = vsel %vm4456, %v6473, 0
      %v6509 = vsel %vm4457, %v6474, 0
      %v6510 = vsel %vm4458, %v6475, 0
      %v6511 = vsel %vm4459, %v6476, 0
      %v6512 = vsel %vm4460, %v6477, 0
      %v6513 = vsel %vm4461, %v6478, 0
      %v6514 = vsel %vm4462, %v6479, 0
      %v6515 = vsel %vm4463, %v6480, 0
      %v6516 = vsel %vm4464, %v6481, 0
      %v6517 = vsel %vm4465, %v6482, 0
      %v6518 = vsel %vm4466, %v6483, 0
      %v6519 = vsel %vm4467, %v6484, 0
      %v6520 = vsel %vm4468, %v6485, 0
      %v6521 = vsel %vm4469, %v6486, 0
      %v6522 = vsel %vm4470, %v6487, 0
      %v6523 = vsel %vm4471, %v6488, 0
      %v6524 = vsel %vm4472, %v6489, 0
      %v6525 = vsel %vm4473, %v6490, 0
      %v6526 = vsel %vm4474, %v6491, 0
      %s6527 = scalar_lea.vmem %s4, 320
      %v6528 = vld [vmem:[%s6527] sm:$0xf]
      %v6529 = vld [vmem:[%s6527 + $0x4] sm:$0xf]
      %v6530 = vld [vmem:[%s6527 + $0x8] sm:$0xf]
      %v6531 = vld [vmem:[%s6527 + $0xc] sm:$0xf]
      %v6532 = vld [vmem:[%s6527 + $0x10] sm:$0xf]
      %v6533 = vld [vmem:[%s6527 + $0x14] sm:$0xf]
      %v6534 = vld [vmem:[%s6527 + $0x18] sm:$0xf]
      %v6535 = vld [vmem:[%s6527 + $0x1c] sm:$0xf]
      %v6536 = vld [vmem:[%s6527 + $0x20] sm:$0xf]
      %v6537 = vld [vmem:[%s6527 + $0x24] sm:$0xf]
      %v6538 = vld [vmem:[%s6527 + $0x28] sm:$0xf]
      %v6539 = vld [vmem:[%s6527 + $0x2c] sm:$0xf]
      %v6540 = vld [vmem:[%s6527 + $0x30] sm:$0xf]
      %v6541 = vld [vmem:[%s6527 + $0x34] sm:$0xf]
      %v6542 = vld [vmem:[%s6527 + $0x38] sm:$0xf]
      %v6543 = vld [vmem:[%s6527 + $0x3c] sm:$0xf]
      %v6545 = vshrl.u32 %v6492, 16
      %v6547 = vshll.u32 %v6492, 16
      %v6549 = vrot.slane %v6547, 1
      %v6550 = vor.u32 %v6545, %v6549
      %v6552 = vshll.u32 %v6493, 16
      %v6554 = vrot.slane %v6552, 1
      %v6555 = vsel %vm2376, %v6550, %v6554
      %v6556 = vshrl.u32 %v6493, 16
      %v6558 = vor.u32 %v6556, %v6554
      %v6560 = vshll.u32 %v6494, 16
      %v6562 = vrot.slane %v6560, 1
      %v6563 = vsel %vm2376, %v6558, %v6562
      %v6564 = vshrl.u32 %v6494, 16
      %v6566 = vor.u32 %v6564, %v6562
      %v6568 = vshll.u32 %v6495, 16
      %v6570 = vrot.slane %v6568, 1
      %v6571 = vsel %vm2376, %v6566, %v6570
      %v6572 = vshrl.u32 %v6495, 16
      %v6574 = vor.u32 %v6572, %v6570
      %v6576 = vshll.u32 %v6496, 16
      %v6578 = vrot.slane %v6576, 1
      %v6579 = vsel %vm2376, %v6574, %v6578
      %v6580 = vshrl.u32 %v6496, 16
      %v6582 = vor.u32 %v6580, %v6578
      %v6584 = vshll.u32 %v6497, 16
      %v6586 = vrot.slane %v6584, 1
      %v6587 = vsel %vm2376, %v6582, %v6586
      %v6588 = vshrl.u32 %v6497, 16
      %v6590 = vor.u32 %v6588, %v6586
      %v6592 = vshll.u32 %v6498, 16
      %v6594 = vrot.slane %v6592, 1
      %v6595 = vsel %vm2376, %v6590, %v6594
      %v6596 = vshrl.u32 %v6498, 16
      %v6598 = vor.u32 %v6596, %v6594
      %v6600 = vshll.u32 %v6499, 16
      %v6602 = vrot.slane %v6600, 1
      %v6603 = vsel %vm2376, %v6598, %v6602
      %v6604 = vshrl.u32 %v6499, 16
      %v6606 = vor.u32 %v6604, %v6602
      %v6608 = vshll.u32 %v6500, 16
      %v6610 = vrot.slane %v6608, 1
      %v6611 = vsel %vm2376, %v6606, %v6610
      %v6612 = vshrl.u32 %v6500, 16
      %v6614 = vor.u32 %v6612, %v6610
      %v6616 = vshll.u32 %v6501, 16
      %v6618 = vrot.slane %v6616, 1
      %v6619 = vsel %vm2376, %v6614, %v6618
      %v6620 = vshrl.u32 %v6501, 16
      %v6622 = vor.u32 %v6620, %v6618
      %v6624 = vshll.u32 %v6502, 16
      %v6626 = vrot.slane %v6624, 1
      %v6627 = vsel %vm2376, %v6622, %v6626
      %v6628 = vshrl.u32 %v6502, 16
      %v6630 = vor.u32 %v6628, %v6626
      %v6632 = vshll.u32 %v6503, 16
      %v6634 = vrot.slane %v6632, 1
      %v6635 = vsel %vm2376, %v6630, %v6634
      %v6636 = vshrl.u32 %v6503, 16
      %v6638 = vor.u32 %v6636, %v6634
      %v6640 = vshll.u32 %v6504, 16
      %v6642 = vrot.slane %v6640, 1
      %v6643 = vsel %vm2376, %v6638, %v6642
      %v6644 = vshrl.u32 %v6504, 16
      %v6646 = vor.u32 %v6644, %v6642
      %v6648 = vshll.u32 %v6505, 16
      %v6650 = vrot.slane %v6648, 1
      %v6651 = vsel %vm2376, %v6646, %v6650
      %v6652 = vshrl.u32 %v6505, 16
      %v6654 = vor.u32 %v6652, %v6650
      %v6656 = vshll.u32 %v6506, 16
      %v6658 = vrot.slane %v6656, 1
      %v6659 = vsel %vm2376, %v6654, %v6658
      %v6660 = vshrl.u32 %v6506, 16
      %v6662 = vor.u32 %v6660, %v6658
      %v6664 = vshll.u32 %v6507, 16
      %v6666 = vrot.slane %v6664, 1
      %v6667 = vsel %vm2376, %v6662, %v6666
      %v6668 = vshrl.u32 %v6507, 16
      %v6670 = vor.u32 %v6668, %v6666
      %v6672 = vshll.u32 %v6508, 16
      %v6674 = vrot.slane %v6672, 1
      %v6675 = vsel %vm2376, %v6670, %v6674
      %v6676 = vshrl.u32 %v6508, 16
      %v6678 = vor.u32 %v6676, %v6674
      %v6680 = vshll.u32 %v6509, 16
      %v6682 = vrot.slane %v6680, 1
      %v6683 = vsel %vm2376, %v6678, %v6682
      %v6684 = vshrl.u32 %v6509, 16
      %v6686 = vor.u32 %v6684, %v6682
      %v6688 = vshll.u32 %v6510, 16
      %v6690 = vrot.slane %v6688, 1
      %v6691 = vsel %vm2376, %v6686, %v6690
      %v6692 = vshrl.u32 %v6510, 16
      %v6694 = vor.u32 %v6692, %v6690
      %v6696 = vshll.u32 %v6511, 16
      %v6698 = vrot.slane %v6696, 1
      %v6699 = vsel %vm2376, %v6694, %v6698
      %v6700 = vshrl.u32 %v6511, 16
      %v6702 = vor.u32 %v6700, %v6698
      %v6704 = vshll.u32 %v6512, 16
      %v6706 = vrot.slane %v6704, 1
      %v6707 = vsel %vm2376, %v6702, %v6706
      %v6708 = vshrl.u32 %v6512, 16
      %v6710 = vor.u32 %v6708, %v6706
      %v6712 = vshll.u32 %v6513, 16
      %v6714 = vrot.slane %v6712, 1
      %v6715 = vsel %vm2376, %v6710, %v6714
      %v6716 = vshrl.u32 %v6513, 16
      %v6718 = vor.u32 %v6716, %v6714
      %v6720 = vshll.u32 %v6514, 16
      %v6722 = vrot.slane %v6720, 1
      %v6723 = vsel %vm2376, %v6718, %v6722
      %v6724 = vshrl.u32 %v6514, 16
      %v6726 = vor.u32 %v6724, %v6722
      %v6728 = vshll.u32 %v6515, 16
      %v6730 = vrot.slane %v6728, 1
      %v6731 = vsel %vm2376, %v6726, %v6730
      %v6732 = vshrl.u32 %v6515, 16
      %v6734 = vor.u32 %v6732, %v6730
      %v6736 = vshll.u32 %v6516, 16
      %v6738 = vrot.slane %v6736, 1
      %v6739 = vsel %vm2376, %v6734, %v6738
      %v6740 = vshrl.u32 %v6516, 16
      %v6742 = vor.u32 %v6740, %v6738
      %v6744 = vshll.u32 %v6517, 16
      %v6746 = vrot.slane %v6744, 1
      %v6747 = vsel %vm2376, %v6742, %v6746
      %v6748 = vshrl.u32 %v6517, 16
      %v6750 = vor.u32 %v6748, %v6746
      %v6752 = vshll.u32 %v6518, 16
      %v6754 = vrot.slane %v6752, 1
      %v6755 = vsel %vm2376, %v6750, %v6754
      %v6756 = vshrl.u32 %v6518, 16
      %v6758 = vor.u32 %v6756, %v6754
      %v6760 = vshll.u32 %v6519, 16
      %v6762 = vrot.slane %v6760, 1
      %v6763 = vsel %vm2376, %v6758, %v6762
      %v6764 = vshrl.u32 %v6519, 16
      %v6766 = vor.u32 %v6764, %v6762
      %v6768 = vshll.u32 %v6520, 16
      %v6770 = vrot.slane %v6768, 1
      %v6771 = vsel %vm2376, %v6766, %v6770
      %v6772 = vshrl.u32 %v6520, 16
      %v6774 = vor.u32 %v6772, %v6770
      %v6776 = vshll.u32 %v6521, 16
      %v6778 = vrot.slane %v6776, 1
      %v6779 = vsel %vm2376, %v6774, %v6778
      %v6780 = vshrl.u32 %v6521, 16
      %v6782 = vor.u32 %v6780, %v6778
      %v6784 = vshll.u32 %v6522, 16
      %v6786 = vrot.slane %v6784, 1
      %v6787 = vsel %vm2376, %v6782, %v6786
      %v6788 = vshrl.u32 %v6522, 16
      %v6790 = vor.u32 %v6788, %v6786
      %v6792 = vshll.u32 %v6523, 16
      %v6794 = vrot.slane %v6792, 1
      %v6795 = vsel %vm2376, %v6790, %v6794
      %v6796 = vshrl.u32 %v6523, 16
      %v6798 = vor.u32 %v6796, %v6794
      %v6800 = vshll.u32 %v6524, 16
      %v6802 = vrot.slane %v6800, 1
      %v6803 = vsel %vm2376, %v6798, %v6802
      %v6804 = vshrl.u32 %v6524, 16
      %v6806 = vor.u32 %v6804, %v6802
      %v6808 = vshll.u32 %v6525, 16
      %v6810 = vrot.slane %v6808, 1
      %v6811 = vsel %vm2376, %v6806, %v6810
      %v6812 = vshrl.u32 %v6525, 16
      %v6814 = vor.u32 %v6812, %v6810
      %v6816 = vshll.u32 %v6526, 16
      %v6818 = vrot.slane %v6816, 1
      %v6819 = vsel %vm2376, %v6814, %v6818
      %v6870 = vunpack.c.l.b16 %v6528
      %v6871 = vunpack.c.l.b16 %v6529
      %v6872 = vunpack.c.l.b16 %v6530
      %v6873 = vunpack.c.l.b16 %v6531
      %v6874 = vunpack.c.l.b16 %v6532
      %v6875 = vunpack.c.l.b16 %v6533
      %v6876 = vunpack.c.l.b16 %v6534
      %v6877 = vunpack.c.l.b16 %v6535
      %v6878 = vunpack.c.l.b16 %v6536
      %v6879 = vunpack.c.l.b16 %v6537
      %v6880 = vunpack.c.l.b16 %v6538
      %v6881 = vunpack.c.l.b16 %v6539
      %v6882 = vunpack.c.l.b16 %v6540
      %v6883 = vunpack.c.l.b16 %v6541
      %v6884 = vunpack.c.l.b16 %v6542
      %v6885 = vunpack.c.l.b16 %v6543
      %v6886 = vpack.c.b16 %v6871, %v6870
      %v6887 = vpack.c.b16 %v6873, %v6872
      %v6888 = vpack.c.b16 %v6875, %v6874
      %v6889 = vpack.c.b16 %v6877, %v6876
      %v6890 = vpack.c.b16 %v6879, %v6878
      %v6891 = vpack.c.b16 %v6881, %v6880
      %v6892 = vpack.c.b16 %v6883, %v6882
      %v6893 = vpack.c.b16 %v6885, %v6884
      %6902 = vmatprep.subr.bf16.mxu0 0
      %6903 = vmatpush1.bf16.msra.mxu0 %v6886
      %6904 = vmatprep.subr.bf16.mxu0 0
      %6905 = vmatpush1.bf16.msra.mxu0 %v6887
      %6906 = vmatprep.subr.bf16.mxu0 0
      %6907 = vmatpush1.bf16.msra.mxu0 %v6888
      %6908 = vmatprep.subr.bf16.mxu0 0
      %6909 = vmatpush1.bf16.msra.mxu0 %v6889
      %6910 = vmatprep.subr.bf16.mxu0 0
      %6911 = vmatpush1.bf16.msra.mxu0 %v6890
      %6912 = vmatprep.subr.bf16.mxu0 0
      %6913 = vmatpush1.bf16.msra.mxu0 %v6891
      %6914 = vmatprep.subr.bf16.mxu0 0
      %6915 = vmatpush1.bf16.msra.mxu0 %v6892
      %6916 = vmatprep.subr.bf16.mxu0 0
      %6917 = vmatpush1.bf16.msra.mxu0 %v6893
      %6918 = vmatprep.subr.bf16.mxu0 0
      %6919 = vmatpush1.bf16.msra.mxu0 0
      %6920 = vmatprep.subr.bf16.mxu0 0
      %6921 = vmatpush1.bf16.msra.mxu0 0
      %6922 = vmatprep.subr.bf16.mxu0 0
      %6923 = vmatpush1.bf16.msra.mxu0 0
      %6924 = vmatprep.subr.bf16.mxu0 0
      %6925 = vmatpush1.bf16.msra.mxu0 0
      %6926 = vmatprep.subr.bf16.mxu0 0
      %6927 = vmatpush1.bf16.msra.mxu0 0
      %6928 = vmatprep.subr.bf16.mxu0 0
      %6929 = vmatpush1.bf16.msra.mxu0 0
      %6930 = vmatprep.subr.bf16.mxu0 0
      %6931 = vmatpush1.bf16.msra.mxu0 0
      %6932 = vmatprep.subr.bf16.mxu0 0
      %6933 = vmatpush1.bf16.msra.mxu0 0
      %6934 = vmatprep.mubr.bf16.mxu0 0
      %6935 = vmatmul.mubr.bf16.gmra.mrb[0].mxu0 %v6555
      %v6936 = vpop.f32.mrb[0].mxu0
      %v6937 = vadd.f32 0.0, %v6936
      %v6938 = vpop.f32.mrb[0].mxu0
      %v6939 = vpop.f32.mrb[0].mxu0
      %v6940 = vadd.f32 0.0, %v6939
      %v6941 = vpop.f32.mrb[0].mxu0
      %6942 = vmatprep.mubr.bf16.mxu0 0
      %6943 = vmatmul.mubr.bf16.gmra.mrb[0].mxu0 %v6563
      %v6944 = vpop.f32.mrb[0].mxu0
      %v6945 = vadd.f32 0.0, %v6944
      %v6946 = vpop.f32.mrb[0].mxu0
      %v6947 = vpop.f32.mrb[0].mxu0
      %v6948 = vadd.f32 0.0, %v6947
      %v6949 = vpop.f32.mrb[0].mxu0
      %6950 = vmatprep.mubr.bf16.mxu0 0
      %6951 = vmatmul.mubr.bf16.gmra.mrb[0].mxu0 %v6571
      %v6952 = vpop.f32.mrb[0].mxu0
      %v6953 = vadd.f32 0.0, %v6952
      %v6954 = vpop.f32.mrb[0].mxu0
      %v6955 = vpop.f32.mrb[0].mxu0
      %v6956 = vadd.f32 0.0, %v6955
      %v6957 = vpop.f32.mrb[0].mxu0
      %6958 = vmatprep.mubr.bf16.mxu0 0
      %6959 = vmatmul.mubr.bf16.gmra.mrb[0].mxu0 %v6579
      %v6960 = vpop.f32.mrb[0].mxu0
      %v6961 = vadd.f32 0.0, %v6960
      %v6962 = vpop.f32.mrb[0].mxu0
      %v6963 = vpop.f32.mrb[0].mxu0
      %v6964 = vadd.f32 0.0, %v6963
      %v6965 = vpop.f32.mrb[0].mxu0
      %6966 = vmatprep.mubr.bf16.mxu0 0
      %6967 = vmatmul.mubr.bf16.gmra.mrb[0].mxu0 %v6587
      %v6968 = vpop.f32.mrb[0].mxu0
      %v6969 = vadd.f32 0.0, %v6968
      %v6970 = vpop.f32.mrb[0].mxu0
      %v6971 = vpop.f32.mrb[0].mxu0
      %v6972 = vadd.f32 0.0, %v6971
      %v6973 = vpop.f32.mrb[0].mxu0
      %6974 = vmatprep.mubr.bf16.mxu0 0
      %6975 = vmatmul.mubr.bf16.gmra.mrb[0].mxu0 %v6595
      %v6976 = vpop.f32.mrb[0].mxu0
      %v6977 = vadd.f32 0.0, %v6976
      %v6978 = vpop.f32.mrb[0].mxu0
      %v6979 = vpop.f32.mrb[0].mxu0
      %v6980 = vadd.f32 0.0, %v6979
      %v6981 = vpop.f32.mrb[0].mxu0
      %6982 = vmatprep.mubr.bf16.mxu0 0
      %6983 = vmatmul.mubr.bf16.gmra.mrb[0].mxu0 %v6603
      %v6984 = vpop.f32.mrb[0].mxu0
      %v6985 = vadd.f32 0.0, %v6984
      %v6986 = vpop.f32.mrb[0].mxu0
      %v6987 = vpop.f32.mrb[0].mxu0
      %v6988 = vadd.f32 0.0, %v6987
      %v6989 = vpop.f32.mrb[0].mxu0
      %6990 = vmatprep.mubr.bf16.mxu0 0
      %6991 = vmatmul.mubr.bf16.gmra.mrb[0].mxu0 %v6611
      %v6992 = vpop.f32.mrb[0].mxu0
      %v6993 = vadd.f32 0.0, %v6992
      %v6994 = vpop.f32.mrb[0].mxu0
      %v6995 = vpop.f32.mrb[0].mxu0
      %v6996 = vadd.f32 0.0, %v6995
      %v6997 = vpop.f32.mrb[0].mxu0
      %6998 = vmatprep.mubr.bf16.mxu0 0
      %6999 = vmatmul.mubr.bf16.gmra.mrb[0].mxu0 %v6619
      %v7000 = vpop.f32.mrb[0].mxu0
      %v7001 = vadd.f32 0.0, %v7000
      %v7002 = vpop.f32.mrb[0].mxu0
      %v7003 = vpop.f32.mrb[0].mxu0
      %v7004 = vadd.f32 0.0, %v7003
      %v7005 = vpop.f32.mrb[0].mxu0
      %7006 = vmatprep.mubr.bf16.mxu0 0
      %7007 = vmatmul.mubr.bf16.gmra.mrb[0].mxu0 %v6627
      %v7008 = vpop.f32.mrb[0].mxu0
      %v7009 = vadd.f32 0.0, %v7008
      %v7010 = vpop.f32.mrb[0].mxu0
      %v7011 = vpop.f32.mrb[0].mxu0
      %v7012 = vadd.f32 0.0, %v7011
      %v7013 = vpop.f32.mrb[0].mxu0
      %7014 = vmatprep.mubr.bf16.mxu0 0
      %7015 = vmatmul.mubr.bf16.gmra.mrb[0].mxu0 %v6635
      %v7016 = vpop.f32.mrb[0].mxu0
      %v7017 = vadd.f32 0.0, %v7016
      %v7018 = vpop.f32.mrb[0].mxu0
      %v7019 = vpop.f32.mrb[0].mxu0
      %v7020 = vadd.f32 0.0, %v7019
      %v7021 = vpop.f32.mrb[0].mxu0
      %7022 = vmatprep.mubr.bf16.mxu0 0
      %7023 = vmatmul.mubr.bf16.gmra.mrb[0].mxu0 %v6643
      %v7024 = vpop.f32.mrb[0].mxu0
      %v7025 = vadd.f32 0.0, %v7024
      %v7026 = vpop.f32.mrb[0].mxu0
      %v7027 = vpop.f32.mrb[0].mxu0
      %v7028 = vadd.f32 0.0, %v7027
      %v7029 = vpop.f32.mrb[0].mxu0
      %7030 = vmatprep.mubr.bf16.mxu0 0
      %7031 = vmatmul.mubr.bf16.gmra.mrb[0].mxu0 %v6651
      %v7032 = vpop.f32.mrb[0].mxu0
      %v7033 = vadd.f32 0.0, %v7032
      %v7034 = vpop.f32.mrb[0].mxu0
      %v7035 = vpop.f32.mrb[0].mxu0
      %v7036 = vadd.f32 0.0, %v7035
      %v7037 = vpop.f32.mrb[0].mxu0
      %7038 = vmatprep.mubr.bf16.mxu0 0
      %7039 = vmatmul.mubr.bf16.gmra.mrb[0].mxu0 %v6659
      %v7040 = vpop.f32.mrb[0].mxu0
      %v7041 = vadd.f32 0.0, %v7040
      %v7042 = vpop.f32.mrb[0].mxu0
      %v7043 = vpop.f32.mrb[0].mxu0
      %v7044 = vadd.f32 0.0, %v7043
      %v7045 = vpop.f32.mrb[0].mxu0
      %7046 = vmatprep.mubr.bf16.mxu0 0
      %7047 = vmatmul.mubr.bf16.gmra.mrb[0].mxu0 %v6667
      %v7048 = vpop.f32.mrb[0].mxu0
      %v7049 = vadd.f32 0.0, %v7048
      %v7050 = vpop.f32.mrb[0].mxu0
      %v7051 = vpop.f32.mrb[0].mxu0
      %v7052 = vadd.f32 0.0, %v7051
      %v7053 = vpop.f32.mrb[0].mxu0
      %7054 = vmatprep.mubr.bf16.mxu0 0
      %7055 = vmatmul.mubr.bf16.gmra.mrb[0].mxu0 %v6675
      %v7056 = vpop.f32.mrb[0].mxu0
      %v7057 = vadd.f32 0.0, %v7056
      %v7058 = vpop.f32.mrb[0].mxu0
      %v7059 = vpop.f32.mrb[0].mxu0
      %v7060 = vadd.f32 0.0, %v7059
      %v7061 = vpop.f32.mrb[0].mxu0
      %7062 = vmatprep.mubr.bf16.mxu0 0
      %7063 = vmatmul.mubr.bf16.gmra.mrb[0].mxu0 %v6683
      %v7064 = vpop.f32.mrb[0].mxu0
      %v7065 = vpop.f32.mrb[0].mxu0
      %v7066 = vpop.f32.mrb[0].mxu0
      %v7067 = vpop.f32.mrb[0].mxu0
      %7068 = vmatprep.mubr.bf16.mxu0 0
      %7069 = vmatmul.mubr.bf16.gmra.mrb[0].mxu0 %v6691
      %v7070 = vpop.f32.mrb[0].mxu0
      %v7071 = vpop.f32.mrb[0].mxu0
      %v7072 = vpop.f32.mrb[0].mxu0
      %v7073 = vpop.f32.mrb[0].mxu0
      %7074 = vmatprep.mubr.bf16.mxu0 0
      %7075 = vmatmul.mubr.bf16.gmra.mrb[0].mxu0 %v6699
      %v7076 = vpop.f32.mrb[0].mxu0
      %v7077 = vadd.f32 0.0, %v7076
      %v7078 = vpop.f32.mrb[0].mxu0
      %v7079 = vpop.f32.mrb[0].mxu0
      %v7080 = vadd.f32 0.0, %v7079
      %v7081 = vpop.f32.mrb[0].mxu0
      %7082 = vmatprep.mubr.bf16.mxu0 0
      %7083 = vmatmul.mubr.bf16.gmra.mrb[0].mxu0 %v6707
      %v7084 = vpop.f32.mrb[0].mxu0
      %v7085 = vadd.f32 0.0, %v7084
      %v7086 = vpop.f32.mrb[0].mxu0
      %v7087 = vpop.f32.mrb[0].mxu0
      %v7088 = vadd.f32 0.0, %v7087
      %v7089 = vpop.f32.mrb[0].mxu0
      %7090 = vmatprep.mubr.bf16.mxu0 0
      %7091 = vmatmul.mubr.bf16.gmra.mrb[0].mxu0 %v6715
      %v7092 = vpop.f32.mrb[0].mxu0
      %v7093 = vadd.f32 0.0, %v7092
      %v7094 = vpop.f32.mrb[0].mxu0
      %v7095 = vpop.f32.mrb[0].mxu0
      %v7096 = vadd.f32 0.0, %v7095
      %v7097 = vpop.f32.mrb[0].mxu0
      %7098 = vmatprep.mubr.bf16.mxu0 0
      %7099 = vmatmul.mubr.bf16.gmra.mrb[0].mxu0 %v6723
      %v7100 = vpop.f32.mrb[0].mxu0
      %v7101 = vadd.f32 0.0, %v7100
      %v7102 = vpop.f32.mrb[0].mxu0
      %v7103 = vpop.f32.mrb[0].mxu0
      %v7104 = vadd.f32 0.0, %v7103
      %v7105 = vpop.f32.mrb[0].mxu0
      %7106 = vmatprep.mubr.bf16.mxu0 0
      %7107 = vmatmul.mubr.bf16.gmra.mrb[0].mxu0 %v6731
      %v7108 = vpop.f32.mrb[0].mxu0
      %v7109 = vadd.f32 0.0, %v7108
      %v7110 = vpop.f32.mrb[0].mxu0
      %v7111 = vpop.f32.mrb[0].mxu0
      %v7112 = vadd.f32 0.0, %v7111
      %v7113 = vpop.f32.mrb[0].mxu0
      %7114 = vmatprep.mubr.bf16.mxu0 0
      %7115 = vmatmul.mubr.bf16.gmra.mrb[0].mxu0 %v6739
      %v7116 = vpop.f32.mrb[0].mxu0
      %v7117 = vadd.f32 0.0, %v7116
      %v7118 = vpop.f32.mrb[0].mxu0
      %v7119 = vpop.f32.mrb[0].mxu0
      %v7120 = vadd.f32 0.0, %v7119
      %v7121 = vpop.f32.mrb[0].mxu0
      %7122 = vmatprep.mubr.bf16.mxu0 0
      %7123 = vmatmul.mubr.bf16.gmra.mrb[0].mxu0 %v6747
      %v7124 = vpop.f32.mrb[0].mxu0
      %v7125 = vadd.f32 0.0, %v7124
      %v7126 = vpop.f32.mrb[0].mxu0
      %v7127 = vpop.f32.mrb[0].mxu0
      %v7128 = vadd.f32 0.0, %v7127
      %v7129 = vpop.f32.mrb[0].mxu0
      %7130 = vmatprep.mubr.bf16.mxu0 0
      %7131 = vmatmul.mubr.bf16.gmra.mrb[0].mxu0 %v6755
      %v7132 = vpop.f32.mrb[0].mxu0
      %v7133 = vadd.f32 0.0, %v7132
      %v7134 = vpop.f32.mrb[0].mxu0
      %v7135 = vpop.f32.mrb[0].mxu0
      %v7136 = vadd.f32 0.0, %v7135
      %v7137 = vpop.f32.mrb[0].mxu0
      %7138 = vmatprep.mubr.bf16.mxu0 0
      %7139 = vmatmul.mubr.bf16.gmra.mrb[0].mxu0 %v6763
      %v7140 = vpop.f32.mrb[0].mxu0
      %v7141 = vadd.f32 0.0, %v7140
      %v7142 = vpop.f32.mrb[0].mxu0
      %v7143 = vpop.f32.mrb[0].mxu0
      %v7144 = vadd.f32 0.0, %v7143
      %v7145 = vpop.f32.mrb[0].mxu0
      %7146 = vmatprep.mubr.bf16.mxu0 0
      %7147 = vmatmul.mubr.bf16.gmra.mrb[0].mxu0 %v6771
      %v7148 = vpop.f32.mrb[0].mxu0
      %v7149 = vadd.f32 0.0, %v7148
      %v7150 = vpop.f32.mrb[0].mxu0
      %v7151 = vpop.f32.mrb[0].mxu0
      %v7152 = vadd.f32 0.0, %v7151
      %v7153 = vpop.f32.mrb[0].mxu0
      %7154 = vmatprep.mubr.bf16.mxu0 0
      %7155 = vmatmul.mubr.bf16.gmra.mrb[0].mxu0 %v6779
      %v7156 = vpop.f32.mrb[0].mxu0
      %v7157 = vadd.f32 0.0, %v7156
      %v7158 = vpop.f32.mrb[0].mxu0
      %v7159 = vpop.f32.mrb[0].mxu0
      %v7160 = vadd.f32 0.0, %v7159
      %v7161 = vpop.f32.mrb[0].mxu0
      %7162 = vmatprep.mubr.bf16.mxu0 0
      %7163 = vmatmul.mubr.bf16.gmra.mrb[0].mxu0 %v6787
      %v7164 = vpop.f32.mrb[0].mxu0
      %v7165 = vadd.f32 0.0, %v7164
      %v7166 = vpop.f32.mrb[0].mxu0
      %v7167 = vpop.f32.mrb[0].mxu0
      %v7168 = vadd.f32 0.0, %v7167
      %v7169 = vpop.f32.mrb[0].mxu0
      %7170 = vmatprep.mubr.bf16.mxu0 0
      %7171 = vmatmul.mubr.bf16.gmra.mrb[0].mxu0 %v6795
      %v7172 = vpop.f32.mrb[0].mxu0
      %v7173 = vadd.f32 0.0, %v7172
      %v7174 = vpop.f32.mrb[0].mxu0
      %v7175 = vpop.f32.mrb[0].mxu0
      %v7176 = vadd.f32 0.0, %v7175
      %v7177 = vpop.f32.mrb[0].mxu0
      %7178 = vmatprep.mubr.bf16.mxu0 0
      %7179 = vmatmul.mubr.bf16.gmra.mrb[0].mxu0 %v6803
      %v7180 = vpop.f32.mrb[0].mxu0
      %v7181 = vadd.f32 0.0, %v7180
      %v7182 = vpop.f32.mrb[0].mxu0
      %v7183 = vpop.f32.mrb[0].mxu0
      %v7184 = vadd.f32 0.0, %v7183
      %v7185 = vpop.f32.mrb[0].mxu0
      %7186 = vmatprep.mubr.bf16.mxu0 0
      %7187 = vmatmul.mubr.bf16.gmra.mrb[0].mxu0 %v6811
      %v7188 = vpop.f32.mrb[0].mxu0
      %v7189 = vadd.f32 0.0, %v7188
      %v7190 = vpop.f32.mrb[0].mxu0
      %v7191 = vpop.f32.mrb[0].mxu0
      %v7192 = vadd.f32 0.0, %v7191
      %v7193 = vpop.f32.mrb[0].mxu0
      %7194 = vmatprep.mubr.bf16.mxu0 0
      %7195 = vmatmul.mubr.bf16.gmra.mrb[0].mxu0 %v6819
      %v7196 = vpop.f32.mrb[0].mxu0
      %v7197 = vadd.f32 0.0, %v7196
      %v7198 = vpop.f32.mrb[0].mxu0
      %v7199 = vpop.f32.mrb[0].mxu0
      %v7200 = vadd.f32 0.0, %v7199
      %v7201 = vpop.f32.mrb[0].mxu0
      %7202 = vdwg.mxu0
      %v7203 = vadd.f32 %v6393, %v6937
      %v7204 = vadd.f32 %v6394, %v6940
      %v7205 = vadd.f32 %v6395, %v6945
      %v7206 = vadd.f32 %v6396, %v6948
      %v7207 = vadd.f32 %v6397, %v6953
      %v7208 = vadd.f32 %v6398, %v6956
      %v7209 = vadd.f32 %v6399, %v6961
      %v7210 = vadd.f32 %v6400, %v6964
      %v7211 = vadd.f32 %v6401, %v6969
      %v7212 = vadd.f32 %v6402, %v6972
      %v7213 = vadd.f32 %v6403, %v6977
      %v7214 = vadd.f32 %v6404, %v6980
      %v7215 = vadd.f32 %v6405, %v6985
      %v7216 = vadd.f32 %v6406, %v6988
      %v7217 = vadd.f32 %v6407, %v6993
      %v7218 = vadd.f32 %v6408, %v6996
      %v7219 = vadd.f32 %v6409, %v7001
      %v7220 = vadd.f32 %v6410, %v7004
      %v7221 = vadd.f32 %v6411, %v7009
      %v7222 = vadd.f32 %v6412, %v7012
      %v7223 = vadd.f32 %v6413, %v7017
      %v7224 = vadd.f32 %v6414, %v7020
      %v7225 = vadd.f32 %v6415, %v7025
      %v7226 = vadd.f32 %v6416, %v7028
      %v7227 = vadd.f32 %v6417, %v7033
      %v7228 = vadd.f32 %v6418, %v7036
      %v7229 = vadd.f32 %v6419, %v7041
      %v7230 = vadd.f32 %v6420, %v7044
      %v7231 = vadd.f32 %v6421, %v7049
      %v7232 = vadd.f32 %v6422, %v7052
      %v7233 = vadd.f32 %v6423, %v7057
      %v7234 = vadd.f32 %v6424, %v7060
      %v7235 = vadd.f32 %v6425, %v7077
      %v7236 = vadd.f32 %v6426, %v7080
      %v7237 = vadd.f32 %v6427, %v7085
      %v7238 = vadd.f32 %v6428, %v7088
      %v7239 = vadd.f32 %v6429, %v7093
      %v7240 = vadd.f32 %v6430, %v7096
      %v7241 = vadd.f32 %v6431, %v7101
      %v7242 = vadd.f32 %v6432, %v7104
      %v7243 = vadd.f32 %v6433, %v7109
      %v7244 = vadd.f32 %v6434, %v7112
      %v7245 = vadd.f32 %v6435, %v7117
      %v7246 = vadd.f32 %v6436, %v7120
      %v7247 = vadd.f32 %v6437, %v7125
      %v7248 = vadd.f32 %v6438, %v7128
      %v7249 = vadd.f32 %v6439, %v7133
      %v7250 = vadd.f32 %v6440, %v7136
      %v7251 = vadd.f32 %v6441, %v7141
      %v7252 = vadd.f32 %v6442, %v7144
      %v7253 = vadd.f32 %v6443, %v7149
      %v7254 = vadd.f32 %v6444, %v7152
      %v7255 = vadd.f32 %v6445, %v7157
      %v7256 = vadd.f32 %v6446, %v7160
      %v7257 = vadd.f32 %v6447, %v7165
      %v7258 = vadd.f32 %v6448, %v7168
      %v7259 = vadd.f32 %v6449, %v7173
      %v7260 = vadd.f32 %v6450, %v7176
      %v7261 = vadd.f32 %v6451, %v7181
      %v7262 = vadd.f32 %v6452, %v7184
      %v7263 = vadd.f32 %v6453, %v7189
      %v7264 = vadd.f32 %v6454, %v7192
      %v7265 = vadd.f32 %v6455, %v7197
      %v7266 = vadd.f32 %v6456, %v7200
      %v7267 = vld [vmem:[#allocation2 + $0x10] sm:$0x80]
      %v7268 = vld [vmem:[#allocation2 + $0x120] sm:$0xff]
      %v7269 = vsel %vm2648, %v7267, 0
      %v7270 = vsel %vm2649, %v6458, 0
      %v7271 = vsel %vm2650, %v6459, 0
      %v7272 = vsel %vm2651, %v6460, 0
      %v7273 = vsel %vm2652, %v6461, 0
      %v7274 = vsel %vm2653, %v6462, 0
      %v7275 = vsel %vm2654, %v6463, 0
      %v7276 = vsel %vm2655, %v6464, 0
      %v7277 = vsel %vm2656, %v6465, 0
      %v7278 = vsel %vm2657, %v6466, 0
      %v7279 = vsel %vm2658, %v6467, 0
      %v7280 = vsel %vm2659, %v6468, 0
      %v7281 = vsel %vm2660, %v6469, 0
      %v7282 = vsel %vm2661, %v6470, 0
      %v7283 = vsel %vm2662, %v6471, 0
      %v7284 = vsel %vm2663, %v6472, 0
      %v7285 = vsel %vm2664, %v6473, 0
      %v7286 = vsel %vm2665, %v6474, 0
      %v7287 = vsel %vm2666, %v6475, 0
      %v7288 = vsel %vm2667, %v6476, 0
      %v7289 = vsel %vm2668, %v6477, 0
      %v7290 = vsel %vm2669, %v6478, 0
      %v7291 = vsel %vm2670, %v6479, 0
      %v7292 = vsel %vm2671, %v6480, 0
      %v7293 = vsel %vm2672, %v6481, 0
      %v7294 = vsel %vm2673, %v6482, 0
      %v7295 = vsel %vm2674, %v6483, 0
      %v7296 = vsel %vm2675, %v6484, 0
      %v7297 = vsel %vm2676, %v6485, 0
      %v7298 = vsel %vm2677, %v6486, 0
      %v7299 = vsel %vm2678, %v6487, 0
      %v7300 = vsel %vm2679, %v6488, 0
      %v7301 = vsel %vm2680, %v6489, 0
      %v7302 = vsel %vm2681, %v6490, 0
      %v7303 = vsel %vm2682, %v7268, 0
      %s7304 = scalar_lea.vmem %s4, 384
      %v7305 = vld [vmem:[%s7304] sm:$0xf]
      %v7306 = vld [vmem:[%s7304 + $0x4] sm:$0xf]
      %v7307 = vld [vmem:[%s7304 + $0x8] sm:$0xf]
      %v7308 = vld [vmem:[%s7304 + $0xc] sm:$0xf]
      %v7309 = vld [vmem:[%s7304 + $0x10] sm:$0xf]
      %v7310 = vld [vmem:[%s7304 + $0x14] sm:$0xf]
      %v7311 = vld [vmem:[%s7304 + $0x18] sm:$0xf]
      %v7312 = vld [vmem:[%s7304 + $0x1c] sm:$0xf]
      %v7313 = vld [vmem:[%s7304 + $0x20] sm:$0xf]
      %v7314 = vld [vmem:[%s7304 + $0x24] sm:$0xf]
      %v7315 = vld [vmem:[%s7304 + $0x28] sm:$0xf]
      %v7316 = vld [vmem:[%s7304 + $0x2c] sm:$0xf]
      %v7317 = vld [vmem:[%s7304 + $0x30] sm:$0xf]
      %v7318 = vld [vmem:[%s7304 + $0x34] sm:$0xf]
      %v7319 = vld [vmem:[%s7304 + $0x38] sm:$0xf]
      %v7320 = vld [vmem:[%s7304 + $0x3c] sm:$0xf]
      %v7322 = vshrl.u32 %v7269, 16
      %v7324 = vrot.slane %v7322, 7
      %v7326 = vshrl.u32 %v7270, 16
      %v7328 = vrot.slane %v7326, 7
      %v7329 = vshll.u32 %v7270, 16
      %v7331 = vor.u32 %v7328, %v7329
      %v7332 = vsel %vm3100, %v7324, %v7331
      %v7334 = vshrl.u32 %v7271, 16
      %v7336 = vrot.slane %v7334, 7
      %v7337 = vshll.u32 %v7271, 16
      %v7339 = vor.u32 %v7336, %v7337
      %v7340 = vsel %vm3100, %v7328, %v7339
      %v7342 = vshrl.u32 %v7272, 16
      %v7344 = vrot.slane %v7342, 7
      %v7345 = vshll.u32 %v7272, 16
      %v7347 = vor.u32 %v7344, %v7345
      %v7348 = vsel %vm3100, %v7336, %v7347
      %v7350 = vshrl.u32 %v7273, 16
      %v7352 = vrot.slane %v7350, 7
      %v7353 = vshll.u32 %v7273, 16
      %v7355 = vor.u32 %v7352, %v7353
      %v7356 = vsel %vm3100, %v7344, %v7355
      %v7358 = vshrl.u32 %v7274, 16
      %v7360 = vrot.slane %v7358, 7
      %v7361 = vshll.u32 %v7274, 16
      %v7363 = vor.u32 %v7360, %v7361
      %v7364 = vsel %vm3100, %v7352, %v7363
      %v7366 = vshrl.u32 %v7275, 16
      %v7368 = vrot.slane %v7366, 7
      %v7369 = vshll.u32 %v7275, 16
      %v7371 = vor.u32 %v7368, %v7369
      %v7372 = vsel %vm3100, %v7360, %v7371
      %v7374 = vshrl.u32 %v7276, 16
      %v7376 = vrot.slane %v7374, 7
      %v7377 = vshll.u32 %v7276, 16
      %v7379 = vor.u32 %v7376, %v7377
      %v7380 = vsel %vm3100, %v7368, %v7379
      %v7382 = vshrl.u32 %v7277, 16
      %v7384 = vrot.slane %v7382, 7
      %v7385 = vshll.u32 %v7277, 16
      %v7387 = vor.u32 %v7384, %v7385
      %v7388 = vsel %vm3100, %v7376, %v7387
      %v7390 = vshrl.u32 %v7278, 16
      %v7392 = vrot.slane %v7390, 7
      %v7393 = vshll.u32 %v7278, 16
      %v7395 = vor.u32 %v7392, %v7393
      %v7396 = vsel %vm3100, %v7384, %v7395
      %v7398 = vshrl.u32 %v7279, 16
      %v7400 = vrot.slane %v7398, 7
      %v7401 = vshll.u32 %v7279, 16
      %v7403 = vor.u32 %v7400, %v7401
      %v7404 = vsel %vm3100, %v7392, %v7403
      %v7406 = vshrl.u32 %v7280, 16
      %v7408 = vrot.slane %v7406, 7
      %v7409 = vshll.u32 %v7280, 16
      %v7411 = vor.u32 %v7408, %v7409
      %v7412 = vsel %vm3100, %v7400, %v7411
      %v7414 = vshrl.u32 %v7281, 16
      %v7416 = vrot.slane %v7414, 7
      %v7417 = vshll.u32 %v7281, 16
      %v7419 = vor.u32 %v7416, %v7417
      %v7420 = vsel %vm3100, %v7408, %v7419
      %v7422 = vshrl.u32 %v7282, 16
      %v7424 = vrot.slane %v7422, 7
      %v7425 = vshll.u32 %v7282, 16
      %v7427 = vor.u32 %v7424, %v7425
      %v7428 = vsel %vm3100, %v7416, %v7427
      %v7430 = vshrl.u32 %v7283, 16
      %v7432 = vrot.slane %v7430, 7
      %v7433 = vshll.u32 %v7283, 16
      %v7435 = vor.u32 %v7432, %v7433
      %v7436 = vsel %vm3100, %v7424, %v7435
      %v7438 = vshrl.u32 %v7284, 16
      %v7440 = vrot.slane %v7438, 7
      %v7441 = vshll.u32 %v7284, 16
      %v7443 = vor.u32 %v7440, %v7441
      %v7444 = vsel %vm3100, %v7432, %v7443
      %v7446 = vshrl.u32 %v7285, 16
      %v7448 = vrot.slane %v7446, 7
      %v7449 = vshll.u32 %v7285, 16
      %v7451 = vor.u32 %v7448, %v7449
      %v7452 = vsel %vm3100, %v7440, %v7451
      %v7454 = vshrl.u32 %v7286, 16
      %v7456 = vrot.slane %v7454, 7
      %v7457 = vshll.u32 %v7286, 16
      %v7459 = vor.u32 %v7456, %v7457
      %v7460 = vsel %vm3100, %v7448, %v7459
      %v7462 = vshrl.u32 %v7287, 16
      %v7464 = vrot.slane %v7462, 7
      %v7465 = vshll.u32 %v7287, 16
      %v7467 = vor.u32 %v7464, %v7465
      %v7468 = vsel %vm3100, %v7456, %v7467
      %v7470 = vshrl.u32 %v7288, 16
      %v7472 = vrot.slane %v7470, 7
      %v7473 = vshll.u32 %v7288, 16
      %v7475 = vor.u32 %v7472, %v7473
      %v7476 = vsel %vm3100, %v7464, %v7475
      %v7478 = vshrl.u32 %v7289, 16
      %v7480 = vrot.slane %v7478, 7
      %v7481 = vshll.u32 %v7289, 16
      %v7483 = vor.u32 %v7480, %v7481
      %v7484 = vsel %vm3100, %v7472, %v7483
      %v7486 = vshrl.u32 %v7290, 16
      %v7488 = vrot.slane %v7486, 7
      %v7489 = vshll.u32 %v7290, 16
      %v7491 = vor.u32 %v7488, %v7489
      %v7492 = vsel %vm3100, %v7480, %v7491
      %v7494 = vshrl.u32 %v7291, 16
      %v7496 = vrot.slane %v7494, 7
      %v7497 = vshll.u32 %v7291, 16
      %v7499 = vor.u32 %v7496, %v7497
      %v7500 = vsel %vm3100, %v7488, %v7499
      %v7502 = vshrl.u32 %v7292, 16
      %v7504 = vrot.slane %v7502, 7
      %v7505 = vshll.u32 %v7292, 16
      %v7507 = vor.u32 %v7504, %v7505
      %v7508 = vsel %vm3100, %v7496, %v7507
      %v7510 = vshrl.u32 %v7293, 16
      %v7512 = vrot.slane %v7510, 7
      %v7513 = vshll.u32 %v7293, 16
      %v7515 = vor.u32 %v7512, %v7513
      %v7516 = vsel %vm3100, %v7504, %v7515
      %v7518 = vshrl.u32 %v7294, 16
      %v7520 = vrot.slane %v7518, 7
      %v7521 = vshll.u32 %v7294, 16
      %v7523 = vor.u32 %v7520, %v7521
      %v7524 = vsel %vm3100, %v7512, %v7523
      %v7526 = vshrl.u32 %v7295, 16
      %v7528 = vrot.slane %v7526, 7
      %v7529 = vshll.u32 %v7295, 16
      %v7531 = vor.u32 %v7528, %v7529
      %v7532 = vsel %vm3100, %v7520, %v7531
      %v7534 = vshrl.u32 %v7296, 16
      %v7536 = vrot.slane %v7534, 7
      %v7537 = vshll.u32 %v7296, 16
      %v7539 = vor.u32 %v7536, %v7537
      %v7540 = vsel %vm3100, %v7528, %v7539
      %v7542 = vshrl.u32 %v7297, 16
      %v7544 = vrot.slane %v7542, 7
      %v7545 = vshll.u32 %v7297, 16
      %v7547 = vor.u32 %v7544, %v7545
      %v7548 = vsel %vm3100, %v7536, %v7547
      %v7550 = vshrl.u32 %v7298, 16
      %v7552 = vrot.slane %v7550, 7
      %v7553 = vshll.u32 %v7298, 16
      %v7555 = vor.u32 %v7552, %v7553
      %v7556 = vsel %vm3100, %v7544, %v7555
      %v7558 = vshrl.u32 %v7299, 16
      %v7560 = vrot.slane %v7558, 7
      %v7561 = vshll.u32 %v7299, 16
      %v7563 = vor.u32 %v7560, %v7561
      %v7564 = vsel %vm3100, %v7552, %v7563
      %v7566 = vshrl.u32 %v7300, 16
      %v7568 = vrot.slane %v7566, 7
      %v7569 = vshll.u32 %v7300, 16
      %v7571 = vor.u32 %v7568, %v7569
      %v7572 = vsel %vm3100, %v7560, %v7571
      %v7574 = vshrl.u32 %v7301, 16
      %v7576 = vrot.slane %v7574, 7
      %v7577 = vshll.u32 %v7301, 16
      %v7579 = vor.u32 %v7576, %v7577
      %v7580 = vsel %vm3100, %v7568, %v7579
      %v7582 = vshrl.u32 %v7302, 16
      %v7584 = vrot.slane %v7582, 7
      %v7585 = vshll.u32 %v7302, 16
      %v7587 = vor.u32 %v7584, %v7585
      %v7588 = vsel %vm3100, %v7576, %v7587
      %v7590 = vshrl.u32 %v7303, 16
      %v7592 = vrot.slane %v7590, 7
      %v7593 = vshll.u32 %v7303, 16
      %v7595 = vor.u32 %v7592, %v7593
      %v7596 = vsel %vm3100, %v7584, %v7595
      %v7647 = vunpack.c.l.b16 %v7305
      %v7648 = vunpack.c.l.b16 %v7306
      %v7649 = vunpack.c.l.b16 %v7307
      %v7650 = vunpack.c.l.b16 %v7308
      %v7651 = vunpack.c.l.b16 %v7309
      %v7652 = vunpack.c.l.b16 %v7310
      %v7653 = vunpack.c.l.b16 %v7311
      %v7654 = vunpack.c.l.b16 %v7312
      %v7655 = vunpack.c.l.b16 %v7313
      %v7656 = vunpack.c.l.b16 %v7314
      %v7657 = vunpack.c.l.b16 %v7315
      %v7658 = vunpack.c.l.b16 %v7316
      %v7659 = vunpack.c.l.b16 %v7317
      %v7660 = vunpack.c.l.b16 %v7318
      %v7661 = vunpack.c.l.b16 %v7319
      %v7662 = vunpack.c.l.b16 %v7320
      %v7663 = vpack.c.b16 %v7648, %v7647
      %v7664 = vpack.c.b16 %v7650, %v7649
      %v7665 = vpack.c.b16 %v7652, %v7651
      %v7666 = vpack.c.b16 %v7654, %v7653
      %v7667 = vpack.c.b16 %v7656, %v7655
      %v7668 = vpack.c.b16 %v7658, %v7657
      %v7669 = vpack.c.b16 %v7660, %v7659
      %v7670 = vpack.c.b16 %v7662, %v7661
      %7679 = vmatprep.subr.bf16.mxu0 0
      %7680 = vmatpush1.bf16.msra.mxu0 %v7663
      %7681 = vmatprep.subr.bf16.mxu0 0
      %7682 = vmatpush1.bf16.msra.mxu0 %v7664
      %7683 = vmatprep.subr.bf16.mxu0 0
      %7684 = vmatpush1.bf16.msra.mxu0 %v7665
      %7685 = vmatprep.subr.bf16.mxu0 0
      %7686 = vmatpush1.bf16.msra.mxu0 %v7666
      %7687 = vmatprep.subr.bf16.mxu0 0
      %7688 = vmatpush1.bf16.msra.mxu0 %v7667
      %7689 = vmatprep.subr.bf16.mxu0 0
      %7690 = vmatpush1.bf16.msra.mxu0 %v7668
      %7691 = vmatprep.subr.bf16.mxu0 0
      %7692 = vmatpush1.bf16.msra.mxu0 %v7669
      %7693 = vmatprep.subr.bf16.mxu0 0
      %7694 = vmatpush1.bf16.msra.mxu0 %v7670
      %7695 = vmatprep.subr.bf16.mxu0 0
      %7696 = vmatpush1.bf16.msra.mxu0 0
      %7697 = vmatprep.subr.bf16.mxu0 0
      %7698 = vmatpush1.bf16.msra.mxu0 0
      %7699 = vmatprep.subr.bf16.mxu0 0
      %7700 = vmatpush1.bf16.msra.mxu0 0
      %7701 = vmatprep.subr.bf16.mxu0 0
      %7702 = vmatpush1.bf16.msra.mxu0 0
      %7703 = vmatprep.subr.bf16.mxu0 0
      %7704 = vmatpush1.bf16.msra.mxu0 0
      %7705 = vmatprep.subr.bf16.mxu0 0
      %7706 = vmatpush1.bf16.msra.mxu0 0
      %7707 = vmatprep.subr.bf16.mxu0 0
      %7708 = vmatpush1.bf16.msra.mxu0 0
      %7709 = vmatprep.subr.bf16.mxu0 0
      %7710 = vmatpush1.bf16.msra.mxu0 0
      %7711 = vmatprep.mubr.bf16.mxu0 0
      %7712 = vmatmul.mubr.bf16.gmra.mrb[0].mxu0 %v7332
      %v7713 = vpop.f32.mrb[0].mxu0
      %v7714 = vadd.f32 0.0, %v7713
      %v7715 = vpop.f32.mrb[0].mxu0
      %v7716 = vpop.f32.mrb[0].mxu0
      %v7717 = vadd.f32 0.0, %v7716
      %v7718 = vpop.f32.mrb[0].mxu0
      %7719 = vmatprep.mubr.bf16.mxu0 0
      %7720 = vmatmul.mubr.bf16.gmra.mrb[0].mxu0 %v7340
      %v7721 = vpop.f32.mrb[0].mxu0
      %v7722 = vadd.f32 0.0, %v7721
      %v7723 = vpop.f32.mrb[0].mxu0
      %v7724 = vpop.f32.mrb[0].mxu0
      %v7725 = vadd.f32 0.0, %v7724
      %v7726 = vpop.f32.mrb[0].mxu0
      %7727 = vmatprep.mubr.bf16.mxu0 0
      %7728 = vmatmul.mubr.bf16.gmra.mrb[0].mxu0 %v7348
      %v7729 = vpop.f32.mrb[0].mxu0
      %v7730 = vadd.f32 0.0, %v7729
      %v7731 = vpop.f32.mrb[0].mxu0
      %v7732 = vpop.f32.mrb[0].mxu0
      %v7733 = vadd.f32 0.0, %v7732
      %v7734 = vpop.f32.mrb[0].mxu0
      %7735 = vmatprep.mubr.bf16.mxu0 0
      %7736 = vmatmul.mubr.bf16.gmra.mrb[0].mxu0 %v7356
      %v7737 = vpop.f32.mrb[0].mxu0
      %v7738 = vadd.f32 0.0, %v7737
      %v7739 = vpop.f32.mrb[0].mxu0
      %v7740 = vpop.f32.mrb[0].mxu0
      %v7741 = vadd.f32 0.0, %v7740
      %v7742 = vpop.f32.mrb[0].mxu0
      %7743 = vmatprep.mubr.bf16.mxu0 0
      %7744 = vmatmul.mubr.bf16.gmra.mrb[0].mxu0 %v7364
      %v7745 = vpop.f32.mrb[0].mxu0
      %v7746 = vadd.f32 0.0, %v7745
      %v7747 = vpop.f32.mrb[0].mxu0
      %v7748 = vpop.f32.mrb[0].mxu0
      %v7749 = vadd.f32 0.0, %v7748
      %v7750 = vpop.f32.mrb[0].mxu0
      %7751 = vmatprep.mubr.bf16.mxu0 0
      %7752 = vmatmul.mubr.bf16.gmra.mrb[0].mxu0 %v7372
      %v7753 = vpop.f32.mrb[0].mxu0
      %v7754 = vadd.f32 0.0, %v7753
      %v7755 = vpop.f32.mrb[0].mxu0
      %v7756 = vpop.f32.mrb[0].mxu0
      %v7757 = vadd.f32 0.0, %v7756
      %v7758 = vpop.f32.mrb[0].mxu0
      %7759 = vmatprep.mubr.bf16.mxu0 0
      %7760 = vmatmul.mubr.bf16.gmra.mrb[0].mxu0 %v7380
      %v7761 = vpop.f32.mrb[0].mxu0
      %v7762 = vadd.f32 0.0, %v7761
      %v7763 = vpop.f32.mrb[0].mxu0
      %v7764 = vpop.f32.mrb[0].mxu0
      %v7765 = vadd.f32 0.0, %v7764
      %v7766 = vpop.f32.mrb[0].mxu0
      %7767 = vmatprep.mubr.bf16.mxu0 0
      %7768 = vmatmul.mubr.bf16.gmra.mrb[0].mxu0 %v7388
      %v7769 = vpop.f32.mrb[0].mxu0
      %v7770 = vadd.f32 0.0, %v7769
      %v7771 = vpop.f32.mrb[0].mxu0
      %v7772 = vpop.f32.mrb[0].mxu0
      %v7773 = vadd.f32 0.0, %v7772
      %v7774 = vpop.f32.mrb[0].mxu0
      %7775 = vmatprep.mubr.bf16.mxu0 0
      %7776 = vmatmul.mubr.bf16.gmra.mrb[0].mxu0 %v7396
      %v7777 = vpop.f32.mrb[0].mxu0
      %v7778 = vadd.f32 0.0, %v7777
      %v7779 = vpop.f32.mrb[0].mxu0
      %v7780 = vpop.f32.mrb[0].mxu0
      %v7781 = vadd.f32 0.0, %v7780
      %v7782 = vpop.f32.mrb[0].mxu0
      %7783 = vmatprep.mubr.bf16.mxu0 0
      %7784 = vmatmul.mubr.bf16.gmra.mrb[0].mxu0 %v7404
      %v7785 = vpop.f32.mrb[0].mxu0
      %v7786 = vadd.f32 0.0, %v7785
      %v7787 = vpop.f32.mrb[0].mxu0
      %v7788 = vpop.f32.mrb[0].mxu0
      %v7789 = vadd.f32 0.0, %v7788
      %v7790 = vpop.f32.mrb[0].mxu0
      %7791 = vmatprep.mubr.bf16.mxu0 0
      %7792 = vmatmul.mubr.bf16.gmra.mrb[0].mxu0 %v7412
      %v7793 = vpop.f32.mrb[0].mxu0
      %v7794 = vadd.f32 0.0, %v7793
      %v7795 = vpop.f32.mrb[0].mxu0
      %v7796 = vpop.f32.mrb[0].mxu0
      %v7797 = vadd.f32 0.0, %v7796
      %v7798 = vpop.f32.mrb[0].mxu0
      %7799 = vmatprep.mubr.bf16.mxu0 0
      %7800 = vmatmul.mubr.bf16.gmra.mrb[0].mxu0 %v7420
      %v7801 = vpop.f32.mrb[0].mxu0
      %v7802 = vadd.f32 0.0, %v7801
      %v7803 = vpop.f32.mrb[0].mxu0
      %v7804 = vpop.f32.mrb[0].mxu0
      %v7805 = vadd.f32 0.0, %v7804
      %v7806 = vpop.f32.mrb[0].mxu0
      %7807 = vmatprep.mubr.bf16.mxu0 0
      %7808 = vmatmul.mubr.bf16.gmra.mrb[0].mxu0 %v7428
      %v7809 = vpop.f32.mrb[0].mxu0
      %v7810 = vadd.f32 0.0, %v7809
      %v7811 = vpop.f32.mrb[0].mxu0
      %v7812 = vpop.f32.mrb[0].mxu0
      %v7813 = vadd.f32 0.0, %v7812
      %v7814 = vpop.f32.mrb[0].mxu0
      %7815 = vmatprep.mubr.bf16.mxu0 0
      %7816 = vmatmul.mubr.bf16.gmra.mrb[0].mxu0 %v7436
      %v7817 = vpop.f32.mrb[0].mxu0
      %v7818 = vadd.f32 0.0, %v7817
      %v7819 = vpop.f32.mrb[0].mxu0
      %v7820 = vpop.f32.mrb[0].mxu0
      %v7821 = vadd.f32 0.0, %v7820
      %v7822 = vpop.f32.mrb[0].mxu0
      %7823 = vmatprep.mubr.bf16.mxu0 0
      %7824 = vmatmul.mubr.bf16.gmra.mrb[0].mxu0 %v7444
      %v7825 = vpop.f32.mrb[0].mxu0
      %v7826 = vadd.f32 0.0, %v7825
      %v7827 = vpop.f32.mrb[0].mxu0
      %v7828 = vpop.f32.mrb[0].mxu0
      %v7829 = vadd.f32 0.0, %v7828
      %v7830 = vpop.f32.mrb[0].mxu0
      %7831 = vmatprep.mubr.bf16.mxu0 0
      %7832 = vmatmul.mubr.bf16.gmra.mrb[0].mxu0 %v7452
      %v7833 = vpop.f32.mrb[0].mxu0
      %v7834 = vadd.f32 0.0, %v7833
      %v7835 = vpop.f32.mrb[0].mxu0
      %v7836 = vpop.f32.mrb[0].mxu0
      %v7837 = vadd.f32 0.0, %v7836
      %v7838 = vpop.f32.mrb[0].mxu0
      %7839 = vmatprep.mubr.bf16.mxu0 0
      %7840 = vmatmul.mubr.bf16.gmra.mrb[0].mxu0 %v7460
      %v7841 = vpop.f32.mrb[0].mxu0
      %v7842 = vpop.f32.mrb[0].mxu0
      %v7843 = vpop.f32.mrb[0].mxu0
      %v7844 = vpop.f32.mrb[0].mxu0
      %7845 = vmatprep.mubr.bf16.mxu0 0
      %7846 = vmatmul.mubr.bf16.gmra.mrb[0].mxu0 %v7468
      %v7847 = vpop.f32.mrb[0].mxu0
      %v7848 = vpop.f32.mrb[0].mxu0
      %v7849 = vpop.f32.mrb[0].mxu0
      %v7850 = vpop.f32.mrb[0].mxu0
      %7851 = vmatprep.mubr.bf16.mxu0 0
      %7852 = vmatmul.mubr.bf16.gmra.mrb[0].mxu0 %v7476
      %v7853 = vpop.f32.mrb[0].mxu0
      %v7854 = vadd.f32 0.0, %v7853
      %v7855 = vpop.f32.mrb[0].mxu0
      %v7856 = vpop.f32.mrb[0].mxu0
      %v7857 = vadd.f32 0.0, %v7856
      %v7858 = vpop.f32.mrb[0].mxu0
      %7859 = vmatprep.mubr.bf16.mxu0 0
      %7860 = vmatmul.mubr.bf16.gmra.mrb[0].mxu0 %v7484
      %v7861 = vpop.f32.mrb[0].mxu0
      %v7862 = vadd.f32 0.0, %v7861
      %v7863 = vpop.f32.mrb[0].mxu0
      %v7864 = vpop.f32.mrb[0].mxu0
      %v7865 = vadd.f32 0.0, %v7864
      %v7866 = vpop.f32.mrb[0].mxu0
      %7867 = vmatprep.mubr.bf16.mxu0 0
      %7868 = vmatmul.mubr.bf16.gmra.mrb[0].mxu0 %v7492
      %v7869 = vpop.f32.mrb[0].mxu0
      %v7870 = vadd.f32 0.0, %v7869
      %v7871 = vpop.f32.mrb[0].mxu0
      %v7872 = vpop.f32.mrb[0].mxu0
      %v7873 = vadd.f32 0.0, %v7872
      %v7874 = vpop.f32.mrb[0].mxu0
      %7875 = vmatprep.mubr.bf16.mxu0 0
      %7876 = vmatmul.mubr.bf16.gmra.mrb[0].mxu0 %v7500
      %v7877 = vpop.f32.mrb[0].mxu0
      %v7878 = vadd.f32 0.0, %v7877
      %v7879 = vpop.f32.mrb[0].mxu0
      %v7880 = vpop.f32.mrb[0].mxu0
      %v7881 = vadd.f32 0.0, %v7880
      %v7882 = vpop.f32.mrb[0].mxu0
      %7883 = vmatprep.mubr.bf16.mxu0 0
      %7884 = vmatmul.mubr.bf16.gmra.mrb[0].mxu0 %v7508
      %v7885 = vpop.f32.mrb[0].mxu0
      %v7886 = vadd.f32 0.0, %v7885
      %v7887 = vpop.f32.mrb[0].mxu0
      %v7888 = vpop.f32.mrb[0].mxu0
      %v7889 = vadd.f32 0.0, %v7888
      %v7890 = vpop.f32.mrb[0].mxu0
      %7891 = vmatprep.mubr.bf16.mxu0 0
      %7892 = vmatmul.mubr.bf16.gmra.mrb[0].mxu0 %v7516
      %v7893 = vpop.f32.mrb[0].mxu0
      %v7894 = vadd.f32 0.0, %v7893
      %v7895 = vpop.f32.mrb[0].mxu0
      %v7896 = vpop.f32.mrb[0].mxu0
      %v7897 = vadd.f32 0.0, %v7896
      %v7898 = vpop.f32.mrb[0].mxu0
      %7899 = vmatprep.mubr.bf16.mxu0 0
      %7900 = vmatmul.mubr.bf16.gmra.mrb[0].mxu0 %v7524
      %v7901 = vpop.f32.mrb[0].mxu0
      %v7902 = vadd.f32 0.0, %v7901
      %v7903 = vpop.f32.mrb[0].mxu0
      %v7904 = vpop.f32.mrb[0].mxu0
      %v7905 = vadd.f32 0.0, %v7904
      %v7906 = vpop.f32.mrb[0].mxu0
      %7907 = vmatprep.mubr.bf16.mxu0 0
      %7908 = vmatmul.mubr.bf16.gmra.mrb[0].mxu0 %v7532
      %v7909 = vpop.f32.mrb[0].mxu0
      %v7910 = vadd.f32 0.0, %v7909
      %v7911 = vpop.f32.mrb[0].mxu0
      %v7912 = vpop.f32.mrb[0].mxu0
      %v7913 = vadd.f32 0.0, %v7912
      %v7914 = vpop.f32.mrb[0].mxu0
      %7915 = vmatprep.mubr.bf16.mxu0 0
      %7916 = vmatmul.mubr.bf16.gmra.mrb[0].mxu0 %v7540
      %v7917 = vpop.f32.mrb[0].mxu0
      %v7918 = vadd.f32 0.0, %v7917
      %v7919 = vpop.f32.mrb[0].mxu0
      %v7920 = vpop.f32.mrb[0].mxu0
      %v7921 = vadd.f32 0.0, %v7920
      %v7922 = vpop.f32.mrb[0].mxu0
      %7923 = vmatprep.mubr.bf16.mxu0 0
      %7924 = vmatmul.mubr.bf16.gmra.mrb[0].mxu0 %v7548
      %v7925 = vpop.f32.mrb[0].mxu0
      %v7926 = vadd.f32 0.0, %v7925
      %v7927 = vpop.f32.mrb[0].mxu0
      %v7928 = vpop.f32.mrb[0].mxu0
      %v7929 = vadd.f32 0.0, %v7928
      %v7930 = vpop.f32.mrb[0].mxu0
      %7931 = vmatprep.mubr.bf16.mxu0 0
      %7932 = vmatmul.mubr.bf16.gmra.mrb[0].mxu0 %v7556
      %v7933 = vpop.f32.mrb[0].mxu0
      %v7934 = vadd.f32 0.0, %v7933
      %v7935 = vpop.f32.mrb[0].mxu0
      %v7936 = vpop.f32.mrb[0].mxu0
      %v7937 = vadd.f32 0.0, %v7936
      %v7938 = vpop.f32.mrb[0].mxu0
      %7939 = vmatprep.mubr.bf16.mxu0 0
      %7940 = vmatmul.mubr.bf16.gmra.mrb[0].mxu0 %v7564
      %v7941 = vpop.f32.mrb[0].mxu0
      %v7942 = vadd.f32 0.0, %v7941
      %v7943 = vpop.f32.mrb[0].mxu0
      %v7944 = vpop.f32.mrb[0].mxu0
      %v7945 = vadd.f32 0.0, %v7944
      %v7946 = vpop.f32.mrb[0].mxu0
      %7947 = vmatprep.mubr.bf16.mxu0 0
      %7948 = vmatmul.mubr.bf16.gmra.mrb[0].mxu0 %v7572
      %v7949 = vpop.f32.mrb[0].mxu0
      %v7950 = vadd.f32 0.0, %v7949
      %v7951 = vpop.f32.mrb[0].mxu0
      %v7952 = vpop.f32.mrb[0].mxu0
      %v7953 = vadd.f32 0.0, %v7952
      %v7954 = vpop.f32.mrb[0].mxu0
      %7955 = vmatprep.mubr.bf16.mxu0 0
      %7956 = vmatmul.mubr.bf16.gmra.mrb[0].mxu0 %v7580
      %v7957 = vpop.f32.mrb[0].mxu0
      %v7958 = vadd.f32 0.0, %v7957
      %v7959 = vpop.f32.mrb[0].mxu0
      %v7960 = vpop.f32.mrb[0].mxu0
      %v7961 = vadd.f32 0.0, %v7960
      %v7962 = vpop.f32.mrb[0].mxu0
      %7963 = vmatprep.mubr.bf16.mxu0 0
      %7964 = vmatmul.mubr.bf16.gmra.mrb[0].mxu0 %v7588
      %v7965 = vpop.f32.mrb[0].mxu0
      %v7966 = vadd.f32 0.0, %v7965
      %v7967 = vpop.f32.mrb[0].mxu0
      %v7968 = vpop.f32.mrb[0].mxu0
      %v7969 = vadd.f32 0.0, %v7968
      %v7970 = vpop.f32.mrb[0].mxu0
      %7971 = vmatprep.mubr.bf16.mxu0 0
      %7972 = vmatmul.mubr.bf16.gmra.mrb[0].mxu0 %v7596
      %v7973 = vpop.f32.mrb[0].mxu0
      %v7974 = vadd.f32 0.0, %v7973
      %v7975 = vpop.f32.mrb[0].mxu0
      %v7976 = vpop.f32.mrb[0].mxu0
      %v7977 = vadd.f32 0.0, %v7976
      %v7978 = vpop.f32.mrb[0].mxu0
      %7979 = vdwg.mxu0
      %v7980 = vadd.f32 %v7203, %v7714
      %v7981 = vadd.f32 %v7204, %v7717
      %v7982 = vadd.f32 %v7205, %v7722
      %v7983 = vadd.f32 %v7206, %v7725
      %v7984 = vadd.f32 %v7207, %v7730
      %v7985 = vadd.f32 %v7208, %v7733
      %v7986 = vadd.f32 %v7209, %v7738
      %v7987 = vadd.f32 %v7210, %v7741
      %v7988 = vadd.f32 %v7211, %v7746
      %v7989 = vadd.f32 %v7212, %v7749
      %v7990 = vadd.f32 %v7213, %v7754
      %v7991 = vadd.f32 %v7214, %v7757
      %v7992 = vadd.f32 %v7215, %v7762
      %v7993 = vadd.f32 %v7216, %v7765
      %v7994 = vadd.f32 %v7217, %v7770
      %v7995 = vadd.f32 %v7218, %v7773
      %v7996 = vadd.f32 %v7219, %v7778
      %v7997 = vadd.f32 %v7220, %v7781
      %v7998 = vadd.f32 %v7221, %v7786
      %v7999 = vadd.f32 %v7222, %v7789
      %v8000 = vadd.f32 %v7223, %v7794
      %v8001 = vadd.f32 %v7224, %v7797
      %v8002 = vadd.f32 %v7225, %v7802
      %v8003 = vadd.f32 %v7226, %v7805
      %v8004 = vadd.f32 %v7227, %v7810
      %v8005 = vadd.f32 %v7228, %v7813
      %v8006 = vadd.f32 %v7229, %v7818
      %v8007 = vadd.f32 %v7230, %v7821
      %v8008 = vadd.f32 %v7231, %v7826
      %v8009 = vadd.f32 %v7232, %v7829
      %v8010 = vadd.f32 %v7233, %v7834
      %v8011 = vadd.f32 %v7234, %v7837
      %v8012 = vadd.f32 %v7235, %v7854
      %v8013 = vadd.f32 %v7236, %v7857
      %v8014 = vadd.f32 %v7237, %v7862
      %v8015 = vadd.f32 %v7238, %v7865
      %v8016 = vadd.f32 %v7239, %v7870
      %v8017 = vadd.f32 %v7240, %v7873
      %v8018 = vadd.f32 %v7241, %v7878
      %v8019 = vadd.f32 %v7242, %v7881
      %v8020 = vadd.f32 %v7243, %v7886
      %v8021 = vadd.f32 %v7244, %v7889
      %v8022 = vadd.f32 %v7245, %v7894
      %v8023 = vadd.f32 %v7246, %v7897
      %v8024 = vadd.f32 %v7247, %v7902
      %v8025 = vadd.f32 %v7248, %v7905
      %v8026 = vadd.f32 %v7249, %v7910
      %v8027 = vadd.f32 %v7250, %v7913
      %v8028 = vadd.f32 %v7251, %v7918
      %v8029 = vadd.f32 %v7252, %v7921
      %v8030 = vadd.f32 %v7253, %v7926
      %v8031 = vadd.f32 %v7254, %v7929
      %v8032 = vadd.f32 %v7255, %v7934
      %v8033 = vadd.f32 %v7256, %v7937
      %v8034 = vadd.f32 %v7257, %v7942
      %v8035 = vadd.f32 %v7258, %v7945
      %v8036 = vadd.f32 %v7259, %v7950
      %v8037 = vadd.f32 %v7260, %v7953
      %v8038 = vadd.f32 %v7261, %v7958
      %v8039 = vadd.f32 %v7262, %v7961
      %v8040 = vadd.f32 %v7263, %v7966
      %v8041 = vadd.f32 %v7264, %v7969
      %v8042 = vadd.f32 %v7265, %v7974
      %v8043 = vadd.f32 %v7266, %v7977
      %s8044 = scalar_lea.vmem %s4, 448
      %v8045 = vld [vmem:[%s8044] sm:$0xf]
      %v8046 = vld [vmem:[%s8044 + $0x4] sm:$0xf]
      %v8047 = vld [vmem:[%s8044 + $0x8] sm:$0xf]
      %v8048 = vld [vmem:[%s8044 + $0xc] sm:$0xf]
      %v8049 = vld [vmem:[%s8044 + $0x10] sm:$0xf]
      %v8050 = vld [vmem:[%s8044 + $0x14] sm:$0xf]
      %v8051 = vld [vmem:[%s8044 + $0x18] sm:$0xf]
      %v8052 = vld [vmem:[%s8044 + $0x1c] sm:$0xf]
      %v8053 = vld [vmem:[%s8044 + $0x20] sm:$0xf]
      %v8054 = vld [vmem:[%s8044 + $0x24] sm:$0xf]
      %v8055 = vld [vmem:[%s8044 + $0x28] sm:$0xf]
      %v8056 = vld [vmem:[%s8044 + $0x2c] sm:$0xf]
      %v8057 = vld [vmem:[%s8044 + $0x30] sm:$0xf]
      %v8058 = vld [vmem:[%s8044 + $0x34] sm:$0xf]
      %v8059 = vld [vmem:[%s8044 + $0x38] sm:$0xf]
      %v8060 = vld [vmem:[%s8044 + $0x3c] sm:$0xf]
      %v8077 = vunpack.c.l.b16 %v8045
      %v8078 = vunpack.c.l.b16 %v8046
      %v8079 = vunpack.c.l.b16 %v8047
      %v8080 = vunpack.c.l.b16 %v8048
      %v8081 = vunpack.c.l.b16 %v8049
      %v8082 = vunpack.c.l.b16 %v8050
      %v8083 = vunpack.c.l.b16 %v8051
      %v8084 = vunpack.c.l.b16 %v8052
      %v8085 = vunpack.c.l.b16 %v8053
      %v8086 = vunpack.c.l.b16 %v8054
      %v8087 = vunpack.c.l.b16 %v8055
      %v8088 = vunpack.c.l.b16 %v8056
      %v8089 = vunpack.c.l.b16 %v8057
      %v8090 = vunpack.c.l.b16 %v8058
      %v8091 = vunpack.c.l.b16 %v8059
      %v8092 = vunpack.c.l.b16 %v8060
      %v8093 = vpack.c.b16 %v8078, %v8077
      %v8094 = vpack.c.b16 %v8080, %v8079
      %v8095 = vpack.c.b16 %v8082, %v8081
      %v8096 = vpack.c.b16 %v8084, %v8083
      %v8097 = vpack.c.b16 %v8086, %v8085
      %v8098 = vpack.c.b16 %v8088, %v8087
      %v8099 = vpack.c.b16 %v8090, %v8089
      %v8100 = vpack.c.b16 %v8092, %v8091
      %8109 = vmatprep.subr.bf16.mxu0 0
      %8110 = vmatpush1.bf16.msra.mxu0 %v8093
      %8111 = vmatprep.subr.bf16.mxu0 0
      %8112 = vmatpush1.bf16.msra.mxu0 %v8094
      %8113 = vmatprep.subr.bf16.mxu0 0
      %8114 = vmatpush1.bf16.msra.mxu0 %v8095
      %8115 = vmatprep.subr.bf16.mxu0 0
      %8116 = vmatpush1.bf16.msra.mxu0 %v8096
      %8117 = vmatprep.subr.bf16.mxu0 0
      %8118 = vmatpush1.bf16.msra.mxu0 %v8097
      %8119 = vmatprep.subr.bf16.mxu0 0
      %8120 = vmatpush1.bf16.msra.mxu0 %v8098
      %8121 = vmatprep.subr.bf16.mxu0 0
      %8122 = vmatpush1.bf16.msra.mxu0 %v8099
      %8123 = vmatprep.subr.bf16.mxu0 0
      %8124 = vmatpush1.bf16.msra.mxu0 %v8100
      %8125 = vmatprep.subr.bf16.mxu0 0
      %8126 = vmatpush1.bf16.msra.mxu0 0
      %8127 = vmatprep.subr.bf16.mxu0 0
      %8128 = vmatpush1.bf16.msra.mxu0 0
      %8129 = vmatprep.subr.bf16.mxu0 0
      %8130 = vmatpush1.bf16.msra.mxu0 0
      %8131 = vmatprep.subr.bf16.mxu0 0
      %8132 = vmatpush1.bf16.msra.mxu0 0
      %8133 = vmatprep.subr.bf16.mxu0 0
      %8134 = vmatpush1.bf16.msra.mxu0 0
      %8135 = vmatprep.subr.bf16.mxu0 0
      %8136 = vmatpush1.bf16.msra.mxu0 0
      %8137 = vmatprep.subr.bf16.mxu0 0
      %8138 = vmatpush1.bf16.msra.mxu0 0
      %8139 = vmatprep.subr.bf16.mxu0 0
      %8140 = vmatpush1.bf16.msra.mxu0 0
      %8141 = vmatprep.mubr.bf16.mxu0 0
      %8142 = vmatmul.mubr.bf16.gmra.mrb[0].mxu0 %v6458
      %v8143 = vpop.f32.mrb[0].mxu0
      %v8144 = vadd.f32 0.0, %v8143
      %v8145 = vpop.f32.mrb[0].mxu0
      %v8146 = vpop.f32.mrb[0].mxu0
      %v8147 = vadd.f32 0.0, %v8146
      %v8148 = vpop.f32.mrb[0].mxu0
      %8149 = vmatprep.mubr.bf16.mxu0 0
      %8150 = vmatmul.mubr.bf16.gmra.mrb[0].mxu0 %v6459
      %v8151 = vpop.f32.mrb[0].mxu0
      %v8152 = vadd.f32 0.0, %v8151
      %v8153 = vpop.f32.mrb[0].mxu0
      %v8154 = vpop.f32.mrb[0].mxu0
      %v8155 = vadd.f32 0.0, %v8154
      %v8156 = vpop.f32.mrb[0].mxu0
      %8157 = vmatprep.mubr.bf16.mxu0 0
      %8158 = vmatmul.mubr.bf16.gmra.mrb[0].mxu0 %v6460
      %v8159 = vpop.f32.mrb[0].mxu0
      %v8160 = vadd.f32 0.0, %v8159
      %v8161 = vpop.f32.mrb[0].mxu0
      %v8162 = vpop.f32.mrb[0].mxu0
      %v8163 = vadd.f32 0.0, %v8162
      %v8164 = vpop.f32.mrb[0].mxu0
      %8165 = vmatprep.mubr.bf16.mxu0 0
      %8166 = vmatmul.mubr.bf16.gmra.mrb[0].mxu0 %v6461
      %v8167 = vpop.f32.mrb[0].mxu0
      %v8168 = vadd.f32 0.0, %v8167
      %v8169 = vpop.f32.mrb[0].mxu0
      %v8170 = vpop.f32.mrb[0].mxu0
      %v8171 = vadd.f32 0.0, %v8170
      %v8172 = vpop.f32.mrb[0].mxu0
      %8173 = vmatprep.mubr.bf16.mxu0 0
      %8174 = vmatmul.mubr.bf16.gmra.mrb[0].mxu0 %v6462
      %v8175 = vpop.f32.mrb[0].mxu0
      %v8176 = vadd.f32 0.0, %v8175
      %v8177 = vpop.f32.mrb[0].mxu0
      %v8178 = vpop.f32.mrb[0].mxu0
      %v8179 = vadd.f32 0.0, %v8178
      %v8180 = vpop.f32.mrb[0].mxu0
      %8181 = vmatprep.mubr.bf16.mxu0 0
      %8182 = vmatmul.mubr.bf16.gmra.mrb[0].mxu0 %v6463
      %v8183 = vpop.f32.mrb[0].mxu0
      %v8184 = vadd.f32 0.0, %v8183
      %v8185 = vpop.f32.mrb[0].mxu0
      %v8186 = vpop.f32.mrb[0].mxu0
      %v8187 = vadd.f32 0.0, %v8186
      %v8188 = vpop.f32.mrb[0].mxu0
      %8189 = vmatprep.mubr.bf16.mxu0 0
      %8190 = vmatmul.mubr.bf16.gmra.mrb[0].mxu0 %v6464
      %v8191 = vpop.f32.mrb[0].mxu0
      %v8192 = vadd.f32 0.0, %v8191
      %v8193 = vpop.f32.mrb[0].mxu0
      %v8194 = vpop.f32.mrb[0].mxu0
      %v8195 = vadd.f32 0.0, %v8194
      %v8196 = vpop.f32.mrb[0].mxu0
      %8197 = vmatprep.mubr.bf16.mxu0 0
      %8198 = vmatmul.mubr.bf16.gmra.mrb[0].mxu0 %v6465
      %v8199 = vpop.f32.mrb[0].mxu0
      %v8200 = vadd.f32 0.0, %v8199
      %v8201 = vpop.f32.mrb[0].mxu0
      %v8202 = vpop.f32.mrb[0].mxu0
      %v8203 = vadd.f32 0.0, %v8202
      %v8204 = vpop.f32.mrb[0].mxu0
      %8205 = vmatprep.mubr.bf16.mxu0 0
      %8206 = vmatmul.mubr.bf16.gmra.mrb[0].mxu0 %v6466
      %v8207 = vpop.f32.mrb[0].mxu0
      %v8208 = vadd.f32 0.0, %v8207
      %v8209 = vpop.f32.mrb[0].mxu0
      %v8210 = vpop.f32.mrb[0].mxu0
      %v8211 = vadd.f32 0.0, %v8210
      %v8212 = vpop.f32.mrb[0].mxu0
      %8213 = vmatprep.mubr.bf16.mxu0 0
      %8214 = vmatmul.mubr.bf16.gmra.mrb[0].mxu0 %v6467
      %v8215 = vpop.f32.mrb[0].mxu0
      %v8216 = vadd.f32 0.0, %v8215
      %v8217 = vpop.f32.mrb[0].mxu0
      %v8218 = vpop.f32.mrb[0].mxu0
      %v8219 = vadd.f32 0.0, %v8218
      %v8220 = vpop.f32.mrb[0].mxu0
      %8221 = vmatprep.mubr.bf16.mxu0 0
      %8222 = vmatmul.mubr.bf16.gmra.mrb[0].mxu0 %v6468
      %v8223 = vpop.f32.mrb[0].mxu0
      %v8224 = vadd.f32 0.0, %v8223
      %v8225 = vpop.f32.mrb[0].mxu0
      %v8226 = vpop.f32.mrb[0].mxu0
      %v8227 = vadd.f32 0.0, %v8226
      %v8228 = vpop.f32.mrb[0].mxu0
      %8229 = vmatprep.mubr.bf16.mxu0 0
      %8230 = vmatmul.mubr.bf16.gmra.mrb[0].mxu0 %v6469
      %v8231 = vpop.f32.mrb[0].mxu0
      %v8232 = vadd.f32 0.0, %v8231
      %v8233 = vpop.f32.mrb[0].mxu0
      %v8234 = vpop.f32.mrb[0].mxu0
      %v8235 = vadd.f32 0.0, %v8234
      %v8236 = vpop.f32.mrb[0].mxu0
      %8237 = vmatprep.mubr.bf16.mxu0 0
      %8238 = vmatmul.mubr.bf16.gmra.mrb[0].mxu0 %v6470
      %v8239 = vpop.f32.mrb[0].mxu0
      %v8240 = vadd.f32 0.0, %v8239
      %v8241 = vpop.f32.mrb[0].mxu0
      %v8242 = vpop.f32.mrb[0].mxu0
      %v8243 = vadd.f32 0.0, %v8242
      %v8244 = vpop.f32.mrb[0].mxu0
      %8245 = vmatprep.mubr.bf16.mxu0 0
      %8246 = vmatmul.mubr.bf16.gmra.mrb[0].mxu0 %v6471
      %v8247 = vpop.f32.mrb[0].mxu0
      %v8248 = vadd.f32 0.0, %v8247
      %v8249 = vpop.f32.mrb[0].mxu0
      %v8250 = vpop.f32.mrb[0].mxu0
      %v8251 = vadd.f32 0.0, %v8250
      %v8252 = vpop.f32.mrb[0].mxu0
      %8253 = vmatprep.mubr.bf16.mxu0 0
      %8254 = vmatmul.mubr.bf16.gmra.mrb[0].mxu0 %v6472
      %v8255 = vpop.f32.mrb[0].mxu0
      %v8256 = vadd.f32 0.0, %v8255
      %v8257 = vpop.f32.mrb[0].mxu0
      %v8258 = vpop.f32.mrb[0].mxu0
      %v8259 = vadd.f32 0.0, %v8258
      %v8260 = vpop.f32.mrb[0].mxu0
      %8261 = vmatprep.mubr.bf16.mxu0 0
      %8262 = vmatmul.mubr.bf16.gmra.mrb[0].mxu0 %v6473
      %v8263 = vpop.f32.mrb[0].mxu0
      %v8264 = vadd.f32 0.0, %v8263
      %v8265 = vpop.f32.mrb[0].mxu0
      %v8266 = vpop.f32.mrb[0].mxu0
      %v8267 = vadd.f32 0.0, %v8266
      %v8268 = vpop.f32.mrb[0].mxu0
      %8269 = vmatprep.mubr.bf16.mxu0 0
      %8270 = vmatmul.mubr.bf16.gmra.mrb[0].mxu0 %v6474
      %v8271 = vpop.f32.mrb[0].mxu0
      %v8272 = vpop.f32.mrb[0].mxu0
      %v8273 = vpop.f32.mrb[0].mxu0
      %v8274 = vpop.f32.mrb[0].mxu0
      %8275 = vmatprep.mubr.bf16.mxu0 0
      %8276 = vmatmul.mubr.bf16.gmra.mrb[0].mxu0 %v6475
      %v8277 = vpop.f32.mrb[0].mxu0
      %v8278 = vpop.f32.mrb[0].mxu0
      %v8279 = vpop.f32.mrb[0].mxu0
      %v8280 = vpop.f32.mrb[0].mxu0
      %8281 = vmatprep.mubr.bf16.mxu0 0
      %8282 = vmatmul.mubr.bf16.gmra.mrb[0].mxu0 %v6476
      %v8283 = vpop.f32.mrb[0].mxu0
      %v8284 = vadd.f32 0.0, %v8283
      %v8285 = vpop.f32.mrb[0].mxu0
      %v8286 = vpop.f32.mrb[0].mxu0
      %v8287 = vadd.f32 0.0, %v8286
      %v8288 = vpop.f32.mrb[0].mxu0
      %8289 = vmatprep.mubr.bf16.mxu0 0
      %8290 = vmatmul.mubr.bf16.gmra.mrb[0].mxu0 %v6477
      %v8291 = vpop.f32.mrb[0].mxu0
      %v8292 = vadd.f32 0.0, %v8291
      %v8293 = vpop.f32.mrb[0].mxu0
      %v8294 = vpop.f32.mrb[0].mxu0
      %v8295 = vadd.f32 0.0, %v8294
      %v8296 = vpop.f32.mrb[0].mxu0
      %8297 = vmatprep.mubr.bf16.mxu0 0
      %8298 = vmatmul.mubr.bf16.gmra.mrb[0].mxu0 %v6478
      %v8299 = vpop.f32.mrb[0].mxu0
      %v8300 = vadd.f32 0.0, %v8299
      %v8301 = vpop.f32.mrb[0].mxu0
      %v8302 = vpop.f32.mrb[0].mxu0
      %v8303 = vadd.f32 0.0, %v8302
      %v8304 = vpop.f32.mrb[0].mxu0
      %8305 = vmatprep.mubr.bf16.mxu0 0
      %8306 = vmatmul.mubr.bf16.gmra.mrb[0].mxu0 %v6479
      %v8307 = vpop.f32.mrb[0].mxu0
      %v8308 = vadd.f32 0.0, %v8307
      %v8309 = vpop.f32.mrb[0].mxu0
      %v8310 = vpop.f32.mrb[0].mxu0
      %v8311 = vadd.f32 0.0, %v8310
      %v8312 = vpop.f32.mrb[0].mxu0
      %8313 = vmatprep.mubr.bf16.mxu0 0
      %8314 = vmatmul.mubr.bf16.gmra.mrb[0].mxu0 %v6480
      %v8315 = vpop.f32.mrb[0].mxu0
      %v8316 = vadd.f32 0.0, %v8315
      %v8317 = vpop.f32.mrb[0].mxu0
      %v8318 = vpop.f32.mrb[0].mxu0
      %v8319 = vadd.f32 0.0, %v8318
      %v8320 = vpop.f32.mrb[0].mxu0
      %8321 = vmatprep.mubr.bf16.mxu0 0
      %8322 = vmatmul.mubr.bf16.gmra.mrb[0].mxu0 %v6481
      %v8323 = vpop.f32.mrb[0].mxu0
      %v8324 = vadd.f32 0.0, %v8323
      %v8325 = vpop.f32.mrb[0].mxu0
      %v8326 = vpop.f32.mrb[0].mxu0
      %v8327 = vadd.f32 0.0, %v8326
      %v8328 = vpop.f32.mrb[0].mxu0
      %8329 = vmatprep.mubr.bf16.mxu0 0
      %8330 = vmatmul.mubr.bf16.gmra.mrb[0].mxu0 %v6482
      %v8331 = vpop.f32.mrb[0].mxu0
      %v8332 = vadd.f32 0.0, %v8331
      %v8333 = vpop.f32.mrb[0].mxu0
      %v8334 = vpop.f32.mrb[0].mxu0
      %v8335 = vadd.f32 0.0, %v8334
      %v8336 = vpop.f32.mrb[0].mxu0
      %8337 = vmatprep.mubr.bf16.mxu0 0
      %8338 = vmatmul.mubr.bf16.gmra.mrb[0].mxu0 %v6483
      %v8339 = vpop.f32.mrb[0].mxu0
      %v8340 = vadd.f32 0.0, %v8339
      %v8341 = vpop.f32.mrb[0].mxu0
      %v8342 = vpop.f32.mrb[0].mxu0
      %v8343 = vadd.f32 0.0, %v8342
      %v8344 = vpop.f32.mrb[0].mxu0
      %8345 = vmatprep.mubr.bf16.mxu0 0
      %8346 = vmatmul.mubr.bf16.gmra.mrb[0].mxu0 %v6484
      %v8347 = vpop.f32.mrb[0].mxu0
      %v8348 = vadd.f32 0.0, %v8347
      %v8349 = vpop.f32.mrb[0].mxu0
      %v8350 = vpop.f32.mrb[0].mxu0
      %v8351 = vadd.f32 0.0, %v8350
      %v8352 = vpop.f32.mrb[0].mxu0
      %8353 = vmatprep.mubr.bf16.mxu0 0
      %8354 = vmatmul.mubr.bf16.gmra.mrb[0].mxu0 %v6485
      %v8355 = vpop.f32.mrb[0].mxu0
      %v8356 = vadd.f32 0.0, %v8355
      %v8357 = vpop.f32.mrb[0].mxu0
      %v8358 = vpop.f32.mrb[0].mxu0
      %v8359 = vadd.f32 0.0, %v8358
      %v8360 = vpop.f32.mrb[0].mxu0
      %8361 = vmatprep.mubr.bf16.mxu0 0
      %8362 = vmatmul.mubr.bf16.gmra.mrb[0].mxu0 %v6486
      %v8363 = vpop.f32.mrb[0].mxu0
      %v8364 = vadd.f32 0.0, %v8363
      %v8365 = vpop.f32.mrb[0].mxu0
      %v8366 = vpop.f32.mrb[0].mxu0
      %v8367 = vadd.f32 0.0, %v8366
      %v8368 = vpop.f32.mrb[0].mxu0
      %8369 = vmatprep.mubr.bf16.mxu0 0
      %8370 = vmatmul.mubr.bf16.gmra.mrb[0].mxu0 %v6487
      %v8371 = vpop.f32.mrb[0].mxu0
      %v8372 = vadd.f32 0.0, %v8371
      %v8373 = vpop.f32.mrb[0].mxu0
      %v8374 = vpop.f32.mrb[0].mxu0
      %v8375 = vadd.f32 0.0, %v8374
      %v8376 = vpop.f32.mrb[0].mxu0
      %8377 = vmatprep.mubr.bf16.mxu0 0
      %8378 = vmatmul.mubr.bf16.gmra.mrb[0].mxu0 %v6488
      %v8379 = vpop.f32.mrb[0].mxu0
      %v8380 = vadd.f32 0.0, %v8379
      %v8381 = vpop.f32.mrb[0].mxu0
      %v8382 = vpop.f32.mrb[0].mxu0
      %v8383 = vadd.f32 0.0, %v8382
      %v8384 = vpop.f32.mrb[0].mxu0
      %8385 = vmatprep.mubr.bf16.mxu0 0
      %8386 = vmatmul.mubr.bf16.gmra.mrb[0].mxu0 %v6489
      %v8387 = vpop.f32.mrb[0].mxu0
      %v8388 = vadd.f32 0.0, %v8387
      %v8389 = vpop.f32.mrb[0].mxu0
      %v8390 = vpop.f32.mrb[0].mxu0
      %v8391 = vadd.f32 0.0, %v8390
      %v8392 = vpop.f32.mrb[0].mxu0
      %8393 = vmatprep.mubr.bf16.mxu0 0
      %8394 = vmatmul.mubr.bf16.gmra.mrb[0].mxu0 %v6490
      %v8395 = vpop.f32.mrb[0].mxu0
      %v8396 = vadd.f32 0.0, %v8395
      %v8397 = vpop.f32.mrb[0].mxu0
      %v8398 = vpop.f32.mrb[0].mxu0
      %v8399 = vadd.f32 0.0, %v8398
      %v8400 = vpop.f32.mrb[0].mxu0
      %8401 = vmatprep.mubr.bf16.mxu0 0
      %8402 = vmatmul.mubr.bf16.gmra.mrb[0].mxu0 %v7268
      %v8403 = vpop.f32.mrb[0].mxu0
      %v8404 = vadd.f32 0.0, %v8403
      %v8405 = vpop.f32.mrb[0].mxu0
      %v8406 = vpop.f32.mrb[0].mxu0
      %v8407 = vadd.f32 0.0, %v8406
      %v8408 = vpop.f32.mrb[0].mxu0
      %8409 = vdwg.mxu0
      %v8410 = vadd.f32 %v7980, %v8144
      %v8411 = vadd.f32 %v7981, %v8147
      %v8412 = vadd.f32 %v7982, %v8152
      %v8413 = vadd.f32 %v7983, %v8155
      %v8414 = vadd.f32 %v7984, %v8160
      %v8415 = vadd.f32 %v7985, %v8163
      %v8416 = vadd.f32 %v7986, %v8168
      %v8417 = vadd.f32 %v7987, %v8171
      %v8418 = vadd.f32 %v7988, %v8176
      %v8419 = vadd.f32 %v7989, %v8179
      %v8420 = vadd.f32 %v7990, %v8184
      %v8421 = vadd.f32 %v7991, %v8187
      %v8422 = vadd.f32 %v7992, %v8192
      %v8423 = vadd.f32 %v7993, %v8195
      %v8424 = vadd.f32 %v7994, %v8200
      %v8425 = vadd.f32 %v7995, %v8203
      %v8426 = vadd.f32 %v7996, %v8208
      %v8427 = vadd.f32 %v7997, %v8211
      %v8428 = vadd.f32 %v7998, %v8216
      %v8429 = vadd.f32 %v7999, %v8219
      %v8430 = vadd.f32 %v8000, %v8224
      %v8431 = vadd.f32 %v8001, %v8227
      %v8432 = vadd.f32 %v8002, %v8232
      %v8433 = vadd.f32 %v8003, %v8235
      %v8434 = vadd.f32 %v8004, %v8240
      %v8435 = vadd.f32 %v8005, %v8243
      %v8436 = vadd.f32 %v8006, %v8248
      %v8437 = vadd.f32 %v8007, %v8251
      %v8438 = vadd.f32 %v8008, %v8256
      %v8439 = vadd.f32 %v8009, %v8259
      %v8440 = vadd.f32 %v8010, %v8264
      %v8441 = vadd.f32 %v8011, %v8267
      %v8442 = vadd.f32 %v8012, %v8284
      %v8443 = vadd.f32 %v8013, %v8287
      %v8444 = vadd.f32 %v8014, %v8292
      %v8445 = vadd.f32 %v8015, %v8295
      %v8446 = vadd.f32 %v8016, %v8300
      %v8447 = vadd.f32 %v8017, %v8303
      %v8448 = vadd.f32 %v8018, %v8308
      %v8449 = vadd.f32 %v8019, %v8311
      %v8450 = vadd.f32 %v8020, %v8316
      %v8451 = vadd.f32 %v8021, %v8319
      %v8452 = vadd.f32 %v8022, %v8324
      %v8453 = vadd.f32 %v8023, %v8327
      %v8454 = vadd.f32 %v8024, %v8332
      %v8455 = vadd.f32 %v8025, %v8335
      %v8456 = vadd.f32 %v8026, %v8340
      %v8457 = vadd.f32 %v8027, %v8343
      %v8458 = vadd.f32 %v8028, %v8348
      %v8459 = vadd.f32 %v8029, %v8351
      %v8460 = vadd.f32 %v8030, %v8356
      %v8461 = vadd.f32 %v8031, %v8359
      %v8462 = vadd.f32 %v8032, %v8364
      %v8463 = vadd.f32 %v8033, %v8367
      %v8464 = vadd.f32 %v8034, %v8372
      %v8465 = vadd.f32 %v8035, %v8375
      %v8466 = vadd.f32 %v8036, %v8380
      %v8467 = vadd.f32 %v8037, %v8383
      %v8468 = vadd.f32 %v8038, %v8388
      %v8469 = vadd.f32 %v8039, %v8391
      %v8470 = vadd.f32 %v8040, %v8396
      %v8471 = vadd.f32 %v8041, %v8399
      %v8472 = vadd.f32 %v8042, %v8404
      %v8473 = vadd.f32 %v8043, %v8407
      %v8474 = vld [vmem:[#allocation2 + $0x18] sm:$0xff]
      %v8475 = vld [vmem:[#allocation2 + $0x20] sm:$0xff]
      %v8476 = vld [vmem:[#allocation2 + $0x28] sm:$0xff]
      %v8477 = vld [vmem:[#allocation2 + $0x30] sm:$0xff]
      %v8478 = vld [vmem:[#allocation2 + $0x38] sm:$0xff]
      %v8479 = vld [vmem:[#allocation2 + $0x40] sm:$0xff]
      %v8480 = vld [vmem:[#allocation2 + $0x48] sm:$0xff]
      %v8481 = vld [vmem:[#allocation2 + $0x50] sm:$0xff]
      %v8482 = vld [vmem:[#allocation2 + $0x58] sm:$0xff]
      %v8483 = vld [vmem:[#allocation2 + $0x60] sm:$0xff]
      %v8484 = vld [vmem:[#allocation2 + $0x68] sm:$0xff]
      %v8485 = vld [vmem:[#allocation2 + $0x70] sm:$0xff]
      %v8486 = vld [vmem:[#allocation2 + $0x78] sm:$0xff]
      %v8487 = vld [vmem:[#allocation2 + $0x80] sm:$0xff]
      %v8488 = vld [vmem:[#allocation2 + $0x88] sm:$0xff]
      %v8489 = vld [vmem:[#allocation2 + $0x90] sm:$0xff]
      %v8490 = vld [vmem:[#allocation2 + $0x98] sm:$0xff]
      %v8491 = vld [vmem:[#allocation2 + $0xa0] sm:$0xff]
      %v8492 = vld [vmem:[#allocation2 + $0xa8] sm:$0xff]
      %v8493 = vld [vmem:[#allocation2 + $0xb0] sm:$0xff]
      %v8494 = vld [vmem:[#allocation2 + $0xb8] sm:$0xff]
      %v8495 = vld [vmem:[#allocation2 + $0xc0] sm:$0xff]
      %v8496 = vld [vmem:[#allocation2 + $0xc8] sm:$0xff]
      %v8497 = vld [vmem:[#allocation2 + $0xd0] sm:$0xff]
      %v8498 = vld [vmem:[#allocation2 + $0xd8] sm:$0xff]
      %v8499 = vld [vmem:[#allocation2 + $0xe0] sm:$0xff]
      %v8500 = vld [vmem:[#allocation2 + $0xe8] sm:$0xff]
      %v8501 = vld [vmem:[#allocation2 + $0xf0] sm:$0xff]
      %v8502 = vld [vmem:[#allocation2 + $0xf8] sm:$0xff]
      %v8503 = vld [vmem:[#allocation2 + $0x100] sm:$0xff]
      %v8504 = vld [vmem:[#allocation2 + $0x108] sm:$0xff]
      %v8505 = vld [vmem:[#allocation2 + $0x110] sm:$0xff]
      %v8506 = vld [vmem:[#allocation2 + $0x118] sm:$0xff]
      %v8507 = vld [vmem:[#allocation2 + $0x120] sm:$0xff]
      %v8508 = vld [vmem:[#allocation2 + $0x128] sm:$0x1]
      %v8509 = vsel %vm4440, %v8474, 0
      %v8510 = vsel %vm4441, %v8475, 0
      %v8511 = vsel %vm4442, %v8476, 0
      %v8512 = vsel %vm4443, %v8477, 0
      %v8513 = vsel %vm4444, %v8478, 0
      %v8514 = vsel %vm4445, %v8479, 0
      %v8515 = vsel %vm4446, %v8480, 0
      %v8516 = vsel %vm4447, %v8481, 0
      %v8517 = vsel %vm4448, %v8482, 0
      %v8518 = vsel %vm4449, %v8483, 0
      %v8519 = vsel %vm4450, %v8484, 0
      %v8520 = vsel %vm4451, %v8485, 0
      %v8521 = vsel %vm4452, %v8486, 0
      %v8522 = vsel %vm4453, %v8487, 0
      %v8523 = vsel %vm4454, %v8488, 0
      %v8524 = vsel %vm4455, %v8489, 0
      %v8525 = vsel %vm4456, %v8490, 0
      %v8526 = vsel %vm4457, %v8491, 0
      %v8527 = vsel %vm4458, %v8492, 0
      %v8528 = vsel %vm4459, %v8493, 0
      %v8529 = vsel %vm4460, %v8494, 0
      %v8530 = vsel %vm4461, %v8495, 0
      %v8531 = vsel %vm4462, %v8496, 0
      %v8532 = vsel %vm4463, %v8497, 0
      %v8533 = vsel %vm4464, %v8498, 0
      %v8534 = vsel %vm4465, %v8499, 0
      %v8535 = vsel %vm4466, %v8500, 0
      %v8536 = vsel %vm4467, %v8501, 0
      %v8537 = vsel %vm4468, %v8502, 0
      %v8538 = vsel %vm4469, %v8503, 0
      %v8539 = vsel %vm4470, %v8504, 0
      %v8540 = vsel %vm4471, %v8505, 0
      %v8541 = vsel %vm4472, %v8506, 0
      %v8542 = vsel %vm4473, %v8507, 0
      %v8543 = vsel %vm4474, %v8508, 0
      %s8544 = scalar_lea.vmem %s4, 512
      %v8545 = vld [vmem:[%s8544] sm:$0xf]
      %v8546 = vld [vmem:[%s8544 + $0x4] sm:$0xf]
      %v8547 = vld [vmem:[%s8544 + $0x8] sm:$0xf]
      %v8548 = vld [vmem:[%s8544 + $0xc] sm:$0xf]
      %v8549 = vld [vmem:[%s8544 + $0x10] sm:$0xf]
      %v8550 = vld [vmem:[%s8544 + $0x14] sm:$0xf]
      %v8551 = vld [vmem:[%s8544 + $0x18] sm:$0xf]
      %v8552 = vld [vmem:[%s8544 + $0x1c] sm:$0xf]
      %v8553 = vld [vmem:[%s8544 + $0x20] sm:$0xf]
      %v8554 = vld [vmem:[%s8544 + $0x24] sm:$0xf]
      %v8555 = vld [vmem:[%s8544 + $0x28] sm:$0xf]
      %v8556 = vld [vmem:[%s8544 + $0x2c] sm:$0xf]
      %v8557 = vld [vmem:[%s8544 + $0x30] sm:$0xf]
      %v8558 = vld [vmem:[%s8544 + $0x34] sm:$0xf]
      %v8559 = vld [vmem:[%s8544 + $0x38] sm:$0xf]
      %v8560 = vld [vmem:[%s8544 + $0x3c] sm:$0xf]
      %v8562 = vshrl.u32 %v8509, 16
      %v8564 = vshll.u32 %v8509, 16
      %v8566 = vrot.slane %v8564, 1
      %v8567 = vor.u32 %v8562, %v8566
      %v8569 = vshll.u32 %v8510, 16
      %v8571 = vrot.slane %v8569, 1
      %v8572 = vsel %vm2376, %v8567, %v8571
      %v8573 = vshrl.u32 %v8510, 16
      %v8575 = vor.u32 %v8573, %v8571
      %v8577 = vshll.u32 %v8511, 16
      %v8579 = vrot.slane %v8577, 1
      %v8580 = vsel %vm2376, %v8575, %v8579
      %v8581 = vshrl.u32 %v8511, 16
      %v8583 = vor.u32 %v8581, %v8579
      %v8585 = vshll.u32 %v8512, 16
      %v8587 = vrot.slane %v8585, 1
      %v8588 = vsel %vm2376, %v8583, %v8587
      %v8589 = vshrl.u32 %v8512, 16
      %v8591 = vor.u32 %v8589, %v8587
      %v8593 = vshll.u32 %v8513, 16
      %v8595 = vrot.slane %v8593, 1
      %v8596 = vsel %vm2376, %v8591, %v8595
      %v8597 = vshrl.u32 %v8513, 16
      %v8599 = vor.u32 %v8597, %v8595
      %v8601 = vshll.u32 %v8514, 16
      %v8603 = vrot.slane %v8601, 1
      %v8604 = vsel %vm2376, %v8599, %v8603
      %v8605 = vshrl.u32 %v8514, 16
      %v8607 = vor.u32 %v8605, %v8603
      %v8609 = vshll.u32 %v8515, 16
      %v8611 = vrot.slane %v8609, 1
      %v8612 = vsel %vm2376, %v8607, %v8611
      %v8613 = vshrl.u32 %v8515, 16
      %v8615 = vor.u32 %v8613, %v8611
      %v8617 = vshll.u32 %v8516, 16
      %v8619 = vrot.slane %v8617, 1
      %v8620 = vsel %vm2376, %v8615, %v8619
      %v8621 = vshrl.u32 %v8516, 16
      %v8623 = vor.u32 %v8621, %v8619
      %v8625 = vshll.u32 %v8517, 16
      %v8627 = vrot.slane %v8625, 1
      %v8628 = vsel %vm2376, %v8623, %v8627
      %v8629 = vshrl.u32 %v8517, 16
      %v8631 = vor.u32 %v8629, %v8627
      %v8633 = vshll.u32 %v8518, 16
      %v8635 = vrot.slane %v8633, 1
      %v8636 = vsel %vm2376, %v8631, %v8635
      %v8637 = vshrl.u32 %v8518, 16
      %v8639 = vor.u32 %v8637, %v8635
      %v8641 = vshll.u32 %v8519, 16
      %v8643 = vrot.slane %v8641, 1
      %v8644 = vsel %vm2376, %v8639, %v8643
      %v8645 = vshrl.u32 %v8519, 16
      %v8647 = vor.u32 %v8645, %v8643
      %v8649 = vshll.u32 %v8520, 16
      %v8651 = vrot.slane %v8649, 1
      %v8652 = vsel %vm2376, %v8647, %v8651
      %v8653 = vshrl.u32 %v8520, 16
      %v8655 = vor.u32 %v8653, %v8651
      %v8657 = vshll.u32 %v8521, 16
      %v8659 = vrot.slane %v8657, 1
      %v8660 = vsel %vm2376, %v8655, %v8659
      %v8661 = vshrl.u32 %v8521, 16
      %v8663 = vor.u32 %v8661, %v8659
      %v8665 = vshll.u32 %v8522, 16
      %v8667 = vrot.slane %v8665, 1
      %v8668 = vsel %vm2376, %v8663, %v8667
      %v8669 = vshrl.u32 %v8522, 16
      %v8671 = vor.u32 %v8669, %v8667
      %v8673 = vshll.u32 %v8523, 16
      %v8675 = vrot.slane %v8673, 1
      %v8676 = vsel %vm2376, %v8671, %v8675
      %v8677 = vshrl.u32 %v8523, 16
      %v8679 = vor.u32 %v8677, %v8675
      %v8681 = vshll.u32 %v8524, 16
      %v8683 = vrot.slane %v8681, 1
      %v8684 = vsel %vm2376, %v8679, %v8683
      %v8685 = vshrl.u32 %v8524, 16
      %v8687 = vor.u32 %v8685, %v8683
      %v8689 = vshll.u32 %v8525, 16
      %v8691 = vrot.slane %v8689, 1
      %v8692 = vsel %vm2376, %v8687, %v8691
      %v8693 = vshrl.u32 %v8525, 16
      %v8695 = vor.u32 %v8693, %v8691
      %v8697 = vshll.u32 %v8526, 16
      %v8699 = vrot.slane %v8697, 1
      %v8700 = vsel %vm2376, %v8695, %v8699
      %v8701 = vshrl.u32 %v8526, 16
      %v8703 = vor.u32 %v8701, %v8699
      %v8705 = vshll.u32 %v8527, 16
      %v8707 = vrot.slane %v8705, 1
      %v8708 = vsel %vm2376, %v8703, %v8707
      %v8709 = vshrl.u32 %v8527, 16
      %v8711 = vor.u32 %v8709, %v8707
      %v8713 = vshll.u32 %v8528, 16
      %v8715 = vrot.slane %v8713, 1
      %v8716 = vsel %vm2376, %v8711, %v8715
      %v8717 = vshrl.u32 %v8528, 16
      %v8719 = vor.u32 %v8717, %v8715
      %v8721 = vshll.u32 %v8529, 16
      %v8723 = vrot.slane %v8721, 1
      %v8724 = vsel %vm2376, %v8719, %v8723
      %v8725 = vshrl.u32 %v8529, 16
      %v8727 = vor.u32 %v8725, %v8723
      %v8729 = vshll.u32 %v8530, 16
      %v8731 = vrot.slane %v8729, 1
      %v8732 = vsel %vm2376, %v8727, %v8731
      %v8733 = vshrl.u32 %v8530, 16
      %v8735 = vor.u32 %v8733, %v8731
      %v8737 = vshll.u32 %v8531, 16
      %v8739 = vrot.slane %v8737, 1
      %v8740 = vsel %vm2376, %v8735, %v8739
      %v8741 = vshrl.u32 %v8531, 16
      %v8743 = vor.u32 %v8741, %v8739
      %v8745 = vshll.u32 %v8532, 16
      %v8747 = vrot.slane %v8745, 1
      %v8748 = vsel %vm2376, %v8743, %v8747
      %v8749 = vshrl.u32 %v8532, 16
      %v8751 = vor.u32 %v8749, %v8747
      %v8753 = vshll.u32 %v8533, 16
      %v8755 = vrot.slane %v8753, 1
      %v8756 = vsel %vm2376, %v8751, %v8755
      %v8757 = vshrl.u32 %v8533, 16
      %v8759 = vor.u32 %v8757, %v8755
      %v8761 = vshll.u32 %v8534, 16
      %v8763 = vrot.slane %v8761, 1
      %v8764 = vsel %vm2376, %v8759, %v8763
      %v8765 = vshrl.u32 %v8534, 16
      %v8767 = vor.u32 %v8765, %v8763
      %v8769 = vshll.u32 %v8535, 16
      %v8771 = vrot.slane %v8769, 1
      %v8772 = vsel %vm2376, %v8767, %v8771
      %v8773 = vshrl.u32 %v8535, 16
      %v8775 = vor.u32 %v8773, %v8771
      %v8777 = vshll.u32 %v8536, 16
      %v8779 = vrot.slane %v8777, 1
      %v8780 = vsel %vm2376, %v8775, %v8779
      %v8781 = vshrl.u32 %v8536, 16
      %v8783 = vor.u32 %v8781, %v8779
      %v8785 = vshll.u32 %v8537, 16
      %v8787 = vrot.slane %v8785, 1
      %v8788 = vsel %vm2376, %v8783, %v8787
      %v8789 = vshrl.u32 %v8537, 16
      %v8791 = vor.u32 %v8789, %v8787
      %v8793 = vshll.u32 %v8538, 16
      %v8795 = vrot.slane %v8793, 1
      %v8796 = vsel %vm2376, %v8791, %v8795
      %v8797 = vshrl.u32 %v8538, 16
      %v8799 = vor.u32 %v8797, %v8795
      %v8801 = vshll.u32 %v8539, 16
      %v8803 = vrot.slane %v8801, 1
      %v8804 = vsel %vm2376, %v8799, %v8803
      %v8805 = vshrl.u32 %v8539, 16
      %v8807 = vor.u32 %v8805, %v8803
      %v8809 = vshll.u32 %v8540, 16
      %v8811 = vrot.slane %v8809, 1
      %v8812 = vsel %vm2376, %v8807, %v8811
      %v8813 = vshrl.u32 %v8540, 16
      %v8815 = vor.u32 %v8813, %v8811
      %v8817 = vshll.u32 %v8541, 16
      %v8819 = vrot.slane %v8817, 1
      %v8820 = vsel %vm2376, %v8815, %v8819
      %v8821 = vshrl.u32 %v8541, 16
      %v8823 = vor.u32 %v8821, %v8819
      %v8825 = vshll.u32 %v8542, 16
      %v8827 = vrot.slane %v8825, 1
      %v8828 = vsel %vm2376, %v8823, %v8827
      %v8829 = vshrl.u32 %v8542, 16
      %v8831 = vor.u32 %v8829, %v8827
      %v8833 = vshll.u32 %v8543, 16
      %v8835 = vrot.slane %v8833, 1
      %v8836 = vsel %vm2376, %v8831, %v8835
      %v8887 = vunpack.c.l.b16 %v8545
      %v8888 = vunpack.c.l.b16 %v8546
      %v8889 = vunpack.c.l.b16 %v8547
      %v8890 = vunpack.c.l.b16 %v8548
      %v8891 = vunpack.c.l.b16 %v8549
      %v8892 = vunpack.c.l.b16 %v8550
      %v8893 = vunpack.c.l.b16 %v8551
      %v8894 = vunpack.c.l.b16 %v8552
      %v8895 = vunpack.c.l.b16 %v8553
      %v8896 = vunpack.c.l.b16 %v8554
      %v8897 = vunpack.c.l.b16 %v8555
      %v8898 = vunpack.c.l.b16 %v8556
      %v8899 = vunpack.c.l.b16 %v8557
      %v8900 = vunpack.c.l.b16 %v8558
      %v8901 = vunpack.c.l.b16 %v8559
      %v8902 = vunpack.c.l.b16 %v8560
      %v8903 = vpack.c.b16 %v8888, %v8887
      %v8904 = vpack.c.b16 %v8890, %v8889
      %v8905 = vpack.c.b16 %v8892, %v8891
      %v8906 = vpack.c.b16 %v8894, %v8893
      %v8907 = vpack.c.b16 %v8896, %v8895
      %v8908 = vpack.c.b16 %v8898, %v8897
      %v8909 = vpack.c.b16 %v8900, %v8899
      %v8910 = vpack.c.b16 %v8902, %v8901
      %8919 = vmatprep.subr.bf16.mxu0 0
      %8920 = vmatpush1.bf16.msra.mxu0 %v8903
      %8921 = vmatprep.subr.bf16.mxu0 0
      %8922 = vmatpush1.bf16.msra.mxu0 %v8904
      %8923 = vmatprep.subr.bf16.mxu0 0
      %8924 = vmatpush1.bf16.msra.mxu0 %v8905
      %8925 = vmatprep.subr.bf16.mxu0 0
      %8926 = vmatpush1.bf16.msra.mxu0 %v8906
      %8927 = vmatprep.subr.bf16.mxu0 0
      %8928 = vmatpush1.bf16.msra.mxu0 %v8907
      %8929 = vmatprep.subr.bf16.mxu0 0
      %8930 = vmatpush1.bf16.msra.mxu0 %v8908
      %8931 = vmatprep.subr.bf16.mxu0 0
      %8932 = vmatpush1.bf16.msra.mxu0 %v8909
      %8933 = vmatprep.subr.bf16.mxu0 0
      %8934 = vmatpush1.bf16.msra.mxu0 %v8910
      %8935 = vmatprep.subr.bf16.mxu0 0
      %8936 = vmatpush1.bf16.msra.mxu0 0
      %8937 = vmatprep.subr.bf16.mxu0 0
      %8938 = vmatpush1.bf16.msra.mxu0 0
      %8939 = vmatprep.subr.bf16.mxu0 0
      %8940 = vmatpush1.bf16.msra.mxu0 0
      %8941 = vmatprep.subr.bf16.mxu0 0
      %8942 = vmatpush1.bf16.msra.mxu0 0
      %8943 = vmatprep.subr.bf16.mxu0 0
      %8944 = vmatpush1.bf16.msra.mxu0 0
      %8945 = vmatprep.subr.bf16.mxu0 0
      %8946 = vmatpush1.bf16.msra.mxu0 0
      %8947 = vmatprep.subr.bf16.mxu0 0
      %8948 = vmatpush1.bf16.msra.mxu0 0
      %8949 = vmatprep.subr.bf16.mxu0 0
      %8950 = vmatpush1.bf16.msra.mxu0 0
      %8951 = vmatprep.mubr.bf16.mxu0 0
      %8952 = vmatmul.mubr.bf16.gmra.mrb[0].mxu0 %v8572
      %v8953 = vpop.f32.mrb[0].mxu0
      %v8954 = vadd.f32 0.0, %v8953
      %v8955 = vpop.f32.mrb[0].mxu0
      %v8956 = vpop.f32.mrb[0].mxu0
      %v8957 = vadd.f32 0.0, %v8956
      %v8958 = vpop.f32.mrb[0].mxu0
      %8959 = vmatprep.mubr.bf16.mxu0 0
      %8960 = vmatmul.mubr.bf16.gmra.mrb[0].mxu0 %v8580
      %v8961 = vpop.f32.mrb[0].mxu0
      %v8962 = vadd.f32 0.0, %v8961
      %v8963 = vpop.f32.mrb[0].mxu0
      %v8964 = vpop.f32.mrb[0].mxu0
      %v8965 = vadd.f32 0.0, %v8964
      %v8966 = vpop.f32.mrb[0].mxu0
      %8967 = vmatprep.mubr.bf16.mxu0 0
      %8968 = vmatmul.mubr.bf16.gmra.mrb[0].mxu0 %v8588
      %v8969 = vpop.f32.mrb[0].mxu0
      %v8970 = vadd.f32 0.0, %v8969
      %v8971 = vpop.f32.mrb[0].mxu0
      %v8972 = vpop.f32.mrb[0].mxu0
      %v8973 = vadd.f32 0.0, %v8972
      %v8974 = vpop.f32.mrb[0].mxu0
      %8975 = vmatprep.mubr.bf16.mxu0 0
      %8976 = vmatmul.mubr.bf16.gmra.mrb[0].mxu0 %v8596
      %v8977 = vpop.f32.mrb[0].mxu0
      %v8978 = vadd.f32 0.0, %v8977
      %v8979 = vpop.f32.mrb[0].mxu0
      %v8980 = vpop.f32.mrb[0].mxu0
      %v8981 = vadd.f32 0.0, %v8980
      %v8982 = vpop.f32.mrb[0].mxu0
      %8983 = vmatprep.mubr.bf16.mxu0 0
      %8984 = vmatmul.mubr.bf16.gmra.mrb[0].mxu0 %v8604
      %v8985 = vpop.f32.mrb[0].mxu0
      %v8986 = vadd.f32 0.0, %v8985
      %v8987 = vpop.f32.mrb[0].mxu0
      %v8988 = vpop.f32.mrb[0].mxu0
      %v8989 = vadd.f32 0.0, %v8988
      %v8990 = vpop.f32.mrb[0].mxu0
      %8991 = vmatprep.mubr.bf16.mxu0 0
      %8992 = vmatmul.mubr.bf16.gmra.mrb[0].mxu0 %v8612
      %v8993 = vpop.f32.mrb[0].mxu0
      %v8994 = vadd.f32 0.0, %v8993
      %v8995 = vpop.f32.mrb[0].mxu0
      %v8996 = vpop.f32.mrb[0].mxu0
      %v8997 = vadd.f32 0.0, %v8996
      %v8998 = vpop.f32.mrb[0].mxu0
      %8999 = vmatprep.mubr.bf16.mxu0 0
      %9000 = vmatmul.mubr.bf16.gmra.mrb[0].mxu0 %v8620
      %v9001 = vpop.f32.mrb[0].mxu0
      %v9002 = vadd.f32 0.0, %v9001
      %v9003 = vpop.f32.mrb[0].mxu0
      %v9004 = vpop.f32.mrb[0].mxu0
      %v9005 = vadd.f32 0.0, %v9004
      %v9006 = vpop.f32.mrb[0].mxu0
      %9007 = vmatprep.mubr.bf16.mxu0 0
      %9008 = vmatmul.mubr.bf16.gmra.mrb[0].mxu0 %v8628
      %v9009 = vpop.f32.mrb[0].mxu0
      %v9010 = vadd.f32 0.0, %v9009
      %v9011 = vpop.f32.mrb[0].mxu0
      %v9012 = vpop.f32.mrb[0].mxu0
      %v9013 = vadd.f32 0.0, %v9012
      %v9014 = vpop.f32.mrb[0].mxu0
      %9015 = vmatprep.mubr.bf16.mxu0 0
      %9016 = vmatmul.mubr.bf16.gmra.mrb[0].mxu0 %v8636
      %v9017 = vpop.f32.mrb[0].mxu0
      %v9018 = vadd.f32 0.0, %v9017
      %v9019 = vpop.f32.mrb[0].mxu0
      %v9020 = vpop.f32.mrb[0].mxu0
      %v9021 = vadd.f32 0.0, %v9020
      %v9022 = vpop.f32.mrb[0].mxu0
      %9023 = vmatprep.mubr.bf16.mxu0 0
      %9024 = vmatmul.mubr.bf16.gmra.mrb[0].mxu0 %v8644
      %v9025 = vpop.f32.mrb[0].mxu0
      %v9026 = vadd.f32 0.0, %v9025
      %v9027 = vpop.f32.mrb[0].mxu0
      %v9028 = vpop.f32.mrb[0].mxu0
      %v9029 = vadd.f32 0.0, %v9028
      %v9030 = vpop.f32.mrb[0].mxu0
      %9031 = vmatprep.mubr.bf16.mxu0 0
      %9032 = vmatmul.mubr.bf16.gmra.mrb[0].mxu0 %v8652
      %v9033 = vpop.f32.mrb[0].mxu0
      %v9034 = vadd.f32 0.0, %v9033
      %v9035 = vpop.f32.mrb[0].mxu0
      %v9036 = vpop.f32.mrb[0].mxu0
      %v9037 = vadd.f32 0.0, %v9036
      %v9038 = vpop.f32.mrb[0].mxu0
      %9039 = vmatprep.mubr.bf16.mxu0 0
      %9040 = vmatmul.mubr.bf16.gmra.mrb[0].mxu0 %v8660
      %v9041 = vpop.f32.mrb[0].mxu0
      %v9042 = vadd.f32 0.0, %v9041
      %v9043 = vpop.f32.mrb[0].mxu0
      %v9044 = vpop.f32.mrb[0].mxu0
      %v9045 = vadd.f32 0.0, %v9044
      %v9046 = vpop.f32.mrb[0].mxu0
      %9047 = vmatprep.mubr.bf16.mxu0 0
      %9048 = vmatmul.mubr.bf16.gmra.mrb[0].mxu0 %v8668
      %v9049 = vpop.f32.mrb[0].mxu0
      %v9050 = vadd.f32 0.0, %v9049
      %v9051 = vpop.f32.mrb[0].mxu0
      %v9052 = vpop.f32.mrb[0].mxu0
      %v9053 = vadd.f32 0.0, %v9052
      %v9054 = vpop.f32.mrb[0].mxu0
      %9055 = vmatprep.mubr.bf16.mxu0 0
      %9056 = vmatmul.mubr.bf16.gmra.mrb[0].mxu0 %v8676
      %v9057 = vpop.f32.mrb[0].mxu0
      %v9058 = vadd.f32 0.0, %v9057
      %v9059 = vpop.f32.mrb[0].mxu0
      %v9060 = vpop.f32.mrb[0].mxu0
      %v9061 = vadd.f32 0.0, %v9060
      %v9062 = vpop.f32.mrb[0].mxu0
      %9063 = vmatprep.mubr.bf16.mxu0 0
      %9064 = vmatmul.mubr.bf16.gmra.mrb[0].mxu0 %v8684
      %v9065 = vpop.f32.mrb[0].mxu0
      %v9066 = vadd.f32 0.0, %v9065
      %v9067 = vpop.f32.mrb[0].mxu0
      %v9068 = vpop.f32.mrb[0].mxu0
      %v9069 = vadd.f32 0.0, %v9068
      %v9070 = vpop.f32.mrb[0].mxu0
      %9071 = vmatprep.mubr.bf16.mxu0 0
      %9072 = vmatmul.mubr.bf16.gmra.mrb[0].mxu0 %v8692
      %v9073 = vpop.f32.mrb[0].mxu0
      %v9074 = vadd.f32 0.0, %v9073
      %v9075 = vpop.f32.mrb[0].mxu0
      %v9076 = vpop.f32.mrb[0].mxu0
      %v9077 = vadd.f32 0.0, %v9076
      %v9078 = vpop.f32.mrb[0].mxu0
      %9079 = vmatprep.mubr.bf16.mxu0 0
      %9080 = vmatmul.mubr.bf16.gmra.mrb[0].mxu0 %v8700
      %v9081 = vpop.f32.mrb[0].mxu0
      %v9082 = vpop.f32.mrb[0].mxu0
      %v9083 = vpop.f32.mrb[0].mxu0
      %v9084 = vpop.f32.mrb[0].mxu0
      %9085 = vmatprep.mubr.bf16.mxu0 0
      %9086 = vmatmul.mubr.bf16.gmra.mrb[0].mxu0 %v8708
      %v9087 = vpop.f32.mrb[0].mxu0
      %v9088 = vpop.f32.mrb[0].mxu0
      %v9089 = vpop.f32.mrb[0].mxu0
      %v9090 = vpop.f32.mrb[0].mxu0
      %9091 = vmatprep.mubr.bf16.mxu0 0
      %9092 = vmatmul.mubr.bf16.gmra.mrb[0].mxu0 %v8716
      %v9093 = vpop.f32.mrb[0].mxu0
      %v9094 = vadd.f32 0.0, %v9093
      %v9095 = vpop.f32.mrb[0].mxu0
      %v9096 = vpop.f32.mrb[0].mxu0
      %v9097 = vadd.f32 0.0, %v9096
      %v9098 = vpop.f32.mrb[0].mxu0
      %9099 = vmatprep.mubr.bf16.mxu0 0
      %9100 = vmatmul.mubr.bf16.gmra.mrb[0].mxu0 %v8724
      %v9101 = vpop.f32.mrb[0].mxu0
      %v9102 = vadd.f32 0.0, %v9101
      %v9103 = vpop.f32.mrb[0].mxu0
      %v9104 = vpop.f32.mrb[0].mxu0
      %v9105 = vadd.f32 0.0, %v9104
      %v9106 = vpop.f32.mrb[0].mxu0
      %9107 = vmatprep.mubr.bf16.mxu0 0
      %9108 = vmatmul.mubr.bf16.gmra.mrb[0].mxu0 %v8732
      %v9109 = vpop.f32.mrb[0].mxu0
      %v9110 = vadd.f32 0.0, %v9109
      %v9111 = vpop.f32.mrb[0].mxu0
      %v9112 = vpop.f32.mrb[0].mxu0
      %v9113 = vadd.f32 0.0, %v9112
      %v9114 = vpop.f32.mrb[0].mxu0
      %9115 = vmatprep.mubr.bf16.mxu0 0
      %9116 = vmatmul.mubr.bf16.gmra.mrb[0].mxu0 %v8740
      %v9117 = vpop.f32.mrb[0].mxu0
      %v9118 = vadd.f32 0.0, %v9117
      %v9119 = vpop.f32.mrb[0].mxu0
      %v9120 = vpop.f32.mrb[0].mxu0
      %v9121 = vadd.f32 0.0, %v9120
      %v9122 = vpop.f32.mrb[0].mxu0
      %9123 = vmatprep.mubr.bf16.mxu0 0
      %9124 = vmatmul.mubr.bf16.gmra.mrb[0].mxu0 %v8748
      %v9125 = vpop.f32.mrb[0].mxu0
      %v9126 = vadd.f32 0.0, %v9125
      %v9127 = vpop.f32.mrb[0].mxu0
      %v9128 = vpop.f32.mrb[0].mxu0
      %v9129 = vadd.f32 0.0, %v9128
      %v9130 = vpop.f32.mrb[0].mxu0
      %9131 = vmatprep.mubr.bf16.mxu0 0
      %9132 = vmatmul.mubr.bf16.gmra.mrb[0].mxu0 %v8756
      %v9133 = vpop.f32.mrb[0].mxu0
      %v9134 = vadd.f32 0.0, %v9133
      %v9135 = vpop.f32.mrb[0].mxu0
      %v9136 = vpop.f32.mrb[0].mxu0
      %v9137 = vadd.f32 0.0, %v9136
      %v9138 = vpop.f32.mrb[0].mxu0
      %9139 = vmatprep.mubr.bf16.mxu0 0
      %9140 = vmatmul.mubr.bf16.gmra.mrb[0].mxu0 %v8764
      %v9141 = vpop.f32.mrb[0].mxu0
      %v9142 = vadd.f32 0.0, %v9141
      %v9143 = vpop.f32.mrb[0].mxu0
      %v9144 = vpop.f32.mrb[0].mxu0
      %v9145 = vadd.f32 0.0, %v9144
      %v9146 = vpop.f32.mrb[0].mxu0
      %9147 = vmatprep.mubr.bf16.mxu0 0
      %9148 = vmatmul.mubr.bf16.gmra.mrb[0].mxu0 %v8772
      %v9149 = vpop.f32.mrb[0].mxu0
      %v9150 = vadd.f32 0.0, %v9149
      %v9151 = vpop.f32.mrb[0].mxu0
      %v9152 = vpop.f32.mrb[0].mxu0
      %v9153 = vadd.f32 0.0, %v9152
      %v9154 = vpop.f32.mrb[0].mxu0
      %9155 = vmatprep.mubr.bf16.mxu0 0
      %9156 = vmatmul.mubr.bf16.gmra.mrb[0].mxu0 %v8780
      %v9157 = vpop.f32.mrb[0].mxu0
      %v9158 = vadd.f32 0.0, %v9157
      %v9159 = vpop.f32.mrb[0].mxu0
      %v9160 = vpop.f32.mrb[0].mxu0
      %v9161 = vadd.f32 0.0, %v9160
      %v9162 = vpop.f32.mrb[0].mxu0
      %9163 = vmatprep.mubr.bf16.mxu0 0
      %9164 = vmatmul.mubr.bf16.gmra.mrb[0].mxu0 %v8788
      %v9165 = vpop.f32.mrb[0].mxu0
      %v9166 = vadd.f32 0.0, %v9165
      %v9167 = vpop.f32.mrb[0].mxu0
      %v9168 = vpop.f32.mrb[0].mxu0
      %v9169 = vadd.f32 0.0, %v9168
      %v9170 = vpop.f32.mrb[0].mxu0
      %9171 = vmatprep.mubr.bf16.mxu0 0
      %9172 = vmatmul.mubr.bf16.gmra.mrb[0].mxu0 %v8796
      %v9173 = vpop.f32.mrb[0].mxu0
      %v9174 = vadd.f32 0.0, %v9173
      %v9175 = vpop.f32.mrb[0].mxu0
      %v9176 = vpop.f32.mrb[0].mxu0
      %v9177 = vadd.f32 0.0, %v9176
      %v9178 = vpop.f32.mrb[0].mxu0
      %9179 = vmatprep.mubr.bf16.mxu0 0
      %9180 = vmatmul.mubr.bf16.gmra.mrb[0].mxu0 %v8804
      %v9181 = vpop.f32.mrb[0].mxu0
      %v9182 = vadd.f32 0.0, %v9181
      %v9183 = vpop.f32.mrb[0].mxu0
      %v9184 = vpop.f32.mrb[0].mxu0
      %v9185 = vadd.f32 0.0, %v9184
      %v9186 = vpop.f32.mrb[0].mxu0
      %9187 = vmatprep.mubr.bf16.mxu0 0
      %9188 = vmatmul.mubr.bf16.gmra.mrb[0].mxu0 %v8812
      %v9189 = vpop.f32.mrb[0].mxu0
      %v9190 = vadd.f32 0.0, %v9189
      %v9191 = vpop.f32.mrb[0].mxu0
      %v9192 = vpop.f32.mrb[0].mxu0
      %v9193 = vadd.f32 0.0, %v9192
      %v9194 = vpop.f32.mrb[0].mxu0
      %9195 = vmatprep.mubr.bf16.mxu0 0
      %9196 = vmatmul.mubr.bf16.gmra.mrb[0].mxu0 %v8820
      %v9197 = vpop.f32.mrb[0].mxu0
      %v9198 = vadd.f32 0.0, %v9197
      %v9199 = vpop.f32.mrb[0].mxu0
      %v9200 = vpop.f32.mrb[0].mxu0
      %v9201 = vadd.f32 0.0, %v9200
      %v9202 = vpop.f32.mrb[0].mxu0
      %9203 = vmatprep.mubr.bf16.mxu0 0
      %9204 = vmatmul.mubr.bf16.gmra.mrb[0].mxu0 %v8828
      %v9205 = vpop.f32.mrb[0].mxu0
      %v9206 = vadd.f32 0.0, %v9205
      %v9207 = vpop.f32.mrb[0].mxu0
      %v9208 = vpop.f32.mrb[0].mxu0
      %v9209 = vadd.f32 0.0, %v9208
      %v9210 = vpop.f32.mrb[0].mxu0
      %9211 = vmatprep.mubr.bf16.mxu0 0
      %9212 = vmatmul.mubr.bf16.gmra.mrb[0].mxu0 %v8836
      %v9213 = vpop.f32.mrb[0].mxu0
      %v9214 = vadd.f32 0.0, %v9213
      %v9215 = vpop.f32.mrb[0].mxu0
      %v9216 = vpop.f32.mrb[0].mxu0
      %v9217 = vadd.f32 0.0, %v9216
      %v9218 = vpop.f32.mrb[0].mxu0
      %9219 = vdwg.mxu0
      %v9220 = vadd.f32 %v8410, %v8954
      %v9221 = vadd.f32 %v8411, %v8957
      %v9222 = vadd.f32 %v8412, %v8962
      %v9223 = vadd.f32 %v8413, %v8965
      %v9224 = vadd.f32 %v8414, %v8970
      %v9225 = vadd.f32 %v8415, %v8973
      %v9226 = vadd.f32 %v8416, %v8978
      %v9227 = vadd.f32 %v8417, %v8981
      %v9228 = vadd.f32 %v8418, %v8986
      %v9229 = vadd.f32 %v8419, %v8989
      %v9230 = vadd.f32 %v8420, %v8994
      %v9231 = vadd.f32 %v8421, %v8997
      %v9232 = vadd.f32 %v8422, %v9002
      %v9233 = vadd.f32 %v8423, %v9005
      %v9234 = vadd.f32 %v8424, %v9010
      %v9235 = vadd.f32 %v8425, %v9013
      %v9236 = vadd.f32 %v8426, %v9018
      %v9237 = vadd.f32 %v8427, %v9021
      %v9238 = vadd.f32 %v8428, %v9026
      %v9239 = vadd.f32 %v8429, %v9029
      %v9240 = vadd.f32 %v8430, %v9034
      %v9241 = vadd.f32 %v8431, %v9037
      %v9242 = vadd.f32 %v8432, %v9042
      %v9243 = vadd.f32 %v8433, %v9045
      %v9244 = vadd.f32 %v8434, %v9050
      %v9245 = vadd.f32 %v8435, %v9053
      %v9246 = vadd.f32 %v8436, %v9058
      %v9247 = vadd.f32 %v8437, %v9061
      %v9248 = vadd.f32 %v8438, %v9066
      %v9249 = vadd.f32 %v8439, %v9069
      %v9250 = vadd.f32 %v8440, %v9074
      %v9251 = vadd.f32 %v8441, %v9077
      %v9252 = vadd.f32 %v8442, %v9094
      %v9253 = vadd.f32 %v8443, %v9097
      %v9254 = vadd.f32 %v8444, %v9102
      %v9255 = vadd.f32 %v8445, %v9105
      %v9256 = vadd.f32 %v8446, %v9110
      %v9257 = vadd.f32 %v8447, %v9113
      %v9258 = vadd.f32 %v8448, %v9118
      %v9259 = vadd.f32 %v8449, %v9121
      %v9260 = vadd.f32 %v8450, %v9126
      %v9261 = vadd.f32 %v8451, %v9129
      %v9262 = vadd.f32 %v8452, %v9134
      %v9263 = vadd.f32 %v8453, %v9137
      %v9264 = vadd.f32 %v8454, %v9142
      %v9265 = vadd.f32 %v8455, %v9145
      %v9266 = vadd.f32 %v8456, %v9150
      %v9267 = vadd.f32 %v8457, %v9153
      %v9268 = vadd.f32 %v8458, %v9158
      %v9269 = vadd.f32 %v8459, %v9161
      %v9270 = vadd.f32 %v8460, %v9166
      %v9271 = vadd.f32 %v8461, %v9169
      %v9272 = vadd.f32 %v8462, %v9174
      %v9273 = vadd.f32 %v8463, %v9177
      %v9274 = vadd.f32 %v8464, %v9182
      %v9275 = vadd.f32 %v8465, %v9185
      %v9276 = vadd.f32 %v8466, %v9190
      %v9277 = vadd.f32 %v8467, %v9193
      %v9278 = vadd.f32 %v8468, %v9198
      %v9279 = vadd.f32 %v8469, %v9201
      %v9280 = vadd.f32 %v8470, %v9206
      %v9281 = vadd.f32 %v8471, %v9209
      %v9282 = vadd.f32 %v8472, %v9214
      %v9283 = vadd.f32 %v8473, %v9217
      %v9285 = vlaneseq
      %v9286 = vshrl.u32 %v9285, 7
      %v9287 = vsub.s32 0, %v9286
      %v9288 = vrot.slane %v278, %v9287
      %v9290 = vadd.f32 %v9220, %v9288
      %v9291 = vadd.f32 %v9221, %v9288
      %v9292 = vadd.f32 %v9222, %v9288
      %v9293 = vadd.f32 %v9223, %v9288
      %v9294 = vadd.f32 %v9224, %v9288
      %v9295 = vadd.f32 %v9225, %v9288
      %v9296 = vadd.f32 %v9226, %v9288
      %v9297 = vadd.f32 %v9227, %v9288
      %v9298 = vadd.f32 %v9228, %v9288
      %v9299 = vadd.f32 %v9229, %v9288
      %v9300 = vadd.f32 %v9230, %v9288
      %v9301 = vadd.f32 %v9231, %v9288
      %v9302 = vadd.f32 %v9232, %v9288
      %v9303 = vadd.f32 %v9233, %v9288
      %v9304 = vadd.f32 %v9234, %v9288
      %v9305 = vadd.f32 %v9235, %v9288
      %v9306 = vadd.f32 %v9236, %v9288
      %v9307 = vadd.f32 %v9237, %v9288
      %v9308 = vadd.f32 %v9238, %v9288
      %v9309 = vadd.f32 %v9239, %v9288
      %v9310 = vadd.f32 %v9240, %v9288
      %v9311 = vadd.f32 %v9241, %v9288
      %v9312 = vadd.f32 %v9242, %v9288
      %v9313 = vadd.f32 %v9243, %v9288
      %v9314 = vadd.f32 %v9244, %v9288
      %v9315 = vadd.f32 %v9245, %v9288
      %v9316 = vadd.f32 %v9246, %v9288
      %v9317 = vadd.f32 %v9247, %v9288
      %v9318 = vadd.f32 %v9248, %v9288
      %v9319 = vadd.f32 %v9249, %v9288
      %v9320 = vadd.f32 %v9250, %v9288
      %v9321 = vadd.f32 %v9251, %v9288
      %v9322 = vadd.f32 %v9252, %v9288
      %v9323 = vadd.f32 %v9253, %v9288
      %v9324 = vadd.f32 %v9254, %v9288
      %v9325 = vadd.f32 %v9255, %v9288
      %v9326 = vadd.f32 %v9256, %v9288
      %v9327 = vadd.f32 %v9257, %v9288
      %v9328 = vadd.f32 %v9258, %v9288
      %v9329 = vadd.f32 %v9259, %v9288
      %v9330 = vadd.f32 %v9260, %v9288
      %v9331 = vadd.f32 %v9261, %v9288
      %v9332 = vadd.f32 %v9262, %v9288
      %v9333 = vadd.f32 %v9263, %v9288
      %v9334 = vadd.f32 %v9264, %v9288
      %v9335 = vadd.f32 %v9265, %v9288
      %v9336 = vadd.f32 %v9266, %v9288
      %v9337 = vadd.f32 %v9267, %v9288
      %v9338 = vadd.f32 %v9268, %v9288
      %v9339 = vadd.f32 %v9269, %v9288
      %v9340 = vadd.f32 %v9270, %v9288
      %v9341 = vadd.f32 %v9271, %v9288
      %v9342 = vadd.f32 %v9272, %v9288
      %v9343 = vadd.f32 %v9273, %v9288
      %v9344 = vadd.f32 %v9274, %v9288
      %v9345 = vadd.f32 %v9275, %v9288
      %v9346 = vadd.f32 %v9276, %v9288
      %v9347 = vadd.f32 %v9277, %v9288
      %v9348 = vadd.f32 %v9278, %v9288
      %v9349 = vadd.f32 %v9279, %v9288
      %v9350 = vadd.f32 %v9280, %v9288
      %v9351 = vadd.f32 %v9281, %v9288
      %v9352 = vadd.f32 %v9282, %v9288
      %v9353 = vadd.f32 %v9283, %v9288
      %v9354 = vmax.f32 %v9290, 0.0
      %v9355 = vmax.f32 %v9291, 0.0
      %v9356 = vmax.f32 %v9292, 0.0
      %v9357 = vmax.f32 %v9293, 0.0
      %v9358 = vmax.f32 %v9294, 0.0
      %v9359 = vmax.f32 %v9295, 0.0
      %v9360 = vmax.f32 %v9296, 0.0
      %v9361 = vmax.f32 %v9297, 0.0
      %v9362 = vmax.f32 %v9298, 0.0
      %v9363 = vmax.f32 %v9299, 0.0
      %v9364 = vmax.f32 %v9300, 0.0
      %v9365 = vmax.f32 %v9301, 0.0
      %v9366 = vmax.f32 %v9302, 0.0
      %v9367 = vmax.f32 %v9303, 0.0
      %v9368 = vmax.f32 %v9304, 0.0
      %v9369 = vmax.f32 %v9305, 0.0
      %v9370 = vmax.f32 %v9306, 0.0
      %v9371 = vmax.f32 %v9307, 0.0
      %v9372 = vmax.f32 %v9308, 0.0
      %v9373 = vmax.f32 %v9309, 0.0
      %v9374 = vmax.f32 %v9310, 0.0
      %v9375 = vmax.f32 %v9311, 0.0
      %v9376 = vmax.f32 %v9312, 0.0
      %v9377 = vmax.f32 %v9313, 0.0
      %v9378 = vmax.f32 %v9314, 0.0
      %v9379 = vmax.f32 %v9315, 0.0
      %v9380 = vmax.f32 %v9316, 0.0
      %v9381 = vmax.f32 %v9317, 0.0
      %v9382 = vmax.f32 %v9318, 0.0
      %v9383 = vmax.f32 %v9319, 0.0
      %v9384 = vmax.f32 %v9320, 0.0
      %v9385 = vmax.f32 %v9321, 0.0
      %v9386 = vmax.f32 %v9322, 0.0
      %v9387 = vmax.f32 %v9323, 0.0
      %v9388 = vmax.f32 %v9324, 0.0
      %v9389 = vmax.f32 %v9325, 0.0
      %v9390 = vmax.f32 %v9326, 0.0
      %v9391 = vmax.f32 %v9327, 0.0
      %v9392 = vmax.f32 %v9328, 0.0
      %v9393 = vmax.f32 %v9329, 0.0
      %v9394 = vmax.f32 %v9330, 0.0
      %v9395 = vmax.f32 %v9331, 0.0
      %v9396 = vmax.f32 %v9332, 0.0
      %v9397 = vmax.f32 %v9333, 0.0
      %v9398 = vmax.f32 %v9334, 0.0
      %v9399 = vmax.f32 %v9335, 0.0
      %v9400 = vmax.f32 %v9336, 0.0
      %v9401 = vmax.f32 %v9337, 0.0
      %v9402 = vmax.f32 %v9338, 0.0
      %v9403 = vmax.f32 %v9339, 0.0
      %v9404 = vmax.f32 %v9340, 0.0
      %v9405 = vmax.f32 %v9341, 0.0
      %v9406 = vmax.f32 %v9342, 0.0
      %v9407 = vmax.f32 %v9343, 0.0
      %v9408 = vmax.f32 %v9344, 0.0
      %v9409 = vmax.f32 %v9345, 0.0
      %v9410 = vmax.f32 %v9346, 0.0
      %v9411 = vmax.f32 %v9347, 0.0
      %v9412 = vmax.f32 %v9348, 0.0
      %v9413 = vmax.f32 %v9349, 0.0
      %v9414 = vmax.f32 %v9350, 0.0
      %v9415 = vmax.f32 %v9351, 0.0
      %v9416 = vmax.f32 %v9352, 0.0
      %v9417 = vmax.f32 %v9353, 0.0
      %v9418 = vsub.f32 %v9354, %v9386
      %v9419 = vsub.f32 %v9355, %v9387
      %v9420 = vsub.f32 %v9356, %v9388
      %v9421 = vsub.f32 %v9357, %v9389
      %v9422 = vsub.f32 %v9358, %v9390
      %v9423 = vsub.f32 %v9359, %v9391
      %v9424 = vsub.f32 %v9360, %v9392
      %v9425 = vsub.f32 %v9361, %v9393
      %v9426 = vsub.f32 %v9362, %v9394
      %v9427 = vsub.f32 %v9363, %v9395
      %v9428 = vsub.f32 %v9364, %v9396
      %v9429 = vsub.f32 %v9365, %v9397
      %v9430 = vsub.f32 %v9366, %v9398
      %v9431 = vsub.f32 %v9367, %v9399
      %v9432 = vsub.f32 %v9368, %v9400
      %v9433 = vsub.f32 %v9369, %v9401
      %v9434 = vsub.f32 %v9370, %v9402
      %v9435 = vsub.f32 %v9371, %v9403
      %v9436 = vsub.f32 %v9372, %v9404
      %v9437 = vsub.f32 %v9373, %v9405
      %v9438 = vsub.f32 %v9374, %v9406
      %v9439 = vsub.f32 %v9375, %v9407
      %v9440 = vsub.f32 %v9376, %v9408
      %v9441 = vsub.f32 %v9377, %v9409
      %v9442 = vsub.f32 %v9378, %v9410
      %v9443 = vsub.f32 %v9379, %v9411
      %v9444 = vsub.f32 %v9380, %v9412
      %v9445 = vsub.f32 %v9381, %v9413
      %v9446 = vsub.f32 %v9382, %v9414
      %v9447 = vsub.f32 %v9383, %v9415
      %v9448 = vsub.f32 %v9384, %v9416
      %v9449 = vsub.f32 %v9385, %v9417
      %v9450 = vmul.f32 %v9418, %v9418
      %v9451 = vmul.f32 %v9419, %v9419
      %v9452 = vmul.f32 %v9420, %v9420
      %v9453 = vmul.f32 %v9421, %v9421
      %v9454 = vmul.f32 %v9422, %v9422
      %v9455 = vmul.f32 %v9423, %v9423
      %v9456 = vmul.f32 %v9424, %v9424
      %v9457 = vmul.f32 %v9425, %v9425
      %v9458 = vmul.f32 %v9426, %v9426
      %v9459 = vmul.f32 %v9427, %v9427
      %v9460 = vmul.f32 %v9428, %v9428
      %v9461 = vmul.f32 %v9429, %v9429
      %v9462 = vmul.f32 %v9430, %v9430
      %v9463 = vmul.f32 %v9431, %v9431
      %v9464 = vmul.f32 %v9432, %v9432
      %v9465 = vmul.f32 %v9433, %v9433
      %v9466 = vmul.f32 %v9434, %v9434
      %v9467 = vmul.f32 %v9435, %v9435
      %v9468 = vmul.f32 %v9436, %v9436
      %v9469 = vmul.f32 %v9437, %v9437
      %v9470 = vmul.f32 %v9438, %v9438
      %v9471 = vmul.f32 %v9439, %v9439
      %v9472 = vmul.f32 %v9440, %v9440
      %v9473 = vmul.f32 %v9441, %v9441
      %v9474 = vmul.f32 %v9442, %v9442
      %v9475 = vmul.f32 %v9443, %v9443
      %v9476 = vmul.f32 %v9444, %v9444
      %v9477 = vmul.f32 %v9445, %v9445
      %v9478 = vmul.f32 %v9446, %v9446
      %v9479 = vmul.f32 %v9447, %v9447
      %v9480 = vmul.f32 %v9448, %v9448
      %v9481 = vmul.f32 %v9449, %v9449
      %v9482 = vadd.f32 %v9450, %v9451
      %v9483 = vadd.f32 %v9482, %v9452
      %v9484 = vadd.f32 %v9483, %v9453
      %v9485 = vadd.f32 %v9484, %v9454
      %v9486 = vadd.f32 %v9485, %v9455
      %v9487 = vadd.f32 %v9486, %v9456
      %v9488 = vadd.f32 %v9487, %v9457
      %v9489 = vadd.f32 %v9488, %v9458
      %v9490 = vadd.f32 %v9489, %v9459
      %v9491 = vadd.f32 %v9490, %v9460
      %v9492 = vadd.f32 %v9491, %v9461
      %v9493 = vadd.f32 %v9492, %v9462
      %v9494 = vadd.f32 %v9493, %v9463
      %v9495 = vadd.f32 %v9494, %v9464
      %v9496 = vadd.f32 %v9495, %v9465
      %v9497 = vadd.f32 %v9496, %v9466
      %v9498 = vadd.f32 %v9497, %v9467
      %v9499 = vadd.f32 %v9498, %v9468
      %v9500 = vadd.f32 %v9499, %v9469
      %v9501 = vadd.f32 %v9500, %v9470
      %v9502 = vadd.f32 %v9501, %v9471
      %v9503 = vadd.f32 %v9502, %v9472
      %v9504 = vadd.f32 %v9503, %v9473
      %v9505 = vadd.f32 %v9504, %v9474
      %v9506 = vadd.f32 %v9505, %v9475
      %v9507 = vadd.f32 %v9506, %v9476
      %v9508 = vadd.f32 %v9507, %v9477
      %v9509 = vadd.f32 %v9508, %v9478
      %v9510 = vadd.f32 %v9509, %v9479
      %v9511 = vadd.f32 %v9510, %v9480
      %v9512 = vadd.f32 %v9511, %v9481
      %9513 = vadd.xlane.f32.xlu0 %v9512
      %v9514 = vpop.xlane.xlu0 %9513
      %v9515 = vrot.slane %v9514, 4
      %v9516 = vadd.f32 %v9514, %v9515
      %v9517 = vrot.slane %v9516, 2
      %v9518 = vadd.f32 %v9516, %v9517
      %v9519 = vrot.slane %v9518, 1
      %v9520 = vadd.f32 %v9518, %v9519
      %s9521 = vtos %v9520
      %v9522 = vstv %s9521
      %9523 = vst [vmem:[%s269] sm:$0xff] %v9522
      %p9524 = scmp.lt.s32.totalorder %s17, 1
      %s9525 = scalar_select %p9524, %s17, 1
      %s9526 = smul.addr %s9525, 8
      %s9527 = scalar_lea.vmem %s6, %s9526
      // Predicated region
      $region45: #{generator_loss.3} parent=43 // pred_check
        %p9528 = pneg %p171
      $region46: #{generator_loss.3} parent=43 // pred_check_branch
        %9530 = sbr.rel (%p9528) target = $region48
      $region47: #{generator_loss.3} parent=43 // pred_region
        _
      $region48: #{generator_loss.3} parent=43 // pred_fallthru
        _
    $region44: #{generator_loss.3} parent=5 // pred_fallthru
      _
    %p9531 = scmp.le.s32.totalorder 2, %s12
    // Predicated region
    $region49: #{generator_loss.3} parent=5 // pred_check
      %p9532 = pneg %p9531
    $region50: #{generator_loss.3} parent=5 // pred_check_branch
      %9534 = sbr.rel (%p9532) target = $region52
    $region51: #{generator_loss.3} parent=5 // pred_region
      %s9535 = ssub.s32 %s12, 2
      // Predicated region
      $region53: #{generator_loss.3} parent=51 // pred_check
        %p9536 = pneg %p177
      $region54: #{generator_loss.3} parent=51 // pred_check_branch
        %9538 = sbr.rel (%p9536) target = $region56
      $region55: #{generator_loss.3} parent=51 // pred_region
        %p9539 = scmp.lt.s32.totalorder %s18, 1
        %s9540 = scalar_select %p9539, %s18, 1
        %s9541 = smul.addr %s9540, 8
        %s9542 = scalar_lea.vmem %s6, %s9541
      $region56: #{generator_loss.3} parent=51 // pred_fallthru
        _
    $region52: #{generator_loss.3} parent=5 // pred_fallthru
      _
  $region6: #{generator_loss.3} parent=0 // loop_footer
    %s16 = sadd.s32 1, %s12
  $region7: #{generator_loss.3} parent=0 // loop_footer_branch
    %11 = sbr.rel target = $region3
  $region8: #{generator_loss.3} parent=0 // loop_exit
    _

</llo_original>
